<compile_context>
chip_gen: v7x
topology: tpu7x:2x2x1
jax: 0.10.0
libtpu: 0.0.40
codegen_flags: <defaults>
</compile_context>

<pallas_src>
import jax
import jax.numpy as jnp
import numpy as np
from jax.experimental import pallas as pl
from jax.experimental.pallas import tpu as pltpu

# ----- model hyper-parameters (small but consistent with the module) --------
B = 2            # batch
C = 512          # feature_channel (resnet18/34)
H = W = 8        # backbone output spatial size
HW = H * W
NUM_JOINTS = 29  # uvd_29 joints
NJ3 = NUM_JOINTS * 3          # 87
HIDDEN = 1024    # fc1 / fc2 width
HEIGHT_DIM = 64  # HEATMAP_SIZE[0]
WIDTH_DIM = 64   # HEATMAP_SIZE[1]

TK = 256                      # fc1-column / fc2-K tile width
NK = HIDDEN // TK             # grid steps (weight-stream pipeline)

# ----- lane-dense output slab layout (each section starts 128-aligned) ------
SEC = 128
O_UVD = 0 * SEC   # coord, grouped u(29) | v(29) | d(29)
O_SIG = 1 * SEC   # sigma (interleaved per-joint xyz, torch order)
O_DSH = 2 * SEC   # delta_shape (10)
O_PSH = 3 * SEC   # pred_shape (10)
O_PHI = 4 * SEC   # phi flat (46)
O_X = 5 * SEC     # cam-space x, root-relative (29)
O_Y = 6 * SEC     # cam-space y (29)
O_Z = 7 * SEC     # cam-space z (29)
OUT_W = 8 * SEC   # 1024 lanes -> single dense output store


# ---------------------------------------------------------------------------
# Fused, pipelined kernel:
#   per step s:  xc_tile = feat @ w1[:, sTK:(s+1)TK] + b1_tile          (MXU)
#                acc    += xc_tile @ w2[sTK:(s+1)TK, :]                 (MXU)
#   step 0:      global average pool -> feat scratch ; zero acc
#   last step:   fc_coord|fc_sigma, decshape|decphi heads, uvd_to_cam,
#                single [B, 1024] output store
# ---------------------------------------------------------------------------
def head_kernel(x0_ref, wcs_ref, bc_ref, bs_ref, w1_ref, b1_ref, w2_ref,
                b2_ref, wshph_ref, bshph_ref, init_shape_ref, geo_ref,
                out_ref, feat_ref, acc_ref):
    s = pl.program_id(0)
    last = pl.num_programs(0) - 1

    @pl.when(s == 0)
    def _init():
        # global average pool; x0 is [B, C, HW] -> reduce over the lane axis
        feat_ref[...] = jnp.mean(x0_ref[...], axis=2)          # [B, C]
        acc_ref[...] = jnp.zeros_like(acc_ref)

    feat = feat_ref[...]                                        # [B, C] f32
    feat_bf = feat.astype(jnp.bfloat16)

    # fc1 column tile (drop1 = identity in eval), bf16 weights, f32 acc
    xc_tile = jnp.dot(feat_bf, w1_ref[...],
                      preferred_element_type=jnp.float32) + b1_ref[...]
    # fc2 K-tile accumulation into persistent scratch
    acc_ref[...] += jnp.dot(xc_tile.astype(jnp.bfloat16), w2_ref[...],
                            preferred_element_type=jnp.float32)

    @pl.when(s == last)
    def _finalize():
        # ---- fc_coord / fc_sigma (one fused matmul, lane-aligned slices) ---
        sumsq = jnp.sum(feat * feat, axis=1, keepdims=True)     # [B, 1]
        inv_norm = jax.lax.rsqrt(sumsq)
        cs = jnp.dot(feat_bf, wcs_ref[...],
                     preferred_element_type=jnp.float32)        # [B, 256]
        coord = cs[:, 0:NJ3] * inv_norm + bc_ref[...]           # u|v|d grouped
        sigma = jax.nn.sigmoid(cs[:, SEC:SEC + NJ3] + bs_ref[...]) + 1e-9

        # ---- SMPL-parameter heads (drop2 = identity in eval) ---------------
        xc2 = acc_ref[...] + b2_ref[...]                        # [B, 1024]
        sp = jnp.dot(xc2.astype(jnp.bfloat16), wshph_ref[...],
                     preferred_element_type=jnp.float32) + bshph_ref[...]
        dshape = sp[:, 0:10]
        pshape = dshape + init_shape_ref[...]
        phi = sp[:, 10:56]

        # ---- uvd_to_cam (fused, exact reciprocal on depth_factor) ----------
        geo = geo_ref[...]                                      # [B, 19]
        u = (coord[:, 0:NUM_JOINTS] + 0.5) * (WIDTH_DIM * 4.0)
        v = (coord[:, NUM_JOINTS:2 * NUM_JOINTS] + 0.5) * (HEIGHT_DIM * 4.0)
        df = geo[:, 18:19]                                      # depth_factor
        inv_df = 1.0 / df                                       # exact
        d = coord[:, 2 * NUM_JOINTS:3 * NUM_JOINTS] * df        # dz

        t = geo[:, 0:6]        # trans_inv, row-major (2, 3)
        uvx = t[:, 0:1] * u + t[:, 1:2] * v + t[:, 2:3]
        uvy = t[:, 3:4] * u + t[:, 4:5] * v + t[:, 5:6]

        K = geo[:, 6:15]       # intrinsic_param, row-major (3, 3)
        cx = K[:, 0:1] * uvx + K[:, 1:2] * uvy + K[:, 2:3]
        cy = K[:, 3:4] * uvx + K[:, 4:5] * uvy + K[:, 5:6]
        cz = K[:, 6:7] * uvx + K[:, 7:8] * uvy + K[:, 8:9]

        root = geo[:, 15:18]   # joint_root
        abs_z = d + root[:, 2:3]
        xr = (cx * abs_z - root[:, 0:1]) * inv_df   # return_relative=True
        yr = (cy * abs_z - root[:, 1:2]) * inv_df
        zr = (cz * abs_z - root[:, 2:3]) * inv_df
        # subtract root joint (index 0, root_idx_smpl)
        xr = xr - xr[:, 0:1]
        yr = yr - yr[:, 0:1]
        zr = zr - zr[:, 0:1]

        # ---- build slab in registers, single full-width store --------------
        def sec(a):
            pad = jnp.zeros((a.shape[0], SEC - a.shape[1]), a.dtype)
            return jnp.concatenate([a, pad], axis=1)

        out_ref[...] = jnp.concatenate(
            [sec(coord), sec(sigma), sec(dshape), sec(pshape), sec(phi),
             sec(xr), sec(yr), sec(zr)], axis=1)


def head_call(x0r, p, geo):
    batch = x0r.shape[0]
    args = (x0r,
            p["wcs"], p["bc"], p["bs"],
            p["w1"], p["b1"], p["w2"], p["b2"],
            p["wshph"], p["bshph"], p["init_shape"], geo)

    in_specs = [
        pl.BlockSpec((batch, C, HW), lambda s: (0, 0, 0)),   # x0 (resident)
        pl.BlockSpec((C, 2 * SEC), lambda s: (0, 0)),        # wcs (resident)
        pl.BlockSpec((1, NJ3), lambda s: (0, 0)),            # bc
        pl.BlockSpec((1, NJ3), lambda s: (0, 0)),            # bs
        pl.BlockSpec((C, TK), lambda s: (0, s)),             # w1 column tile
        pl.BlockSpec((1, TK), lambda s: (0, s)),             # b1 tile
        pl.BlockSpec((TK, HIDDEN), lambda s: (s, 0)),        # w2 K tile
        pl.BlockSpec((1, HIDDEN), lambda s: (0, 0)),         # b2
        pl.BlockSpec((HIDDEN, 56), lambda s: (0, 0)),        # wshph (resident)
        pl.BlockSpec((1, 56), lambda s: (0, 0)),             # bshph
        pl.BlockSpec((1, 10), lambda s: (0, 0)),             # init_shape
        pl.BlockSpec((batch, 19), lambda s: (0, 0)),         # geo
    ]
    out_shape = jax.ShapeDtypeStruct((batch, OUT_W), jnp.float32)
    return pl.pallas_call(
        head_kernel,
        grid=(NK,),
        in_specs=in_specs,
        out_specs=pl.BlockSpec((batch, OUT_W), lambda s: (0, 0)),
        out_shape=out_shape,
        scratch_shapes=[pltpu.VMEM((batch, C), jnp.float32),       # feat
                        pltpu.VMEM((batch, HIDDEN), jnp.float32)],  # fc2 acc
        compiler_params=pltpu.CompilerParams(
            dimension_semantics=("arbitrary",)),   # weight-stream reduction
    )(*args)


# ---------------------------------------------------------------------------
# Forward wrapper (glue: layout, packing, output dict)
# ---------------------------------------------------------------------------
@jax.jit
def forward(x0, params, trans_inv, intrinsic_param, joint_root, depth_factor):
    batch = x0.shape[0]
    # native [B, C, HW]: contiguous reshape only, NO transpose round trip.
    x0r = x0.reshape(batch, C, HW)

    # pack the geometric params into one [B, 19] input (one tiny DMA)
    geo = jnp.concatenate([trans_inv.reshape(batch, 6),
                           intrinsic_param.reshape(batch, 9),
                           joint_root.reshape(batch, 3),
                           depth_factor.reshape(batch, 1)], axis=-1)

    slab = head_call(x0r, params, geo)                          # [B, 1024]

    u = slab[:, O_UVD:O_UVD + NUM_JOINTS]
    v = slab[:, O_UVD + NUM_JOINTS:O_UVD + 2 * NUM_JOINTS]
    d = slab[:, O_UVD + 2 * NUM_JOINTS:O_UVD + 3 * NUM_JOINTS]
    pred_jts = jnp.stack([u, v, d], axis=-1)                    # [B, 29, 3]

    sigma = slab[:, O_SIG:O_SIG + NJ3].reshape(batch, NUM_JOINTS, 3)
    scores = jnp.mean(1.0 - sigma, axis=2, keepdims=True)       # [B, 29, 1]

    dshape = slab[:, O_DSH:O_DSH + 10]
    pshape = slab[:, O_PSH:O_PSH + 10]
    pred_phi = slab[:, O_PHI:O_PHI + 46].reshape(batch, 23, 2)

    pred_xyz_jts_29 = jnp.stack([slab[:, O_X:O_X + NUM_JOINTS],
                                 slab[:, O_Y:O_Y + NUM_JOINTS],
                                 slab[:, O_Z:O_Z + NUM_JOINTS]], axis=-1)
    pred_xyz_jts_29_flat = pred_xyz_jts_29.reshape(batch, -1)   # [B, 87]
    pred_xyz_jts_24 = pred_xyz_jts_29[:, :24, :].reshape(batch, 72)

    # TODO(synk): pred_vertices / pred_xyz_jts_24_struct / pred_xyz_jts_17 /
    # pred_theta_mats require SMPL_layer.hybrik; nf_loss/log_phi require the
    # RealNVP flows with training labels — omitted (inference path).
    return dict(
        pred_phi=pred_phi,
        pred_delta_shape=dshape,
        pred_shape=pshape,
        pred_uvd_jts=pred_jts,
        pred_xyz_jts_29=pred_xyz_jts_29_flat,
        pred_xyz_jts_24=pred_xyz_jts_24,
        maxvals=scores,
        sigma=sigma,
    )


# ---------------------------------------------------------------------------
# Pure-JAX reference (for correctness check; mirrors the torch forward path,
# with the same bf16 weight casts the kernel applies)
# ---------------------------------------------------------------------------
def forward_ref(x0, params, trans_inv, intrinsic_param, joint_root,
                depth_factor):
    batch = x0.shape[0]
    feat = jnp.mean(x0.reshape(batch, C, HW), axis=2)           # [B, C]
    feat_bf = feat.astype(jnp.bfloat16).astype(jnp.float32)

    inv_norm = jax.lax.rsqrt(jnp.sum(feat * feat, axis=1, keepdims=True))
    cs = jnp.dot(feat_bf, params["wcs"].astype(jnp.float32))
    coord = cs[:, 0:NJ3] * inv_norm + params["bc"]              # u|v|d
    sigma = jax.nn.sigmoid(cs[:, SEC:SEC + NJ3] + params["bs"]) + 1e-9

    xc = jnp.dot(feat_bf, params["w1"].astype(jnp.float32)) + params["b1"]
    xc2 = jnp.dot(xc.astype(jnp.bfloat16).astype(jnp.float32),
                  params["w2"].astype(jnp.float32)) + params["b2"]
    sp = jnp.dot(xc2.astype(jnp.bfloat16).astype(jnp.float32),
                 params["wshph"].astype(jnp.float32)) + params["bshph"]
    dshape = sp[:, 0:10]
    pshape = dshape + params["init_shape"]
    phi = sp[:, 10:56]

    pred_jts = jnp.stack([coord[:, :NUM_JOINTS],
                          coord[:, NUM_JOINTS:2 * NUM_JOINTS],
                          coord[:, 2 * NUM_JOINTS:]], axis=-1)  # [B, 29, 3]

    # uvd_to_cam with real (2,3)/(3,3) matmuls (torch semantics)
    u = (pred_jts[:, :, 0] + 0.5) * WIDTH_DIM * 4.0
    v = (pred_jts[:, :, 1] + 0.5) * HEIGHT_DIM * 4.0
    d = pred_jts[:, :, 2] * depth_factor                        # [B, 29]
    uv_homo = jnp.stack([u, v, jnp.ones_like(u)], axis=-1)      # [B, 29, 3]
    uv = jnp.einsum('bij,bkj->bki', trans_inv, uv_homo)         # [B, 29, 2]
    cam_homo = jnp.concatenate([uv, jnp.ones_like(uv[:, :, :1])], axis=-1)
    xyz = jnp.einsum('bij,bkj->bki', intrinsic_param, cam_homo) # [B, 29, 3]
    abs_z = d + joint_root[:, 2][:, None]
    xyz = xyz * abs_z[..., None]
    xyz = (xyz - joint_root[:, None, :]) / depth_factor[..., None]
    xyz = xyz - xyz[:, 0:1, :]

    sigma3 = sigma.reshape(batch, NUM_JOINTS, 3)
    return dict(
        pred_phi=phi.reshape(batch, 23, 2),
        pred_delta_shape=dshape,
        pred_shape=pshape,
        pred_uvd_jts=pred_jts,
        pred_xyz_jts_29=xyz.reshape(batch, -1),
        pred_xyz_jts_24=xyz[:, :24, :].reshape(batch, 72),
        maxvals=jnp.mean(1.0 - sigma3, axis=2, keepdims=True),
        sigma=sigma3,
    )


# ---------------------------------------------------------------------------
# Deterministic parameter init (synthetic; shapes from the module __init__)
# ---------------------------------------------------------------------------
def init_params(key):
    ks = jax.random.split(key, 8)

    def lin(k, fan_in, fan_out, gain=1.0):
        kw, kb = jax.random.split(k)
        lim = gain * jnp.sqrt(6.0 / (fan_in + fan_out))
        w = jax.random.uniform(kw, (fan_in, fan_out), jnp.float32, -lim, lim)
        b = jax.random.uniform(kb, (1, fan_out), jnp.float32, -0.01, 0.01)
        return w, b

    wc, bc = lin(ks[0], C, NJ3, gain=0.01)    # fc_coord (xavier gain=0.01)
    ws, bs = lin(ks[1], C, NJ3, gain=0.01)    # fc_sigma
    w1, b1 = lin(ks[2], C, HIDDEN)            # fc1
    w2, b2 = lin(ks[3], HIDDEN, HIDDEN)       # fc2
    wsh, bsh = lin(ks[4], HIDDEN, 10)         # decshape
    wph, bph = lin(ks[5], HIDDEN, 23 * 2)     # decphi
    init_shape = 0.1 * jax.random.normal(ks[6], (1, 10), jnp.float32)

    # Permute fc_coord columns from interleaved (x0,y0,z0,x1,...) to grouped
    # (u..., v..., d...) so the fused uvd_to_cam uses contiguous slices.
    perm = jnp.concatenate([jnp.arange(0, NJ3, 3),
                            jnp.arange(1, NJ3, 3),
                            jnp.arange(2, NJ3, 3)])
    wc = wc[:, perm]
    bc = bc[:, perm]

    # Fuse fc_coord | fc_sigma into one lane-aligned bf16 weight [512, 256]
    wcs = jnp.zeros((C, 2 * SEC), jnp.float32)
    wcs = wcs.at[:, 0:NJ3].set(wc)
    wcs = wcs.at[:, SEC:SEC + NJ3].set(ws)

    # Fuse decshape | decphi into one [1024, 56] weight
    wshph = jnp.concatenate([wsh, wph], axis=1)
    bshph = jnp.concatenate([bsh, bph], axis=1)

    return dict(wcs=wcs.astype(jnp.bfloat16), bc=bc, bs=bs,
                w1=w1.astype(jnp.bfloat16), b1=b1,     # bf16 weight streams
                w2=w2.astype(jnp.bfloat16), b2=b2,
                wshph=wshph.astype(jnp.bfloat16), bshph=bshph,
                init_shape=init_shape)


if __name__ == "__main__":
    key = jax.random.PRNGKey(0)
    kx, kt, ki, kr, kp = jax.random.split(key, 5)

    # x0: backbone (ResNet) output feature map — see TODO(synk) at top.
    x0 = jax.random.normal(kx, (B, C, H, W), jnp.float32)
    trans_inv = jax.random.normal(kt, (B, 2, 3), jnp.float32)
    intrinsic_param = jax.random.normal(ki, (B, 3, 3), jnp.float32)
    joint_root = jax.random.normal(kr, (B, 3), jnp.float32)
    depth_factor = jnp.full((B, 1), 2.0, jnp.float32)

    params = init_params(kp)

    out = forward(x0, params, trans_inv, intrinsic_param, joint_root,
                  depth_factor)
    out = jax.tree_util.tree_map(jax.block_until_ready, out)

    # shape checks
    assert out["pred_uvd_jts"].shape == (B, NUM_JOINTS, 3)
    assert out["pred_xyz_jts_29"].shape == (B, NJ3)
    assert out["pred_xyz_jts_24"].shape == (B, 72)
    assert out["pred_phi"].shape == (B, 23, 2)
    assert out["pred_shape"].shape == (B, 10)
    assert out["maxvals"].shape == (B, NUM_JOINTS, 1)
    assert out["sigma"].shape == (B, NUM_JOINTS, 3)

    # numeric check against pure-JAX reference (ref applies the same bf16
    # weight casts; reciprocal is exact, so tolerances are tight)
    ref = forward_ref(x0, params, trans_inv, intrinsic_param, joint_root,
                      depth_factor)
    np.testing.assert_allclose(out["pred_uvd_jts"], ref["pred_uvd_jts"],
                               rtol=5e-3, atol=1e-4)
    np.testing.assert_allclose(out["sigma"], ref["sigma"],
                               rtol=5e-3, atol=1e-4)
    np.testing.assert_allclose(out["maxvals"], ref["maxvals"],
                               rtol=5e-3, atol=1e-4)
    np.testing.assert_allclose(out["pred_xyz_jts_29"], ref["pred_xyz_jts_29"],
                               rtol=5e-3, atol=1e-2)
    np.testing.assert_allclose(out["pred_xyz_jts_24"], ref["pred_xyz_jts_24"],
                               rtol=5e-3, atol=1e-2)
    np.testing.assert_allclose(out["pred_delta_shape"],
                               ref["pred_delta_shape"], rtol=1e-2, atol=1e-3)
    np.testing.assert_allclose(out["pred_shape"], ref["pred_shape"],
                               rtol=1e-2, atol=1e-3)
    np.testing.assert_allclose(out["pred_phi"], ref["pred_phi"],
                               rtol=1e-2, atol=1e-3)

    print("KERNEL_OK")
</pallas_src>

<mosaic_0001>
module attributes {stable_mosaic.version = 11 : i64} {
  func.func @head_kernel(%arg0: i32, %arg1: memref<2x512x64xf32, #tpu.memory_space<vmem>>, %arg2: memref<512x256xbf16, #tpu.memory_space<vmem>>, %arg3: memref<1x87xf32, #tpu.memory_space<vmem>>, %arg4: memref<1x87xf32, #tpu.memory_space<vmem>>, %arg5: memref<512x256xbf16, #tpu.memory_space<vmem>>, %arg6: memref<1x256xf32, #tpu.memory_space<vmem>>, %arg7: memref<256x1024xbf16, #tpu.memory_space<vmem>>, %arg8: memref<1x1024xf32, #tpu.memory_space<vmem>>, %arg9: memref<1024x56xbf16, #tpu.memory_space<vmem>>, %arg10: memref<1x56xf32, #tpu.memory_space<vmem>>, %arg11: memref<1x10xf32, #tpu.memory_space<vmem>>, %arg12: memref<2x19xf32, #tpu.memory_space<vmem>>, %arg13: memref<2x1024xf32, #tpu.memory_space<vmem>>, %arg14: memref<2x512xf32, #tpu.memory_space<vmem>>, %arg15: memref<2x1024xf32, #tpu.memory_space<vmem>>) attributes {dimension_semantics = [#tpu.dimension_semantics<arbitrary>], iteration_bounds = array<i64: 4>, scalar_prefetch = 0 : i64, scratch_operands = 2 : i64, tpu.core_type = #tpu.core_type<tc>, window_params = [{pipeline_mode = #tpu.pipeline_mode<synchronous>, transform_indices = @transform_0, window_bounds = array<i64: 2, 512, 64>}, {pipeline_mode = #tpu.pipeline_mode<synchronous>, transform_indices = @transform_1, window_bounds = array<i64: 512, 256>}, {pipeline_mode = #tpu.pipeline_mode<synchronous>, transform_indices = @transform_2, window_bounds = array<i64: 1, 87>}, {pipeline_mode = #tpu.pipeline_mode<synchronous>, transform_indices = @transform_3, window_bounds = array<i64: 1, 87>}, {transform_indices = @transform_4, window_bounds = array<i64: 512, 256>}, {transform_indices = @transform_5, window_bounds = array<i64: 1, 256>}, {transform_indices = @transform_6, window_bounds = array<i64: 256, 1024>}, {pipeline_mode = #tpu.pipeline_mode<synchronous>, transform_indices = @transform_7, window_bounds = array<i64: 1, 1024>}, {pipeline_mode = #tpu.pipeline_mode<synchronous>, transform_indices = @transform_8, window_bounds = array<i64: 1024, 56>}, {pipeline_mode = #tpu.pipeline_mode<synchronous>, transform_indices = @transform_9, window_bounds = array<i64: 1, 56>}, {pipeline_mode = #tpu.pipeline_mode<synchronous>, transform_indices = @transform_10, window_bounds = array<i64: 1, 10>}, {pipeline_mode = #tpu.pipeline_mode<synchronous>, transform_indices = @transform_11, window_bounds = array<i64: 2, 19>}, {pipeline_mode = #tpu.pipeline_mode<synchronous>, transform_indices = @transform_12, window_bounds = array<i64: 2, 1024>}]} {
    %c0_i32 = arith.constant 0 : i32
    %0 = arith.cmpi eq, %arg0, %c0_i32 : i32
    %1 = arith.extui %0 : i1 to i32
    %c0_i32_0 = arith.constant 0 : i32
    %2 = arith.cmpi ne, %1, %c0_i32_0 : i32
    scf.if %2 {
      %c0_14 = arith.constant 0 : index
      %c0_15 = arith.constant 0 : index
      %c0_16 = arith.constant 0 : index
      %19 = vector.load %arg1[%c0_14, %c0_15, %c0_16] : memref<2x512x64xf32, #tpu.memory_space<vmem>>, vector<2x512x64xf32>
      %cst_17 = arith.constant dense<0.000000e+00> : vector<2x512xf32>
      %20 = vector.multi_reduction <add>, %19, %cst_17 [2] : vector<2x512x64xf32> to vector<2x512xf32>
      %cst_18 = arith.constant 6.400000e+01 : f32
      %21 = vector.broadcast %cst_18 : f32 to vector<2x512xf32>
      %22 = arith.divf %20, %21 : vector<2x512xf32>
      %c0_19 = arith.constant 0 : index
      %c0_20 = arith.constant 0 : index
      %23 = vector.load %arg14[%c0_19, %c0_20] : memref<2x512xf32, #tpu.memory_space<vmem>>, vector<2x512xf32>
      tpu.vector_store %arg14[%c0_19, %c0_20], %22 {strides = array<i32>} : memref<2x512xf32, #tpu.memory_space<vmem>>, vector<2x512xf32>,
      %cst_21 = arith.constant 0.000000e+00 : f32
      %24 = vector.broadcast %cst_21 : f32 to vector<2x1024xf32>
      %c0_22 = arith.constant 0 : index
      %c0_23 = arith.constant 0 : index
      %25 = vector.load %arg15[%c0_22, %c0_23] : memref<2x1024xf32, #tpu.memory_space<vmem>>, vector<2x1024xf32>
      tpu.vector_store %arg15[%c0_22, %c0_23], %24 {strides = array<i32>} : memref<2x1024xf32, #tpu.memory_space<vmem>>, vector<2x1024xf32>,
    } else {
    }
    %c0 = arith.constant 0 : index
    %c0_1 = arith.constant 0 : index
    %3 = vector.load %arg14[%c0, %c0_1] : memref<2x512xf32, #tpu.memory_space<vmem>>, vector<2x512xf32>
    %4 = arith.truncf %3 : vector<2x512xf32> to vector<2x512xbf16>
    %c0_2 = arith.constant 0 : index
    %c0_3 = arith.constant 0 : index
    %5 = vector.load %arg5[%c0_2, %c0_3] : memref<512x256xbf16, #tpu.memory_space<vmem>>, vector<512x256xbf16>
    %cst = arith.constant dense<0.000000e+00> : vector<2x256xf32>
    %6 = tpu.matmul %4, %5, %cst {dimension_numbers = #tpu.dot_dimension_numbers<[1], [0], [0], [1], [0, 0, 1, 1], [], []>} : vector<2x512xbf16>, vector<512x256xbf16>, vector<2x256xf32> -> vector<2x256xf32>
    %c0_4 = arith.constant 0 : index
    %c0_5 = arith.constant 0 : index
    %7 = vector.load %arg6[%c0_4, %c0_5] : memref<1x256xf32, #tpu.memory_space<vmem>>, vector<1x256xf32>
    %8 = vector.broadcast %7 : vector<1x256xf32> to vector<2x256xf32>
    %9 = arith.addf %6, %8 : vector<2x256xf32>
    %c0_6 = arith.constant 0 : index
    %c0_7 = arith.constant 0 : index
    %10 = vector.load %arg15[%c0_6, %c0_7] : memref<2x1024xf32, #tpu.memory_space<vmem>>, vector<2x1024xf32>
    %11 = arith.truncf %9 : vector<2x256xf32> to vector<2x256xbf16>
    %c0_8 = arith.constant 0 : index
    %c0_9 = arith.constant 0 : index
    %12 = vector.load %arg7[%c0_8, %c0_9] : memref<256x1024xbf16, #tpu.memory_space<vmem>>, vector<256x1024xbf16>
    %cst_10 = arith.constant dense<0.000000e+00> : vector<2x1024xf32>
    %13 = tpu.matmul %11, %12, %cst_10 {dimension_numbers = #tpu.dot_dimension_numbers<[1], [0], [0], [1], [0, 0, 1, 1], [], []>} : vector<2x256xbf16>, vector<256x1024xbf16>, vector<2x1024xf32> -> vector<2x1024xf32>
    %14 = arith.addf %10, %13 : vector<2x1024xf32>
    %c0_11 = arith.constant 0 : index
    %c0_12 = arith.constant 0 : index
    %15 = vector.load %arg15[%c0_11, %c0_12] : memref<2x1024xf32, #tpu.memory_space<vmem>>, vector<2x1024xf32>
    tpu.vector_store %arg15[%c0_11, %c0_12], %14 {strides = array<i32>} : memref<2x1024xf32, #tpu.memory_space<vmem>>, vector<2x1024xf32>,
    %c3_i32 = arith.constant 3 : i32
    %16 = arith.cmpi eq, %arg0, %c3_i32 : i32
    %17 = arith.extui %16 : i1 to i32
    %c0_i32_13 = arith.constant 0 : i32
    %18 = arith.cmpi ne, %17, %c0_i32_13 : i32
    scf.if %18 {
      %19 = arith.mulf %3, %3 : vector<2x512xf32>
      %cst_14 = arith.constant dense<0.000000e+00> : vector<2xf32>
      %20 = vector.multi_reduction <add>, %19, %cst_14 [1] : vector<2x512xf32> to vector<2xf32>
      %21 = vector.shape_cast %20 : vector<2xf32> to vector<2x1xf32>
      %22 = math.rsqrt %21 : vector<2x1xf32>
      %c0_15 = arith.constant 0 : index
      %c0_16 = arith.constant 0 : index
      %23 = vector.load %arg2[%c0_15, %c0_16] : memref<512x256xbf16, #tpu.memory_space<vmem>>, vector<512x256xbf16>
      %cst_17 = arith.constant dense<0.000000e+00> : vector<2x256xf32>
      %24 = tpu.matmul %4, %23, %cst_17 {dimension_numbers = #tpu.dot_dimension_numbers<[1], [0], [0], [1], [0, 0, 1, 1], [], []>} : vector<2x512xbf16>, vector<512x256xbf16>, vector<2x256xf32> -> vector<2x256xf32>
      %25 = vector.extract_strided_slice %24 {offsets = [0, 0], sizes = [2, 87], strides = [1, 1]} : vector<2x256xf32> to vector<2x87xf32>
      %26 = vector.broadcast %22 : vector<2x1xf32> to vector<2x87xf32>
      %27 = arith.mulf %25, %26 : vector<2x87xf32>
      %c0_18 = arith.constant 0 : index
      %c0_19 = arith.constant 0 : index
      %28 = vector.load %arg3[%c0_18, %c0_19] : memref<1x87xf32, #tpu.memory_space<vmem>>, vector<1x87xf32>
      %29 = vector.broadcast %28 : vector<1x87xf32> to vector<2x87xf32>
      %30 = arith.addf %27, %29 : vector<2x87xf32>
      %31 = vector.extract_strided_slice %24 {offsets = [0, 128], sizes = [2, 87], strides = [1, 1]} : vector<2x256xf32> to vector<2x87xf32>
      %c0_20 = arith.constant 0 : index
      %c0_21 = arith.constant 0 : index
      %32 = vector.load %arg4[%c0_20, %c0_21] : memref<1x87xf32, #tpu.memory_space<vmem>>, vector<1x87xf32>
      %33 = vector.broadcast %32 : vector<1x87xf32> to vector<2x87xf32>
      %34 = arith.addf %31, %33 : vector<2x87xf32>
      %35 = arith.negf %34 : vector<2x87xf32>
      %36 = math.exp %35 : vector<2x87xf32>
      %cst_22 = arith.constant 1.000000e+00 : f32
      %37 = vector.broadcast %cst_22 : f32 to vector<2x87xf32>
      %38 = arith.addf %37, %36 : vector<2x87xf32>
      %39 = arith.divf %37, %38 : vector<2x87xf32>
      %cst_23 = arith.constant 9.99999971E-10 : f32
      %40 = vector.broadcast %cst_23 : f32 to vector<2x87xf32>
      %41 = arith.addf %39, %40 : vector<2x87xf32>
      %c0_24 = arith.constant 0 : index
      %c0_25 = arith.constant 0 : index
      %42 = vector.load %arg15[%c0_24, %c0_25] : memref<2x1024xf32, #tpu.memory_space<vmem>>, vector<2x1024xf32>
      %c0_26 = arith.constant 0 : index
      %c0_27 = arith.constant 0 : index
      %43 = vector.load %arg8[%c0_26, %c0_27] : memref<1x1024xf32, #tpu.memory_space<vmem>>, vector<1x1024xf32>
      %44 = vector.broadcast %43 : vector<1x1024xf32> to vector<2x1024xf32>
      %45 = arith.addf %42, %44 : vector<2x1024xf32>
      %46 = arith.truncf %45 : vector<2x1024xf32> to vector<2x1024xbf16>
      %c0_28 = arith.constant 0 : index
      %c0_29 = arith.constant 0 : index
      %47 = vector.load %arg9[%c0_28, %c0_29] : memref<1024x56xbf16, #tpu.memory_space<vmem>>, vector<1024x56xbf16>
      %cst_30 = arith.constant dense<0.000000e+00> : vector<2x56xf32>
      %48 = tpu.matmul %46, %47, %cst_30 {dimension_numbers = #tpu.dot_dimension_numbers<[1], [0], [0], [1], [0, 0, 1, 1], [], []>} : vector<2x1024xbf16>, vector<1024x56xbf16>, vector<2x56xf32> -> vector<2x56xf32>
      %c0_31 = arith.constant 0 : index
      %c0_32 = arith.constant 0 : index
      %49 = vector.load %arg10[%c0_31, %c0_32] : memref<1x56xf32, #tpu.memory_space<vmem>>, vector<1x56xf32>
      %50 = vector.broadcast %49 : vector<1x56xf32> to vector<2x56xf32>
      %51 = arith.addf %48, %50 : vector<2x56xf32>
      %52 = vector.extract_strided_slice %51 {offsets = [0, 0], sizes = [2, 10], strides = [1, 1]} : vector<2x56xf32> to vector<2x10xf32>
      %c0_33 = arith.constant 0 : index
      %c0_34 = arith.constant 0 : index
      %53 = vector.load %arg11[%c0_33, %c0_34] : memref<1x10xf32, #tpu.memory_space<vmem>>, vector<1x10xf32>
      %54 = vector.broadcast %53 : vector<1x10xf32> to vector<2x10xf32>
      %55 = arith.addf %52, %54 : vector<2x10xf32>
      %56 = vector.extract_strided_slice %51 {offsets = [0, 10], sizes = [2, 46], strides = [1, 1]} : vector<2x56xf32> to vector<2x46xf32>
      %c0_35 = arith.constant 0 : index
      %c0_36 = arith.constant 0 : index
      %57 = vector.load %arg12[%c0_35, %c0_36] : memref<2x19xf32, #tpu.memory_space<vmem>>, vector<2x19xf32>
      %58 = vector.extract_strided_slice %30 {offsets = [0, 0], sizes = [2, 29], strides = [1, 1]} : vector<2x87xf32> to vector<2x29xf32>
      %cst_37 = arith.constant 5.000000e-01 : f32
      %59 = vector.broadcast %cst_37 : f32 to vector<2x29xf32>
      %60 = arith.addf %58, %59 : vector<2x29xf32>
      %cst_38 = arith.constant 2.560000e+02 : f32
      %61 = vector.broadcast %cst_38 : f32 to vector<2x29xf32>
      %62 = arith.mulf %60, %61 : vector<2x29xf32>
      %63 = vector.extract_strided_slice %30 {offsets = [0, 29], sizes = [2, 29], strides = [1, 1]} : vector<2x87xf32> to vector<2x29xf32>
      %cst_39 = arith.constant 5.000000e-01 : f32
      %64 = vector.broadcast %cst_39 : f32 to vector<2x29xf32>
      %65 = arith.addf %63, %64 : vector<2x29xf32>
      %cst_40 = arith.constant 2.560000e+02 : f32
      %66 = vector.broadcast %cst_40 : f32 to vector<2x29xf32>
      %67 = arith.mulf %65, %66 : vector<2x29xf32>
      %68 = vector.extract_strided_slice %57 {offsets = [0, 18], sizes = [2, 1], strides = [1, 1]} : vector<2x19xf32> to vector<2x1xf32>
      %cst_41 = arith.constant 1.000000e+00 : f32
      %69 = vector.broadcast %cst_41 : f32 to vector<2x1xf32>
      %70 = arith.divf %69, %68 : vector<2x1xf32>
      %71 = vector.extract_strided_slice %30 {offsets = [0, 58], sizes = [2, 29], strides = [1, 1]} : vector<2x87xf32> to vector<2x29xf32>
      %72 = vector.broadcast %68 : vector<2x1xf32> to vector<2x29xf32>
      %73 = arith.mulf %71, %72 : vector<2x29xf32>
      %74 = vector.extract_strided_slice %57 {offsets = [0, 0], sizes = [2, 6], strides = [1, 1]} : vector<2x19xf32> to vector<2x6xf32>
      %75 = vector.extract_strided_slice %74 {offsets = [0, 0], sizes = [2, 1], strides = [1, 1]} : vector<2x6xf32> to vector<2x1xf32>
      %76 = vector.broadcast %75 : vector<2x1xf32> to vector<2x29xf32>
      %77 = arith.mulf %76, %62 : vector<2x29xf32>
      %78 = vector.extract_strided_slice %74 {offsets = [0, 1], sizes = [2, 1], strides = [1, 1]} : vector<2x6xf32> to vector<2x1xf32>
      %79 = vector.broadcast %78 : vector<2x1xf32> to vector<2x29xf32>
      %80 = arith.mulf %79, %67 : vector<2x29xf32>
      %81 = arith.addf %77, %80 : vector<2x29xf32>
      %82 = vector.extract_strided_slice %74 {offsets = [0, 2], sizes = [2, 1], strides = [1, 1]} : vector<2x6xf32> to vector<2x1xf32>
      %83 = vector.broadcast %82 : vector<2x1xf32> to vector<2x29xf32>
      %84 = arith.addf %81, %83 : vector<2x29xf32>
      %85 = vector.extract_strided_slice %74 {offsets = [0, 3], sizes = [2, 1], strides = [1, 1]} : vector<2x6xf32> to vector<2x1xf32>
      %86 = vector.broadcast %85 : vector<2x1xf32> to vector<2x29xf32>
      %87 = arith.mulf %86, %62 : vector<2x29xf32>
      %88 = vector.extract_strided_slice %74 {offsets = [0, 4], sizes = [2, 1], strides = [1, 1]} : vector<2x6xf32> to vector<2x1xf32>
      %89 = vector.broadcast %88 : vector<2x1xf32> to vector<2x29xf32>
      %90 = arith.mulf %89, %67 : vector<2x29xf32>
      %91 = arith.addf %87, %90 : vector<2x29xf32>
      %92 = vector.extract_strided_slice %74 {offsets = [0, 5], sizes = [2, 1], strides = [1, 1]} : vector<2x6xf32> to vector<2x1xf32>
      %93 = vector.broadcast %92 : vector<2x1xf32> to vector<2x29xf32>
      %94 = arith.addf %91, %93 : vector<2x29xf32>
      %95 = vector.extract_strided_slice %57 {offsets = [0, 6], sizes = [2, 9], strides = [1, 1]} : vector<2x19xf32> to vector<2x9xf32>
      %96 = vector.extract_strided_slice %95 {offsets = [0, 0], sizes = [2, 1], strides = [1, 1]} : vector<2x9xf32> to vector<2x1xf32>
      %97 = vector.broadcast %96 : vector<2x1xf32> to vector<2x29xf32>
      %98 = arith.mulf %97, %84 : vector<2x29xf32>
      %99 = vector.extract_strided_slice %95 {offsets = [0, 1], sizes = [2, 1], strides = [1, 1]} : vector<2x9xf32> to vector<2x1xf32>
      %100 = vector.broadcast %99 : vector<2x1xf32> to vector<2x29xf32>
      %101 = arith.mulf %100, %94 : vector<2x29xf32>
      %102 = arith.addf %98, %101 : vector<2x29xf32>
      %103 = vector.extract_strided_slice %95 {offsets = [0, 2], sizes = [2, 1], strides = [1, 1]} : vector<2x9xf32> to vector<2x1xf32>
      %104 = vector.broadcast %103 : vector<2x1xf32> to vector<2x29xf32>
      %105 = arith.addf %102, %104 : vector<2x29xf32>
      %106 = vector.extract_strided_slice %95 {offsets = [0, 3], sizes = [2, 1], strides = [1, 1]} : vector<2x9xf32> to vector<2x1xf32>
      %107 = vector.broadcast %106 : vector<2x1xf32> to vector<2x29xf32>
      %108 = arith.mulf %107, %84 : vector<2x29xf32>
      %109 = vector.extract_strided_slice %95 {offsets = [0, 4], sizes = [2, 1], strides = [1, 1]} : vector<2x9xf32> to vector<2x1xf32>
      %110 = vector.broadcast %109 : vector<2x1xf32> to vector<2x29xf32>
      %111 = arith.mulf %110, %94 : vector<2x29xf32>
      %112 = arith.addf %108, %111 : vector<2x29xf32>
      %113 = vector.extract_strided_slice %95 {offsets = [0, 5], sizes = [2, 1], strides = [1, 1]} : vector<2x9xf32> to vector<2x1xf32>
      %114 = vector.broadcast %113 : vector<2x1xf32> to vector<2x29xf32>
      %115 = arith.addf %112, %114 : vector<2x29xf32>
      %116 = vector.extract_strided_slice %95 {offsets = [0, 6], sizes = [2, 1], strides = [1, 1]} : vector<2x9xf32> to vector<2x1xf32>
      %117 = vector.broadcast %116 : vector<2x1xf32> to vector<2x29xf32>
      %118 = arith.mulf %117, %84 : vector<2x29xf32>
      %119 = vector.extract_strided_slice %95 {offsets = [0, 7], sizes = [2, 1], strides = [1, 1]} : vector<2x9xf32> to vector<2x1xf32>
      %120 = vector.broadcast %119 : vector<2x1xf32> to vector<2x29xf32>
      %121 = arith.mulf %120, %94 : vector<2x29xf32>
      %122 = arith.addf %118, %121 : vector<2x29xf32>
      %123 = vector.extract_strided_slice %95 {offsets = [0, 8], sizes = [2, 1], strides = [1, 1]} : vector<2x9xf32> to vector<2x1xf32>
      %124 = vector.broadcast %123 : vector<2x1xf32> to vector<2x29xf32>
      %125 = arith.addf %122, %124 : vector<2x29xf32>
      %126 = vector.extract_strided_slice %57 {offsets = [0, 15], sizes = [2, 3], strides = [1, 1]} : vector<2x19xf32> to vector<2x3xf32>
      %127 = vector.extract_strided_slice %126 {offsets = [0, 2], sizes = [2, 1], strides = [1, 1]} : vector<2x3xf32> to vector<2x1xf32>
      %128 = vector.broadcast %127 : vector<2x1xf32> to vector<2x29xf32>
      %129 = arith.addf %73, %128 : vector<2x29xf32>
      %130 = arith.mulf %105, %129 : vector<2x29xf32>
      %131 = vector.extract_strided_slice %126 {offsets = [0, 0], sizes = [2, 1], strides = [1, 1]} : vector<2x3xf32> to vector<2x1xf32>
      %132 = vector.broadcast %131 : vector<2x1xf32> to vector<2x29xf32>
      %133 = arith.subf %130, %132 : vector<2x29xf32>
      %134 = vector.broadcast %70 : vector<2x1xf32> to vector<2x29xf32>
      %135 = arith.mulf %133, %134 : vector<2x29xf32>
      %136 = arith.mulf %115, %129 : vector<2x29xf32>
      %137 = vector.extract_strided_slice %126 {offsets = [0, 1], sizes = [2, 1], strides = [1, 1]} : vector<2x3xf32> to vector<2x1xf32>
      %138 = vector.broadcast %137 : vector<2x1xf32> to vector<2x29xf32>
      %139 = arith.subf %136, %138 : vector<2x29xf32>
      %140 = vector.broadcast %70 : vector<2x1xf32> to vector<2x29xf32>
      %141 = arith.mulf %139, %140 : vector<2x29xf32>
      %142 = arith.mulf %125, %129 : vector<2x29xf32>
      %143 = vector.extract_strided_slice %126 {offsets = [0, 2], sizes = [2, 1], strides = [1, 1]} : vector<2x3xf32> to vector<2x1xf32>
      %144 = vector.broadcast %143 : vector<2x1xf32> to vector<2x29xf32>
      %145 = arith.subf %142, %144 : vector<2x29xf32>
      %146 = vector.broadcast %70 : vector<2x1xf32> to vector<2x29xf32>
      %147 = arith.mulf %145, %146 : vector<2x29xf32>
      %148 = vector.extract_strided_slice %135 {offsets = [0, 0], sizes = [2, 1], strides = [1, 1]} : vector<2x29xf32> to vector<2x1xf32>
      %149 = vector.broadcast %148 : vector<2x1xf32> to vector<2x29xf32>
      %150 = arith.subf %135, %149 : vector<2x29xf32>
      %151 = vector.extract_strided_slice %141 {offsets = [0, 0], sizes = [2, 1], strides = [1, 1]} : vector<2x29xf32> to vector<2x1xf32>
      %152 = vector.broadcast %151 : vector<2x1xf32> to vector<2x29xf32>
      %153 = arith.subf %141, %152 : vector<2x29xf32>
      %154 = vector.extract_strided_slice %147 {offsets = [0, 0], sizes = [2, 1], strides = [1, 1]} : vector<2x29xf32> to vector<2x1xf32>
      %155 = vector.broadcast %154 : vector<2x1xf32> to vector<2x29xf32>
      %156 = arith.subf %147, %155 : vector<2x29xf32>
      %cst_42 = arith.constant 0.000000e+00 : f32
      %157 = vector.broadcast %cst_42 : f32 to vector<2x41xf32>
      %158 = tpu.concatenate %30, %157 in 1 : vector<2x87xf32>, vector<2x41xf32> -> vector<2x128xf32>
      %cst_43 = arith.constant 0.000000e+00 : f32
      %159 = vector.broadcast %cst_43 : f32 to vector<2x41xf32>
      %160 = tpu.concatenate %41, %159 in 1 : vector<2x87xf32>, vector<2x41xf32> -> vector<2x128xf32>
      %cst_44 = arith.constant 0.000000e+00 : f32
      %161 = vector.broadcast %cst_44 : f32 to vector<2x118xf32>
      %162 = tpu.concatenate %52, %161 in 1 : vector<2x10xf32>, vector<2x118xf32> -> vector<2x128xf32>
      %cst_45 = arith.constant 0.000000e+00 : f32
      %163 = vector.broadcast %cst_45 : f32 to vector<2x118xf32>
      %164 = tpu.concatenate %55, %163 in 1 : vector<2x10xf32>, vector<2x118xf32> -> vector<2x128xf32>
      %cst_46 = arith.constant 0.000000e+00 : f32
      %165 = vector.broadcast %cst_46 : f32 to vector<2x82xf32>
      %166 = tpu.concatenate %56, %165 in 1 : vector<2x46xf32>, vector<2x82xf32> -> vector<2x128xf32>
      %cst_47 = arith.constant 0.000000e+00 : f32
      %167 = vector.broadcast %cst_47 : f32 to vector<2x99xf32>
      %168 = tpu.concatenate %150, %167 in 1 : vector<2x29xf32>, vector<2x99xf32> -> vector<2x128xf32>
      %cst_48 = arith.constant 0.000000e+00 : f32
      %169 = vector.broadcast %cst_48 : f32 to vector<2x99xf32>
      %170 = tpu.concatenate %153, %169 in 1 : vector<2x29xf32>, vector<2x99xf32> -> vector<2x128xf32>
      %cst_49 = arith.constant 0.000000e+00 : f32
      %171 = vector.broadcast %cst_49 : f32 to vector<2x99xf32>
      %172 = tpu.concatenate %156, %171 in 1 : vector<2x29xf32>, vector<2x99xf32> -> vector<2x128xf32>
      %173 = tpu.concatenate %158, %160, %162, %164, %166, %168, %170, %172 in 1 : vector<2x128xf32>, vector<2x128xf32>, vector<2x128xf32>, vector<2x128xf32>, vector<2x128xf32>, vector<2x128xf32>, vector<2x128xf32>, vector<2x128xf32> -> vector<2x1024xf32>
      %c0_50 = arith.constant 0 : index
      %c0_51 = arith.constant 0 : index
      %174 = vector.load %arg13[%c0_50, %c0_51] : memref<2x1024xf32, #tpu.memory_space<vmem>>, vector<2x1024xf32>
      tpu.vector_store %arg13[%c0_50, %c0_51], %173 {strides = array<i32>} : memref<2x1024xf32, #tpu.memory_space<vmem>>, vector<2x1024xf32>,
    } else {
    }
    return
  }
  func.func @transform_0(%arg0: i32) -> (i32, i32, i32) {
    %c0_i32 = arith.constant 0 : i32
    %c0_i32_0 = arith.constant 0 : i32
    %c0_i32_1 = arith.constant 0 : i32
    %c0_i32_2 = arith.constant 0 : i32
    return %c0_i32, %c0_i32_0, %c0_i32_1 : i32, i32, i32
  }
  func.func @transform_1(%arg0: i32) -> (i32, i32) {
    %c0_i32 = arith.constant 0 : i32
    %c0_i32_0 = arith.constant 0 : i32
    %c0_i32_1 = arith.constant 0 : i32
    return %c0_i32, %c0_i32_0 : i32, i32
  }
  func.func @transform_2(%arg0: i32) -> (i32, i32) {
    %c0_i32 = arith.constant 0 : i32
    %c0_i32_0 = arith.constant 0 : i32
    %c0_i32_1 = arith.constant 0 : i32
    return %c0_i32, %c0_i32_0 : i32, i32
  }
  func.func @transform_3(%arg0: i32) -> (i32, i32) {
    %c0_i32 = arith.constant 0 : i32
    %c0_i32_0 = arith.constant 0 : i32
    %c0_i32_1 = arith.constant 0 : i32
    return %c0_i32, %c0_i32_0 : i32, i32
  }
  func.func @transform_4(%arg0: i32) -> (i32, i32) {
    %c0_i32 = arith.constant 0 : i32
    %c0_i32_0 = arith.constant 0 : i32
    return %c0_i32, %arg0 : i32, i32
  }
  func.func @transform_5(%arg0: i32) -> (i32, i32) {
    %c0_i32 = arith.constant 0 : i32
    %c0_i32_0 = arith.constant 0 : i32
    return %c0_i32, %arg0 : i32, i32
  }
  func.func @transform_6(%arg0: i32) -> (i32, i32) {
    %c0_i32 = arith.constant 0 : i32
    %c0_i32_0 = arith.constant 0 : i32
    return %arg0, %c0_i32 : i32, i32
  }
  func.func @transform_7(%arg0: i32) -> (i32, i32) {
    %c0_i32 = arith.constant 0 : i32
    %c0_i32_0 = arith.constant 0 : i32
    %c0_i32_1 = arith.constant 0 : i32
    return %c0_i32, %c0_i32_0 : i32, i32
  }
  func.func @transform_8(%arg0: i32) -> (i32, i32) {
    %c0_i32 = arith.constant 0 : i32
    %c0_i32_0 = arith.constant 0 : i32
    %c0_i32_1 = arith.constant 0 : i32
    return %c0_i32, %c0_i32_0 : i32, i32
  }
  func.func @transform_9(%arg0: i32) -> (i32, i32) {
    %c0_i32 = arith.constant 0 : i32
    %c0_i32_0 = arith.constant 0 : i32
    %c0_i32_1 = arith.constant 0 : i32
    return %c0_i32, %c0_i32_0 : i32, i32
  }
  func.func @transform_10(%arg0: i32) -> (i32, i32) {
    %c0_i32 = arith.constant 0 : i32
    %c0_i32_0 = arith.constant 0 : i32
    %c0_i32_1 = arith.constant 0 : i32
    return %c0_i32, %c0_i32_0 : i32, i32
  }
  func.func @transform_11(%arg0: i32) -> (i32, i32) {
    %c0_i32 = arith.constant 0 : i32
    %c0_i32_0 = arith.constant 0 : i32
    %c0_i32_1 = arith.constant 0 : i32
    return %c0_i32, %c0_i32_0 : i32, i32
  }
  func.func @transform_12(%arg0: i32) -> (i32, i32) {
    %c0_i32 = arith.constant 0 : i32
    %c0_i32_0 = arith.constant 0 : i32
    %c0_i32_1 = arith.constant 0 : i32
    return %c0_i32, %c0_i32_0 : i32, i32
  }
}

</mosaic_0001>

<llo_original>
// kernel: forward.1
$region0: #{forward.1}
  #allocation0 [shape = 'u32[]', space=smem, size = 0x4, offset = 0x4, fixed_abs, tag = 'smem constant byte address 0x4 - core index']
  #allocation1 [shape = 'u32[144,128]{1,0:T(1,128)}', space=vmem, size = 0x12000, scoped, tag = 'internal scratch']
  #allocation2 [shape = 'f32[2,512]{1,0:T(2,128)}', space=vmem, size = 0x1000, scoped, tag = 'scratch operand']
  #allocation3 [shape = 'f32[2,1024]{1,0:T(2,128)}', space=vmem, size = 0x2000, scoped, tag = 'scratch operand']
  %s0 = inlined_call_operand.vmem [shape: f32[2,512,64], index: 0, kind: input, shape index: {}]
  %s1 = inlined_call_operand.hbm [shape: bf16[512,256], index: 1, kind: input, shape index: {}]
  %s2 = inlined_call_operand.hbm [shape: f32[1,87], index: 2, kind: input, shape index: {}]
  %s3 = inlined_call_operand.hbm [shape: f32[1,87], index: 3, kind: input, shape index: {}]
  %s4 = inlined_call_operand.hbm [shape: bf16[512,1024], index: 4, kind: input, shape index: {}]
  %s5 = inlined_call_operand.hbm [shape: f32[1,1024], index: 5, kind: input, shape index: {}]
  %s6 = inlined_call_operand.hbm [shape: bf16[1024,1024], index: 6, kind: input, shape index: {}]
  %s7 = inlined_call_operand.hbm [shape: f32[1,1024], index: 7, kind: input, shape index: {}]
  %s8 = inlined_call_operand.vmem [shape: bf16[1024,56], index: 8, kind: input, shape index: {}]
  %s9 = inlined_call_operand.hbm [shape: f32[1,56], index: 9, kind: input, shape index: {}]
  %s10 = inlined_call_operand.hbm [shape: f32[1,10], index: 10, kind: input, shape index: {}]
  %s11 = inlined_call_operand.vmem [shape: f32[2,19], index: 11, kind: input, shape index: {}]
  %s12 = inlined_call_operand.vmem [shape: f32[2,1024], index: 12, kind: output, shape index: {}]
  %s13 = sld [smem:[#allocation0]]
  $region125: #{forward.1} parent=0
    _
  %s15 = ssub.s32 1, %s13
  %s16 = scalar_select 0, %s15, %s13
  $region1: #{forward.1} parent=0
    #allocation4 [shape = 'u8[262144]{0}', space=vmem, size = 0x40000, scoped, tag = 'input window, operand 1, single buffered']
    #allocation5 [shape = 's32[2]{0}', space=sflag, size = 0x8, scoped, tag = 'scoped memory for forward.1']
    #allocation6 [shape = 'u8[512]{0}', space=vmem, size = 0x400, scoped, tag = 'input window, operand 2, single buffered']
    #allocation7 [shape = 's32[1]{0}', space=sflag, size = 0x4, scoped, tag = 'scoped memory for forward.1']
    #allocation8 [shape = 'u8[512]{0}', space=vmem, size = 0x400, scoped, tag = 'input window, operand 3, single buffered']
    #allocation9 [shape = 'u8[524288]{0}', space=vmem, size = 0x80000, scoped, tag = 'input window, operand 4']
    #allocation10 [shape = 's32[2]{0}', space=sflag, size = 0x8, scoped, tag = 'scoped memory for forward.1']
    #allocation11 [shape = 'u8[2048]{0}', space=vmem, size = 0x800, scoped, tag = 'input window, operand 5']
    #allocation12 [shape = 'u8[1048576]{0}', space=vmem, size = 0x100000, scoped, tag = 'input window, operand 6']
    #allocation13 [shape = 's32[2]{0}', space=sflag, size = 0x8, scoped, tag = 'scoped memory for forward.1']
    #allocation14 [shape = 'u8[4096]{0}', space=vmem, size = 0x1000, scoped, tag = 'input window, operand 7, single buffered']
    #allocation15 [shape = 'u8[512]{0}', space=vmem, size = 0x400, scoped, tag = 'input window, operand 9, single buffered']
    #allocation16 [shape = 's32[1]{0}', space=sflag, size = 0x4, scoped, tag = 'scoped memory for forward.1']
    #allocation17 [shape = 'u8[512]{0}', space=vmem, size = 0x400, scoped, tag = 'input window, operand 10, single buffered']
    %17 = vsyncpa [#allocation5], 0
    %18 = vsyncpa [#allocation7], 0
    %19 = vsyncpa [#allocation10], 0
    %s20 = scalar_lea.sflag [#allocation10], 1
    %21 = vsyncpa %s20, 0
    %22 = vsyncpa [#allocation13], 0
    %s23 = scalar_lea.sflag [#allocation13], 1
    %24 = vsyncpa %s23, 0
    %25 = vsyncpa [#allocation16], 0
    loop: start=0, step=1, limit=6
    $region2: #{forward.1} parent=1 // loop_pre_header
      _
    $region3: #{forward.1} parent=1 // loop_header
      %s27 = sphi 0, %s31
      %p28 = scmp.ge.s32.totalorder %s27, 6
      %s35 = sphi 0, %s35
      %s37 = sphi 0, %s35
      %s38 = sphi 0, %s37
      %s52 = sphi 0, %s38
      %s56 = sphi 0, %s56
      %s58 = sphi 0, %s56
      %s59 = sphi 0, %s58
      %s73 = sphi 0, %s59
      %s77 = sphi 0, %s77
      %s79 = sphi 0, %s77
      %s80 = sphi 0, %s79
      %s94 = sphi 0, %s80
      %s98 = sphi 0, %s98
      %s100 = sphi 0, %s98
      %s101 = sphi 0, %s100
      %s115 = sphi 0, %s101
      %s121 = sphi 0, %s123
      %s124 = sphi 0, %s121
      %s125 = sphi 0, %s124
      %s141 = sphi 0, %s125
      %s147 = sphi 0, %s149
      %s150 = sphi 0, %s147
      %s151 = sphi 0, %s150
      %s167 = sphi 0, %s151
      %s173 = sphi 0, %s175
      %s176 = sphi 0, %s173
      %s177 = sphi 0, %s176
      %s193 = sphi 0, %s177
      %s197 = sphi 0, %s197
      %s199 = sphi 0, %s197
      %s200 = sphi 0, %s199
      %s214 = sphi 0, %s200
      %s218 = sphi 0, %s218
      %s220 = sphi 0, %s218
      %s221 = sphi 0, %s220
      %s235 = sphi 0, %s221
      %s239 = sphi 0, %s239
      %s241 = sphi 0, %s239
      %s242 = sphi 0, %s241
      %s256 = sphi 0, %s242
      %s260 = sphi 0, %s260
      %s262 = sphi 0, %s260
      %s263 = sphi 0, %s262
      %s277 = sphi 0, %s263
      %s281 = sphi 0, %s281
      %s283 = sphi 0, %s281
      %s284 = sphi 0, %s283
      %s298 = sphi 0, %s284
      %s302 = sphi 0, %s302
      %s304 = sphi 0, %s302
      %s305 = sphi 0, %s304
      %s319 = sphi 0, %s305
    $region4: #{forward.1} parent=1 // loop_header_branch
      %30 = sbr.rel (%p28) target = $region8
    $region5: #{forward.1} parent=1 // loop_body
      %s32 = ssub.s32 %s27, 1
      %s33 = ssub.s32 %s27, 2
      %s34 = sadd.s32 %s27, 1
      %s36 = sadd.s32 %s35, 1
      %p39 = scmp.eq.s32.totalorder %s27, 3
      %p40 = scmp.ne.s32.totalorder %s35, %s37
      %p41 = scmp.eq.s32.totalorder %s27, 0
      %p42 = por %p40, %p41
      %p43 = scmp.ne.s32.totalorder %s35, %s37
      %p44 = scmp.eq.s32.totalorder %s32, 3
      %p45 = por %p43, %p44
      %p46 = scmp.ne.s32.totalorder %s37, %s38
      %p47 = scmp.eq.s32.totalorder %s32, 0
      %p48 = por %p46, %p47
      %p49 = scmp.ne.s32.totalorder %s37, %s38
      %p50 = scmp.eq.s32.totalorder %s33, 3
      %p51 = por %p49, %p50
      %p53 = scmp.ne.s32.totalorder %s38, %s52
      %p54 = scmp.eq.s32.totalorder %s33, 0
      %p55 = por %p53, %p54
      %s57 = sadd.s32 %s56, 1
      %p60 = scmp.eq.s32.totalorder %s27, 3
      %p61 = scmp.ne.s32.totalorder %s56, %s58
      %p62 = scmp.eq.s32.totalorder %s27, 0
      %p63 = por %p61, %p62
      %p64 = scmp.ne.s32.totalorder %s56, %s58
      %p65 = scmp.eq.s32.totalorder %s32, 3
      %p66 = por %p64, %p65
      %p67 = scmp.ne.s32.totalorder %s58, %s59
      %p68 = scmp.eq.s32.totalorder %s32, 0
      %p69 = por %p67, %p68
      %p70 = scmp.ne.s32.totalorder %s58, %s59
      %p71 = scmp.eq.s32.totalorder %s33, 3
      %p72 = por %p70, %p71
      %p74 = scmp.ne.s32.totalorder %s59, %s73
      %p75 = scmp.eq.s32.totalorder %s33, 0
      %p76 = por %p74, %p75
      %s78 = sadd.s32 %s77, 1
      %p81 = scmp.eq.s32.totalorder %s27, 3
      %p82 = scmp.ne.s32.totalorder %s77, %s79
      %p83 = scmp.eq.s32.totalorder %s27, 0
      %p84 = por %p82, %p83
      %p85 = scmp.ne.s32.totalorder %s77, %s79
      %p86 = scmp.eq.s32.totalorder %s32, 3
      %p87 = por %p85, %p86
      %p88 = scmp.ne.s32.totalorder %s79, %s80
      %p89 = scmp.eq.s32.totalorder %s32, 0
      %p90 = por %p88, %p89
      %p91 = scmp.ne.s32.totalorder %s79, %s80
      %p92 = scmp.eq.s32.totalorder %s33, 3
      %p93 = por %p91, %p92
      %p95 = scmp.ne.s32.totalorder %s80, %s94
      %p96 = scmp.eq.s32.totalorder %s33, 0
      %p97 = por %p95, %p96
      %s99 = sadd.s32 %s98, 1
      %p102 = scmp.eq.s32.totalorder %s27, 3
      %p103 = scmp.ne.s32.totalorder %s98, %s100
      %p104 = scmp.eq.s32.totalorder %s27, 0
      %p105 = por %p103, %p104
      %p106 = scmp.ne.s32.totalorder %s98, %s100
      %p107 = scmp.eq.s32.totalorder %s32, 3
      %p108 = por %p106, %p107
      %p109 = scmp.ne.s32.totalorder %s100, %s101
      %p110 = scmp.eq.s32.totalorder %s32, 0
      %p111 = por %p109, %p110
      %p112 = scmp.ne.s32.totalorder %s100, %s101
      %p113 = scmp.eq.s32.totalorder %s33, 3
      %p114 = por %p112, %p113
      %p116 = scmp.ne.s32.totalorder %s101, %s115
      %p117 = scmp.eq.s32.totalorder %s33, 0
      %p118 = por %p116, %p117
      %s119 = ssub.s32 %s27, %s34
      %p120 = scmp.eq.s32.totalorder %s119, 0
      %s122 = sadd.s32 %s121, 1
      %s123 = scalar_select %p120, %s121, %s122
      %p126 = pneg %p120
      %p127 = scmp.eq.s32.totalorder %s27, 3
      %p128 = por %p126, %p127
      %p129 = scmp.ne.s32.totalorder %s121, %s124
      %p130 = scmp.eq.s32.totalorder %s27, 0
      %p131 = por %p129, %p130
      %p132 = scmp.ne.s32.totalorder %s121, %s124
      %p133 = scmp.eq.s32.totalorder %s32, 3
      %p134 = por %p132, %p133
      %p135 = scmp.ne.s32.totalorder %s124, %s125
      %p136 = scmp.eq.s32.totalorder %s32, 0
      %p137 = por %p135, %p136
      %p138 = scmp.ne.s32.totalorder %s124, %s125
      %p139 = scmp.eq.s32.totalorder %s33, 3
      %p140 = por %p138, %p139
      %p142 = scmp.ne.s32.totalorder %s125, %s141
      %p143 = scmp.eq.s32.totalorder %s33, 0
      %p144 = por %p142, %p143
      %s145 = ssub.s32 %s27, %s34
      %p146 = scmp.eq.s32.totalorder %s145, 0
      %s148 = sadd.s32 %s147, 1
      %s149 = scalar_select %p146, %s147, %s148
      %p152 = pneg %p146
      %p153 = scmp.eq.s32.totalorder %s27, 3
      %p154 = por %p152, %p153
      %p155 = scmp.ne.s32.totalorder %s147, %s150
      %p156 = scmp.eq.s32.totalorder %s27, 0
      %p157 = por %p155, %p156
      %p158 = scmp.ne.s32.totalorder %s147, %s150
      %p159 = scmp.eq.s32.totalorder %s32, 3
      %p160 = por %p158, %p159
      %p161 = scmp.ne.s32.totalorder %s150, %s151
      %p162 = scmp.eq.s32.totalorder %s32, 0
      %p163 = por %p161, %p162
      %p164 = scmp.ne.s32.totalorder %s150, %s151
      %p165 = scmp.eq.s32.totalorder %s33, 3
      %p166 = por %p164, %p165
      %p168 = scmp.ne.s32.totalorder %s151, %s167
      %p169 = scmp.eq.s32.totalorder %s33, 0
      %p170 = por %p168, %p169
      %s171 = ssub.s32 %s27, %s34
      %p172 = scmp.eq.s32.totalorder %s171, 0
      %s174 = sadd.s32 %s173, 1
      %s175 = scalar_select %p172, %s173, %s174
      %p178 = pneg %p172
      %p179 = scmp.eq.s32.totalorder %s27, 3
      %p180 = por %p178, %p179
      %p181 = scmp.ne.s32.totalorder %s173, %s176
      %p182 = scmp.eq.s32.totalorder %s27, 0
      %p183 = por %p181, %p182
      %p184 = scmp.ne.s32.totalorder %s173, %s176
      %p185 = scmp.eq.s32.totalorder %s32, 3
      %p186 = por %p184, %p185
      %p187 = scmp.ne.s32.totalorder %s176, %s177
      %p188 = scmp.eq.s32.totalorder %s32, 0
      %p189 = por %p187, %p188
      %p190 = scmp.ne.s32.totalorder %s176, %s177
      %p191 = scmp.eq.s32.totalorder %s33, 3
      %p192 = por %p190, %p191
      %p194 = scmp.ne.s32.totalorder %s177, %s193
      %p195 = scmp.eq.s32.totalorder %s33, 0
      %p196 = por %p194, %p195
      %s198 = sadd.s32 %s197, 1
      %p201 = scmp.eq.s32.totalorder %s27, 3
      %p202 = scmp.ne.s32.totalorder %s197, %s199
      %p203 = scmp.eq.s32.totalorder %s27, 0
      %p204 = por %p202, %p203
      %p205 = scmp.ne.s32.totalorder %s197, %s199
      %p206 = scmp.eq.s32.totalorder %s32, 3
      %p207 = por %p205, %p206
      %p208 = scmp.ne.s32.totalorder %s199, %s200
      %p209 = scmp.eq.s32.totalorder %s32, 0
      %p210 = por %p208, %p209
      %p211 = scmp.ne.s32.totalorder %s199, %s200
      %p212 = scmp.eq.s32.totalorder %s33, 3
      %p213 = por %p211, %p212
      %p215 = scmp.ne.s32.totalorder %s200, %s214
      %p216 = scmp.eq.s32.totalorder %s33, 0
      %p217 = por %p215, %p216
      %s219 = sadd.s32 %s218, 1
      %p222 = scmp.eq.s32.totalorder %s27, 3
      %p223 = scmp.ne.s32.totalorder %s218, %s220
      %p224 = scmp.eq.s32.totalorder %s27, 0
      %p225 = por %p223, %p224
      %p226 = scmp.ne.s32.totalorder %s218, %s220
      %p227 = scmp.eq.s32.totalorder %s32, 3
      %p228 = por %p226, %p227
      %p229 = scmp.ne.s32.totalorder %s220, %s221
      %p230 = scmp.eq.s32.totalorder %s32, 0
      %p231 = por %p229, %p230
      %p232 = scmp.ne.s32.totalorder %s220, %s221
      %p233 = scmp.eq.s32.totalorder %s33, 3
      %p234 = por %p232, %p233
      %p236 = scmp.ne.s32.totalorder %s221, %s235
      %p237 = scmp.eq.s32.totalorder %s33, 0
      %p238 = por %p236, %p237
      %s240 = sadd.s32 %s239, 1
      %p243 = scmp.eq.s32.totalorder %s27, 3
      %p244 = scmp.ne.s32.totalorder %s239, %s241
      %p245 = scmp.eq.s32.totalorder %s27, 0
      %p246 = por %p244, %p245
      %p247 = scmp.ne.s32.totalorder %s239, %s241
      %p248 = scmp.eq.s32.totalorder %s32, 3
      %p249 = por %p247, %p248
      %p250 = scmp.ne.s32.totalorder %s241, %s242
      %p251 = scmp.eq.s32.totalorder %s32, 0
      %p252 = por %p250, %p251
      %p253 = scmp.ne.s32.totalorder %s241, %s242
      %p254 = scmp.eq.s32.totalorder %s33, 3
      %p255 = por %p253, %p254
      %p257 = scmp.ne.s32.totalorder %s242, %s256
      %p258 = scmp.eq.s32.totalorder %s33, 0
      %p259 = por %p257, %p258
      %s261 = sadd.s32 %s260, 1
      %p264 = scmp.eq.s32.totalorder %s27, 3
      %p265 = scmp.ne.s32.totalorder %s260, %s262
      %p266 = scmp.eq.s32.totalorder %s27, 0
      %p267 = por %p265, %p266
      %p268 = scmp.ne.s32.totalorder %s260, %s262
      %p269 = scmp.eq.s32.totalorder %s32, 3
      %p270 = por %p268, %p269
      %p271 = scmp.ne.s32.totalorder %s262, %s263
      %p272 = scmp.eq.s32.totalorder %s32, 0
      %p273 = por %p271, %p272
      %p274 = scmp.ne.s32.totalorder %s262, %s263
      %p275 = scmp.eq.s32.totalorder %s33, 3
      %p276 = por %p274, %p275
      %p278 = scmp.ne.s32.totalorder %s263, %s277
      %p279 = scmp.eq.s32.totalorder %s33, 0
      %p280 = por %p278, %p279
      %s282 = sadd.s32 %s281, 1
      %p285 = scmp.eq.s32.totalorder %s27, 3
      %p286 = scmp.ne.s32.totalorder %s281, %s283
      %p287 = scmp.eq.s32.totalorder %s27, 0
      %p288 = por %p286, %p287
      %p289 = scmp.ne.s32.totalorder %s281, %s283
      %p290 = scmp.eq.s32.totalorder %s32, 3
      %p291 = por %p289, %p290
      %p292 = scmp.ne.s32.totalorder %s283, %s284
      %p293 = scmp.eq.s32.totalorder %s32, 0
      %p294 = por %p292, %p293
      %p295 = scmp.ne.s32.totalorder %s283, %s284
      %p296 = scmp.eq.s32.totalorder %s33, 3
      %p297 = por %p295, %p296
      %p299 = scmp.ne.s32.totalorder %s284, %s298
      %p300 = scmp.eq.s32.totalorder %s33, 0
      %p301 = por %p299, %p300
      %s303 = sadd.s32 %s302, 1
      %p306 = scmp.eq.s32.totalorder %s27, 3
      %p307 = scmp.ne.s32.totalorder %s302, %s304
      %p308 = scmp.eq.s32.totalorder %s27, 0
      %p309 = por %p307, %p308
      %p310 = scmp.ne.s32.totalorder %s302, %s304
      %p311 = scmp.eq.s32.totalorder %s32, 3
      %p312 = por %p310, %p311
      %p313 = scmp.ne.s32.totalorder %s304, %s305
      %p314 = scmp.eq.s32.totalorder %s32, 0
      %p315 = por %p313, %p314
      %p316 = scmp.ne.s32.totalorder %s304, %s305
      %p317 = scmp.eq.s32.totalorder %s33, 3
      %p318 = por %p316, %p317
      %p320 = scmp.ne.s32.totalorder %s305, %s319
      %p321 = scmp.eq.s32.totalorder %s33, 0
      %p322 = por %p320, %p321
      %p323 = scmp.le.s32.totalorder 1, %s27
      %p324 = scmp.lt.s32.totalorder %s27, 5
      %p325 = pnand %p323, %p324
      %p326 = pneg %p325
      // Predicated region
      $region9: #{forward.1} parent=5 // pred_check
        _
      $region10: #{forward.1} parent=5 // pred_check_branch
        %328 = sbr.rel (%p325) target = $region12
      $region11: #{forward.1} parent=5 // pred_region
        %s329 = ssub.s32 %s27, 1
        // Predicated region
        $region13: #{forward.1} parent=11 // pred_check
          %p330 = pneg %p48
        $region14: #{forward.1} parent=11 // pred_check_branch
          %332 = sbr.rel (%p330) target = $region16
        $region15: #{forward.1} parent=11 // pred_region
          _
        $region16: #{forward.1} parent=11 // pred_fallthru
          _
        // Predicated region
        $region17: #{forward.1} parent=11 // pred_check
          %p333 = pneg %p69
        $region18: #{forward.1} parent=11 // pred_check_branch
          %335 = sbr.rel (%p333) target = $region20
        $region19: #{forward.1} parent=11 // pred_region
          %s337 = ssub.s32 8192, 8192
          %338 = vsyncadd [#allocation5], %s337
          %s339 = sshll.u32 [#allocation4], 4
          %s340 = int_to_ptr.vmem [resolvable:$true] %s339
          %345 = dma.hbm_to_vmem [thread:$0]  %s1, 8192, %s340, [#allocation5], 128, 128, 8
        $region20: #{forward.1} parent=11 // pred_fallthru
          _
        // Predicated region
        $region21: #{forward.1} parent=11 // pred_check
          %p346 = pneg %p90
        $region22: #{forward.1} parent=11 // pred_check_branch
          %348 = sbr.rel (%p346) target = $region24
        $region23: #{forward.1} parent=11 // pred_region
          %s350 = ssub.s32 16, 16
          %351 = vsyncadd [#allocation7], %s350
          %s353 = sshll.u32 [#allocation6], 4
          %s354 = int_to_ptr.vmem [resolvable:$true] %s353
          %356 = dma.hbm_to_vmem [thread:$0]  %s2, 16, %s354, [#allocation7]
        $region24: #{forward.1} parent=11 // pred_fallthru
          _
        // Predicated region
        $region25: #{forward.1} parent=11 // pred_check
          %p357 = pneg %p111
        $region26: #{forward.1} parent=11 // pred_check_branch
          %359 = sbr.rel (%p357) target = $region28
        $region27: #{forward.1} parent=11 // pred_region
          %s361 = ssub.s32 16, 16
          %362 = vsyncadd [#allocation7], %s361
          %s364 = sshll.u32 [#allocation8], 4
          %s365 = int_to_ptr.vmem [resolvable:$true] %s364
          %367 = dma.hbm_to_vmem [thread:$0]  %s3, 16, %s365, [#allocation7]
        $region28: #{forward.1} parent=11 // pred_fallthru
          _
        // Predicated region
        $region29: #{forward.1} parent=11 // pred_check
          %p368 = pneg %p210
        $region30: #{forward.1} parent=11 // pred_check_branch
          %370 = sbr.rel (%p368) target = $region32
        $region31: #{forward.1} parent=11 // pred_region
          %s372 = ssub.s32 128, 128
          %373 = vsyncadd [#allocation13], %s372
          %s375 = sshll.u32 [#allocation14], 4
          %s376 = int_to_ptr.vmem [resolvable:$true] %s375
          %378 = dma.hbm_to_vmem [thread:$0]  %s7, 128, %s376, [#allocation13]
        $region32: #{forward.1} parent=11 // pred_fallthru
          _
        // Predicated region
        $region33: #{forward.1} parent=11 // pred_check
          %p379 = pneg %p231
        $region34: #{forward.1} parent=11 // pred_check_branch
          %381 = sbr.rel (%p379) target = $region36
        $region35: #{forward.1} parent=11 // pred_region
          _
        $region36: #{forward.1} parent=11 // pred_fallthru
          _
        // Predicated region
        $region37: #{forward.1} parent=11 // pred_check
          %p382 = pneg %p252
        $region38: #{forward.1} parent=11 // pred_check_branch
          %384 = sbr.rel (%p382) target = $region40
        $region39: #{forward.1} parent=11 // pred_region
          %s386 = ssub.s32 16, 16
          %387 = vsyncadd [#allocation16], %s386
          %s389 = sshll.u32 [#allocation15], 4
          %s390 = int_to_ptr.vmem [resolvable:$true] %s389
          %392 = dma.hbm_to_vmem [thread:$0]  %s9, 16, %s390, [#allocation16]
        $region40: #{forward.1} parent=11 // pred_fallthru
          _
        // Predicated region
        $region41: #{forward.1} parent=11 // pred_check
          %p393 = pneg %p273
        $region42: #{forward.1} parent=11 // pred_check_branch
          %395 = sbr.rel (%p393) target = $region44
        $region43: #{forward.1} parent=11 // pred_region
          %s397 = ssub.s32 16, 16
          %398 = vsyncadd [#allocation16], %s397
          %s400 = sshll.u32 [#allocation17], 4
          %s401 = int_to_ptr.vmem [resolvable:$true] %s400
          %403 = dma.hbm_to_vmem [thread:$0]  %s10, 16, %s401, [#allocation16]
        $region44: #{forward.1} parent=11 // pred_fallthru
          _
        // Predicated region
        $region45: #{forward.1} parent=11 // pred_check
          %p404 = pneg %p294
        $region46: #{forward.1} parent=11 // pred_check_branch
          %406 = sbr.rel (%p404) target = $region48
        $region47: #{forward.1} parent=11 // pred_region
          _
        $region48: #{forward.1} parent=11 // pred_fallthru
          _
      $region12: #{forward.1} parent=5 // pred_fallthru
        _
      %p407 = scmp.lt.s32.totalorder %s27, 4
      // Predicated region
      $region49: #{forward.1} parent=5 // pred_check
        %p408 = pneg %p407
      $region50: #{forward.1} parent=5 // pred_check_branch
        %410 = sbr.rel (%p408) target = $region52
      $region51: #{forward.1} parent=5 // pred_region
        // Predicated region
        $region53: #{forward.1} parent=51 // pred_check
          %p411 = pneg %p131
        $region54: #{forward.1} parent=51 // pred_check_branch
          %413 = sbr.rel (%p411) target = $region56
        $region55: #{forward.1} parent=51 // pred_region
          %s414 = sand.u32 %s27, 1
          %s415 = scalar_lea.sflag [#allocation10], %s414
          %s416 = sand.u32 %s121, 1
          %s417 = smul.addr %s416, 512
          %s418 = scalar_lea.vmem [#allocation9], %s417
          %s419 = smul.u32 2, %s27
          %s421 = ssub.s32 8192, 8192
          %422 = vsyncadd %s415, %s421
          %s423 = smul.addr %s419, 64
          %s424 = scalar_lea.hbm %s4, %s423
          %s425 = sshll.u32 %s418, 4
          %s426 = int_to_ptr.vmem [resolvable:$true] %s425
          %431 = dma.hbm_to_vmem [thread:$0]  %s424, 8192, %s426, %s415, 512, 128, 8
        $region56: #{forward.1} parent=51 // pred_fallthru
          _
        // Predicated region
        $region57: #{forward.1} parent=51 // pred_check
          %p432 = pneg %p157
        $region58: #{forward.1} parent=51 // pred_check_branch
          %434 = sbr.rel (%p432) target = $region60
        $region59: #{forward.1} parent=51 // pred_region
          %s435 = sand.u32 %s27, 1
          %s436 = scalar_lea.sflag [#allocation10], %s435
          %s437 = sand.u32 %s147, 1
          %s438 = smul.addr %s437, 2
          %s439 = scalar_lea.vmem [#allocation11], %s438
          %s440 = smul.u32 2, %s27
          %s442 = ssub.s32 32, 32
          %443 = vsyncadd %s436, %s442
          %s444 = smul.addr %s440, 16
          %s445 = scalar_lea.hbm %s5, %s444
          %s447 = sshll.u32 %s439, 4
          %s448 = int_to_ptr.vmem [resolvable:$true] %s447
          %450 = dma.hbm_to_vmem [thread:$0]  %s445, 32, %s448, %s436
        $region60: #{forward.1} parent=51 // pred_fallthru
          _
        // Predicated region
        $region61: #{forward.1} parent=51 // pred_check
          %p451 = pneg %p183
        $region62: #{forward.1} parent=51 // pred_check_branch
          %453 = sbr.rel (%p451) target = $region64
        $region63: #{forward.1} parent=51 // pred_region
          %s454 = sand.u32 %s27, 1
          %s455 = scalar_lea.sflag [#allocation13], %s454
          %s456 = sand.u32 %s173, 1
          %s457 = smul.addr %s456, 1024
          %s458 = scalar_lea.vmem [#allocation12], %s457
          %s459 = smul.u32 32, %s27
          %s461 = ssub.s32 16384, 16384
          %462 = vsyncadd %s455, %s461
          %s463 = smul.addr %s459, 8
          %s464 = smul.addr %s463, 64
          %s465 = scalar_lea.hbm %s6, %s464
          %s466 = sshll.u32 %s458, 4
          %s467 = int_to_ptr.vmem [resolvable:$true] %s466
          %472 = dma.hbm_to_vmem [thread:$0]  %s465, 16384, %s467, %s455, 512, 512, 32
        $region64: #{forward.1} parent=51 // pred_fallthru
          _
      $region52: #{forward.1} parent=5 // pred_fallthru
        _
      %p473 = scmp.le.s32.totalorder 1, %s27
      %p474 = scmp.lt.s32.totalorder %s27, 5
      %p475 = pnand %p473, %p474
      %p476 = pneg %p475
      // Predicated region
      $region65: #{forward.1} parent=5 // pred_check
        _
      $region66: #{forward.1} parent=5 // pred_check_branch
        %478 = sbr.rel (%p475) target = $region68
      $region67: #{forward.1} parent=5 // pred_region
        %s479 = ssub.s32 %s27, 1
        // Predicated region
        $region69: #{forward.1} parent=67 // pred_check
          %p480 = pneg %p69
        $region70: #{forward.1} parent=67 // pred_check_branch
          %482 = sbr.rel (%p480) target = $region72
        $region71: #{forward.1} parent=67 // pred_region
          %483 = dma.done [#allocation5], 8192
        $region72: #{forward.1} parent=67 // pred_fallthru
          _
        // Predicated region
        $region73: #{forward.1} parent=67 // pred_check
          %p484 = pneg %p90
        $region74: #{forward.1} parent=67 // pred_check_branch
          %486 = sbr.rel (%p484) target = $region76
        $region75: #{forward.1} parent=67 // pred_region
          %487 = dma.done [#allocation7], 16
        $region76: #{forward.1} parent=67 // pred_fallthru
          _
        // Predicated region
        $region77: #{forward.1} parent=67 // pred_check
          %p488 = pneg %p111
        $region78: #{forward.1} parent=67 // pred_check_branch
          %490 = sbr.rel (%p488) target = $region80
        $region79: #{forward.1} parent=67 // pred_region
          %491 = dma.done [#allocation7], 16
        $region80: #{forward.1} parent=67 // pred_fallthru
          _
        %s492 = sand.u32 %s32, 1
        %s493 = scalar_lea.sflag [#allocation10], %s492
        %s494 = sand.u32 %s124, 1
        %s495 = smul.addr %s494, 512
        %s496 = scalar_lea.vmem [#allocation9], %s495
        // Predicated region
        $region81: #{forward.1} parent=67 // pred_check
          %p497 = pneg %p137
        $region82: #{forward.1} parent=67 // pred_check_branch
          %499 = sbr.rel (%p497) target = $region84
        $region83: #{forward.1} parent=67 // pred_region
          %500 = dma.done %s493, 8192
        $region84: #{forward.1} parent=67 // pred_fallthru
          _
        %s501 = sand.u32 %s32, 1
        %s502 = scalar_lea.sflag [#allocation10], %s501
        %s503 = sand.u32 %s150, 1
        %s504 = smul.addr %s503, 2
        %s505 = scalar_lea.vmem [#allocation11], %s504
        // Predicated region
        $region85: #{forward.1} parent=67 // pred_check
          %p506 = pneg %p163
        $region86: #{forward.1} parent=67 // pred_check_branch
          %508 = sbr.rel (%p506) target = $region88
        $region87: #{forward.1} parent=67 // pred_region
          %509 = dma.done %s502, 32
        $region88: #{forward.1} parent=67 // pred_fallthru
          _
        %s510 = sand.u32 %s32, 1
        %s511 = scalar_lea.sflag [#allocation13], %s510
        %s512 = sand.u32 %s176, 1
        %s513 = smul.addr %s512, 1024
        %s514 = scalar_lea.vmem [#allocation12], %s513
        // Predicated region
        $region89: #{forward.1} parent=67 // pred_check
          %p515 = pneg %p189
        $region90: #{forward.1} parent=67 // pred_check_branch
          %517 = sbr.rel (%p515) target = $region92
        $region91: #{forward.1} parent=67 // pred_region
          %518 = dma.done %s511, 16384
        $region92: #{forward.1} parent=67 // pred_fallthru
          _
        // Predicated region
        $region93: #{forward.1} parent=67 // pred_check
          %p519 = pneg %p210
        $region94: #{forward.1} parent=67 // pred_check_branch
          %521 = sbr.rel (%p519) target = $region96
        $region95: #{forward.1} parent=67 // pred_region
          %522 = dma.done [#allocation13], 128
        $region96: #{forward.1} parent=67 // pred_fallthru
          _
        // Predicated region
        $region97: #{forward.1} parent=67 // pred_check
          %p523 = pneg %p252
        $region98: #{forward.1} parent=67 // pred_check_branch
          %525 = sbr.rel (%p523) target = $region100
        $region99: #{forward.1} parent=67 // pred_region
          %526 = dma.done [#allocation16], 16
        $region100: #{forward.1} parent=67 // pred_fallthru
          _
        // Predicated region
        $region101: #{forward.1} parent=67 // pred_check
          %p527 = pneg %p273
        $region102: #{forward.1} parent=67 // pred_check_branch
          %529 = sbr.rel (%p527) target = $region104
        $region103: #{forward.1} parent=67 // pred_region
          %530 = dma.done [#allocation16], 16
        $region104: #{forward.1} parent=67 // pred_fallthru
          _
        %p531 = pneg %p48
        %p532 = pneg %p45
        %p533 = pneg %p69
        %p534 = pneg %p66
        %p535 = pneg %p90
        %p536 = pneg %p87
        %p537 = pneg %p111
        %p538 = pneg %p108
        %s539 = sand.u32 %s32, 1
        %s540 = scalar_lea.sflag [#allocation10], %s539
        %s541 = sand.u32 %s124, 1
        %s542 = smul.addr %s541, 512
        %s543 = scalar_lea.vmem [#allocation9], %s542
        %p544 = pneg %p137
        %p545 = pneg %p134
        %s546 = sand.u32 %s32, 1
        %s547 = scalar_lea.sflag [#allocation10], %s546
        %s548 = sand.u32 %s150, 1
        %s549 = smul.addr %s548, 2
        %s550 = scalar_lea.vmem [#allocation11], %s549
        %p551 = pneg %p163
        %p552 = pneg %p160
        %s553 = sand.u32 %s32, 1
        %s554 = scalar_lea.sflag [#allocation13], %s553
        %s555 = sand.u32 %s176, 1
        %s556 = smul.addr %s555, 1024
        %s557 = scalar_lea.vmem [#allocation12], %s556
        %p558 = pneg %p189
        %p559 = pneg %p186
        %p560 = pneg %p210
        %p561 = pneg %p207
        %p562 = pneg %p231
        %p563 = pneg %p228
        %p564 = pneg %p252
        %p565 = pneg %p249
        %p566 = pneg %p273
        %p567 = pneg %p270
        %p568 = pneg %p294
        %p569 = pneg %p291
        %p570 = pneg %p315
        %p571 = pneg %p312
        %s572 = smul.u32 2, %s32
        %s573 = smul.u32 2, %s32
        %s574 = smul.u32 32, %s32
        %p576 = scmp.eq.s32.totalorder %s32, 0
        // Predicated region
        $region105: #{forward.1} parent=67 // pred_check
          %p577 = pneg %p576
        $region106: #{forward.1} parent=67 // pred_check_branch
          %579 = sbr.rel (%p577) target = $region108
        $region107: #{forward.1} parent=67 // pred_region
          %v580 = vld [vmem:[%s0] sm:$0xff]
          %v581 = vld [vmem:[%s0 + $0x8] sm:$0xff]
          %v582 = vld [vmem:[%s0 + $0x10] sm:$0xff]
          %v583 = vld [vmem:[%s0 + $0x18] sm:$0xff]
          %v584 = vld [vmem:[%s0 + $0x20] sm:$0xff]
          %v585 = vld [vmem:[%s0 + $0x28] sm:$0xff]
          %v586 = vld [vmem:[%s0 + $0x30] sm:$0xff]
          %v587 = vld [vmem:[%s0 + $0x38] sm:$0xff]
          %v588 = vld [vmem:[%s0 + $0x40] sm:$0xff]
          %v589 = vld [vmem:[%s0 + $0x48] sm:$0xff]
          %v590 = vld [vmem:[%s0 + $0x50] sm:$0xff]
          %v591 = vld [vmem:[%s0 + $0x58] sm:$0xff]
          %v592 = vld [vmem:[%s0 + $0x60] sm:$0xff]
          %v593 = vld [vmem:[%s0 + $0x68] sm:$0xff]
          %v594 = vld [vmem:[%s0 + $0x70] sm:$0xff]
          %v595 = vld [vmem:[%s0 + $0x78] sm:$0xff]
          %v596 = vld [vmem:[%s0 + $0x80] sm:$0xff]
          %v597 = vld [vmem:[%s0 + $0x88] sm:$0xff]
          %v598 = vld [vmem:[%s0 + $0x90] sm:$0xff]
          %v599 = vld [vmem:[%s0 + $0x98] sm:$0xff]
          %v600 = vld [vmem:[%s0 + $0xa0] sm:$0xff]
          %v601 = vld [vmem:[%s0 + $0xa8] sm:$0xff]
          %v602 = vld [vmem:[%s0 + $0xb0] sm:$0xff]
          %v603 = vld [vmem:[%s0 + $0xb8] sm:$0xff]
          %v604 = vld [vmem:[%s0 + $0xc0] sm:$0xff]
          %v605 = vld [vmem:[%s0 + $0xc8] sm:$0xff]
          %v606 = vld [vmem:[%s0 + $0xd0] sm:$0xff]
          %v607 = vld [vmem:[%s0 + $0xd8] sm:$0xff]
          %v608 = vld [vmem:[%s0 + $0xe0] sm:$0xff]
          %v609 = vld [vmem:[%s0 + $0xe8] sm:$0xff]
          %v610 = vld [vmem:[%s0 + $0xf0] sm:$0xff]
          %v611 = vld [vmem:[%s0 + $0xf8] sm:$0xff]
          %v612 = vld [vmem:[%s0 + $0x100] sm:$0xff]
          %v613 = vld [vmem:[%s0 + $0x108] sm:$0xff]
          %v614 = vld [vmem:[%s0 + $0x110] sm:$0xff]
          %v615 = vld [vmem:[%s0 + $0x118] sm:$0xff]
          %v616 = vld [vmem:[%s0 + $0x120] sm:$0xff]
          %v617 = vld [vmem:[%s0 + $0x128] sm:$0xff]
          %v618 = vld [vmem:[%s0 + $0x130] sm:$0xff]
          %v619 = vld [vmem:[%s0 + $0x138] sm:$0xff]
          %v620 = vld [vmem:[%s0 + $0x140] sm:$0xff]
          %v621 = vld [vmem:[%s0 + $0x148] sm:$0xff]
          %v622 = vld [vmem:[%s0 + $0x150] sm:$0xff]
          %v623 = vld [vmem:[%s0 + $0x158] sm:$0xff]
          %v624 = vld [vmem:[%s0 + $0x160] sm:$0xff]
          %v625 = vld [vmem:[%s0 + $0x168] sm:$0xff]
          %v626 = vld [vmem:[%s0 + $0x170] sm:$0xff]
          %v627 = vld [vmem:[%s0 + $0x178] sm:$0xff]
          %v628 = vld [vmem:[%s0 + $0x180] sm:$0xff]
          %v629 = vld [vmem:[%s0 + $0x188] sm:$0xff]
          %v630 = vld [vmem:[%s0 + $0x190] sm:$0xff]
          %v631 = vld [vmem:[%s0 + $0x198] sm:$0xff]
          %v632 = vld [vmem:[%s0 + $0x1a0] sm:$0xff]
          %v633 = vld [vmem:[%s0 + $0x1a8] sm:$0xff]
          %v634 = vld [vmem:[%s0 + $0x1b0] sm:$0xff]
          %v635 = vld [vmem:[%s0 + $0x1b8] sm:$0xff]
          %v636 = vld [vmem:[%s0 + $0x1c0] sm:$0xff]
          %v637 = vld [vmem:[%s0 + $0x1c8] sm:$0xff]
          %v638 = vld [vmem:[%s0 + $0x1d0] sm:$0xff]
          %v639 = vld [vmem:[%s0 + $0x1d8] sm:$0xff]
          %v640 = vld [vmem:[%s0 + $0x1e0] sm:$0xff]
          %v641 = vld [vmem:[%s0 + $0x1e8] sm:$0xff]
          %v642 = vld [vmem:[%s0 + $0x1f0] sm:$0xff]
          %v643 = vld [vmem:[%s0 + $0x1f8] sm:$0xff]
          %v644 = vld [vmem:[%s0 + $0x200] sm:$0xff]
          %v645 = vld [vmem:[%s0 + $0x208] sm:$0xff]
          %v646 = vld [vmem:[%s0 + $0x210] sm:$0xff]
          %v647 = vld [vmem:[%s0 + $0x218] sm:$0xff]
          %v648 = vld [vmem:[%s0 + $0x220] sm:$0xff]
          %v649 = vld [vmem:[%s0 + $0x228] sm:$0xff]
          %v650 = vld [vmem:[%s0 + $0x230] sm:$0xff]
          %v651 = vld [vmem:[%s0 + $0x238] sm:$0xff]
          %v652 = vld [vmem:[%s0 + $0x240] sm:$0xff]
          %v653 = vld [vmem:[%s0 + $0x248] sm:$0xff]
          %v654 = vld [vmem:[%s0 + $0x250] sm:$0xff]
          %v655 = vld [vmem:[%s0 + $0x258] sm:$0xff]
          %v656 = vld [vmem:[%s0 + $0x260] sm:$0xff]
          %v657 = vld [vmem:[%s0 + $0x268] sm:$0xff]
          %v658 = vld [vmem:[%s0 + $0x270] sm:$0xff]
          %v659 = vld [vmem:[%s0 + $0x278] sm:$0xff]
          %v660 = vld [vmem:[%s0 + $0x280] sm:$0xff]
          %v661 = vld [vmem:[%s0 + $0x288] sm:$0xff]
          %v662 = vld [vmem:[%s0 + $0x290] sm:$0xff]
          %v663 = vld [vmem:[%s0 + $0x298] sm:$0xff]
          %v664 = vld [vmem:[%s0 + $0x2a0] sm:$0xff]
          %v665 = vld [vmem:[%s0 + $0x2a8] sm:$0xff]
          %v666 = vld [vmem:[%s0 + $0x2b0] sm:$0xff]
          %v667 = vld [vmem:[%s0 + $0x2b8] sm:$0xff]
          %v668 = vld [vmem:[%s0 + $0x2c0] sm:$0xff]
          %v669 = vld [vmem:[%s0 + $0x2c8] sm:$0xff]
          %v670 = vld [vmem:[%s0 + $0x2d0] sm:$0xff]
          %v671 = vld [vmem:[%s0 + $0x2d8] sm:$0xff]
          %v672 = vld [vmem:[%s0 + $0x2e0] sm:$0xff]
          %v673 = vld [vmem:[%s0 + $0x2e8] sm:$0xff]
          %v674 = vld [vmem:[%s0 + $0x2f0] sm:$0xff]
          %v675 = vld [vmem:[%s0 + $0x2f8] sm:$0xff]
          %v676 = vld [vmem:[%s0 + $0x300] sm:$0xff]
          %v677 = vld [vmem:[%s0 + $0x308] sm:$0xff]
          %v678 = vld [vmem:[%s0 + $0x310] sm:$0xff]
          %v679 = vld [vmem:[%s0 + $0x318] sm:$0xff]
          %v680 = vld [vmem:[%s0 + $0x320] sm:$0xff]
          %v681 = vld [vmem:[%s0 + $0x328] sm:$0xff]
          %v682 = vld [vmem:[%s0 + $0x330] sm:$0xff]
          %v683 = vld [vmem:[%s0 + $0x338] sm:$0xff]
          %v684 = vld [vmem:[%s0 + $0x340] sm:$0xff]
          %v685 = vld [vmem:[%s0 + $0x348] sm:$0xff]
          %v686 = vld [vmem:[%s0 + $0x350] sm:$0xff]
          %v687 = vld [vmem:[%s0 + $0x358] sm:$0xff]
          %v688 = vld [vmem:[%s0 + $0x360] sm:$0xff]
          %v689 = vld [vmem:[%s0 + $0x368] sm:$0xff]
          %v690 = vld [vmem:[%s0 + $0x370] sm:$0xff]
          %v691 = vld [vmem:[%s0 + $0x378] sm:$0xff]
          %v692 = vld [vmem:[%s0 + $0x380] sm:$0xff]
          %v693 = vld [vmem:[%s0 + $0x388] sm:$0xff]
          %v694 = vld [vmem:[%s0 + $0x390] sm:$0xff]
          %v695 = vld [vmem:[%s0 + $0x398] sm:$0xff]
          %v696 = vld [vmem:[%s0 + $0x3a0] sm:$0xff]
          %v697 = vld [vmem:[%s0 + $0x3a8] sm:$0xff]
          %v698 = vld [vmem:[%s0 + $0x3b0] sm:$0xff]
          %v699 = vld [vmem:[%s0 + $0x3b8] sm:$0xff]
          %v700 = vld [vmem:[%s0 + $0x3c0] sm:$0xff]
          %v701 = vld [vmem:[%s0 + $0x3c8] sm:$0xff]
          %v702 = vld [vmem:[%s0 + $0x3d0] sm:$0xff]
          %v703 = vld [vmem:[%s0 + $0x3d8] sm:$0xff]
          %v704 = vld [vmem:[%s0 + $0x3e0] sm:$0xff]
          %v705 = vld [vmem:[%s0 + $0x3e8] sm:$0xff]
          %v706 = vld [vmem:[%s0 + $0x3f0] sm:$0xff]
          %v707 = vld [vmem:[%s0 + $0x3f8] sm:$0xff]
          %vm708 = vcmask 523264
          %v709 = vsel %vm708, %v580, 0.0
          %710 = vadd.xlane.f32.xlu0 %v709
          %v711 = vpop.xlane.xlu0 %710
          %v712 = vsel %vm708, %v581, 0.0
          %713 = vadd.xlane.f32.xlu0 %v712
          %v714 = vpop.xlane.xlu0 %713
          %v715 = vsel %vm708, %v582, 0.0
          %716 = vadd.xlane.f32.xlu0 %v715
          %v717 = vpop.xlane.xlu0 %716
          %v718 = vsel %vm708, %v583, 0.0
          %719 = vadd.xlane.f32.xlu0 %v718
          %v720 = vpop.xlane.xlu0 %719
          %v721 = vsel %vm708, %v584, 0.0
          %722 = vadd.xlane.f32.xlu0 %v721
          %v723 = vpop.xlane.xlu0 %722
          %v724 = vsel %vm708, %v585, 0.0
          %725 = vadd.xlane.f32.xlu0 %v724
          %v726 = vpop.xlane.xlu0 %725
          %v727 = vsel %vm708, %v586, 0.0
          %728 = vadd.xlane.f32.xlu0 %v727
          %v729 = vpop.xlane.xlu0 %728
          %v730 = vsel %vm708, %v587, 0.0
          %731 = vadd.xlane.f32.xlu0 %v730
          %v732 = vpop.xlane.xlu0 %731
          %v733 = vsel %vm708, %v588, 0.0
          %734 = vadd.xlane.f32.xlu0 %v733
          %v735 = vpop.xlane.xlu0 %734
          %v736 = vsel %vm708, %v589, 0.0
          %737 = vadd.xlane.f32.xlu0 %v736
          %v738 = vpop.xlane.xlu0 %737
          %v739 = vsel %vm708, %v590, 0.0
          %740 = vadd.xlane.f32.xlu0 %v739
          %v741 = vpop.xlane.xlu0 %740
          %v742 = vsel %vm708, %v591, 0.0
          %743 = vadd.xlane.f32.xlu0 %v742
          %v744 = vpop.xlane.xlu0 %743
          %v745 = vsel %vm708, %v592, 0.0
          %746 = vadd.xlane.f32.xlu0 %v745
          %v747 = vpop.xlane.xlu0 %746
          %v748 = vsel %vm708, %v593, 0.0
          %749 = vadd.xlane.f32.xlu0 %v748
          %v750 = vpop.xlane.xlu0 %749
          %v751 = vsel %vm708, %v594, 0.0
          %752 = vadd.xlane.f32.xlu0 %v751
          %v753 = vpop.xlane.xlu0 %752
          %v754 = vsel %vm708, %v595, 0.0
          %755 = vadd.xlane.f32.xlu0 %v754
          %v756 = vpop.xlane.xlu0 %755
          %v757 = vsel %vm708, %v596, 0.0
          %758 = vadd.xlane.f32.xlu0 %v757
          %v759 = vpop.xlane.xlu0 %758
          %v760 = vsel %vm708, %v597, 0.0
          %761 = vadd.xlane.f32.xlu0 %v760
          %v762 = vpop.xlane.xlu0 %761
          %v763 = vsel %vm708, %v598, 0.0
          %764 = vadd.xlane.f32.xlu0 %v763
          %v765 = vpop.xlane.xlu0 %764
          %v766 = vsel %vm708, %v599, 0.0
          %767 = vadd.xlane.f32.xlu0 %v766
          %v768 = vpop.xlane.xlu0 %767
          %v769 = vsel %vm708, %v600, 0.0
          %770 = vadd.xlane.f32.xlu0 %v769
          %v771 = vpop.xlane.xlu0 %770
          %v772 = vsel %vm708, %v601, 0.0
          %773 = vadd.xlane.f32.xlu0 %v772
          %v774 = vpop.xlane.xlu0 %773
          %v775 = vsel %vm708, %v602, 0.0
          %776 = vadd.xlane.f32.xlu0 %v775
          %v777 = vpop.xlane.xlu0 %776
          %v778 = vsel %vm708, %v603, 0.0
          %779 = vadd.xlane.f32.xlu0 %v778
          %v780 = vpop.xlane.xlu0 %779
          %v781 = vsel %vm708, %v604, 0.0
          %782 = vadd.xlane.f32.xlu0 %v781
          %v783 = vpop.xlane.xlu0 %782
          %v784 = vsel %vm708, %v605, 0.0
          %785 = vadd.xlane.f32.xlu0 %v784
          %v786 = vpop.xlane.xlu0 %785
          %v787 = vsel %vm708, %v606, 0.0
          %788 = vadd.xlane.f32.xlu0 %v787
          %v789 = vpop.xlane.xlu0 %788
          %v790 = vsel %vm708, %v607, 0.0
          %791 = vadd.xlane.f32.xlu0 %v790
          %v792 = vpop.xlane.xlu0 %791
          %v793 = vsel %vm708, %v608, 0.0
          %794 = vadd.xlane.f32.xlu0 %v793
          %v795 = vpop.xlane.xlu0 %794
          %v796 = vsel %vm708, %v609, 0.0
          %797 = vadd.xlane.f32.xlu0 %v796
          %v798 = vpop.xlane.xlu0 %797
          %v799 = vsel %vm708, %v610, 0.0
          %800 = vadd.xlane.f32.xlu0 %v799
          %v801 = vpop.xlane.xlu0 %800
          %v802 = vsel %vm708, %v611, 0.0
          %803 = vadd.xlane.f32.xlu0 %v802
          %v804 = vpop.xlane.xlu0 %803
          %v805 = vsel %vm708, %v612, 0.0
          %806 = vadd.xlane.f32.xlu0 %v805
          %v807 = vpop.xlane.xlu0 %806
          %v808 = vsel %vm708, %v613, 0.0
          %809 = vadd.xlane.f32.xlu0 %v808
          %v810 = vpop.xlane.xlu0 %809
          %v811 = vsel %vm708, %v614, 0.0
          %812 = vadd.xlane.f32.xlu0 %v811
          %v813 = vpop.xlane.xlu0 %812
          %v814 = vsel %vm708, %v615, 0.0
          %815 = vadd.xlane.f32.xlu0 %v814
          %v816 = vpop.xlane.xlu0 %815
          %v817 = vsel %vm708, %v616, 0.0
          %818 = vadd.xlane.f32.xlu0 %v817
          %v819 = vpop.xlane.xlu0 %818
          %v820 = vsel %vm708, %v617, 0.0
          %821 = vadd.xlane.f32.xlu0 %v820
          %v822 = vpop.xlane.xlu0 %821
          %v823 = vsel %vm708, %v618, 0.0
          %824 = vadd.xlane.f32.xlu0 %v823
          %v825 = vpop.xlane.xlu0 %824
          %v826 = vsel %vm708, %v619, 0.0
          %827 = vadd.xlane.f32.xlu0 %v826
          %v828 = vpop.xlane.xlu0 %827
          %v829 = vsel %vm708, %v620, 0.0
          %830 = vadd.xlane.f32.xlu0 %v829
          %v831 = vpop.xlane.xlu0 %830
          %v832 = vsel %vm708, %v621, 0.0
          %833 = vadd.xlane.f32.xlu0 %v832
          %v834 = vpop.xlane.xlu0 %833
          %v835 = vsel %vm708, %v622, 0.0
          %836 = vadd.xlane.f32.xlu0 %v835
          %v837 = vpop.xlane.xlu0 %836
          %v838 = vsel %vm708, %v623, 0.0
          %839 = vadd.xlane.f32.xlu0 %v838
          %v840 = vpop.xlane.xlu0 %839
          %v841 = vsel %vm708, %v624, 0.0
          %842 = vadd.xlane.f32.xlu0 %v841
          %v843 = vpop.xlane.xlu0 %842
          %v844 = vsel %vm708, %v625, 0.0
          %845 = vadd.xlane.f32.xlu0 %v844
          %v846 = vpop.xlane.xlu0 %845
          %v847 = vsel %vm708, %v626, 0.0
          %848 = vadd.xlane.f32.xlu0 %v847
          %v849 = vpop.xlane.xlu0 %848
          %v850 = vsel %vm708, %v627, 0.0
          %851 = vadd.xlane.f32.xlu0 %v850
          %v852 = vpop.xlane.xlu0 %851
          %v853 = vsel %vm708, %v628, 0.0
          %854 = vadd.xlane.f32.xlu0 %v853
          %v855 = vpop.xlane.xlu0 %854
          %v856 = vsel %vm708, %v629, 0.0
          %857 = vadd.xlane.f32.xlu0 %v856
          %v858 = vpop.xlane.xlu0 %857
          %v859 = vsel %vm708, %v630, 0.0
          %860 = vadd.xlane.f32.xlu0 %v859
          %v861 = vpop.xlane.xlu0 %860
          %v862 = vsel %vm708, %v631, 0.0
          %863 = vadd.xlane.f32.xlu0 %v862
          %v864 = vpop.xlane.xlu0 %863
          %v865 = vsel %vm708, %v632, 0.0
          %866 = vadd.xlane.f32.xlu0 %v865
          %v867 = vpop.xlane.xlu0 %866
          %v868 = vsel %vm708, %v633, 0.0
          %869 = vadd.xlane.f32.xlu0 %v868
          %v870 = vpop.xlane.xlu0 %869
          %v871 = vsel %vm708, %v634, 0.0
          %872 = vadd.xlane.f32.xlu0 %v871
          %v873 = vpop.xlane.xlu0 %872
          %v874 = vsel %vm708, %v635, 0.0
          %875 = vadd.xlane.f32.xlu0 %v874
          %v876 = vpop.xlane.xlu0 %875
          %v877 = vsel %vm708, %v636, 0.0
          %878 = vadd.xlane.f32.xlu0 %v877
          %v879 = vpop.xlane.xlu0 %878
          %v880 = vsel %vm708, %v637, 0.0
          %881 = vadd.xlane.f32.xlu0 %v880
          %v882 = vpop.xlane.xlu0 %881
          %v883 = vsel %vm708, %v638, 0.0
          %884 = vadd.xlane.f32.xlu0 %v883
          %v885 = vpop.xlane.xlu0 %884
          %v886 = vsel %vm708, %v639, 0.0
          %887 = vadd.xlane.f32.xlu0 %v886
          %v888 = vpop.xlane.xlu0 %887
          %v889 = vsel %vm708, %v640, 0.0
          %890 = vadd.xlane.f32.xlu0 %v889
          %v891 = vpop.xlane.xlu0 %890
          %v892 = vsel %vm708, %v641, 0.0
          %893 = vadd.xlane.f32.xlu0 %v892
          %v894 = vpop.xlane.xlu0 %893
          %v895 = vsel %vm708, %v642, 0.0
          %896 = vadd.xlane.f32.xlu0 %v895
          %v897 = vpop.xlane.xlu0 %896
          %v898 = vsel %vm708, %v643, 0.0
          %899 = vadd.xlane.f32.xlu0 %v898
          %v900 = vpop.xlane.xlu0 %899
          %v901 = vsel %vm708, %v644, 0.0
          %902 = vadd.xlane.f32.xlu0 %v901
          %v903 = vpop.xlane.xlu0 %902
          %v904 = vsel %vm708, %v645, 0.0
          %905 = vadd.xlane.f32.xlu0 %v904
          %v906 = vpop.xlane.xlu0 %905
          %v907 = vsel %vm708, %v646, 0.0
          %908 = vadd.xlane.f32.xlu0 %v907
          %v909 = vpop.xlane.xlu0 %908
          %v910 = vsel %vm708, %v647, 0.0
          %911 = vadd.xlane.f32.xlu0 %v910
          %v912 = vpop.xlane.xlu0 %911
          %v913 = vsel %vm708, %v648, 0.0
          %914 = vadd.xlane.f32.xlu0 %v913
          %v915 = vpop.xlane.xlu0 %914
          %v916 = vsel %vm708, %v649, 0.0
          %917 = vadd.xlane.f32.xlu0 %v916
          %v918 = vpop.xlane.xlu0 %917
          %v919 = vsel %vm708, %v650, 0.0
          %920 = vadd.xlane.f32.xlu0 %v919
          %v921 = vpop.xlane.xlu0 %920
          %v922 = vsel %vm708, %v651, 0.0
          %923 = vadd.xlane.f32.xlu0 %v922
          %v924 = vpop.xlane.xlu0 %923
          %v925 = vsel %vm708, %v652, 0.0
          %926 = vadd.xlane.f32.xlu0 %v925
          %v927 = vpop.xlane.xlu0 %926
          %v928 = vsel %vm708, %v653, 0.0
          %929 = vadd.xlane.f32.xlu0 %v928
          %v930 = vpop.xlane.xlu0 %929
          %v931 = vsel %vm708, %v654, 0.0
          %932 = vadd.xlane.f32.xlu0 %v931
          %v933 = vpop.xlane.xlu0 %932
          %v934 = vsel %vm708, %v655, 0.0
          %935 = vadd.xlane.f32.xlu0 %v934
          %v936 = vpop.xlane.xlu0 %935
          %v937 = vsel %vm708, %v656, 0.0
          %938 = vadd.xlane.f32.xlu0 %v937
          %v939 = vpop.xlane.xlu0 %938
          %v940 = vsel %vm708, %v657, 0.0
          %941 = vadd.xlane.f32.xlu0 %v940
          %v942 = vpop.xlane.xlu0 %941
          %v943 = vsel %vm708, %v658, 0.0
          %944 = vadd.xlane.f32.xlu0 %v943
          %v945 = vpop.xlane.xlu0 %944
          %v946 = vsel %vm708, %v659, 0.0
          %947 = vadd.xlane.f32.xlu0 %v946
          %v948 = vpop.xlane.xlu0 %947
          %v949 = vsel %vm708, %v660, 0.0
          %950 = vadd.xlane.f32.xlu0 %v949
          %v951 = vpop.xlane.xlu0 %950
          %v952 = vsel %vm708, %v661, 0.0
          %953 = vadd.xlane.f32.xlu0 %v952
          %v954 = vpop.xlane.xlu0 %953
          %v955 = vsel %vm708, %v662, 0.0
          %956 = vadd.xlane.f32.xlu0 %v955
          %v957 = vpop.xlane.xlu0 %956
          %v958 = vsel %vm708, %v663, 0.0
          %959 = vadd.xlane.f32.xlu0 %v958
          %v960 = vpop.xlane.xlu0 %959
          %v961 = vsel %vm708, %v664, 0.0
          %962 = vadd.xlane.f32.xlu0 %v961
          %v963 = vpop.xlane.xlu0 %962
          %v964 = vsel %vm708, %v665, 0.0
          %965 = vadd.xlane.f32.xlu0 %v964
          %v966 = vpop.xlane.xlu0 %965
          %v967 = vsel %vm708, %v666, 0.0
          %968 = vadd.xlane.f32.xlu0 %v967
          %v969 = vpop.xlane.xlu0 %968
          %v970 = vsel %vm708, %v667, 0.0
          %971 = vadd.xlane.f32.xlu0 %v970
          %v972 = vpop.xlane.xlu0 %971
          %v973 = vsel %vm708, %v668, 0.0
          %974 = vadd.xlane.f32.xlu0 %v973
          %v975 = vpop.xlane.xlu0 %974
          %v976 = vsel %vm708, %v669, 0.0
          %977 = vadd.xlane.f32.xlu0 %v976
          %v978 = vpop.xlane.xlu0 %977
          %v979 = vsel %vm708, %v670, 0.0
          %980 = vadd.xlane.f32.xlu0 %v979
          %v981 = vpop.xlane.xlu0 %980
          %v982 = vsel %vm708, %v671, 0.0
          %983 = vadd.xlane.f32.xlu0 %v982
          %v984 = vpop.xlane.xlu0 %983
          %v985 = vsel %vm708, %v672, 0.0
          %986 = vadd.xlane.f32.xlu0 %v985
          %v987 = vpop.xlane.xlu0 %986
          %v988 = vsel %vm708, %v673, 0.0
          %989 = vadd.xlane.f32.xlu0 %v988
          %v990 = vpop.xlane.xlu0 %989
          %v991 = vsel %vm708, %v674, 0.0
          %992 = vadd.xlane.f32.xlu0 %v991
          %v993 = vpop.xlane.xlu0 %992
          %v994 = vsel %vm708, %v675, 0.0
          %995 = vadd.xlane.f32.xlu0 %v994
          %v996 = vpop.xlane.xlu0 %995
          %v997 = vsel %vm708, %v676, 0.0
          %998 = vadd.xlane.f32.xlu0 %v997
          %v999 = vpop.xlane.xlu0 %998
          %v1000 = vsel %vm708, %v677, 0.0
          %1001 = vadd.xlane.f32.xlu0 %v1000
          %v1002 = vpop.xlane.xlu0 %1001
          %v1003 = vsel %vm708, %v678, 0.0
          %1004 = vadd.xlane.f32.xlu0 %v1003
          %v1005 = vpop.xlane.xlu0 %1004
          %v1006 = vsel %vm708, %v679, 0.0
          %1007 = vadd.xlane.f32.xlu0 %v1006
          %v1008 = vpop.xlane.xlu0 %1007
          %v1009 = vsel %vm708, %v680, 0.0
          %1010 = vadd.xlane.f32.xlu0 %v1009
          %v1011 = vpop.xlane.xlu0 %1010
          %v1012 = vsel %vm708, %v681, 0.0
          %1013 = vadd.xlane.f32.xlu0 %v1012
          %v1014 = vpop.xlane.xlu0 %1013
          %v1015 = vsel %vm708, %v682, 0.0
          %1016 = vadd.xlane.f32.xlu0 %v1015
          %v1017 = vpop.xlane.xlu0 %1016
          %v1018 = vsel %vm708, %v683, 0.0
          %1019 = vadd.xlane.f32.xlu0 %v1018
          %v1020 = vpop.xlane.xlu0 %1019
          %v1021 = vsel %vm708, %v684, 0.0
          %1022 = vadd.xlane.f32.xlu0 %v1021
          %v1023 = vpop.xlane.xlu0 %1022
          %v1024 = vsel %vm708, %v685, 0.0
          %1025 = vadd.xlane.f32.xlu0 %v1024
          %v1026 = vpop.xlane.xlu0 %1025
          %v1027 = vsel %vm708, %v686, 0.0
          %1028 = vadd.xlane.f32.xlu0 %v1027
          %v1029 = vpop.xlane.xlu0 %1028
          %v1030 = vsel %vm708, %v687, 0.0
          %1031 = vadd.xlane.f32.xlu0 %v1030
          %v1032 = vpop.xlane.xlu0 %1031
          %v1033 = vsel %vm708, %v688, 0.0
          %1034 = vadd.xlane.f32.xlu0 %v1033
          %v1035 = vpop.xlane.xlu0 %1034
          %v1036 = vsel %vm708, %v689, 0.0
          %1037 = vadd.xlane.f32.xlu0 %v1036
          %v1038 = vpop.xlane.xlu0 %1037
          %v1039 = vsel %vm708, %v690, 0.0
          %1040 = vadd.xlane.f32.xlu0 %v1039
          %v1041 = vpop.xlane.xlu0 %1040
          %v1042 = vsel %vm708, %v691, 0.0
          %1043 = vadd.xlane.f32.xlu0 %v1042
          %v1044 = vpop.xlane.xlu0 %1043
          %v1045 = vsel %vm708, %v692, 0.0
          %1046 = vadd.xlane.f32.xlu0 %v1045
          %v1047 = vpop.xlane.xlu0 %1046
          %v1048 = vsel %vm708, %v693, 0.0
          %1049 = vadd.xlane.f32.xlu0 %v1048
          %v1050 = vpop.xlane.xlu0 %1049
          %v1051 = vsel %vm708, %v694, 0.0
          %1052 = vadd.xlane.f32.xlu0 %v1051
          %v1053 = vpop.xlane.xlu0 %1052
          %v1054 = vsel %vm708, %v695, 0.0
          %1055 = vadd.xlane.f32.xlu0 %v1054
          %v1056 = vpop.xlane.xlu0 %1055
          %v1057 = vsel %vm708, %v696, 0.0
          %1058 = vadd.xlane.f32.xlu0 %v1057
          %v1059 = vpop.xlane.xlu0 %1058
          %v1060 = vsel %vm708, %v697, 0.0
          %1061 = vadd.xlane.f32.xlu0 %v1060
          %v1062 = vpop.xlane.xlu0 %1061
          %v1063 = vsel %vm708, %v698, 0.0
          %1064 = vadd.xlane.f32.xlu0 %v1063
          %v1065 = vpop.xlane.xlu0 %1064
          %v1066 = vsel %vm708, %v699, 0.0
          %1067 = vadd.xlane.f32.xlu0 %v1066
          %v1068 = vpop.xlane.xlu0 %1067
          %v1069 = vsel %vm708, %v700, 0.0
          %1070 = vadd.xlane.f32.xlu0 %v1069
          %v1071 = vpop.xlane.xlu0 %1070
          %v1072 = vsel %vm708, %v701, 0.0
          %1073 = vadd.xlane.f32.xlu0 %v1072
          %v1074 = vpop.xlane.xlu0 %1073
          %v1075 = vsel %vm708, %v702, 0.0
          %1076 = vadd.xlane.f32.xlu0 %v1075
          %v1077 = vpop.xlane.xlu0 %1076
          %v1078 = vsel %vm708, %v703, 0.0
          %1079 = vadd.xlane.f32.xlu0 %v1078
          %v1080 = vpop.xlane.xlu0 %1079
          %v1081 = vsel %vm708, %v704, 0.0
          %1082 = vadd.xlane.f32.xlu0 %v1081
          %v1083 = vpop.xlane.xlu0 %1082
          %v1084 = vsel %vm708, %v705, 0.0
          %1085 = vadd.xlane.f32.xlu0 %v1084
          %v1086 = vpop.xlane.xlu0 %1085
          %v1087 = vsel %vm708, %v706, 0.0
          %1088 = vadd.xlane.f32.xlu0 %v1087
          %v1089 = vpop.xlane.xlu0 %1088
          %v1090 = vsel %vm708, %v707, 0.0
          %1091 = vadd.xlane.f32.xlu0 %v1090
          %v1092 = vpop.xlane.xlu0 %1091
          %v1093 = vrcp.pop 64.0
          %v1094 = vmul.f32 %v711, %v1093
          %v1095 = vmul.f32 %v714, %v1093
          %v1096 = vmul.f32 %v717, %v1093
          %v1097 = vmul.f32 %v720, %v1093
          %v1098 = vmul.f32 %v723, %v1093
          %v1099 = vmul.f32 %v726, %v1093
          %v1100 = vmul.f32 %v729, %v1093
          %v1101 = vmul.f32 %v732, %v1093
          %v1102 = vmul.f32 %v735, %v1093
          %v1103 = vmul.f32 %v738, %v1093
          %v1104 = vmul.f32 %v741, %v1093
          %v1105 = vmul.f32 %v744, %v1093
          %v1106 = vmul.f32 %v747, %v1093
          %v1107 = vmul.f32 %v750, %v1093
          %v1108 = vmul.f32 %v753, %v1093
          %v1109 = vmul.f32 %v756, %v1093
          %v1110 = vmul.f32 %v759, %v1093
          %v1111 = vmul.f32 %v762, %v1093
          %v1112 = vmul.f32 %v765, %v1093
          %v1113 = vmul.f32 %v768, %v1093
          %v1114 = vmul.f32 %v771, %v1093
          %v1115 = vmul.f32 %v774, %v1093
          %v1116 = vmul.f32 %v777, %v1093
          %v1117 = vmul.f32 %v780, %v1093
          %v1118 = vmul.f32 %v783, %v1093
          %v1119 = vmul.f32 %v786, %v1093
          %v1120 = vmul.f32 %v789, %v1093
          %v1121 = vmul.f32 %v792, %v1093
          %v1122 = vmul.f32 %v795, %v1093
          %v1123 = vmul.f32 %v798, %v1093
          %v1124 = vmul.f32 %v801, %v1093
          %v1125 = vmul.f32 %v804, %v1093
          %v1126 = vmul.f32 %v807, %v1093
          %v1127 = vmul.f32 %v810, %v1093
          %v1128 = vmul.f32 %v813, %v1093
          %v1129 = vmul.f32 %v816, %v1093
          %v1130 = vmul.f32 %v819, %v1093
          %v1131 = vmul.f32 %v822, %v1093
          %v1132 = vmul.f32 %v825, %v1093
          %v1133 = vmul.f32 %v828, %v1093
          %v1134 = vmul.f32 %v831, %v1093
          %v1135 = vmul.f32 %v834, %v1093
          %v1136 = vmul.f32 %v837, %v1093
          %v1137 = vmul.f32 %v840, %v1093
          %v1138 = vmul.f32 %v843, %v1093
          %v1139 = vmul.f32 %v846, %v1093
          %v1140 = vmul.f32 %v849, %v1093
          %v1141 = vmul.f32 %v852, %v1093
          %v1142 = vmul.f32 %v855, %v1093
          %v1143 = vmul.f32 %v858, %v1093
          %v1144 = vmul.f32 %v861, %v1093
          %v1145 = vmul.f32 %v864, %v1093
          %v1146 = vmul.f32 %v867, %v1093
          %v1147 = vmul.f32 %v870, %v1093
          %v1148 = vmul.f32 %v873, %v1093
          %v1149 = vmul.f32 %v876, %v1093
          %v1150 = vmul.f32 %v879, %v1093
          %v1151 = vmul.f32 %v882, %v1093
          %v1152 = vmul.f32 %v885, %v1093
          %v1153 = vmul.f32 %v888, %v1093
          %v1154 = vmul.f32 %v891, %v1093
          %v1155 = vmul.f32 %v894, %v1093
          %v1156 = vmul.f32 %v897, %v1093
          %v1157 = vmul.f32 %v900, %v1093
          %v1158 = vmul.f32 %v903, %v1093
          %v1159 = vmul.f32 %v906, %v1093
          %v1160 = vmul.f32 %v909, %v1093
          %v1161 = vmul.f32 %v912, %v1093
          %v1162 = vmul.f32 %v915, %v1093
          %v1163 = vmul.f32 %v918, %v1093
          %v1164 = vmul.f32 %v921, %v1093
          %v1165 = vmul.f32 %v924, %v1093
          %v1166 = vmul.f32 %v927, %v1093
          %v1167 = vmul.f32 %v930, %v1093
          %v1168 = vmul.f32 %v933, %v1093
          %v1169 = vmul.f32 %v936, %v1093
          %v1170 = vmul.f32 %v939, %v1093
          %v1171 = vmul.f32 %v942, %v1093
          %v1172 = vmul.f32 %v945, %v1093
          %v1173 = vmul.f32 %v948, %v1093
          %v1174 = vmul.f32 %v951, %v1093
          %v1175 = vmul.f32 %v954, %v1093
          %v1176 = vmul.f32 %v957, %v1093
          %v1177 = vmul.f32 %v960, %v1093
          %v1178 = vmul.f32 %v963, %v1093
          %v1179 = vmul.f32 %v966, %v1093
          %v1180 = vmul.f32 %v969, %v1093
          %v1181 = vmul.f32 %v972, %v1093
          %v1182 = vmul.f32 %v975, %v1093
          %v1183 = vmul.f32 %v978, %v1093
          %v1184 = vmul.f32 %v981, %v1093
          %v1185 = vmul.f32 %v984, %v1093
          %v1186 = vmul.f32 %v987, %v1093
          %v1187 = vmul.f32 %v990, %v1093
          %v1188 = vmul.f32 %v993, %v1093
          %v1189 = vmul.f32 %v996, %v1093
          %v1190 = vmul.f32 %v999, %v1093
          %v1191 = vmul.f32 %v1002, %v1093
          %v1192 = vmul.f32 %v1005, %v1093
          %v1193 = vmul.f32 %v1008, %v1093
          %v1194 = vmul.f32 %v1011, %v1093
          %v1195 = vmul.f32 %v1014, %v1093
          %v1196 = vmul.f32 %v1017, %v1093
          %v1197 = vmul.f32 %v1020, %v1093
          %v1198 = vmul.f32 %v1023, %v1093
          %v1199 = vmul.f32 %v1026, %v1093
          %v1200 = vmul.f32 %v1029, %v1093
          %v1201 = vmul.f32 %v1032, %v1093
          %v1202 = vmul.f32 %v1035, %v1093
          %v1203 = vmul.f32 %v1038, %v1093
          %v1204 = vmul.f32 %v1041, %v1093
          %v1205 = vmul.f32 %v1044, %v1093
          %v1206 = vmul.f32 %v1047, %v1093
          %v1207 = vmul.f32 %v1050, %v1093
          %v1208 = vmul.f32 %v1053, %v1093
          %v1209 = vmul.f32 %v1056, %v1093
          %v1210 = vmul.f32 %v1059, %v1093
          %v1211 = vmul.f32 %v1062, %v1093
          %v1212 = vmul.f32 %v1065, %v1093
          %v1213 = vmul.f32 %v1068, %v1093
          %v1214 = vmul.f32 %v1071, %v1093
          %v1215 = vmul.f32 %v1074, %v1093
          %v1216 = vmul.f32 %v1077, %v1093
          %v1217 = vmul.f32 %v1080, %v1093
          %v1218 = vmul.f32 %v1083, %v1093
          %v1219 = vmul.f32 %v1086, %v1093
          %v1220 = vmul.f32 %v1089, %v1093
          %v1221 = vmul.f32 %v1092, %v1093
          %v1351 = vunpack.c.l.s4 269488144
          %v1352 = vunpack.c.0.s8 %v1351
          %v1353 = vlaneseq
          %v1354 = vshrl.u32 %v1353, 7
          %v1355 = vsub.s32 %v1352, %v1354
          %v1356 = vrot.slane %v1094, %v1355
          %v1358 = vunpack.c.l.s4 842150450
          %v1359 = vunpack.c.0.s8 %v1358
          %v1360 = vlaneseq
          %v1361 = vshrl.u32 %v1360, 7
          %v1362 = vsub.s32 %v1359, %v1361
          %v1363 = vrot.slane %v1094, %v1362
          %v1365 = vunpack.c.l.s4 1414812756
          %v1366 = vunpack.c.0.s8 %v1365
          %v1367 = vlaneseq
          %v1368 = vshrl.u32 %v1367, 7
          %v1369 = vsub.s32 %v1366, %v1368
          %v1370 = vrot.slane %v1094, %v1369
          %v1372 = vunpack.c.l.s4 1987475062
          %v1373 = vunpack.c.0.s8 %v1372
          %v1374 = vlaneseq
          %v1375 = vshrl.u32 %v1374, 7
          %v1376 = vsub.s32 %v1373, %v1375
          %v1377 = vrot.slane %v1094, %v1376
          %v1379 = vunpack.c.l.s4 269488144
          %v1380 = vunpack.c.0.s8 %v1379
          %v1381 = vlaneseq
          %v1382 = vshrl.u32 %v1381, 7
          %v1383 = vsub.s32 %v1380, %v1382
          %v1384 = vrot.slane %v1095, %v1383
          %v1386 = vunpack.c.l.s4 842150450
          %v1387 = vunpack.c.0.s8 %v1386
          %v1388 = vlaneseq
          %v1389 = vshrl.u32 %v1388, 7
          %v1390 = vsub.s32 %v1387, %v1389
          %v1391 = vrot.slane %v1095, %v1390
          %v1393 = vunpack.c.l.s4 1414812756
          %v1394 = vunpack.c.0.s8 %v1393
          %v1395 = vlaneseq
          %v1396 = vshrl.u32 %v1395, 7
          %v1397 = vsub.s32 %v1394, %v1396
          %v1398 = vrot.slane %v1095, %v1397
          %v1400 = vunpack.c.l.s4 1987475062
          %v1401 = vunpack.c.0.s8 %v1400
          %v1402 = vlaneseq
          %v1403 = vshrl.u32 %v1402, 7
          %v1404 = vsub.s32 %v1401, %v1403
          %v1405 = vrot.slane %v1095, %v1404
          %v1407 = vunpack.c.l.s4 269488144
          %v1408 = vunpack.c.0.s8 %v1407
          %v1409 = vlaneseq
          %v1410 = vshrl.u32 %v1409, 7
          %v1411 = vsub.s32 %v1408, %v1410
          %v1412 = vrot.slane %v1096, %v1411
          %v1414 = vunpack.c.l.s4 842150450
          %v1415 = vunpack.c.0.s8 %v1414
          %v1416 = vlaneseq
          %v1417 = vshrl.u32 %v1416, 7
          %v1418 = vsub.s32 %v1415, %v1417
          %v1419 = vrot.slane %v1096, %v1418
          %v1421 = vunpack.c.l.s4 1414812756
          %v1422 = vunpack.c.0.s8 %v1421
          %v1423 = vlaneseq
          %v1424 = vshrl.u32 %v1423, 7
          %v1425 = vsub.s32 %v1422, %v1424
          %v1426 = vrot.slane %v1096, %v1425
          %v1428 = vunpack.c.l.s4 1987475062
          %v1429 = vunpack.c.0.s8 %v1428
          %v1430 = vlaneseq
          %v1431 = vshrl.u32 %v1430, 7
          %v1432 = vsub.s32 %v1429, %v1431
          %v1433 = vrot.slane %v1096, %v1432
          %v1435 = vunpack.c.l.s4 269488144
          %v1436 = vunpack.c.0.s8 %v1435
          %v1437 = vlaneseq
          %v1438 = vshrl.u32 %v1437, 7
          %v1439 = vsub.s32 %v1436, %v1438
          %v1440 = vrot.slane %v1097, %v1439
          %v1442 = vunpack.c.l.s4 842150450
          %v1443 = vunpack.c.0.s8 %v1442
          %v1444 = vlaneseq
          %v1445 = vshrl.u32 %v1444, 7
          %v1446 = vsub.s32 %v1443, %v1445
          %v1447 = vrot.slane %v1097, %v1446
          %v1449 = vunpack.c.l.s4 1414812756
          %v1450 = vunpack.c.0.s8 %v1449
          %v1451 = vlaneseq
          %v1452 = vshrl.u32 %v1451, 7
          %v1453 = vsub.s32 %v1450, %v1452
          %v1454 = vrot.slane %v1097, %v1453
          %v1456 = vunpack.c.l.s4 1987475062
          %v1457 = vunpack.c.0.s8 %v1456
          %v1458 = vlaneseq
          %v1459 = vshrl.u32 %v1458, 7
          %v1460 = vsub.s32 %v1457, %v1459
          %v1461 = vrot.slane %v1097, %v1460
          %v1463 = vunpack.c.l.s4 269488144
          %v1464 = vunpack.c.0.s8 %v1463
          %v1465 = vlaneseq
          %v1466 = vshrl.u32 %v1465, 7
          %v1467 = vsub.s32 %v1464, %v1466
          %v1468 = vrot.slane %v1098, %v1467
          %v1470 = vunpack.c.l.s4 842150450
          %v1471 = vunpack.c.0.s8 %v1470
          %v1472 = vlaneseq
          %v1473 = vshrl.u32 %v1472, 7
          %v1474 = vsub.s32 %v1471, %v1473
          %v1475 = vrot.slane %v1098, %v1474
          %v1477 = vunpack.c.l.s4 1414812756
          %v1478 = vunpack.c.0.s8 %v1477
          %v1479 = vlaneseq
          %v1480 = vshrl.u32 %v1479, 7
          %v1481 = vsub.s32 %v1478, %v1480
          %v1482 = vrot.slane %v1098, %v1481
          %v1484 = vunpack.c.l.s4 1987475062
          %v1485 = vunpack.c.0.s8 %v1484
          %v1486 = vlaneseq
          %v1487 = vshrl.u32 %v1486, 7
          %v1488 = vsub.s32 %v1485, %v1487
          %v1489 = vrot.slane %v1098, %v1488
          %v1491 = vunpack.c.l.s4 269488144
          %v1492 = vunpack.c.0.s8 %v1491
          %v1493 = vlaneseq
          %v1494 = vshrl.u32 %v1493, 7
          %v1495 = vsub.s32 %v1492, %v1494
          %v1496 = vrot.slane %v1099, %v1495
          %v1498 = vunpack.c.l.s4 842150450
          %v1499 = vunpack.c.0.s8 %v1498
          %v1500 = vlaneseq
          %v1501 = vshrl.u32 %v1500, 7
          %v1502 = vsub.s32 %v1499, %v1501
          %v1503 = vrot.slane %v1099, %v1502
          %v1505 = vunpack.c.l.s4 1414812756
          %v1506 = vunpack.c.0.s8 %v1505
          %v1507 = vlaneseq
          %v1508 = vshrl.u32 %v1507, 7
          %v1509 = vsub.s32 %v1506, %v1508
          %v1510 = vrot.slane %v1099, %v1509
          %v1512 = vunpack.c.l.s4 1987475062
          %v1513 = vunpack.c.0.s8 %v1512
          %v1514 = vlaneseq
          %v1515 = vshrl.u32 %v1514, 7
          %v1516 = vsub.s32 %v1513, %v1515
          %v1517 = vrot.slane %v1099, %v1516
          %v1519 = vunpack.c.l.s4 269488144
          %v1520 = vunpack.c.0.s8 %v1519
          %v1521 = vlaneseq
          %v1522 = vshrl.u32 %v1521, 7
          %v1523 = vsub.s32 %v1520, %v1522
          %v1524 = vrot.slane %v1100, %v1523
          %v1526 = vunpack.c.l.s4 842150450
          %v1527 = vunpack.c.0.s8 %v1526
          %v1528 = vlaneseq
          %v1529 = vshrl.u32 %v1528, 7
          %v1530 = vsub.s32 %v1527, %v1529
          %v1531 = vrot.slane %v1100, %v1530
          %v1533 = vunpack.c.l.s4 1414812756
          %v1534 = vunpack.c.0.s8 %v1533
          %v1535 = vlaneseq
          %v1536 = vshrl.u32 %v1535, 7
          %v1537 = vsub.s32 %v1534, %v1536
          %v1538 = vrot.slane %v1100, %v1537
          %v1540 = vunpack.c.l.s4 1987475062
          %v1541 = vunpack.c.0.s8 %v1540
          %v1542 = vlaneseq
          %v1543 = vshrl.u32 %v1542, 7
          %v1544 = vsub.s32 %v1541, %v1543
          %v1545 = vrot.slane %v1100, %v1544
          %v1547 = vunpack.c.l.s4 269488144
          %v1548 = vunpack.c.0.s8 %v1547
          %v1549 = vlaneseq
          %v1550 = vshrl.u32 %v1549, 7
          %v1551 = vsub.s32 %v1548, %v1550
          %v1552 = vrot.slane %v1101, %v1551
          %v1554 = vunpack.c.l.s4 842150450
          %v1555 = vunpack.c.0.s8 %v1554
          %v1556 = vlaneseq
          %v1557 = vshrl.u32 %v1556, 7
          %v1558 = vsub.s32 %v1555, %v1557
          %v1559 = vrot.slane %v1101, %v1558
          %v1561 = vunpack.c.l.s4 1414812756
          %v1562 = vunpack.c.0.s8 %v1561
          %v1563 = vlaneseq
          %v1564 = vshrl.u32 %v1563, 7
          %v1565 = vsub.s32 %v1562, %v1564
          %v1566 = vrot.slane %v1101, %v1565
          %v1568 = vunpack.c.l.s4 1987475062
          %v1569 = vunpack.c.0.s8 %v1568
          %v1570 = vlaneseq
          %v1571 = vshrl.u32 %v1570, 7
          %v1572 = vsub.s32 %v1569, %v1571
          %v1573 = vrot.slane %v1101, %v1572
          %v1575 = vunpack.c.l.s4 269488144
          %v1576 = vunpack.c.0.s8 %v1575
          %v1577 = vlaneseq
          %v1578 = vshrl.u32 %v1577, 7
          %v1579 = vsub.s32 %v1576, %v1578
          %v1580 = vrot.slane %v1102, %v1579
          %v1582 = vunpack.c.l.s4 842150450
          %v1583 = vunpack.c.0.s8 %v1582
          %v1584 = vlaneseq
          %v1585 = vshrl.u32 %v1584, 7
          %v1586 = vsub.s32 %v1583, %v1585
          %v1587 = vrot.slane %v1102, %v1586
          %v1589 = vunpack.c.l.s4 1414812756
          %v1590 = vunpack.c.0.s8 %v1589
          %v1591 = vlaneseq
          %v1592 = vshrl.u32 %v1591, 7
          %v1593 = vsub.s32 %v1590, %v1592
          %v1594 = vrot.slane %v1102, %v1593
          %v1596 = vunpack.c.l.s4 1987475062
          %v1597 = vunpack.c.0.s8 %v1596
          %v1598 = vlaneseq
          %v1599 = vshrl.u32 %v1598, 7
          %v1600 = vsub.s32 %v1597, %v1599
          %v1601 = vrot.slane %v1102, %v1600
          %v1603 = vunpack.c.l.s4 269488144
          %v1604 = vunpack.c.0.s8 %v1603
          %v1605 = vlaneseq
          %v1606 = vshrl.u32 %v1605, 7
          %v1607 = vsub.s32 %v1604, %v1606
          %v1608 = vrot.slane %v1103, %v1607
          %v1610 = vunpack.c.l.s4 842150450
          %v1611 = vunpack.c.0.s8 %v1610
          %v1612 = vlaneseq
          %v1613 = vshrl.u32 %v1612, 7
          %v1614 = vsub.s32 %v1611, %v1613
          %v1615 = vrot.slane %v1103, %v1614
          %v1617 = vunpack.c.l.s4 1414812756
          %v1618 = vunpack.c.0.s8 %v1617
          %v1619 = vlaneseq
          %v1620 = vshrl.u32 %v1619, 7
          %v1621 = vsub.s32 %v1618, %v1620
          %v1622 = vrot.slane %v1103, %v1621
          %v1624 = vunpack.c.l.s4 1987475062
          %v1625 = vunpack.c.0.s8 %v1624
          %v1626 = vlaneseq
          %v1627 = vshrl.u32 %v1626, 7
          %v1628 = vsub.s32 %v1625, %v1627
          %v1629 = vrot.slane %v1103, %v1628
          %v1631 = vunpack.c.l.s4 269488144
          %v1632 = vunpack.c.0.s8 %v1631
          %v1633 = vlaneseq
          %v1634 = vshrl.u32 %v1633, 7
          %v1635 = vsub.s32 %v1632, %v1634
          %v1636 = vrot.slane %v1104, %v1635
          %v1638 = vunpack.c.l.s4 842150450
          %v1639 = vunpack.c.0.s8 %v1638
          %v1640 = vlaneseq
          %v1641 = vshrl.u32 %v1640, 7
          %v1642 = vsub.s32 %v1639, %v1641
          %v1643 = vrot.slane %v1104, %v1642
          %v1645 = vunpack.c.l.s4 1414812756
          %v1646 = vunpack.c.0.s8 %v1645
          %v1647 = vlaneseq
          %v1648 = vshrl.u32 %v1647, 7
          %v1649 = vsub.s32 %v1646, %v1648
          %v1650 = vrot.slane %v1104, %v1649
          %v1652 = vunpack.c.l.s4 1987475062
          %v1653 = vunpack.c.0.s8 %v1652
          %v1654 = vlaneseq
          %v1655 = vshrl.u32 %v1654, 7
          %v1656 = vsub.s32 %v1653, %v1655
          %v1657 = vrot.slane %v1104, %v1656
          %v1659 = vunpack.c.l.s4 269488144
          %v1660 = vunpack.c.0.s8 %v1659
          %v1661 = vlaneseq
          %v1662 = vshrl.u32 %v1661, 7
          %v1663 = vsub.s32 %v1660, %v1662
          %v1664 = vrot.slane %v1105, %v1663
          %v1666 = vunpack.c.l.s4 842150450
          %v1667 = vunpack.c.0.s8 %v1666
          %v1668 = vlaneseq
          %v1669 = vshrl.u32 %v1668, 7
          %v1670 = vsub.s32 %v1667, %v1669
          %v1671 = vrot.slane %v1105, %v1670
          %v1673 = vunpack.c.l.s4 1414812756
          %v1674 = vunpack.c.0.s8 %v1673
          %v1675 = vlaneseq
          %v1676 = vshrl.u32 %v1675, 7
          %v1677 = vsub.s32 %v1674, %v1676
          %v1678 = vrot.slane %v1105, %v1677
          %v1680 = vunpack.c.l.s4 1987475062
          %v1681 = vunpack.c.0.s8 %v1680
          %v1682 = vlaneseq
          %v1683 = vshrl.u32 %v1682, 7
          %v1684 = vsub.s32 %v1681, %v1683
          %v1685 = vrot.slane %v1105, %v1684
          %v1687 = vunpack.c.l.s4 269488144
          %v1688 = vunpack.c.0.s8 %v1687
          %v1689 = vlaneseq
          %v1690 = vshrl.u32 %v1689, 7
          %v1691 = vsub.s32 %v1688, %v1690
          %v1692 = vrot.slane %v1106, %v1691
          %v1694 = vunpack.c.l.s4 842150450
          %v1695 = vunpack.c.0.s8 %v1694
          %v1696 = vlaneseq
          %v1697 = vshrl.u32 %v1696, 7
          %v1698 = vsub.s32 %v1695, %v1697
          %v1699 = vrot.slane %v1106, %v1698
          %v1701 = vunpack.c.l.s4 1414812756
          %v1702 = vunpack.c.0.s8 %v1701
          %v1703 = vlaneseq
          %v1704 = vshrl.u32 %v1703, 7
          %v1705 = vsub.s32 %v1702, %v1704
          %v1706 = vrot.slane %v1106, %v1705
          %v1708 = vunpack.c.l.s4 1987475062
          %v1709 = vunpack.c.0.s8 %v1708
          %v1710 = vlaneseq
          %v1711 = vshrl.u32 %v1710, 7
          %v1712 = vsub.s32 %v1709, %v1711
          %v1713 = vrot.slane %v1106, %v1712
          %v1715 = vunpack.c.l.s4 269488144
          %v1716 = vunpack.c.0.s8 %v1715
          %v1717 = vlaneseq
          %v1718 = vshrl.u32 %v1717, 7
          %v1719 = vsub.s32 %v1716, %v1718
          %v1720 = vrot.slane %v1107, %v1719
          %v1722 = vunpack.c.l.s4 842150450
          %v1723 = vunpack.c.0.s8 %v1722
          %v1724 = vlaneseq
          %v1725 = vshrl.u32 %v1724, 7
          %v1726 = vsub.s32 %v1723, %v1725
          %v1727 = vrot.slane %v1107, %v1726
          %v1729 = vunpack.c.l.s4 1414812756
          %v1730 = vunpack.c.0.s8 %v1729
          %v1731 = vlaneseq
          %v1732 = vshrl.u32 %v1731, 7
          %v1733 = vsub.s32 %v1730, %v1732
          %v1734 = vrot.slane %v1107, %v1733
          %v1736 = vunpack.c.l.s4 1987475062
          %v1737 = vunpack.c.0.s8 %v1736
          %v1738 = vlaneseq
          %v1739 = vshrl.u32 %v1738, 7
          %v1740 = vsub.s32 %v1737, %v1739
          %v1741 = vrot.slane %v1107, %v1740
          %v1743 = vunpack.c.l.s4 269488144
          %v1744 = vunpack.c.0.s8 %v1743
          %v1745 = vlaneseq
          %v1746 = vshrl.u32 %v1745, 7
          %v1747 = vsub.s32 %v1744, %v1746
          %v1748 = vrot.slane %v1108, %v1747
          %v1750 = vunpack.c.l.s4 842150450
          %v1751 = vunpack.c.0.s8 %v1750
          %v1752 = vlaneseq
          %v1753 = vshrl.u32 %v1752, 7
          %v1754 = vsub.s32 %v1751, %v1753
          %v1755 = vrot.slane %v1108, %v1754
          %v1757 = vunpack.c.l.s4 1414812756
          %v1758 = vunpack.c.0.s8 %v1757
          %v1759 = vlaneseq
          %v1760 = vshrl.u32 %v1759, 7
          %v1761 = vsub.s32 %v1758, %v1760
          %v1762 = vrot.slane %v1108, %v1761
          %v1764 = vunpack.c.l.s4 1987475062
          %v1765 = vunpack.c.0.s8 %v1764
          %v1766 = vlaneseq
          %v1767 = vshrl.u32 %v1766, 7
          %v1768 = vsub.s32 %v1765, %v1767
          %v1769 = vrot.slane %v1108, %v1768
          %v1771 = vunpack.c.l.s4 269488144
          %v1772 = vunpack.c.0.s8 %v1771
          %v1773 = vlaneseq
          %v1774 = vshrl.u32 %v1773, 7
          %v1775 = vsub.s32 %v1772, %v1774
          %v1776 = vrot.slane %v1109, %v1775
          %v1778 = vunpack.c.l.s4 842150450
          %v1779 = vunpack.c.0.s8 %v1778
          %v1780 = vlaneseq
          %v1781 = vshrl.u32 %v1780, 7
          %v1782 = vsub.s32 %v1779, %v1781
          %v1783 = vrot.slane %v1109, %v1782
          %v1785 = vunpack.c.l.s4 1414812756
          %v1786 = vunpack.c.0.s8 %v1785
          %v1787 = vlaneseq
          %v1788 = vshrl.u32 %v1787, 7
          %v1789 = vsub.s32 %v1786, %v1788
          %v1790 = vrot.slane %v1109, %v1789
          %v1792 = vunpack.c.l.s4 1987475062
          %v1793 = vunpack.c.0.s8 %v1792
          %v1794 = vlaneseq
          %v1795 = vshrl.u32 %v1794, 7
          %v1796 = vsub.s32 %v1793, %v1795
          %v1797 = vrot.slane %v1109, %v1796
          %v1799 = vunpack.c.l.s4 269488144
          %v1800 = vunpack.c.0.s8 %v1799
          %v1801 = vlaneseq
          %v1802 = vshrl.u32 %v1801, 7
          %v1803 = vsub.s32 %v1800, %v1802
          %v1804 = vrot.slane %v1110, %v1803
          %v1806 = vunpack.c.l.s4 842150450
          %v1807 = vunpack.c.0.s8 %v1806
          %v1808 = vlaneseq
          %v1809 = vshrl.u32 %v1808, 7
          %v1810 = vsub.s32 %v1807, %v1809
          %v1811 = vrot.slane %v1110, %v1810
          %v1813 = vunpack.c.l.s4 1414812756
          %v1814 = vunpack.c.0.s8 %v1813
          %v1815 = vlaneseq
          %v1816 = vshrl.u32 %v1815, 7
          %v1817 = vsub.s32 %v1814, %v1816
          %v1818 = vrot.slane %v1110, %v1817
          %v1820 = vunpack.c.l.s4 1987475062
          %v1821 = vunpack.c.0.s8 %v1820
          %v1822 = vlaneseq
          %v1823 = vshrl.u32 %v1822, 7
          %v1824 = vsub.s32 %v1821, %v1823
          %v1825 = vrot.slane %v1110, %v1824
          %v1827 = vunpack.c.l.s4 269488144
          %v1828 = vunpack.c.0.s8 %v1827
          %v1829 = vlaneseq
          %v1830 = vshrl.u32 %v1829, 7
          %v1831 = vsub.s32 %v1828, %v1830
          %v1832 = vrot.slane %v1111, %v1831
          %v1834 = vunpack.c.l.s4 842150450
          %v1835 = vunpack.c.0.s8 %v1834
          %v1836 = vlaneseq
          %v1837 = vshrl.u32 %v1836, 7
          %v1838 = vsub.s32 %v1835, %v1837
          %v1839 = vrot.slane %v1111, %v1838
          %v1841 = vunpack.c.l.s4 1414812756
          %v1842 = vunpack.c.0.s8 %v1841
          %v1843 = vlaneseq
          %v1844 = vshrl.u32 %v1843, 7
          %v1845 = vsub.s32 %v1842, %v1844
          %v1846 = vrot.slane %v1111, %v1845
          %v1848 = vunpack.c.l.s4 1987475062
          %v1849 = vunpack.c.0.s8 %v1848
          %v1850 = vlaneseq
          %v1851 = vshrl.u32 %v1850, 7
          %v1852 = vsub.s32 %v1849, %v1851
          %v1853 = vrot.slane %v1111, %v1852
          %v1855 = vunpack.c.l.s4 269488144
          %v1856 = vunpack.c.0.s8 %v1855
          %v1857 = vlaneseq
          %v1858 = vshrl.u32 %v1857, 7
          %v1859 = vsub.s32 %v1856, %v1858
          %v1860 = vrot.slane %v1112, %v1859
          %v1862 = vunpack.c.l.s4 842150450
          %v1863 = vunpack.c.0.s8 %v1862
          %v1864 = vlaneseq
          %v1865 = vshrl.u32 %v1864, 7
          %v1866 = vsub.s32 %v1863, %v1865
          %v1867 = vrot.slane %v1112, %v1866
          %v1869 = vunpack.c.l.s4 1414812756
          %v1870 = vunpack.c.0.s8 %v1869
          %v1871 = vlaneseq
          %v1872 = vshrl.u32 %v1871, 7
          %v1873 = vsub.s32 %v1870, %v1872
          %v1874 = vrot.slane %v1112, %v1873
          %v1876 = vunpack.c.l.s4 1987475062
          %v1877 = vunpack.c.0.s8 %v1876
          %v1878 = vlaneseq
          %v1879 = vshrl.u32 %v1878, 7
          %v1880 = vsub.s32 %v1877, %v1879
          %v1881 = vrot.slane %v1112, %v1880
          %v1883 = vunpack.c.l.s4 269488144
          %v1884 = vunpack.c.0.s8 %v1883
          %v1885 = vlaneseq
          %v1886 = vshrl.u32 %v1885, 7
          %v1887 = vsub.s32 %v1884, %v1886
          %v1888 = vrot.slane %v1113, %v1887
          %v1890 = vunpack.c.l.s4 842150450
          %v1891 = vunpack.c.0.s8 %v1890
          %v1892 = vlaneseq
          %v1893 = vshrl.u32 %v1892, 7
          %v1894 = vsub.s32 %v1891, %v1893
          %v1895 = vrot.slane %v1113, %v1894
          %v1897 = vunpack.c.l.s4 1414812756
          %v1898 = vunpack.c.0.s8 %v1897
          %v1899 = vlaneseq
          %v1900 = vshrl.u32 %v1899, 7
          %v1901 = vsub.s32 %v1898, %v1900
          %v1902 = vrot.slane %v1113, %v1901
          %v1904 = vunpack.c.l.s4 1987475062
          %v1905 = vunpack.c.0.s8 %v1904
          %v1906 = vlaneseq
          %v1907 = vshrl.u32 %v1906, 7
          %v1908 = vsub.s32 %v1905, %v1907
          %v1909 = vrot.slane %v1113, %v1908
          %v1911 = vunpack.c.l.s4 269488144
          %v1912 = vunpack.c.0.s8 %v1911
          %v1913 = vlaneseq
          %v1914 = vshrl.u32 %v1913, 7
          %v1915 = vsub.s32 %v1912, %v1914
          %v1916 = vrot.slane %v1114, %v1915
          %v1918 = vunpack.c.l.s4 842150450
          %v1919 = vunpack.c.0.s8 %v1918
          %v1920 = vlaneseq
          %v1921 = vshrl.u32 %v1920, 7
          %v1922 = vsub.s32 %v1919, %v1921
          %v1923 = vrot.slane %v1114, %v1922
          %v1925 = vunpack.c.l.s4 1414812756
          %v1926 = vunpack.c.0.s8 %v1925
          %v1927 = vlaneseq
          %v1928 = vshrl.u32 %v1927, 7
          %v1929 = vsub.s32 %v1926, %v1928
          %v1930 = vrot.slane %v1114, %v1929
          %v1932 = vunpack.c.l.s4 1987475062
          %v1933 = vunpack.c.0.s8 %v1932
          %v1934 = vlaneseq
          %v1935 = vshrl.u32 %v1934, 7
          %v1936 = vsub.s32 %v1933, %v1935
          %v1937 = vrot.slane %v1114, %v1936
          %v1939 = vunpack.c.l.s4 269488144
          %v1940 = vunpack.c.0.s8 %v1939
          %v1941 = vlaneseq
          %v1942 = vshrl.u32 %v1941, 7
          %v1943 = vsub.s32 %v1940, %v1942
          %v1944 = vrot.slane %v1115, %v1943
          %v1946 = vunpack.c.l.s4 842150450
          %v1947 = vunpack.c.0.s8 %v1946
          %v1948 = vlaneseq
          %v1949 = vshrl.u32 %v1948, 7
          %v1950 = vsub.s32 %v1947, %v1949
          %v1951 = vrot.slane %v1115, %v1950
          %v1953 = vunpack.c.l.s4 1414812756
          %v1954 = vunpack.c.0.s8 %v1953
          %v1955 = vlaneseq
          %v1956 = vshrl.u32 %v1955, 7
          %v1957 = vsub.s32 %v1954, %v1956
          %v1958 = vrot.slane %v1115, %v1957
          %v1960 = vunpack.c.l.s4 1987475062
          %v1961 = vunpack.c.0.s8 %v1960
          %v1962 = vlaneseq
          %v1963 = vshrl.u32 %v1962, 7
          %v1964 = vsub.s32 %v1961, %v1963
          %v1965 = vrot.slane %v1115, %v1964
          %v1967 = vunpack.c.l.s4 269488144
          %v1968 = vunpack.c.0.s8 %v1967
          %v1969 = vlaneseq
          %v1970 = vshrl.u32 %v1969, 7
          %v1971 = vsub.s32 %v1968, %v1970
          %v1972 = vrot.slane %v1116, %v1971
          %v1974 = vunpack.c.l.s4 842150450
          %v1975 = vunpack.c.0.s8 %v1974
          %v1976 = vlaneseq
          %v1977 = vshrl.u32 %v1976, 7
          %v1978 = vsub.s32 %v1975, %v1977
          %v1979 = vrot.slane %v1116, %v1978
          %v1981 = vunpack.c.l.s4 1414812756
          %v1982 = vunpack.c.0.s8 %v1981
          %v1983 = vlaneseq
          %v1984 = vshrl.u32 %v1983, 7
          %v1985 = vsub.s32 %v1982, %v1984
          %v1986 = vrot.slane %v1116, %v1985
          %v1988 = vunpack.c.l.s4 1987475062
          %v1989 = vunpack.c.0.s8 %v1988
          %v1990 = vlaneseq
          %v1991 = vshrl.u32 %v1990, 7
          %v1992 = vsub.s32 %v1989, %v1991
          %v1993 = vrot.slane %v1116, %v1992
          %v1995 = vunpack.c.l.s4 269488144
          %v1996 = vunpack.c.0.s8 %v1995
          %v1997 = vlaneseq
          %v1998 = vshrl.u32 %v1997, 7
          %v1999 = vsub.s32 %v1996, %v1998
          %v2000 = vrot.slane %v1117, %v1999
          %v2002 = vunpack.c.l.s4 842150450
          %v2003 = vunpack.c.0.s8 %v2002
          %v2004 = vlaneseq
          %v2005 = vshrl.u32 %v2004, 7
          %v2006 = vsub.s32 %v2003, %v2005
          %v2007 = vrot.slane %v1117, %v2006
          %v2009 = vunpack.c.l.s4 1414812756
          %v2010 = vunpack.c.0.s8 %v2009
          %v2011 = vlaneseq
          %v2012 = vshrl.u32 %v2011, 7
          %v2013 = vsub.s32 %v2010, %v2012
          %v2014 = vrot.slane %v1117, %v2013
          %v2016 = vunpack.c.l.s4 1987475062
          %v2017 = vunpack.c.0.s8 %v2016
          %v2018 = vlaneseq
          %v2019 = vshrl.u32 %v2018, 7
          %v2020 = vsub.s32 %v2017, %v2019
          %v2021 = vrot.slane %v1117, %v2020
          %v2023 = vunpack.c.l.s4 269488144
          %v2024 = vunpack.c.0.s8 %v2023
          %v2025 = vlaneseq
          %v2026 = vshrl.u32 %v2025, 7
          %v2027 = vsub.s32 %v2024, %v2026
          %v2028 = vrot.slane %v1118, %v2027
          %v2030 = vunpack.c.l.s4 842150450
          %v2031 = vunpack.c.0.s8 %v2030
          %v2032 = vlaneseq
          %v2033 = vshrl.u32 %v2032, 7
          %v2034 = vsub.s32 %v2031, %v2033
          %v2035 = vrot.slane %v1118, %v2034
          %v2037 = vunpack.c.l.s4 1414812756
          %v2038 = vunpack.c.0.s8 %v2037
          %v2039 = vlaneseq
          %v2040 = vshrl.u32 %v2039, 7
          %v2041 = vsub.s32 %v2038, %v2040
          %v2042 = vrot.slane %v1118, %v2041
          %v2044 = vunpack.c.l.s4 1987475062
          %v2045 = vunpack.c.0.s8 %v2044
          %v2046 = vlaneseq
          %v2047 = vshrl.u32 %v2046, 7
          %v2048 = vsub.s32 %v2045, %v2047
          %v2049 = vrot.slane %v1118, %v2048
          %v2051 = vunpack.c.l.s4 269488144
          %v2052 = vunpack.c.0.s8 %v2051
          %v2053 = vlaneseq
          %v2054 = vshrl.u32 %v2053, 7
          %v2055 = vsub.s32 %v2052, %v2054
          %v2056 = vrot.slane %v1119, %v2055
          %v2058 = vunpack.c.l.s4 842150450
          %v2059 = vunpack.c.0.s8 %v2058
          %v2060 = vlaneseq
          %v2061 = vshrl.u32 %v2060, 7
          %v2062 = vsub.s32 %v2059, %v2061
          %v2063 = vrot.slane %v1119, %v2062
          %v2065 = vunpack.c.l.s4 1414812756
          %v2066 = vunpack.c.0.s8 %v2065
          %v2067 = vlaneseq
          %v2068 = vshrl.u32 %v2067, 7
          %v2069 = vsub.s32 %v2066, %v2068
          %v2070 = vrot.slane %v1119, %v2069
          %v2072 = vunpack.c.l.s4 1987475062
          %v2073 = vunpack.c.0.s8 %v2072
          %v2074 = vlaneseq
          %v2075 = vshrl.u32 %v2074, 7
          %v2076 = vsub.s32 %v2073, %v2075
          %v2077 = vrot.slane %v1119, %v2076
          %v2079 = vunpack.c.l.s4 269488144
          %v2080 = vunpack.c.0.s8 %v2079
          %v2081 = vlaneseq
          %v2082 = vshrl.u32 %v2081, 7
          %v2083 = vsub.s32 %v2080, %v2082
          %v2084 = vrot.slane %v1120, %v2083
          %v2086 = vunpack.c.l.s4 842150450
          %v2087 = vunpack.c.0.s8 %v2086
          %v2088 = vlaneseq
          %v2089 = vshrl.u32 %v2088, 7
          %v2090 = vsub.s32 %v2087, %v2089
          %v2091 = vrot.slane %v1120, %v2090
          %v2093 = vunpack.c.l.s4 1414812756
          %v2094 = vunpack.c.0.s8 %v2093
          %v2095 = vlaneseq
          %v2096 = vshrl.u32 %v2095, 7
          %v2097 = vsub.s32 %v2094, %v2096
          %v2098 = vrot.slane %v1120, %v2097
          %v2100 = vunpack.c.l.s4 1987475062
          %v2101 = vunpack.c.0.s8 %v2100
          %v2102 = vlaneseq
          %v2103 = vshrl.u32 %v2102, 7
          %v2104 = vsub.s32 %v2101, %v2103
          %v2105 = vrot.slane %v1120, %v2104
          %v2107 = vunpack.c.l.s4 269488144
          %v2108 = vunpack.c.0.s8 %v2107
          %v2109 = vlaneseq
          %v2110 = vshrl.u32 %v2109, 7
          %v2111 = vsub.s32 %v2108, %v2110
          %v2112 = vrot.slane %v1121, %v2111
          %v2114 = vunpack.c.l.s4 842150450
          %v2115 = vunpack.c.0.s8 %v2114
          %v2116 = vlaneseq
          %v2117 = vshrl.u32 %v2116, 7
          %v2118 = vsub.s32 %v2115, %v2117
          %v2119 = vrot.slane %v1121, %v2118
          %v2121 = vunpack.c.l.s4 1414812756
          %v2122 = vunpack.c.0.s8 %v2121
          %v2123 = vlaneseq
          %v2124 = vshrl.u32 %v2123, 7
          %v2125 = vsub.s32 %v2122, %v2124
          %v2126 = vrot.slane %v1121, %v2125
          %v2128 = vunpack.c.l.s4 1987475062
          %v2129 = vunpack.c.0.s8 %v2128
          %v2130 = vlaneseq
          %v2131 = vshrl.u32 %v2130, 7
          %v2132 = vsub.s32 %v2129, %v2131
          %v2133 = vrot.slane %v1121, %v2132
          %v2135 = vunpack.c.l.s4 269488144
          %v2136 = vunpack.c.0.s8 %v2135
          %v2137 = vlaneseq
          %v2138 = vshrl.u32 %v2137, 7
          %v2139 = vsub.s32 %v2136, %v2138
          %v2140 = vrot.slane %v1122, %v2139
          %v2142 = vunpack.c.l.s4 842150450
          %v2143 = vunpack.c.0.s8 %v2142
          %v2144 = vlaneseq
          %v2145 = vshrl.u32 %v2144, 7
          %v2146 = vsub.s32 %v2143, %v2145
          %v2147 = vrot.slane %v1122, %v2146
          %v2149 = vunpack.c.l.s4 1414812756
          %v2150 = vunpack.c.0.s8 %v2149
          %v2151 = vlaneseq
          %v2152 = vshrl.u32 %v2151, 7
          %v2153 = vsub.s32 %v2150, %v2152
          %v2154 = vrot.slane %v1122, %v2153
          %v2156 = vunpack.c.l.s4 1987475062
          %v2157 = vunpack.c.0.s8 %v2156
          %v2158 = vlaneseq
          %v2159 = vshrl.u32 %v2158, 7
          %v2160 = vsub.s32 %v2157, %v2159
          %v2161 = vrot.slane %v1122, %v2160
          %v2163 = vunpack.c.l.s4 269488144
          %v2164 = vunpack.c.0.s8 %v2163
          %v2165 = vlaneseq
          %v2166 = vshrl.u32 %v2165, 7
          %v2167 = vsub.s32 %v2164, %v2166
          %v2168 = vrot.slane %v1123, %v2167
          %v2170 = vunpack.c.l.s4 842150450
          %v2171 = vunpack.c.0.s8 %v2170
          %v2172 = vlaneseq
          %v2173 = vshrl.u32 %v2172, 7
          %v2174 = vsub.s32 %v2171, %v2173
          %v2175 = vrot.slane %v1123, %v2174
          %v2177 = vunpack.c.l.s4 1414812756
          %v2178 = vunpack.c.0.s8 %v2177
          %v2179 = vlaneseq
          %v2180 = vshrl.u32 %v2179, 7
          %v2181 = vsub.s32 %v2178, %v2180
          %v2182 = vrot.slane %v1123, %v2181
          %v2184 = vunpack.c.l.s4 1987475062
          %v2185 = vunpack.c.0.s8 %v2184
          %v2186 = vlaneseq
          %v2187 = vshrl.u32 %v2186, 7
          %v2188 = vsub.s32 %v2185, %v2187
          %v2189 = vrot.slane %v1123, %v2188
          %v2191 = vunpack.c.l.s4 269488144
          %v2192 = vunpack.c.0.s8 %v2191
          %v2193 = vlaneseq
          %v2194 = vshrl.u32 %v2193, 7
          %v2195 = vsub.s32 %v2192, %v2194
          %v2196 = vrot.slane %v1124, %v2195
          %v2198 = vunpack.c.l.s4 842150450
          %v2199 = vunpack.c.0.s8 %v2198
          %v2200 = vlaneseq
          %v2201 = vshrl.u32 %v2200, 7
          %v2202 = vsub.s32 %v2199, %v2201
          %v2203 = vrot.slane %v1124, %v2202
          %v2205 = vunpack.c.l.s4 1414812756
          %v2206 = vunpack.c.0.s8 %v2205
          %v2207 = vlaneseq
          %v2208 = vshrl.u32 %v2207, 7
          %v2209 = vsub.s32 %v2206, %v2208
          %v2210 = vrot.slane %v1124, %v2209
          %v2212 = vunpack.c.l.s4 1987475062
          %v2213 = vunpack.c.0.s8 %v2212
          %v2214 = vlaneseq
          %v2215 = vshrl.u32 %v2214, 7
          %v2216 = vsub.s32 %v2213, %v2215
          %v2217 = vrot.slane %v1124, %v2216
          %v2219 = vunpack.c.l.s4 269488144
          %v2220 = vunpack.c.0.s8 %v2219
          %v2221 = vlaneseq
          %v2222 = vshrl.u32 %v2221, 7
          %v2223 = vsub.s32 %v2220, %v2222
          %v2224 = vrot.slane %v1125, %v2223
          %v2226 = vunpack.c.l.s4 842150450
          %v2227 = vunpack.c.0.s8 %v2226
          %v2228 = vlaneseq
          %v2229 = vshrl.u32 %v2228, 7
          %v2230 = vsub.s32 %v2227, %v2229
          %v2231 = vrot.slane %v1125, %v2230
          %v2233 = vunpack.c.l.s4 1414812756
          %v2234 = vunpack.c.0.s8 %v2233
          %v2235 = vlaneseq
          %v2236 = vshrl.u32 %v2235, 7
          %v2237 = vsub.s32 %v2234, %v2236
          %v2238 = vrot.slane %v1125, %v2237
          %v2240 = vunpack.c.l.s4 1987475062
          %v2241 = vunpack.c.0.s8 %v2240
          %v2242 = vlaneseq
          %v2243 = vshrl.u32 %v2242, 7
          %v2244 = vsub.s32 %v2241, %v2243
          %v2245 = vrot.slane %v1125, %v2244
          %v2247 = vunpack.c.l.s4 269488144
          %v2248 = vunpack.c.0.s8 %v2247
          %v2249 = vlaneseq
          %v2250 = vshrl.u32 %v2249, 7
          %v2251 = vsub.s32 %v2248, %v2250
          %v2252 = vrot.slane %v1126, %v2251
          %v2254 = vunpack.c.l.s4 842150450
          %v2255 = vunpack.c.0.s8 %v2254
          %v2256 = vlaneseq
          %v2257 = vshrl.u32 %v2256, 7
          %v2258 = vsub.s32 %v2255, %v2257
          %v2259 = vrot.slane %v1126, %v2258
          %v2261 = vunpack.c.l.s4 1414812756
          %v2262 = vunpack.c.0.s8 %v2261
          %v2263 = vlaneseq
          %v2264 = vshrl.u32 %v2263, 7
          %v2265 = vsub.s32 %v2262, %v2264
          %v2266 = vrot.slane %v1126, %v2265
          %v2268 = vunpack.c.l.s4 1987475062
          %v2269 = vunpack.c.0.s8 %v2268
          %v2270 = vlaneseq
          %v2271 = vshrl.u32 %v2270, 7
          %v2272 = vsub.s32 %v2269, %v2271
          %v2273 = vrot.slane %v1126, %v2272
          %v2275 = vunpack.c.l.s4 269488144
          %v2276 = vunpack.c.0.s8 %v2275
          %v2277 = vlaneseq
          %v2278 = vshrl.u32 %v2277, 7
          %v2279 = vsub.s32 %v2276, %v2278
          %v2280 = vrot.slane %v1127, %v2279
          %v2282 = vunpack.c.l.s4 842150450
          %v2283 = vunpack.c.0.s8 %v2282
          %v2284 = vlaneseq
          %v2285 = vshrl.u32 %v2284, 7
          %v2286 = vsub.s32 %v2283, %v2285
          %v2287 = vrot.slane %v1127, %v2286
          %v2289 = vunpack.c.l.s4 1414812756
          %v2290 = vunpack.c.0.s8 %v2289
          %v2291 = vlaneseq
          %v2292 = vshrl.u32 %v2291, 7
          %v2293 = vsub.s32 %v2290, %v2292
          %v2294 = vrot.slane %v1127, %v2293
          %v2296 = vunpack.c.l.s4 1987475062
          %v2297 = vunpack.c.0.s8 %v2296
          %v2298 = vlaneseq
          %v2299 = vshrl.u32 %v2298, 7
          %v2300 = vsub.s32 %v2297, %v2299
          %v2301 = vrot.slane %v1127, %v2300
          %v2303 = vunpack.c.l.s4 269488144
          %v2304 = vunpack.c.0.s8 %v2303
          %v2305 = vlaneseq
          %v2306 = vshrl.u32 %v2305, 7
          %v2307 = vsub.s32 %v2304, %v2306
          %v2308 = vrot.slane %v1128, %v2307
          %v2310 = vunpack.c.l.s4 842150450
          %v2311 = vunpack.c.0.s8 %v2310
          %v2312 = vlaneseq
          %v2313 = vshrl.u32 %v2312, 7
          %v2314 = vsub.s32 %v2311, %v2313
          %v2315 = vrot.slane %v1128, %v2314
          %v2317 = vunpack.c.l.s4 1414812756
          %v2318 = vunpack.c.0.s8 %v2317
          %v2319 = vlaneseq
          %v2320 = vshrl.u32 %v2319, 7
          %v2321 = vsub.s32 %v2318, %v2320
          %v2322 = vrot.slane %v1128, %v2321
          %v2324 = vunpack.c.l.s4 1987475062
          %v2325 = vunpack.c.0.s8 %v2324
          %v2326 = vlaneseq
          %v2327 = vshrl.u32 %v2326, 7
          %v2328 = vsub.s32 %v2325, %v2327
          %v2329 = vrot.slane %v1128, %v2328
          %v2331 = vunpack.c.l.s4 269488144
          %v2332 = vunpack.c.0.s8 %v2331
          %v2333 = vlaneseq
          %v2334 = vshrl.u32 %v2333, 7
          %v2335 = vsub.s32 %v2332, %v2334
          %v2336 = vrot.slane %v1129, %v2335
          %v2338 = vunpack.c.l.s4 842150450
          %v2339 = vunpack.c.0.s8 %v2338
          %v2340 = vlaneseq
          %v2341 = vshrl.u32 %v2340, 7
          %v2342 = vsub.s32 %v2339, %v2341
          %v2343 = vrot.slane %v1129, %v2342
          %v2345 = vunpack.c.l.s4 1414812756
          %v2346 = vunpack.c.0.s8 %v2345
          %v2347 = vlaneseq
          %v2348 = vshrl.u32 %v2347, 7
          %v2349 = vsub.s32 %v2346, %v2348
          %v2350 = vrot.slane %v1129, %v2349
          %v2352 = vunpack.c.l.s4 1987475062
          %v2353 = vunpack.c.0.s8 %v2352
          %v2354 = vlaneseq
          %v2355 = vshrl.u32 %v2354, 7
          %v2356 = vsub.s32 %v2353, %v2355
          %v2357 = vrot.slane %v1129, %v2356
          %v2359 = vunpack.c.l.s4 269488144
          %v2360 = vunpack.c.0.s8 %v2359
          %v2361 = vlaneseq
          %v2362 = vshrl.u32 %v2361, 7
          %v2363 = vsub.s32 %v2360, %v2362
          %v2364 = vrot.slane %v1130, %v2363
          %v2366 = vunpack.c.l.s4 842150450
          %v2367 = vunpack.c.0.s8 %v2366
          %v2368 = vlaneseq
          %v2369 = vshrl.u32 %v2368, 7
          %v2370 = vsub.s32 %v2367, %v2369
          %v2371 = vrot.slane %v1130, %v2370
          %v2373 = vunpack.c.l.s4 1414812756
          %v2374 = vunpack.c.0.s8 %v2373
          %v2375 = vlaneseq
          %v2376 = vshrl.u32 %v2375, 7
          %v2377 = vsub.s32 %v2374, %v2376
          %v2378 = vrot.slane %v1130, %v2377
          %v2380 = vunpack.c.l.s4 1987475062
          %v2381 = vunpack.c.0.s8 %v2380
          %v2382 = vlaneseq
          %v2383 = vshrl.u32 %v2382, 7
          %v2384 = vsub.s32 %v2381, %v2383
          %v2385 = vrot.slane %v1130, %v2384
          %v2387 = vunpack.c.l.s4 269488144
          %v2388 = vunpack.c.0.s8 %v2387
          %v2389 = vlaneseq
          %v2390 = vshrl.u32 %v2389, 7
          %v2391 = vsub.s32 %v2388, %v2390
          %v2392 = vrot.slane %v1131, %v2391
          %v2394 = vunpack.c.l.s4 842150450
          %v2395 = vunpack.c.0.s8 %v2394
          %v2396 = vlaneseq
          %v2397 = vshrl.u32 %v2396, 7
          %v2398 = vsub.s32 %v2395, %v2397
          %v2399 = vrot.slane %v1131, %v2398
          %v2401 = vunpack.c.l.s4 1414812756
          %v2402 = vunpack.c.0.s8 %v2401
          %v2403 = vlaneseq
          %v2404 = vshrl.u32 %v2403, 7
          %v2405 = vsub.s32 %v2402, %v2404
          %v2406 = vrot.slane %v1131, %v2405
          %v2408 = vunpack.c.l.s4 1987475062
          %v2409 = vunpack.c.0.s8 %v2408
          %v2410 = vlaneseq
          %v2411 = vshrl.u32 %v2410, 7
          %v2412 = vsub.s32 %v2409, %v2411
          %v2413 = vrot.slane %v1131, %v2412
          %v2415 = vunpack.c.l.s4 269488144
          %v2416 = vunpack.c.0.s8 %v2415
          %v2417 = vlaneseq
          %v2418 = vshrl.u32 %v2417, 7
          %v2419 = vsub.s32 %v2416, %v2418
          %v2420 = vrot.slane %v1132, %v2419
          %v2422 = vunpack.c.l.s4 842150450
          %v2423 = vunpack.c.0.s8 %v2422
          %v2424 = vlaneseq
          %v2425 = vshrl.u32 %v2424, 7
          %v2426 = vsub.s32 %v2423, %v2425
          %v2427 = vrot.slane %v1132, %v2426
          %v2429 = vunpack.c.l.s4 1414812756
          %v2430 = vunpack.c.0.s8 %v2429
          %v2431 = vlaneseq
          %v2432 = vshrl.u32 %v2431, 7
          %v2433 = vsub.s32 %v2430, %v2432
          %v2434 = vrot.slane %v1132, %v2433
          %v2436 = vunpack.c.l.s4 1987475062
          %v2437 = vunpack.c.0.s8 %v2436
          %v2438 = vlaneseq
          %v2439 = vshrl.u32 %v2438, 7
          %v2440 = vsub.s32 %v2437, %v2439
          %v2441 = vrot.slane %v1132, %v2440
          %v2443 = vunpack.c.l.s4 269488144
          %v2444 = vunpack.c.0.s8 %v2443
          %v2445 = vlaneseq
          %v2446 = vshrl.u32 %v2445, 7
          %v2447 = vsub.s32 %v2444, %v2446
          %v2448 = vrot.slane %v1133, %v2447
          %v2450 = vunpack.c.l.s4 842150450
          %v2451 = vunpack.c.0.s8 %v2450
          %v2452 = vlaneseq
          %v2453 = vshrl.u32 %v2452, 7
          %v2454 = vsub.s32 %v2451, %v2453
          %v2455 = vrot.slane %v1133, %v2454
          %v2457 = vunpack.c.l.s4 1414812756
          %v2458 = vunpack.c.0.s8 %v2457
          %v2459 = vlaneseq
          %v2460 = vshrl.u32 %v2459, 7
          %v2461 = vsub.s32 %v2458, %v2460
          %v2462 = vrot.slane %v1133, %v2461
          %v2464 = vunpack.c.l.s4 1987475062
          %v2465 = vunpack.c.0.s8 %v2464
          %v2466 = vlaneseq
          %v2467 = vshrl.u32 %v2466, 7
          %v2468 = vsub.s32 %v2465, %v2467
          %v2469 = vrot.slane %v1133, %v2468
          %v2471 = vunpack.c.l.s4 269488144
          %v2472 = vunpack.c.0.s8 %v2471
          %v2473 = vlaneseq
          %v2474 = vshrl.u32 %v2473, 7
          %v2475 = vsub.s32 %v2472, %v2474
          %v2476 = vrot.slane %v1134, %v2475
          %v2478 = vunpack.c.l.s4 842150450
          %v2479 = vunpack.c.0.s8 %v2478
          %v2480 = vlaneseq
          %v2481 = vshrl.u32 %v2480, 7
          %v2482 = vsub.s32 %v2479, %v2481
          %v2483 = vrot.slane %v1134, %v2482
          %v2485 = vunpack.c.l.s4 1414812756
          %v2486 = vunpack.c.0.s8 %v2485
          %v2487 = vlaneseq
          %v2488 = vshrl.u32 %v2487, 7
          %v2489 = vsub.s32 %v2486, %v2488
          %v2490 = vrot.slane %v1134, %v2489
          %v2492 = vunpack.c.l.s4 1987475062
          %v2493 = vunpack.c.0.s8 %v2492
          %v2494 = vlaneseq
          %v2495 = vshrl.u32 %v2494, 7
          %v2496 = vsub.s32 %v2493, %v2495
          %v2497 = vrot.slane %v1134, %v2496
          %v2499 = vunpack.c.l.s4 269488144
          %v2500 = vunpack.c.0.s8 %v2499
          %v2501 = vlaneseq
          %v2502 = vshrl.u32 %v2501, 7
          %v2503 = vsub.s32 %v2500, %v2502
          %v2504 = vrot.slane %v1135, %v2503
          %v2506 = vunpack.c.l.s4 842150450
          %v2507 = vunpack.c.0.s8 %v2506
          %v2508 = vlaneseq
          %v2509 = vshrl.u32 %v2508, 7
          %v2510 = vsub.s32 %v2507, %v2509
          %v2511 = vrot.slane %v1135, %v2510
          %v2513 = vunpack.c.l.s4 1414812756
          %v2514 = vunpack.c.0.s8 %v2513
          %v2515 = vlaneseq
          %v2516 = vshrl.u32 %v2515, 7
          %v2517 = vsub.s32 %v2514, %v2516
          %v2518 = vrot.slane %v1135, %v2517
          %v2520 = vunpack.c.l.s4 1987475062
          %v2521 = vunpack.c.0.s8 %v2520
          %v2522 = vlaneseq
          %v2523 = vshrl.u32 %v2522, 7
          %v2524 = vsub.s32 %v2521, %v2523
          %v2525 = vrot.slane %v1135, %v2524
          %v2527 = vunpack.c.l.s4 269488144
          %v2528 = vunpack.c.0.s8 %v2527
          %v2529 = vlaneseq
          %v2530 = vshrl.u32 %v2529, 7
          %v2531 = vsub.s32 %v2528, %v2530
          %v2532 = vrot.slane %v1136, %v2531
          %v2534 = vunpack.c.l.s4 842150450
          %v2535 = vunpack.c.0.s8 %v2534
          %v2536 = vlaneseq
          %v2537 = vshrl.u32 %v2536, 7
          %v2538 = vsub.s32 %v2535, %v2537
          %v2539 = vrot.slane %v1136, %v2538
          %v2541 = vunpack.c.l.s4 1414812756
          %v2542 = vunpack.c.0.s8 %v2541
          %v2543 = vlaneseq
          %v2544 = vshrl.u32 %v2543, 7
          %v2545 = vsub.s32 %v2542, %v2544
          %v2546 = vrot.slane %v1136, %v2545
          %v2548 = vunpack.c.l.s4 1987475062
          %v2549 = vunpack.c.0.s8 %v2548
          %v2550 = vlaneseq
          %v2551 = vshrl.u32 %v2550, 7
          %v2552 = vsub.s32 %v2549, %v2551
          %v2553 = vrot.slane %v1136, %v2552
          %v2555 = vunpack.c.l.s4 269488144
          %v2556 = vunpack.c.0.s8 %v2555
          %v2557 = vlaneseq
          %v2558 = vshrl.u32 %v2557, 7
          %v2559 = vsub.s32 %v2556, %v2558
          %v2560 = vrot.slane %v1137, %v2559
          %v2562 = vunpack.c.l.s4 842150450
          %v2563 = vunpack.c.0.s8 %v2562
          %v2564 = vlaneseq
          %v2565 = vshrl.u32 %v2564, 7
          %v2566 = vsub.s32 %v2563, %v2565
          %v2567 = vrot.slane %v1137, %v2566
          %v2569 = vunpack.c.l.s4 1414812756
          %v2570 = vunpack.c.0.s8 %v2569
          %v2571 = vlaneseq
          %v2572 = vshrl.u32 %v2571, 7
          %v2573 = vsub.s32 %v2570, %v2572
          %v2574 = vrot.slane %v1137, %v2573
          %v2576 = vunpack.c.l.s4 1987475062
          %v2577 = vunpack.c.0.s8 %v2576
          %v2578 = vlaneseq
          %v2579 = vshrl.u32 %v2578, 7
          %v2580 = vsub.s32 %v2577, %v2579
          %v2581 = vrot.slane %v1137, %v2580
          %v2583 = vunpack.c.l.s4 269488144
          %v2584 = vunpack.c.0.s8 %v2583
          %v2585 = vlaneseq
          %v2586 = vshrl.u32 %v2585, 7
          %v2587 = vsub.s32 %v2584, %v2586
          %v2588 = vrot.slane %v1138, %v2587
          %v2590 = vunpack.c.l.s4 842150450
          %v2591 = vunpack.c.0.s8 %v2590
          %v2592 = vlaneseq
          %v2593 = vshrl.u32 %v2592, 7
          %v2594 = vsub.s32 %v2591, %v2593
          %v2595 = vrot.slane %v1138, %v2594
          %v2597 = vunpack.c.l.s4 1414812756
          %v2598 = vunpack.c.0.s8 %v2597
          %v2599 = vlaneseq
          %v2600 = vshrl.u32 %v2599, 7
          %v2601 = vsub.s32 %v2598, %v2600
          %v2602 = vrot.slane %v1138, %v2601
          %v2604 = vunpack.c.l.s4 1987475062
          %v2605 = vunpack.c.0.s8 %v2604
          %v2606 = vlaneseq
          %v2607 = vshrl.u32 %v2606, 7
          %v2608 = vsub.s32 %v2605, %v2607
          %v2609 = vrot.slane %v1138, %v2608
          %v2611 = vunpack.c.l.s4 269488144
          %v2612 = vunpack.c.0.s8 %v2611
          %v2613 = vlaneseq
          %v2614 = vshrl.u32 %v2613, 7
          %v2615 = vsub.s32 %v2612, %v2614
          %v2616 = vrot.slane %v1139, %v2615
          %v2618 = vunpack.c.l.s4 842150450
          %v2619 = vunpack.c.0.s8 %v2618
          %v2620 = vlaneseq
          %v2621 = vshrl.u32 %v2620, 7
          %v2622 = vsub.s32 %v2619, %v2621
          %v2623 = vrot.slane %v1139, %v2622
          %v2625 = vunpack.c.l.s4 1414812756
          %v2626 = vunpack.c.0.s8 %v2625
          %v2627 = vlaneseq
          %v2628 = vshrl.u32 %v2627, 7
          %v2629 = vsub.s32 %v2626, %v2628
          %v2630 = vrot.slane %v1139, %v2629
          %v2632 = vunpack.c.l.s4 1987475062
          %v2633 = vunpack.c.0.s8 %v2632
          %v2634 = vlaneseq
          %v2635 = vshrl.u32 %v2634, 7
          %v2636 = vsub.s32 %v2633, %v2635
          %v2637 = vrot.slane %v1139, %v2636
          %v2639 = vunpack.c.l.s4 269488144
          %v2640 = vunpack.c.0.s8 %v2639
          %v2641 = vlaneseq
          %v2642 = vshrl.u32 %v2641, 7
          %v2643 = vsub.s32 %v2640, %v2642
          %v2644 = vrot.slane %v1140, %v2643
          %v2646 = vunpack.c.l.s4 842150450
          %v2647 = vunpack.c.0.s8 %v2646
          %v2648 = vlaneseq
          %v2649 = vshrl.u32 %v2648, 7
          %v2650 = vsub.s32 %v2647, %v2649
          %v2651 = vrot.slane %v1140, %v2650
          %v2653 = vunpack.c.l.s4 1414812756
          %v2654 = vunpack.c.0.s8 %v2653
          %v2655 = vlaneseq
          %v2656 = vshrl.u32 %v2655, 7
          %v2657 = vsub.s32 %v2654, %v2656
          %v2658 = vrot.slane %v1140, %v2657
          %v2660 = vunpack.c.l.s4 1987475062
          %v2661 = vunpack.c.0.s8 %v2660
          %v2662 = vlaneseq
          %v2663 = vshrl.u32 %v2662, 7
          %v2664 = vsub.s32 %v2661, %v2663
          %v2665 = vrot.slane %v1140, %v2664
          %v2667 = vunpack.c.l.s4 269488144
          %v2668 = vunpack.c.0.s8 %v2667
          %v2669 = vlaneseq
          %v2670 = vshrl.u32 %v2669, 7
          %v2671 = vsub.s32 %v2668, %v2670
          %v2672 = vrot.slane %v1141, %v2671
          %v2674 = vunpack.c.l.s4 842150450
          %v2675 = vunpack.c.0.s8 %v2674
          %v2676 = vlaneseq
          %v2677 = vshrl.u32 %v2676, 7
          %v2678 = vsub.s32 %v2675, %v2677
          %v2679 = vrot.slane %v1141, %v2678
          %v2681 = vunpack.c.l.s4 1414812756
          %v2682 = vunpack.c.0.s8 %v2681
          %v2683 = vlaneseq
          %v2684 = vshrl.u32 %v2683, 7
          %v2685 = vsub.s32 %v2682, %v2684
          %v2686 = vrot.slane %v1141, %v2685
          %v2688 = vunpack.c.l.s4 1987475062
          %v2689 = vunpack.c.0.s8 %v2688
          %v2690 = vlaneseq
          %v2691 = vshrl.u32 %v2690, 7
          %v2692 = vsub.s32 %v2689, %v2691
          %v2693 = vrot.slane %v1141, %v2692
          %v2695 = vunpack.c.l.s4 269488144
          %v2696 = vunpack.c.0.s8 %v2695
          %v2697 = vlaneseq
          %v2698 = vshrl.u32 %v2697, 7
          %v2699 = vsub.s32 %v2696, %v2698
          %v2700 = vrot.slane %v1142, %v2699
          %v2702 = vunpack.c.l.s4 842150450
          %v2703 = vunpack.c.0.s8 %v2702
          %v2704 = vlaneseq
          %v2705 = vshrl.u32 %v2704, 7
          %v2706 = vsub.s32 %v2703, %v2705
          %v2707 = vrot.slane %v1142, %v2706
          %v2709 = vunpack.c.l.s4 1414812756
          %v2710 = vunpack.c.0.s8 %v2709
          %v2711 = vlaneseq
          %v2712 = vshrl.u32 %v2711, 7
          %v2713 = vsub.s32 %v2710, %v2712
          %v2714 = vrot.slane %v1142, %v2713
          %v2716 = vunpack.c.l.s4 1987475062
          %v2717 = vunpack.c.0.s8 %v2716
          %v2718 = vlaneseq
          %v2719 = vshrl.u32 %v2718, 7
          %v2720 = vsub.s32 %v2717, %v2719
          %v2721 = vrot.slane %v1142, %v2720
          %v2723 = vunpack.c.l.s4 269488144
          %v2724 = vunpack.c.0.s8 %v2723
          %v2725 = vlaneseq
          %v2726 = vshrl.u32 %v2725, 7
          %v2727 = vsub.s32 %v2724, %v2726
          %v2728 = vrot.slane %v1143, %v2727
          %v2730 = vunpack.c.l.s4 842150450
          %v2731 = vunpack.c.0.s8 %v2730
          %v2732 = vlaneseq
          %v2733 = vshrl.u32 %v2732, 7
          %v2734 = vsub.s32 %v2731, %v2733
          %v2735 = vrot.slane %v1143, %v2734
          %v2737 = vunpack.c.l.s4 1414812756
          %v2738 = vunpack.c.0.s8 %v2737
          %v2739 = vlaneseq
          %v2740 = vshrl.u32 %v2739, 7
          %v2741 = vsub.s32 %v2738, %v2740
          %v2742 = vrot.slane %v1143, %v2741
          %v2744 = vunpack.c.l.s4 1987475062
          %v2745 = vunpack.c.0.s8 %v2744
          %v2746 = vlaneseq
          %v2747 = vshrl.u32 %v2746, 7
          %v2748 = vsub.s32 %v2745, %v2747
          %v2749 = vrot.slane %v1143, %v2748
          %v2751 = vunpack.c.l.s4 269488144
          %v2752 = vunpack.c.0.s8 %v2751
          %v2753 = vlaneseq
          %v2754 = vshrl.u32 %v2753, 7
          %v2755 = vsub.s32 %v2752, %v2754
          %v2756 = vrot.slane %v1144, %v2755
          %v2758 = vunpack.c.l.s4 842150450
          %v2759 = vunpack.c.0.s8 %v2758
          %v2760 = vlaneseq
          %v2761 = vshrl.u32 %v2760, 7
          %v2762 = vsub.s32 %v2759, %v2761
          %v2763 = vrot.slane %v1144, %v2762
          %v2765 = vunpack.c.l.s4 1414812756
          %v2766 = vunpack.c.0.s8 %v2765
          %v2767 = vlaneseq
          %v2768 = vshrl.u32 %v2767, 7
          %v2769 = vsub.s32 %v2766, %v2768
          %v2770 = vrot.slane %v1144, %v2769
          %v2772 = vunpack.c.l.s4 1987475062
          %v2773 = vunpack.c.0.s8 %v2772
          %v2774 = vlaneseq
          %v2775 = vshrl.u32 %v2774, 7
          %v2776 = vsub.s32 %v2773, %v2775
          %v2777 = vrot.slane %v1144, %v2776
          %v2779 = vunpack.c.l.s4 269488144
          %v2780 = vunpack.c.0.s8 %v2779
          %v2781 = vlaneseq
          %v2782 = vshrl.u32 %v2781, 7
          %v2783 = vsub.s32 %v2780, %v2782
          %v2784 = vrot.slane %v1145, %v2783
          %v2786 = vunpack.c.l.s4 842150450
          %v2787 = vunpack.c.0.s8 %v2786
          %v2788 = vlaneseq
          %v2789 = vshrl.u32 %v2788, 7
          %v2790 = vsub.s32 %v2787, %v2789
          %v2791 = vrot.slane %v1145, %v2790
          %v2793 = vunpack.c.l.s4 1414812756
          %v2794 = vunpack.c.0.s8 %v2793
          %v2795 = vlaneseq
          %v2796 = vshrl.u32 %v2795, 7
          %v2797 = vsub.s32 %v2794, %v2796
          %v2798 = vrot.slane %v1145, %v2797
          %v2800 = vunpack.c.l.s4 1987475062
          %v2801 = vunpack.c.0.s8 %v2800
          %v2802 = vlaneseq
          %v2803 = vshrl.u32 %v2802, 7
          %v2804 = vsub.s32 %v2801, %v2803
          %v2805 = vrot.slane %v1145, %v2804
          %v2807 = vunpack.c.l.s4 269488144
          %v2808 = vunpack.c.0.s8 %v2807
          %v2809 = vlaneseq
          %v2810 = vshrl.u32 %v2809, 7
          %v2811 = vsub.s32 %v2808, %v2810
          %v2812 = vrot.slane %v1146, %v2811
          %v2814 = vunpack.c.l.s4 842150450
          %v2815 = vunpack.c.0.s8 %v2814
          %v2816 = vlaneseq
          %v2817 = vshrl.u32 %v2816, 7
          %v2818 = vsub.s32 %v2815, %v2817
          %v2819 = vrot.slane %v1146, %v2818
          %v2821 = vunpack.c.l.s4 1414812756
          %v2822 = vunpack.c.0.s8 %v2821
          %v2823 = vlaneseq
          %v2824 = vshrl.u32 %v2823, 7
          %v2825 = vsub.s32 %v2822, %v2824
          %v2826 = vrot.slane %v1146, %v2825
          %v2828 = vunpack.c.l.s4 1987475062
          %v2829 = vunpack.c.0.s8 %v2828
          %v2830 = vlaneseq
          %v2831 = vshrl.u32 %v2830, 7
          %v2832 = vsub.s32 %v2829, %v2831
          %v2833 = vrot.slane %v1146, %v2832
          %v2835 = vunpack.c.l.s4 269488144
          %v2836 = vunpack.c.0.s8 %v2835
          %v2837 = vlaneseq
          %v2838 = vshrl.u32 %v2837, 7
          %v2839 = vsub.s32 %v2836, %v2838
          %v2840 = vrot.slane %v1147, %v2839
          %v2842 = vunpack.c.l.s4 842150450
          %v2843 = vunpack.c.0.s8 %v2842
          %v2844 = vlaneseq
          %v2845 = vshrl.u32 %v2844, 7
          %v2846 = vsub.s32 %v2843, %v2845
          %v2847 = vrot.slane %v1147, %v2846
          %v2849 = vunpack.c.l.s4 1414812756
          %v2850 = vunpack.c.0.s8 %v2849
          %v2851 = vlaneseq
          %v2852 = vshrl.u32 %v2851, 7
          %v2853 = vsub.s32 %v2850, %v2852
          %v2854 = vrot.slane %v1147, %v2853
          %v2856 = vunpack.c.l.s4 1987475062
          %v2857 = vunpack.c.0.s8 %v2856
          %v2858 = vlaneseq
          %v2859 = vshrl.u32 %v2858, 7
          %v2860 = vsub.s32 %v2857, %v2859
          %v2861 = vrot.slane %v1147, %v2860
          %v2863 = vunpack.c.l.s4 269488144
          %v2864 = vunpack.c.0.s8 %v2863
          %v2865 = vlaneseq
          %v2866 = vshrl.u32 %v2865, 7
          %v2867 = vsub.s32 %v2864, %v2866
          %v2868 = vrot.slane %v1148, %v2867
          %v2870 = vunpack.c.l.s4 842150450
          %v2871 = vunpack.c.0.s8 %v2870
          %v2872 = vlaneseq
          %v2873 = vshrl.u32 %v2872, 7
          %v2874 = vsub.s32 %v2871, %v2873
          %v2875 = vrot.slane %v1148, %v2874
          %v2877 = vunpack.c.l.s4 1414812756
          %v2878 = vunpack.c.0.s8 %v2877
          %v2879 = vlaneseq
          %v2880 = vshrl.u32 %v2879, 7
          %v2881 = vsub.s32 %v2878, %v2880
          %v2882 = vrot.slane %v1148, %v2881
          %v2884 = vunpack.c.l.s4 1987475062
          %v2885 = vunpack.c.0.s8 %v2884
          %v2886 = vlaneseq
          %v2887 = vshrl.u32 %v2886, 7
          %v2888 = vsub.s32 %v2885, %v2887
          %v2889 = vrot.slane %v1148, %v2888
          %v2891 = vunpack.c.l.s4 269488144
          %v2892 = vunpack.c.0.s8 %v2891
          %v2893 = vlaneseq
          %v2894 = vshrl.u32 %v2893, 7
          %v2895 = vsub.s32 %v2892, %v2894
          %v2896 = vrot.slane %v1149, %v2895
          %v2898 = vunpack.c.l.s4 842150450
          %v2899 = vunpack.c.0.s8 %v2898
          %v2900 = vlaneseq
          %v2901 = vshrl.u32 %v2900, 7
          %v2902 = vsub.s32 %v2899, %v2901
          %v2903 = vrot.slane %v1149, %v2902
          %v2905 = vunpack.c.l.s4 1414812756
          %v2906 = vunpack.c.0.s8 %v2905
          %v2907 = vlaneseq
          %v2908 = vshrl.u32 %v2907, 7
          %v2909 = vsub.s32 %v2906, %v2908
          %v2910 = vrot.slane %v1149, %v2909
          %v2912 = vunpack.c.l.s4 1987475062
          %v2913 = vunpack.c.0.s8 %v2912
          %v2914 = vlaneseq
          %v2915 = vshrl.u32 %v2914, 7
          %v2916 = vsub.s32 %v2913, %v2915
          %v2917 = vrot.slane %v1149, %v2916
          %v2919 = vunpack.c.l.s4 269488144
          %v2920 = vunpack.c.0.s8 %v2919
          %v2921 = vlaneseq
          %v2922 = vshrl.u32 %v2921, 7
          %v2923 = vsub.s32 %v2920, %v2922
          %v2924 = vrot.slane %v1150, %v2923
          %v2926 = vunpack.c.l.s4 842150450
          %v2927 = vunpack.c.0.s8 %v2926
          %v2928 = vlaneseq
          %v2929 = vshrl.u32 %v2928, 7
          %v2930 = vsub.s32 %v2927, %v2929
          %v2931 = vrot.slane %v1150, %v2930
          %v2933 = vunpack.c.l.s4 1414812756
          %v2934 = vunpack.c.0.s8 %v2933
          %v2935 = vlaneseq
          %v2936 = vshrl.u32 %v2935, 7
          %v2937 = vsub.s32 %v2934, %v2936
          %v2938 = vrot.slane %v1150, %v2937
          %v2940 = vunpack.c.l.s4 1987475062
          %v2941 = vunpack.c.0.s8 %v2940
          %v2942 = vlaneseq
          %v2943 = vshrl.u32 %v2942, 7
          %v2944 = vsub.s32 %v2941, %v2943
          %v2945 = vrot.slane %v1150, %v2944
          %v2947 = vunpack.c.l.s4 269488144
          %v2948 = vunpack.c.0.s8 %v2947
          %v2949 = vlaneseq
          %v2950 = vshrl.u32 %v2949, 7
          %v2951 = vsub.s32 %v2948, %v2950
          %v2952 = vrot.slane %v1151, %v2951
          %v2954 = vunpack.c.l.s4 842150450
          %v2955 = vunpack.c.0.s8 %v2954
          %v2956 = vlaneseq
          %v2957 = vshrl.u32 %v2956, 7
          %v2958 = vsub.s32 %v2955, %v2957
          %v2959 = vrot.slane %v1151, %v2958
          %v2961 = vunpack.c.l.s4 1414812756
          %v2962 = vunpack.c.0.s8 %v2961
          %v2963 = vlaneseq
          %v2964 = vshrl.u32 %v2963, 7
          %v2965 = vsub.s32 %v2962, %v2964
          %v2966 = vrot.slane %v1151, %v2965
          %v2968 = vunpack.c.l.s4 1987475062
          %v2969 = vunpack.c.0.s8 %v2968
          %v2970 = vlaneseq
          %v2971 = vshrl.u32 %v2970, 7
          %v2972 = vsub.s32 %v2969, %v2971
          %v2973 = vrot.slane %v1151, %v2972
          %v2975 = vunpack.c.l.s4 269488144
          %v2976 = vunpack.c.0.s8 %v2975
          %v2977 = vlaneseq
          %v2978 = vshrl.u32 %v2977, 7
          %v2979 = vsub.s32 %v2976, %v2978
          %v2980 = vrot.slane %v1152, %v2979
          %v2982 = vunpack.c.l.s4 842150450
          %v2983 = vunpack.c.0.s8 %v2982
          %v2984 = vlaneseq
          %v2985 = vshrl.u32 %v2984, 7
          %v2986 = vsub.s32 %v2983, %v2985
          %v2987 = vrot.slane %v1152, %v2986
          %v2989 = vunpack.c.l.s4 1414812756
          %v2990 = vunpack.c.0.s8 %v2989
          %v2991 = vlaneseq
          %v2992 = vshrl.u32 %v2991, 7
          %v2993 = vsub.s32 %v2990, %v2992
          %v2994 = vrot.slane %v1152, %v2993
          %v2996 = vunpack.c.l.s4 1987475062
          %v2997 = vunpack.c.0.s8 %v2996
          %v2998 = vlaneseq
          %v2999 = vshrl.u32 %v2998, 7
          %v3000 = vsub.s32 %v2997, %v2999
          %v3001 = vrot.slane %v1152, %v3000
          %v3003 = vunpack.c.l.s4 269488144
          %v3004 = vunpack.c.0.s8 %v3003
          %v3005 = vlaneseq
          %v3006 = vshrl.u32 %v3005, 7
          %v3007 = vsub.s32 %v3004, %v3006
          %v3008 = vrot.slane %v1153, %v3007
          %v3010 = vunpack.c.l.s4 842150450
          %v3011 = vunpack.c.0.s8 %v3010
          %v3012 = vlaneseq
          %v3013 = vshrl.u32 %v3012, 7
          %v3014 = vsub.s32 %v3011, %v3013
          %v3015 = vrot.slane %v1153, %v3014
          %v3017 = vunpack.c.l.s4 1414812756
          %v3018 = vunpack.c.0.s8 %v3017
          %v3019 = vlaneseq
          %v3020 = vshrl.u32 %v3019, 7
          %v3021 = vsub.s32 %v3018, %v3020
          %v3022 = vrot.slane %v1153, %v3021
          %v3024 = vunpack.c.l.s4 1987475062
          %v3025 = vunpack.c.0.s8 %v3024
          %v3026 = vlaneseq
          %v3027 = vshrl.u32 %v3026, 7
          %v3028 = vsub.s32 %v3025, %v3027
          %v3029 = vrot.slane %v1153, %v3028
          %v3031 = vunpack.c.l.s4 269488144
          %v3032 = vunpack.c.0.s8 %v3031
          %v3033 = vlaneseq
          %v3034 = vshrl.u32 %v3033, 7
          %v3035 = vsub.s32 %v3032, %v3034
          %v3036 = vrot.slane %v1154, %v3035
          %v3038 = vunpack.c.l.s4 842150450
          %v3039 = vunpack.c.0.s8 %v3038
          %v3040 = vlaneseq
          %v3041 = vshrl.u32 %v3040, 7
          %v3042 = vsub.s32 %v3039, %v3041
          %v3043 = vrot.slane %v1154, %v3042
          %v3045 = vunpack.c.l.s4 1414812756
          %v3046 = vunpack.c.0.s8 %v3045
          %v3047 = vlaneseq
          %v3048 = vshrl.u32 %v3047, 7
          %v3049 = vsub.s32 %v3046, %v3048
          %v3050 = vrot.slane %v1154, %v3049
          %v3052 = vunpack.c.l.s4 1987475062
          %v3053 = vunpack.c.0.s8 %v3052
          %v3054 = vlaneseq
          %v3055 = vshrl.u32 %v3054, 7
          %v3056 = vsub.s32 %v3053, %v3055
          %v3057 = vrot.slane %v1154, %v3056
          %v3059 = vunpack.c.l.s4 269488144
          %v3060 = vunpack.c.0.s8 %v3059
          %v3061 = vlaneseq
          %v3062 = vshrl.u32 %v3061, 7
          %v3063 = vsub.s32 %v3060, %v3062
          %v3064 = vrot.slane %v1155, %v3063
          %v3066 = vunpack.c.l.s4 842150450
          %v3067 = vunpack.c.0.s8 %v3066
          %v3068 = vlaneseq
          %v3069 = vshrl.u32 %v3068, 7
          %v3070 = vsub.s32 %v3067, %v3069
          %v3071 = vrot.slane %v1155, %v3070
          %v3073 = vunpack.c.l.s4 1414812756
          %v3074 = vunpack.c.0.s8 %v3073
          %v3075 = vlaneseq
          %v3076 = vshrl.u32 %v3075, 7
          %v3077 = vsub.s32 %v3074, %v3076
          %v3078 = vrot.slane %v1155, %v3077
          %v3080 = vunpack.c.l.s4 1987475062
          %v3081 = vunpack.c.0.s8 %v3080
          %v3082 = vlaneseq
          %v3083 = vshrl.u32 %v3082, 7
          %v3084 = vsub.s32 %v3081, %v3083
          %v3085 = vrot.slane %v1155, %v3084
          %v3087 = vunpack.c.l.s4 269488144
          %v3088 = vunpack.c.0.s8 %v3087
          %v3089 = vlaneseq
          %v3090 = vshrl.u32 %v3089, 7
          %v3091 = vsub.s32 %v3088, %v3090
          %v3092 = vrot.slane %v1156, %v3091
          %v3094 = vunpack.c.l.s4 842150450
          %v3095 = vunpack.c.0.s8 %v3094
          %v3096 = vlaneseq
          %v3097 = vshrl.u32 %v3096, 7
          %v3098 = vsub.s32 %v3095, %v3097
          %v3099 = vrot.slane %v1156, %v3098
          %v3101 = vunpack.c.l.s4 1414812756
          %v3102 = vunpack.c.0.s8 %v3101
          %v3103 = vlaneseq
          %v3104 = vshrl.u32 %v3103, 7
          %v3105 = vsub.s32 %v3102, %v3104
          %v3106 = vrot.slane %v1156, %v3105
          %v3108 = vunpack.c.l.s4 1987475062
          %v3109 = vunpack.c.0.s8 %v3108
          %v3110 = vlaneseq
          %v3111 = vshrl.u32 %v3110, 7
          %v3112 = vsub.s32 %v3109, %v3111
          %v3113 = vrot.slane %v1156, %v3112
          %v3115 = vunpack.c.l.s4 269488144
          %v3116 = vunpack.c.0.s8 %v3115
          %v3117 = vlaneseq
          %v3118 = vshrl.u32 %v3117, 7
          %v3119 = vsub.s32 %v3116, %v3118
          %v3120 = vrot.slane %v1157, %v3119
          %v3122 = vunpack.c.l.s4 842150450
          %v3123 = vunpack.c.0.s8 %v3122
          %v3124 = vlaneseq
          %v3125 = vshrl.u32 %v3124, 7
          %v3126 = vsub.s32 %v3123, %v3125
          %v3127 = vrot.slane %v1157, %v3126
          %v3129 = vunpack.c.l.s4 1414812756
          %v3130 = vunpack.c.0.s8 %v3129
          %v3131 = vlaneseq
          %v3132 = vshrl.u32 %v3131, 7
          %v3133 = vsub.s32 %v3130, %v3132
          %v3134 = vrot.slane %v1157, %v3133
          %v3136 = vunpack.c.l.s4 1987475062
          %v3137 = vunpack.c.0.s8 %v3136
          %v3138 = vlaneseq
          %v3139 = vshrl.u32 %v3138, 7
          %v3140 = vsub.s32 %v3137, %v3139
          %v3141 = vrot.slane %v1157, %v3140
          %v3143 = vunpack.c.l.s4 269488144
          %v3144 = vunpack.c.0.s8 %v3143
          %v3145 = vlaneseq
          %v3146 = vshrl.u32 %v3145, 7
          %v3147 = vsub.s32 %v3144, %v3146
          %v3148 = vrot.slane %v1158, %v3147
          %v3150 = vunpack.c.l.s4 842150450
          %v3151 = vunpack.c.0.s8 %v3150
          %v3152 = vlaneseq
          %v3153 = vshrl.u32 %v3152, 7
          %v3154 = vsub.s32 %v3151, %v3153
          %v3155 = vrot.slane %v1158, %v3154
          %v3157 = vunpack.c.l.s4 1414812756
          %v3158 = vunpack.c.0.s8 %v3157
          %v3159 = vlaneseq
          %v3160 = vshrl.u32 %v3159, 7
          %v3161 = vsub.s32 %v3158, %v3160
          %v3162 = vrot.slane %v1158, %v3161
          %v3164 = vunpack.c.l.s4 1987475062
          %v3165 = vunpack.c.0.s8 %v3164
          %v3166 = vlaneseq
          %v3167 = vshrl.u32 %v3166, 7
          %v3168 = vsub.s32 %v3165, %v3167
          %v3169 = vrot.slane %v1158, %v3168
          %v3171 = vunpack.c.l.s4 269488144
          %v3172 = vunpack.c.0.s8 %v3171
          %v3173 = vlaneseq
          %v3174 = vshrl.u32 %v3173, 7
          %v3175 = vsub.s32 %v3172, %v3174
          %v3176 = vrot.slane %v1159, %v3175
          %v3178 = vunpack.c.l.s4 842150450
          %v3179 = vunpack.c.0.s8 %v3178
          %v3180 = vlaneseq
          %v3181 = vshrl.u32 %v3180, 7
          %v3182 = vsub.s32 %v3179, %v3181
          %v3183 = vrot.slane %v1159, %v3182
          %v3185 = vunpack.c.l.s4 1414812756
          %v3186 = vunpack.c.0.s8 %v3185
          %v3187 = vlaneseq
          %v3188 = vshrl.u32 %v3187, 7
          %v3189 = vsub.s32 %v3186, %v3188
          %v3190 = vrot.slane %v1159, %v3189
          %v3192 = vunpack.c.l.s4 1987475062
          %v3193 = vunpack.c.0.s8 %v3192
          %v3194 = vlaneseq
          %v3195 = vshrl.u32 %v3194, 7
          %v3196 = vsub.s32 %v3193, %v3195
          %v3197 = vrot.slane %v1159, %v3196
          %v3199 = vunpack.c.l.s4 269488144
          %v3200 = vunpack.c.0.s8 %v3199
          %v3201 = vlaneseq
          %v3202 = vshrl.u32 %v3201, 7
          %v3203 = vsub.s32 %v3200, %v3202
          %v3204 = vrot.slane %v1160, %v3203
          %v3206 = vunpack.c.l.s4 842150450
          %v3207 = vunpack.c.0.s8 %v3206
          %v3208 = vlaneseq
          %v3209 = vshrl.u32 %v3208, 7
          %v3210 = vsub.s32 %v3207, %v3209
          %v3211 = vrot.slane %v1160, %v3210
          %v3213 = vunpack.c.l.s4 1414812756
          %v3214 = vunpack.c.0.s8 %v3213
          %v3215 = vlaneseq
          %v3216 = vshrl.u32 %v3215, 7
          %v3217 = vsub.s32 %v3214, %v3216
          %v3218 = vrot.slane %v1160, %v3217
          %v3220 = vunpack.c.l.s4 1987475062
          %v3221 = vunpack.c.0.s8 %v3220
          %v3222 = vlaneseq
          %v3223 = vshrl.u32 %v3222, 7
          %v3224 = vsub.s32 %v3221, %v3223
          %v3225 = vrot.slane %v1160, %v3224
          %v3227 = vunpack.c.l.s4 269488144
          %v3228 = vunpack.c.0.s8 %v3227
          %v3229 = vlaneseq
          %v3230 = vshrl.u32 %v3229, 7
          %v3231 = vsub.s32 %v3228, %v3230
          %v3232 = vrot.slane %v1161, %v3231
          %v3234 = vunpack.c.l.s4 842150450
          %v3235 = vunpack.c.0.s8 %v3234
          %v3236 = vlaneseq
          %v3237 = vshrl.u32 %v3236, 7
          %v3238 = vsub.s32 %v3235, %v3237
          %v3239 = vrot.slane %v1161, %v3238
          %v3241 = vunpack.c.l.s4 1414812756
          %v3242 = vunpack.c.0.s8 %v3241
          %v3243 = vlaneseq
          %v3244 = vshrl.u32 %v3243, 7
          %v3245 = vsub.s32 %v3242, %v3244
          %v3246 = vrot.slane %v1161, %v3245
          %v3248 = vunpack.c.l.s4 1987475062
          %v3249 = vunpack.c.0.s8 %v3248
          %v3250 = vlaneseq
          %v3251 = vshrl.u32 %v3250, 7
          %v3252 = vsub.s32 %v3249, %v3251
          %v3253 = vrot.slane %v1161, %v3252
          %v3255 = vunpack.c.l.s4 269488144
          %v3256 = vunpack.c.0.s8 %v3255
          %v3257 = vlaneseq
          %v3258 = vshrl.u32 %v3257, 7
          %v3259 = vsub.s32 %v3256, %v3258
          %v3260 = vrot.slane %v1162, %v3259
          %v3262 = vunpack.c.l.s4 842150450
          %v3263 = vunpack.c.0.s8 %v3262
          %v3264 = vlaneseq
          %v3265 = vshrl.u32 %v3264, 7
          %v3266 = vsub.s32 %v3263, %v3265
          %v3267 = vrot.slane %v1162, %v3266
          %v3269 = vunpack.c.l.s4 1414812756
          %v3270 = vunpack.c.0.s8 %v3269
          %v3271 = vlaneseq
          %v3272 = vshrl.u32 %v3271, 7
          %v3273 = vsub.s32 %v3270, %v3272
          %v3274 = vrot.slane %v1162, %v3273
          %v3276 = vunpack.c.l.s4 1987475062
          %v3277 = vunpack.c.0.s8 %v3276
          %v3278 = vlaneseq
          %v3279 = vshrl.u32 %v3278, 7
          %v3280 = vsub.s32 %v3277, %v3279
          %v3281 = vrot.slane %v1162, %v3280
          %v3283 = vunpack.c.l.s4 269488144
          %v3284 = vunpack.c.0.s8 %v3283
          %v3285 = vlaneseq
          %v3286 = vshrl.u32 %v3285, 7
          %v3287 = vsub.s32 %v3284, %v3286
          %v3288 = vrot.slane %v1163, %v3287
          %v3290 = vunpack.c.l.s4 842150450
          %v3291 = vunpack.c.0.s8 %v3290
          %v3292 = vlaneseq
          %v3293 = vshrl.u32 %v3292, 7
          %v3294 = vsub.s32 %v3291, %v3293
          %v3295 = vrot.slane %v1163, %v3294
          %v3297 = vunpack.c.l.s4 1414812756
          %v3298 = vunpack.c.0.s8 %v3297
          %v3299 = vlaneseq
          %v3300 = vshrl.u32 %v3299, 7
          %v3301 = vsub.s32 %v3298, %v3300
          %v3302 = vrot.slane %v1163, %v3301
          %v3304 = vunpack.c.l.s4 1987475062
          %v3305 = vunpack.c.0.s8 %v3304
          %v3306 = vlaneseq
          %v3307 = vshrl.u32 %v3306, 7
          %v3308 = vsub.s32 %v3305, %v3307
          %v3309 = vrot.slane %v1163, %v3308
          %v3311 = vunpack.c.l.s4 269488144
          %v3312 = vunpack.c.0.s8 %v3311
          %v3313 = vlaneseq
          %v3314 = vshrl.u32 %v3313, 7
          %v3315 = vsub.s32 %v3312, %v3314
          %v3316 = vrot.slane %v1164, %v3315
          %v3318 = vunpack.c.l.s4 842150450
          %v3319 = vunpack.c.0.s8 %v3318
          %v3320 = vlaneseq
          %v3321 = vshrl.u32 %v3320, 7
          %v3322 = vsub.s32 %v3319, %v3321
          %v3323 = vrot.slane %v1164, %v3322
          %v3325 = vunpack.c.l.s4 1414812756
          %v3326 = vunpack.c.0.s8 %v3325
          %v3327 = vlaneseq
          %v3328 = vshrl.u32 %v3327, 7
          %v3329 = vsub.s32 %v3326, %v3328
          %v3330 = vrot.slane %v1164, %v3329
          %v3332 = vunpack.c.l.s4 1987475062
          %v3333 = vunpack.c.0.s8 %v3332
          %v3334 = vlaneseq
          %v3335 = vshrl.u32 %v3334, 7
          %v3336 = vsub.s32 %v3333, %v3335
          %v3337 = vrot.slane %v1164, %v3336
          %v3339 = vunpack.c.l.s4 269488144
          %v3340 = vunpack.c.0.s8 %v3339
          %v3341 = vlaneseq
          %v3342 = vshrl.u32 %v3341, 7
          %v3343 = vsub.s32 %v3340, %v3342
          %v3344 = vrot.slane %v1165, %v3343
          %v3346 = vunpack.c.l.s4 842150450
          %v3347 = vunpack.c.0.s8 %v3346
          %v3348 = vlaneseq
          %v3349 = vshrl.u32 %v3348, 7
          %v3350 = vsub.s32 %v3347, %v3349
          %v3351 = vrot.slane %v1165, %v3350
          %v3353 = vunpack.c.l.s4 1414812756
          %v3354 = vunpack.c.0.s8 %v3353
          %v3355 = vlaneseq
          %v3356 = vshrl.u32 %v3355, 7
          %v3357 = vsub.s32 %v3354, %v3356
          %v3358 = vrot.slane %v1165, %v3357
          %v3360 = vunpack.c.l.s4 1987475062
          %v3361 = vunpack.c.0.s8 %v3360
          %v3362 = vlaneseq
          %v3363 = vshrl.u32 %v3362, 7
          %v3364 = vsub.s32 %v3361, %v3363
          %v3365 = vrot.slane %v1165, %v3364
          %v3367 = vunpack.c.l.s4 269488144
          %v3368 = vunpack.c.0.s8 %v3367
          %v3369 = vlaneseq
          %v3370 = vshrl.u32 %v3369, 7
          %v3371 = vsub.s32 %v3368, %v3370
          %v3372 = vrot.slane %v1166, %v3371
          %v3374 = vunpack.c.l.s4 842150450
          %v3375 = vunpack.c.0.s8 %v3374
          %v3376 = vlaneseq
          %v3377 = vshrl.u32 %v3376, 7
          %v3378 = vsub.s32 %v3375, %v3377
          %v3379 = vrot.slane %v1166, %v3378
          %v3381 = vunpack.c.l.s4 1414812756
          %v3382 = vunpack.c.0.s8 %v3381
          %v3383 = vlaneseq
          %v3384 = vshrl.u32 %v3383, 7
          %v3385 = vsub.s32 %v3382, %v3384
          %v3386 = vrot.slane %v1166, %v3385
          %v3388 = vunpack.c.l.s4 1987475062
          %v3389 = vunpack.c.0.s8 %v3388
          %v3390 = vlaneseq
          %v3391 = vshrl.u32 %v3390, 7
          %v3392 = vsub.s32 %v3389, %v3391
          %v3393 = vrot.slane %v1166, %v3392
          %v3395 = vunpack.c.l.s4 269488144
          %v3396 = vunpack.c.0.s8 %v3395
          %v3397 = vlaneseq
          %v3398 = vshrl.u32 %v3397, 7
          %v3399 = vsub.s32 %v3396, %v3398
          %v3400 = vrot.slane %v1167, %v3399
          %v3402 = vunpack.c.l.s4 842150450
          %v3403 = vunpack.c.0.s8 %v3402
          %v3404 = vlaneseq
          %v3405 = vshrl.u32 %v3404, 7
          %v3406 = vsub.s32 %v3403, %v3405
          %v3407 = vrot.slane %v1167, %v3406
          %v3409 = vunpack.c.l.s4 1414812756
          %v3410 = vunpack.c.0.s8 %v3409
          %v3411 = vlaneseq
          %v3412 = vshrl.u32 %v3411, 7
          %v3413 = vsub.s32 %v3410, %v3412
          %v3414 = vrot.slane %v1167, %v3413
          %v3416 = vunpack.c.l.s4 1987475062
          %v3417 = vunpack.c.0.s8 %v3416
          %v3418 = vlaneseq
          %v3419 = vshrl.u32 %v3418, 7
          %v3420 = vsub.s32 %v3417, %v3419
          %v3421 = vrot.slane %v1167, %v3420
          %v3423 = vunpack.c.l.s4 269488144
          %v3424 = vunpack.c.0.s8 %v3423
          %v3425 = vlaneseq
          %v3426 = vshrl.u32 %v3425, 7
          %v3427 = vsub.s32 %v3424, %v3426
          %v3428 = vrot.slane %v1168, %v3427
          %v3430 = vunpack.c.l.s4 842150450
          %v3431 = vunpack.c.0.s8 %v3430
          %v3432 = vlaneseq
          %v3433 = vshrl.u32 %v3432, 7
          %v3434 = vsub.s32 %v3431, %v3433
          %v3435 = vrot.slane %v1168, %v3434
          %v3437 = vunpack.c.l.s4 1414812756
          %v3438 = vunpack.c.0.s8 %v3437
          %v3439 = vlaneseq
          %v3440 = vshrl.u32 %v3439, 7
          %v3441 = vsub.s32 %v3438, %v3440
          %v3442 = vrot.slane %v1168, %v3441
          %v3444 = vunpack.c.l.s4 1987475062
          %v3445 = vunpack.c.0.s8 %v3444
          %v3446 = vlaneseq
          %v3447 = vshrl.u32 %v3446, 7
          %v3448 = vsub.s32 %v3445, %v3447
          %v3449 = vrot.slane %v1168, %v3448
          %v3451 = vunpack.c.l.s4 269488144
          %v3452 = vunpack.c.0.s8 %v3451
          %v3453 = vlaneseq
          %v3454 = vshrl.u32 %v3453, 7
          %v3455 = vsub.s32 %v3452, %v3454
          %v3456 = vrot.slane %v1169, %v3455
          %v3458 = vunpack.c.l.s4 842150450
          %v3459 = vunpack.c.0.s8 %v3458
          %v3460 = vlaneseq
          %v3461 = vshrl.u32 %v3460, 7
          %v3462 = vsub.s32 %v3459, %v3461
          %v3463 = vrot.slane %v1169, %v3462
          %v3465 = vunpack.c.l.s4 1414812756
          %v3466 = vunpack.c.0.s8 %v3465
          %v3467 = vlaneseq
          %v3468 = vshrl.u32 %v3467, 7
          %v3469 = vsub.s32 %v3466, %v3468
          %v3470 = vrot.slane %v1169, %v3469
          %v3472 = vunpack.c.l.s4 1987475062
          %v3473 = vunpack.c.0.s8 %v3472
          %v3474 = vlaneseq
          %v3475 = vshrl.u32 %v3474, 7
          %v3476 = vsub.s32 %v3473, %v3475
          %v3477 = vrot.slane %v1169, %v3476
          %v3479 = vunpack.c.l.s4 269488144
          %v3480 = vunpack.c.0.s8 %v3479
          %v3481 = vlaneseq
          %v3482 = vshrl.u32 %v3481, 7
          %v3483 = vsub.s32 %v3480, %v3482
          %v3484 = vrot.slane %v1170, %v3483
          %v3486 = vunpack.c.l.s4 842150450
          %v3487 = vunpack.c.0.s8 %v3486
          %v3488 = vlaneseq
          %v3489 = vshrl.u32 %v3488, 7
          %v3490 = vsub.s32 %v3487, %v3489
          %v3491 = vrot.slane %v1170, %v3490
          %v3493 = vunpack.c.l.s4 1414812756
          %v3494 = vunpack.c.0.s8 %v3493
          %v3495 = vlaneseq
          %v3496 = vshrl.u32 %v3495, 7
          %v3497 = vsub.s32 %v3494, %v3496
          %v3498 = vrot.slane %v1170, %v3497
          %v3500 = vunpack.c.l.s4 1987475062
          %v3501 = vunpack.c.0.s8 %v3500
          %v3502 = vlaneseq
          %v3503 = vshrl.u32 %v3502, 7
          %v3504 = vsub.s32 %v3501, %v3503
          %v3505 = vrot.slane %v1170, %v3504
          %v3507 = vunpack.c.l.s4 269488144
          %v3508 = vunpack.c.0.s8 %v3507
          %v3509 = vlaneseq
          %v3510 = vshrl.u32 %v3509, 7
          %v3511 = vsub.s32 %v3508, %v3510
          %v3512 = vrot.slane %v1171, %v3511
          %v3514 = vunpack.c.l.s4 842150450
          %v3515 = vunpack.c.0.s8 %v3514
          %v3516 = vlaneseq
          %v3517 = vshrl.u32 %v3516, 7
          %v3518 = vsub.s32 %v3515, %v3517
          %v3519 = vrot.slane %v1171, %v3518
          %v3521 = vunpack.c.l.s4 1414812756
          %v3522 = vunpack.c.0.s8 %v3521
          %v3523 = vlaneseq
          %v3524 = vshrl.u32 %v3523, 7
          %v3525 = vsub.s32 %v3522, %v3524
          %v3526 = vrot.slane %v1171, %v3525
          %v3528 = vunpack.c.l.s4 1987475062
          %v3529 = vunpack.c.0.s8 %v3528
          %v3530 = vlaneseq
          %v3531 = vshrl.u32 %v3530, 7
          %v3532 = vsub.s32 %v3529, %v3531
          %v3533 = vrot.slane %v1171, %v3532
          %v3535 = vunpack.c.l.s4 269488144
          %v3536 = vunpack.c.0.s8 %v3535
          %v3537 = vlaneseq
          %v3538 = vshrl.u32 %v3537, 7
          %v3539 = vsub.s32 %v3536, %v3538
          %v3540 = vrot.slane %v1172, %v3539
          %v3542 = vunpack.c.l.s4 842150450
          %v3543 = vunpack.c.0.s8 %v3542
          %v3544 = vlaneseq
          %v3545 = vshrl.u32 %v3544, 7
          %v3546 = vsub.s32 %v3543, %v3545
          %v3547 = vrot.slane %v1172, %v3546
          %v3549 = vunpack.c.l.s4 1414812756
          %v3550 = vunpack.c.0.s8 %v3549
          %v3551 = vlaneseq
          %v3552 = vshrl.u32 %v3551, 7
          %v3553 = vsub.s32 %v3550, %v3552
          %v3554 = vrot.slane %v1172, %v3553
          %v3556 = vunpack.c.l.s4 1987475062
          %v3557 = vunpack.c.0.s8 %v3556
          %v3558 = vlaneseq
          %v3559 = vshrl.u32 %v3558, 7
          %v3560 = vsub.s32 %v3557, %v3559
          %v3561 = vrot.slane %v1172, %v3560
          %v3563 = vunpack.c.l.s4 269488144
          %v3564 = vunpack.c.0.s8 %v3563
          %v3565 = vlaneseq
          %v3566 = vshrl.u32 %v3565, 7
          %v3567 = vsub.s32 %v3564, %v3566
          %v3568 = vrot.slane %v1173, %v3567
          %v3570 = vunpack.c.l.s4 842150450
          %v3571 = vunpack.c.0.s8 %v3570
          %v3572 = vlaneseq
          %v3573 = vshrl.u32 %v3572, 7
          %v3574 = vsub.s32 %v3571, %v3573
          %v3575 = vrot.slane %v1173, %v3574
          %v3577 = vunpack.c.l.s4 1414812756
          %v3578 = vunpack.c.0.s8 %v3577
          %v3579 = vlaneseq
          %v3580 = vshrl.u32 %v3579, 7
          %v3581 = vsub.s32 %v3578, %v3580
          %v3582 = vrot.slane %v1173, %v3581
          %v3584 = vunpack.c.l.s4 1987475062
          %v3585 = vunpack.c.0.s8 %v3584
          %v3586 = vlaneseq
          %v3587 = vshrl.u32 %v3586, 7
          %v3588 = vsub.s32 %v3585, %v3587
          %v3589 = vrot.slane %v1173, %v3588
          %v3591 = vunpack.c.l.s4 269488144
          %v3592 = vunpack.c.0.s8 %v3591
          %v3593 = vlaneseq
          %v3594 = vshrl.u32 %v3593, 7
          %v3595 = vsub.s32 %v3592, %v3594
          %v3596 = vrot.slane %v1174, %v3595
          %v3598 = vunpack.c.l.s4 842150450
          %v3599 = vunpack.c.0.s8 %v3598
          %v3600 = vlaneseq
          %v3601 = vshrl.u32 %v3600, 7
          %v3602 = vsub.s32 %v3599, %v3601
          %v3603 = vrot.slane %v1174, %v3602
          %v3605 = vunpack.c.l.s4 1414812756
          %v3606 = vunpack.c.0.s8 %v3605
          %v3607 = vlaneseq
          %v3608 = vshrl.u32 %v3607, 7
          %v3609 = vsub.s32 %v3606, %v3608
          %v3610 = vrot.slane %v1174, %v3609
          %v3612 = vunpack.c.l.s4 1987475062
          %v3613 = vunpack.c.0.s8 %v3612
          %v3614 = vlaneseq
          %v3615 = vshrl.u32 %v3614, 7
          %v3616 = vsub.s32 %v3613, %v3615
          %v3617 = vrot.slane %v1174, %v3616
          %v3619 = vunpack.c.l.s4 269488144
          %v3620 = vunpack.c.0.s8 %v3619
          %v3621 = vlaneseq
          %v3622 = vshrl.u32 %v3621, 7
          %v3623 = vsub.s32 %v3620, %v3622
          %v3624 = vrot.slane %v1175, %v3623
          %v3626 = vunpack.c.l.s4 842150450
          %v3627 = vunpack.c.0.s8 %v3626
          %v3628 = vlaneseq
          %v3629 = vshrl.u32 %v3628, 7
          %v3630 = vsub.s32 %v3627, %v3629
          %v3631 = vrot.slane %v1175, %v3630
          %v3633 = vunpack.c.l.s4 1414812756
          %v3634 = vunpack.c.0.s8 %v3633
          %v3635 = vlaneseq
          %v3636 = vshrl.u32 %v3635, 7
          %v3637 = vsub.s32 %v3634, %v3636
          %v3638 = vrot.slane %v1175, %v3637
          %v3640 = vunpack.c.l.s4 1987475062
          %v3641 = vunpack.c.0.s8 %v3640
          %v3642 = vlaneseq
          %v3643 = vshrl.u32 %v3642, 7
          %v3644 = vsub.s32 %v3641, %v3643
          %v3645 = vrot.slane %v1175, %v3644
          %v3647 = vunpack.c.l.s4 269488144
          %v3648 = vunpack.c.0.s8 %v3647
          %v3649 = vlaneseq
          %v3650 = vshrl.u32 %v3649, 7
          %v3651 = vsub.s32 %v3648, %v3650
          %v3652 = vrot.slane %v1176, %v3651
          %v3654 = vunpack.c.l.s4 842150450
          %v3655 = vunpack.c.0.s8 %v3654
          %v3656 = vlaneseq
          %v3657 = vshrl.u32 %v3656, 7
          %v3658 = vsub.s32 %v3655, %v3657
          %v3659 = vrot.slane %v1176, %v3658
          %v3661 = vunpack.c.l.s4 1414812756
          %v3662 = vunpack.c.0.s8 %v3661
          %v3663 = vlaneseq
          %v3664 = vshrl.u32 %v3663, 7
          %v3665 = vsub.s32 %v3662, %v3664
          %v3666 = vrot.slane %v1176, %v3665
          %v3668 = vunpack.c.l.s4 1987475062
          %v3669 = vunpack.c.0.s8 %v3668
          %v3670 = vlaneseq
          %v3671 = vshrl.u32 %v3670, 7
          %v3672 = vsub.s32 %v3669, %v3671
          %v3673 = vrot.slane %v1176, %v3672
          %v3675 = vunpack.c.l.s4 269488144
          %v3676 = vunpack.c.0.s8 %v3675
          %v3677 = vlaneseq
          %v3678 = vshrl.u32 %v3677, 7
          %v3679 = vsub.s32 %v3676, %v3678
          %v3680 = vrot.slane %v1177, %v3679
          %v3682 = vunpack.c.l.s4 842150450
          %v3683 = vunpack.c.0.s8 %v3682
          %v3684 = vlaneseq
          %v3685 = vshrl.u32 %v3684, 7
          %v3686 = vsub.s32 %v3683, %v3685
          %v3687 = vrot.slane %v1177, %v3686
          %v3689 = vunpack.c.l.s4 1414812756
          %v3690 = vunpack.c.0.s8 %v3689
          %v3691 = vlaneseq
          %v3692 = vshrl.u32 %v3691, 7
          %v3693 = vsub.s32 %v3690, %v3692
          %v3694 = vrot.slane %v1177, %v3693
          %v3696 = vunpack.c.l.s4 1987475062
          %v3697 = vunpack.c.0.s8 %v3696
          %v3698 = vlaneseq
          %v3699 = vshrl.u32 %v3698, 7
          %v3700 = vsub.s32 %v3697, %v3699
          %v3701 = vrot.slane %v1177, %v3700
          %v3703 = vunpack.c.l.s4 269488144
          %v3704 = vunpack.c.0.s8 %v3703
          %v3705 = vlaneseq
          %v3706 = vshrl.u32 %v3705, 7
          %v3707 = vsub.s32 %v3704, %v3706
          %v3708 = vrot.slane %v1178, %v3707
          %v3710 = vunpack.c.l.s4 842150450
          %v3711 = vunpack.c.0.s8 %v3710
          %v3712 = vlaneseq
          %v3713 = vshrl.u32 %v3712, 7
          %v3714 = vsub.s32 %v3711, %v3713
          %v3715 = vrot.slane %v1178, %v3714
          %v3717 = vunpack.c.l.s4 1414812756
          %v3718 = vunpack.c.0.s8 %v3717
          %v3719 = vlaneseq
          %v3720 = vshrl.u32 %v3719, 7
          %v3721 = vsub.s32 %v3718, %v3720
          %v3722 = vrot.slane %v1178, %v3721
          %v3724 = vunpack.c.l.s4 1987475062
          %v3725 = vunpack.c.0.s8 %v3724
          %v3726 = vlaneseq
          %v3727 = vshrl.u32 %v3726, 7
          %v3728 = vsub.s32 %v3725, %v3727
          %v3729 = vrot.slane %v1178, %v3728
          %v3731 = vunpack.c.l.s4 269488144
          %v3732 = vunpack.c.0.s8 %v3731
          %v3733 = vlaneseq
          %v3734 = vshrl.u32 %v3733, 7
          %v3735 = vsub.s32 %v3732, %v3734
          %v3736 = vrot.slane %v1179, %v3735
          %v3738 = vunpack.c.l.s4 842150450
          %v3739 = vunpack.c.0.s8 %v3738
          %v3740 = vlaneseq
          %v3741 = vshrl.u32 %v3740, 7
          %v3742 = vsub.s32 %v3739, %v3741
          %v3743 = vrot.slane %v1179, %v3742
          %v3745 = vunpack.c.l.s4 1414812756
          %v3746 = vunpack.c.0.s8 %v3745
          %v3747 = vlaneseq
          %v3748 = vshrl.u32 %v3747, 7
          %v3749 = vsub.s32 %v3746, %v3748
          %v3750 = vrot.slane %v1179, %v3749
          %v3752 = vunpack.c.l.s4 1987475062
          %v3753 = vunpack.c.0.s8 %v3752
          %v3754 = vlaneseq
          %v3755 = vshrl.u32 %v3754, 7
          %v3756 = vsub.s32 %v3753, %v3755
          %v3757 = vrot.slane %v1179, %v3756
          %v3759 = vunpack.c.l.s4 269488144
          %v3760 = vunpack.c.0.s8 %v3759
          %v3761 = vlaneseq
          %v3762 = vshrl.u32 %v3761, 7
          %v3763 = vsub.s32 %v3760, %v3762
          %v3764 = vrot.slane %v1180, %v3763
          %v3766 = vunpack.c.l.s4 842150450
          %v3767 = vunpack.c.0.s8 %v3766
          %v3768 = vlaneseq
          %v3769 = vshrl.u32 %v3768, 7
          %v3770 = vsub.s32 %v3767, %v3769
          %v3771 = vrot.slane %v1180, %v3770
          %v3773 = vunpack.c.l.s4 1414812756
          %v3774 = vunpack.c.0.s8 %v3773
          %v3775 = vlaneseq
          %v3776 = vshrl.u32 %v3775, 7
          %v3777 = vsub.s32 %v3774, %v3776
          %v3778 = vrot.slane %v1180, %v3777
          %v3780 = vunpack.c.l.s4 1987475062
          %v3781 = vunpack.c.0.s8 %v3780
          %v3782 = vlaneseq
          %v3783 = vshrl.u32 %v3782, 7
          %v3784 = vsub.s32 %v3781, %v3783
          %v3785 = vrot.slane %v1180, %v3784
          %v3787 = vunpack.c.l.s4 269488144
          %v3788 = vunpack.c.0.s8 %v3787
          %v3789 = vlaneseq
          %v3790 = vshrl.u32 %v3789, 7
          %v3791 = vsub.s32 %v3788, %v3790
          %v3792 = vrot.slane %v1181, %v3791
          %v3794 = vunpack.c.l.s4 842150450
          %v3795 = vunpack.c.0.s8 %v3794
          %v3796 = vlaneseq
          %v3797 = vshrl.u32 %v3796, 7
          %v3798 = vsub.s32 %v3795, %v3797
          %v3799 = vrot.slane %v1181, %v3798
          %v3801 = vunpack.c.l.s4 1414812756
          %v3802 = vunpack.c.0.s8 %v3801
          %v3803 = vlaneseq
          %v3804 = vshrl.u32 %v3803, 7
          %v3805 = vsub.s32 %v3802, %v3804
          %v3806 = vrot.slane %v1181, %v3805
          %v3808 = vunpack.c.l.s4 1987475062
          %v3809 = vunpack.c.0.s8 %v3808
          %v3810 = vlaneseq
          %v3811 = vshrl.u32 %v3810, 7
          %v3812 = vsub.s32 %v3809, %v3811
          %v3813 = vrot.slane %v1181, %v3812
          %v3815 = vunpack.c.l.s4 269488144
          %v3816 = vunpack.c.0.s8 %v3815
          %v3817 = vlaneseq
          %v3818 = vshrl.u32 %v3817, 7
          %v3819 = vsub.s32 %v3816, %v3818
          %v3820 = vrot.slane %v1182, %v3819
          %v3822 = vunpack.c.l.s4 842150450
          %v3823 = vunpack.c.0.s8 %v3822
          %v3824 = vlaneseq
          %v3825 = vshrl.u32 %v3824, 7
          %v3826 = vsub.s32 %v3823, %v3825
          %v3827 = vrot.slane %v1182, %v3826
          %v3829 = vunpack.c.l.s4 1414812756
          %v3830 = vunpack.c.0.s8 %v3829
          %v3831 = vlaneseq
          %v3832 = vshrl.u32 %v3831, 7
          %v3833 = vsub.s32 %v3830, %v3832
          %v3834 = vrot.slane %v1182, %v3833
          %v3836 = vunpack.c.l.s4 1987475062
          %v3837 = vunpack.c.0.s8 %v3836
          %v3838 = vlaneseq
          %v3839 = vshrl.u32 %v3838, 7
          %v3840 = vsub.s32 %v3837, %v3839
          %v3841 = vrot.slane %v1182, %v3840
          %v3843 = vunpack.c.l.s4 269488144
          %v3844 = vunpack.c.0.s8 %v3843
          %v3845 = vlaneseq
          %v3846 = vshrl.u32 %v3845, 7
          %v3847 = vsub.s32 %v3844, %v3846
          %v3848 = vrot.slane %v1183, %v3847
          %v3850 = vunpack.c.l.s4 842150450
          %v3851 = vunpack.c.0.s8 %v3850
          %v3852 = vlaneseq
          %v3853 = vshrl.u32 %v3852, 7
          %v3854 = vsub.s32 %v3851, %v3853
          %v3855 = vrot.slane %v1183, %v3854
          %v3857 = vunpack.c.l.s4 1414812756
          %v3858 = vunpack.c.0.s8 %v3857
          %v3859 = vlaneseq
          %v3860 = vshrl.u32 %v3859, 7
          %v3861 = vsub.s32 %v3858, %v3860
          %v3862 = vrot.slane %v1183, %v3861
          %v3864 = vunpack.c.l.s4 1987475062
          %v3865 = vunpack.c.0.s8 %v3864
          %v3866 = vlaneseq
          %v3867 = vshrl.u32 %v3866, 7
          %v3868 = vsub.s32 %v3865, %v3867
          %v3869 = vrot.slane %v1183, %v3868
          %v3871 = vunpack.c.l.s4 269488144
          %v3872 = vunpack.c.0.s8 %v3871
          %v3873 = vlaneseq
          %v3874 = vshrl.u32 %v3873, 7
          %v3875 = vsub.s32 %v3872, %v3874
          %v3876 = vrot.slane %v1184, %v3875
          %v3878 = vunpack.c.l.s4 842150450
          %v3879 = vunpack.c.0.s8 %v3878
          %v3880 = vlaneseq
          %v3881 = vshrl.u32 %v3880, 7
          %v3882 = vsub.s32 %v3879, %v3881
          %v3883 = vrot.slane %v1184, %v3882
          %v3885 = vunpack.c.l.s4 1414812756
          %v3886 = vunpack.c.0.s8 %v3885
          %v3887 = vlaneseq
          %v3888 = vshrl.u32 %v3887, 7
          %v3889 = vsub.s32 %v3886, %v3888
          %v3890 = vrot.slane %v1184, %v3889
          %v3892 = vunpack.c.l.s4 1987475062
          %v3893 = vunpack.c.0.s8 %v3892
          %v3894 = vlaneseq
          %v3895 = vshrl.u32 %v3894, 7
          %v3896 = vsub.s32 %v3893, %v3895
          %v3897 = vrot.slane %v1184, %v3896
          %v3899 = vunpack.c.l.s4 269488144
          %v3900 = vunpack.c.0.s8 %v3899
          %v3901 = vlaneseq
          %v3902 = vshrl.u32 %v3901, 7
          %v3903 = vsub.s32 %v3900, %v3902
          %v3904 = vrot.slane %v1185, %v3903
          %v3906 = vunpack.c.l.s4 842150450
          %v3907 = vunpack.c.0.s8 %v3906
          %v3908 = vlaneseq
          %v3909 = vshrl.u32 %v3908, 7
          %v3910 = vsub.s32 %v3907, %v3909
          %v3911 = vrot.slane %v1185, %v3910
          %v3913 = vunpack.c.l.s4 1414812756
          %v3914 = vunpack.c.0.s8 %v3913
          %v3915 = vlaneseq
          %v3916 = vshrl.u32 %v3915, 7
          %v3917 = vsub.s32 %v3914, %v3916
          %v3918 = vrot.slane %v1185, %v3917
          %v3920 = vunpack.c.l.s4 1987475062
          %v3921 = vunpack.c.0.s8 %v3920
          %v3922 = vlaneseq
          %v3923 = vshrl.u32 %v3922, 7
          %v3924 = vsub.s32 %v3921, %v3923
          %v3925 = vrot.slane %v1185, %v3924
          %v3927 = vunpack.c.l.s4 269488144
          %v3928 = vunpack.c.0.s8 %v3927
          %v3929 = vlaneseq
          %v3930 = vshrl.u32 %v3929, 7
          %v3931 = vsub.s32 %v3928, %v3930
          %v3932 = vrot.slane %v1186, %v3931
          %v3934 = vunpack.c.l.s4 842150450
          %v3935 = vunpack.c.0.s8 %v3934
          %v3936 = vlaneseq
          %v3937 = vshrl.u32 %v3936, 7
          %v3938 = vsub.s32 %v3935, %v3937
          %v3939 = vrot.slane %v1186, %v3938
          %v3941 = vunpack.c.l.s4 1414812756
          %v3942 = vunpack.c.0.s8 %v3941
          %v3943 = vlaneseq
          %v3944 = vshrl.u32 %v3943, 7
          %v3945 = vsub.s32 %v3942, %v3944
          %v3946 = vrot.slane %v1186, %v3945
          %v3948 = vunpack.c.l.s4 1987475062
          %v3949 = vunpack.c.0.s8 %v3948
          %v3950 = vlaneseq
          %v3951 = vshrl.u32 %v3950, 7
          %v3952 = vsub.s32 %v3949, %v3951
          %v3953 = vrot.slane %v1186, %v3952
          %v3955 = vunpack.c.l.s4 269488144
          %v3956 = vunpack.c.0.s8 %v3955
          %v3957 = vlaneseq
          %v3958 = vshrl.u32 %v3957, 7
          %v3959 = vsub.s32 %v3956, %v3958
          %v3960 = vrot.slane %v1187, %v3959
          %v3962 = vunpack.c.l.s4 842150450
          %v3963 = vunpack.c.0.s8 %v3962
          %v3964 = vlaneseq
          %v3965 = vshrl.u32 %v3964, 7
          %v3966 = vsub.s32 %v3963, %v3965
          %v3967 = vrot.slane %v1187, %v3966
          %v3969 = vunpack.c.l.s4 1414812756
          %v3970 = vunpack.c.0.s8 %v3969
          %v3971 = vlaneseq
          %v3972 = vshrl.u32 %v3971, 7
          %v3973 = vsub.s32 %v3970, %v3972
          %v3974 = vrot.slane %v1187, %v3973
          %v3976 = vunpack.c.l.s4 1987475062
          %v3977 = vunpack.c.0.s8 %v3976
          %v3978 = vlaneseq
          %v3979 = vshrl.u32 %v3978, 7
          %v3980 = vsub.s32 %v3977, %v3979
          %v3981 = vrot.slane %v1187, %v3980
          %v3983 = vunpack.c.l.s4 269488144
          %v3984 = vunpack.c.0.s8 %v3983
          %v3985 = vlaneseq
          %v3986 = vshrl.u32 %v3985, 7
          %v3987 = vsub.s32 %v3984, %v3986
          %v3988 = vrot.slane %v1188, %v3987
          %v3990 = vunpack.c.l.s4 842150450
          %v3991 = vunpack.c.0.s8 %v3990
          %v3992 = vlaneseq
          %v3993 = vshrl.u32 %v3992, 7
          %v3994 = vsub.s32 %v3991, %v3993
          %v3995 = vrot.slane %v1188, %v3994
          %v3997 = vunpack.c.l.s4 1414812756
          %v3998 = vunpack.c.0.s8 %v3997
          %v3999 = vlaneseq
          %v4000 = vshrl.u32 %v3999, 7
          %v4001 = vsub.s32 %v3998, %v4000
          %v4002 = vrot.slane %v1188, %v4001
          %v4004 = vunpack.c.l.s4 1987475062
          %v4005 = vunpack.c.0.s8 %v4004
          %v4006 = vlaneseq
          %v4007 = vshrl.u32 %v4006, 7
          %v4008 = vsub.s32 %v4005, %v4007
          %v4009 = vrot.slane %v1188, %v4008
          %v4011 = vunpack.c.l.s4 269488144
          %v4012 = vunpack.c.0.s8 %v4011
          %v4013 = vlaneseq
          %v4014 = vshrl.u32 %v4013, 7
          %v4015 = vsub.s32 %v4012, %v4014
          %v4016 = vrot.slane %v1189, %v4015
          %v4018 = vunpack.c.l.s4 842150450
          %v4019 = vunpack.c.0.s8 %v4018
          %v4020 = vlaneseq
          %v4021 = vshrl.u32 %v4020, 7
          %v4022 = vsub.s32 %v4019, %v4021
          %v4023 = vrot.slane %v1189, %v4022
          %v4025 = vunpack.c.l.s4 1414812756
          %v4026 = vunpack.c.0.s8 %v4025
          %v4027 = vlaneseq
          %v4028 = vshrl.u32 %v4027, 7
          %v4029 = vsub.s32 %v4026, %v4028
          %v4030 = vrot.slane %v1189, %v4029
          %v4032 = vunpack.c.l.s4 1987475062
          %v4033 = vunpack.c.0.s8 %v4032
          %v4034 = vlaneseq
          %v4035 = vshrl.u32 %v4034, 7
          %v4036 = vsub.s32 %v4033, %v4035
          %v4037 = vrot.slane %v1189, %v4036
          %v4039 = vunpack.c.l.s4 269488144
          %v4040 = vunpack.c.0.s8 %v4039
          %v4041 = vlaneseq
          %v4042 = vshrl.u32 %v4041, 7
          %v4043 = vsub.s32 %v4040, %v4042
          %v4044 = vrot.slane %v1190, %v4043
          %v4046 = vunpack.c.l.s4 842150450
          %v4047 = vunpack.c.0.s8 %v4046
          %v4048 = vlaneseq
          %v4049 = vshrl.u32 %v4048, 7
          %v4050 = vsub.s32 %v4047, %v4049
          %v4051 = vrot.slane %v1190, %v4050
          %v4053 = vunpack.c.l.s4 1414812756
          %v4054 = vunpack.c.0.s8 %v4053
          %v4055 = vlaneseq
          %v4056 = vshrl.u32 %v4055, 7
          %v4057 = vsub.s32 %v4054, %v4056
          %v4058 = vrot.slane %v1190, %v4057
          %v4060 = vunpack.c.l.s4 1987475062
          %v4061 = vunpack.c.0.s8 %v4060
          %v4062 = vlaneseq
          %v4063 = vshrl.u32 %v4062, 7
          %v4064 = vsub.s32 %v4061, %v4063
          %v4065 = vrot.slane %v1190, %v4064
          %v4067 = vunpack.c.l.s4 269488144
          %v4068 = vunpack.c.0.s8 %v4067
          %v4069 = vlaneseq
          %v4070 = vshrl.u32 %v4069, 7
          %v4071 = vsub.s32 %v4068, %v4070
          %v4072 = vrot.slane %v1191, %v4071
          %v4074 = vunpack.c.l.s4 842150450
          %v4075 = vunpack.c.0.s8 %v4074
          %v4076 = vlaneseq
          %v4077 = vshrl.u32 %v4076, 7
          %v4078 = vsub.s32 %v4075, %v4077
          %v4079 = vrot.slane %v1191, %v4078
          %v4081 = vunpack.c.l.s4 1414812756
          %v4082 = vunpack.c.0.s8 %v4081
          %v4083 = vlaneseq
          %v4084 = vshrl.u32 %v4083, 7
          %v4085 = vsub.s32 %v4082, %v4084
          %v4086 = vrot.slane %v1191, %v4085
          %v4088 = vunpack.c.l.s4 1987475062
          %v4089 = vunpack.c.0.s8 %v4088
          %v4090 = vlaneseq
          %v4091 = vshrl.u32 %v4090, 7
          %v4092 = vsub.s32 %v4089, %v4091
          %v4093 = vrot.slane %v1191, %v4092
          %v4095 = vunpack.c.l.s4 269488144
          %v4096 = vunpack.c.0.s8 %v4095
          %v4097 = vlaneseq
          %v4098 = vshrl.u32 %v4097, 7
          %v4099 = vsub.s32 %v4096, %v4098
          %v4100 = vrot.slane %v1192, %v4099
          %v4102 = vunpack.c.l.s4 842150450
          %v4103 = vunpack.c.0.s8 %v4102
          %v4104 = vlaneseq
          %v4105 = vshrl.u32 %v4104, 7
          %v4106 = vsub.s32 %v4103, %v4105
          %v4107 = vrot.slane %v1192, %v4106
          %v4109 = vunpack.c.l.s4 1414812756
          %v4110 = vunpack.c.0.s8 %v4109
          %v4111 = vlaneseq
          %v4112 = vshrl.u32 %v4111, 7
          %v4113 = vsub.s32 %v4110, %v4112
          %v4114 = vrot.slane %v1192, %v4113
          %v4116 = vunpack.c.l.s4 1987475062
          %v4117 = vunpack.c.0.s8 %v4116
          %v4118 = vlaneseq
          %v4119 = vshrl.u32 %v4118, 7
          %v4120 = vsub.s32 %v4117, %v4119
          %v4121 = vrot.slane %v1192, %v4120
          %v4123 = vunpack.c.l.s4 269488144
          %v4124 = vunpack.c.0.s8 %v4123
          %v4125 = vlaneseq
          %v4126 = vshrl.u32 %v4125, 7
          %v4127 = vsub.s32 %v4124, %v4126
          %v4128 = vrot.slane %v1193, %v4127
          %v4130 = vunpack.c.l.s4 842150450
          %v4131 = vunpack.c.0.s8 %v4130
          %v4132 = vlaneseq
          %v4133 = vshrl.u32 %v4132, 7
          %v4134 = vsub.s32 %v4131, %v4133
          %v4135 = vrot.slane %v1193, %v4134
          %v4137 = vunpack.c.l.s4 1414812756
          %v4138 = vunpack.c.0.s8 %v4137
          %v4139 = vlaneseq
          %v4140 = vshrl.u32 %v4139, 7
          %v4141 = vsub.s32 %v4138, %v4140
          %v4142 = vrot.slane %v1193, %v4141
          %v4144 = vunpack.c.l.s4 1987475062
          %v4145 = vunpack.c.0.s8 %v4144
          %v4146 = vlaneseq
          %v4147 = vshrl.u32 %v4146, 7
          %v4148 = vsub.s32 %v4145, %v4147
          %v4149 = vrot.slane %v1193, %v4148
          %v4151 = vunpack.c.l.s4 269488144
          %v4152 = vunpack.c.0.s8 %v4151
          %v4153 = vlaneseq
          %v4154 = vshrl.u32 %v4153, 7
          %v4155 = vsub.s32 %v4152, %v4154
          %v4156 = vrot.slane %v1194, %v4155
          %v4158 = vunpack.c.l.s4 842150450
          %v4159 = vunpack.c.0.s8 %v4158
          %v4160 = vlaneseq
          %v4161 = vshrl.u32 %v4160, 7
          %v4162 = vsub.s32 %v4159, %v4161
          %v4163 = vrot.slane %v1194, %v4162
          %v4165 = vunpack.c.l.s4 1414812756
          %v4166 = vunpack.c.0.s8 %v4165
          %v4167 = vlaneseq
          %v4168 = vshrl.u32 %v4167, 7
          %v4169 = vsub.s32 %v4166, %v4168
          %v4170 = vrot.slane %v1194, %v4169
          %v4172 = vunpack.c.l.s4 1987475062
          %v4173 = vunpack.c.0.s8 %v4172
          %v4174 = vlaneseq
          %v4175 = vshrl.u32 %v4174, 7
          %v4176 = vsub.s32 %v4173, %v4175
          %v4177 = vrot.slane %v1194, %v4176
          %v4179 = vunpack.c.l.s4 269488144
          %v4180 = vunpack.c.0.s8 %v4179
          %v4181 = vlaneseq
          %v4182 = vshrl.u32 %v4181, 7
          %v4183 = vsub.s32 %v4180, %v4182
          %v4184 = vrot.slane %v1195, %v4183
          %v4186 = vunpack.c.l.s4 842150450
          %v4187 = vunpack.c.0.s8 %v4186
          %v4188 = vlaneseq
          %v4189 = vshrl.u32 %v4188, 7
          %v4190 = vsub.s32 %v4187, %v4189
          %v4191 = vrot.slane %v1195, %v4190
          %v4193 = vunpack.c.l.s4 1414812756
          %v4194 = vunpack.c.0.s8 %v4193
          %v4195 = vlaneseq
          %v4196 = vshrl.u32 %v4195, 7
          %v4197 = vsub.s32 %v4194, %v4196
          %v4198 = vrot.slane %v1195, %v4197
          %v4200 = vunpack.c.l.s4 1987475062
          %v4201 = vunpack.c.0.s8 %v4200
          %v4202 = vlaneseq
          %v4203 = vshrl.u32 %v4202, 7
          %v4204 = vsub.s32 %v4201, %v4203
          %v4205 = vrot.slane %v1195, %v4204
          %v4207 = vunpack.c.l.s4 269488144
          %v4208 = vunpack.c.0.s8 %v4207
          %v4209 = vlaneseq
          %v4210 = vshrl.u32 %v4209, 7
          %v4211 = vsub.s32 %v4208, %v4210
          %v4212 = vrot.slane %v1196, %v4211
          %v4214 = vunpack.c.l.s4 842150450
          %v4215 = vunpack.c.0.s8 %v4214
          %v4216 = vlaneseq
          %v4217 = vshrl.u32 %v4216, 7
          %v4218 = vsub.s32 %v4215, %v4217
          %v4219 = vrot.slane %v1196, %v4218
          %v4221 = vunpack.c.l.s4 1414812756
          %v4222 = vunpack.c.0.s8 %v4221
          %v4223 = vlaneseq
          %v4224 = vshrl.u32 %v4223, 7
          %v4225 = vsub.s32 %v4222, %v4224
          %v4226 = vrot.slane %v1196, %v4225
          %v4228 = vunpack.c.l.s4 1987475062
          %v4229 = vunpack.c.0.s8 %v4228
          %v4230 = vlaneseq
          %v4231 = vshrl.u32 %v4230, 7
          %v4232 = vsub.s32 %v4229, %v4231
          %v4233 = vrot.slane %v1196, %v4232
          %v4235 = vunpack.c.l.s4 269488144
          %v4236 = vunpack.c.0.s8 %v4235
          %v4237 = vlaneseq
          %v4238 = vshrl.u32 %v4237, 7
          %v4239 = vsub.s32 %v4236, %v4238
          %v4240 = vrot.slane %v1197, %v4239
          %v4242 = vunpack.c.l.s4 842150450
          %v4243 = vunpack.c.0.s8 %v4242
          %v4244 = vlaneseq
          %v4245 = vshrl.u32 %v4244, 7
          %v4246 = vsub.s32 %v4243, %v4245
          %v4247 = vrot.slane %v1197, %v4246
          %v4249 = vunpack.c.l.s4 1414812756
          %v4250 = vunpack.c.0.s8 %v4249
          %v4251 = vlaneseq
          %v4252 = vshrl.u32 %v4251, 7
          %v4253 = vsub.s32 %v4250, %v4252
          %v4254 = vrot.slane %v1197, %v4253
          %v4256 = vunpack.c.l.s4 1987475062
          %v4257 = vunpack.c.0.s8 %v4256
          %v4258 = vlaneseq
          %v4259 = vshrl.u32 %v4258, 7
          %v4260 = vsub.s32 %v4257, %v4259
          %v4261 = vrot.slane %v1197, %v4260
          %v4263 = vunpack.c.l.s4 269488144
          %v4264 = vunpack.c.0.s8 %v4263
          %v4265 = vlaneseq
          %v4266 = vshrl.u32 %v4265, 7
          %v4267 = vsub.s32 %v4264, %v4266
          %v4268 = vrot.slane %v1198, %v4267
          %v4270 = vunpack.c.l.s4 842150450
          %v4271 = vunpack.c.0.s8 %v4270
          %v4272 = vlaneseq
          %v4273 = vshrl.u32 %v4272, 7
          %v4274 = vsub.s32 %v4271, %v4273
          %v4275 = vrot.slane %v1198, %v4274
          %v4277 = vunpack.c.l.s4 1414812756
          %v4278 = vunpack.c.0.s8 %v4277
          %v4279 = vlaneseq
          %v4280 = vshrl.u32 %v4279, 7
          %v4281 = vsub.s32 %v4278, %v4280
          %v4282 = vrot.slane %v1198, %v4281
          %v4284 = vunpack.c.l.s4 1987475062
          %v4285 = vunpack.c.0.s8 %v4284
          %v4286 = vlaneseq
          %v4287 = vshrl.u32 %v4286, 7
          %v4288 = vsub.s32 %v4285, %v4287
          %v4289 = vrot.slane %v1198, %v4288
          %v4291 = vunpack.c.l.s4 269488144
          %v4292 = vunpack.c.0.s8 %v4291
          %v4293 = vlaneseq
          %v4294 = vshrl.u32 %v4293, 7
          %v4295 = vsub.s32 %v4292, %v4294
          %v4296 = vrot.slane %v1199, %v4295
          %v4298 = vunpack.c.l.s4 842150450
          %v4299 = vunpack.c.0.s8 %v4298
          %v4300 = vlaneseq
          %v4301 = vshrl.u32 %v4300, 7
          %v4302 = vsub.s32 %v4299, %v4301
          %v4303 = vrot.slane %v1199, %v4302
          %v4305 = vunpack.c.l.s4 1414812756
          %v4306 = vunpack.c.0.s8 %v4305
          %v4307 = vlaneseq
          %v4308 = vshrl.u32 %v4307, 7
          %v4309 = vsub.s32 %v4306, %v4308
          %v4310 = vrot.slane %v1199, %v4309
          %v4312 = vunpack.c.l.s4 1987475062
          %v4313 = vunpack.c.0.s8 %v4312
          %v4314 = vlaneseq
          %v4315 = vshrl.u32 %v4314, 7
          %v4316 = vsub.s32 %v4313, %v4315
          %v4317 = vrot.slane %v1199, %v4316
          %v4319 = vunpack.c.l.s4 269488144
          %v4320 = vunpack.c.0.s8 %v4319
          %v4321 = vlaneseq
          %v4322 = vshrl.u32 %v4321, 7
          %v4323 = vsub.s32 %v4320, %v4322
          %v4324 = vrot.slane %v1200, %v4323
          %v4326 = vunpack.c.l.s4 842150450
          %v4327 = vunpack.c.0.s8 %v4326
          %v4328 = vlaneseq
          %v4329 = vshrl.u32 %v4328, 7
          %v4330 = vsub.s32 %v4327, %v4329
          %v4331 = vrot.slane %v1200, %v4330
          %v4333 = vunpack.c.l.s4 1414812756
          %v4334 = vunpack.c.0.s8 %v4333
          %v4335 = vlaneseq
          %v4336 = vshrl.u32 %v4335, 7
          %v4337 = vsub.s32 %v4334, %v4336
          %v4338 = vrot.slane %v1200, %v4337
          %v4340 = vunpack.c.l.s4 1987475062
          %v4341 = vunpack.c.0.s8 %v4340
          %v4342 = vlaneseq
          %v4343 = vshrl.u32 %v4342, 7
          %v4344 = vsub.s32 %v4341, %v4343
          %v4345 = vrot.slane %v1200, %v4344
          %v4347 = vunpack.c.l.s4 269488144
          %v4348 = vunpack.c.0.s8 %v4347
          %v4349 = vlaneseq
          %v4350 = vshrl.u32 %v4349, 7
          %v4351 = vsub.s32 %v4348, %v4350
          %v4352 = vrot.slane %v1201, %v4351
          %v4354 = vunpack.c.l.s4 842150450
          %v4355 = vunpack.c.0.s8 %v4354
          %v4356 = vlaneseq
          %v4357 = vshrl.u32 %v4356, 7
          %v4358 = vsub.s32 %v4355, %v4357
          %v4359 = vrot.slane %v1201, %v4358
          %v4361 = vunpack.c.l.s4 1414812756
          %v4362 = vunpack.c.0.s8 %v4361
          %v4363 = vlaneseq
          %v4364 = vshrl.u32 %v4363, 7
          %v4365 = vsub.s32 %v4362, %v4364
          %v4366 = vrot.slane %v1201, %v4365
          %v4368 = vunpack.c.l.s4 1987475062
          %v4369 = vunpack.c.0.s8 %v4368
          %v4370 = vlaneseq
          %v4371 = vshrl.u32 %v4370, 7
          %v4372 = vsub.s32 %v4369, %v4371
          %v4373 = vrot.slane %v1201, %v4372
          %v4375 = vunpack.c.l.s4 269488144
          %v4376 = vunpack.c.0.s8 %v4375
          %v4377 = vlaneseq
          %v4378 = vshrl.u32 %v4377, 7
          %v4379 = vsub.s32 %v4376, %v4378
          %v4380 = vrot.slane %v1202, %v4379
          %v4382 = vunpack.c.l.s4 842150450
          %v4383 = vunpack.c.0.s8 %v4382
          %v4384 = vlaneseq
          %v4385 = vshrl.u32 %v4384, 7
          %v4386 = vsub.s32 %v4383, %v4385
          %v4387 = vrot.slane %v1202, %v4386
          %v4389 = vunpack.c.l.s4 1414812756
          %v4390 = vunpack.c.0.s8 %v4389
          %v4391 = vlaneseq
          %v4392 = vshrl.u32 %v4391, 7
          %v4393 = vsub.s32 %v4390, %v4392
          %v4394 = vrot.slane %v1202, %v4393
          %v4396 = vunpack.c.l.s4 1987475062
          %v4397 = vunpack.c.0.s8 %v4396
          %v4398 = vlaneseq
          %v4399 = vshrl.u32 %v4398, 7
          %v4400 = vsub.s32 %v4397, %v4399
          %v4401 = vrot.slane %v1202, %v4400
          %v4403 = vunpack.c.l.s4 269488144
          %v4404 = vunpack.c.0.s8 %v4403
          %v4405 = vlaneseq
          %v4406 = vshrl.u32 %v4405, 7
          %v4407 = vsub.s32 %v4404, %v4406
          %v4408 = vrot.slane %v1203, %v4407
          %v4410 = vunpack.c.l.s4 842150450
          %v4411 = vunpack.c.0.s8 %v4410
          %v4412 = vlaneseq
          %v4413 = vshrl.u32 %v4412, 7
          %v4414 = vsub.s32 %v4411, %v4413
          %v4415 = vrot.slane %v1203, %v4414
          %v4417 = vunpack.c.l.s4 1414812756
          %v4418 = vunpack.c.0.s8 %v4417
          %v4419 = vlaneseq
          %v4420 = vshrl.u32 %v4419, 7
          %v4421 = vsub.s32 %v4418, %v4420
          %v4422 = vrot.slane %v1203, %v4421
          %v4424 = vunpack.c.l.s4 1987475062
          %v4425 = vunpack.c.0.s8 %v4424
          %v4426 = vlaneseq
          %v4427 = vshrl.u32 %v4426, 7
          %v4428 = vsub.s32 %v4425, %v4427
          %v4429 = vrot.slane %v1203, %v4428
          %v4431 = vunpack.c.l.s4 269488144
          %v4432 = vunpack.c.0.s8 %v4431
          %v4433 = vlaneseq
          %v4434 = vshrl.u32 %v4433, 7
          %v4435 = vsub.s32 %v4432, %v4434
          %v4436 = vrot.slane %v1204, %v4435
          %v4438 = vunpack.c.l.s4 842150450
          %v4439 = vunpack.c.0.s8 %v4438
          %v4440 = vlaneseq
          %v4441 = vshrl.u32 %v4440, 7
          %v4442 = vsub.s32 %v4439, %v4441
          %v4443 = vrot.slane %v1204, %v4442
          %v4445 = vunpack.c.l.s4 1414812756
          %v4446 = vunpack.c.0.s8 %v4445
          %v4447 = vlaneseq
          %v4448 = vshrl.u32 %v4447, 7
          %v4449 = vsub.s32 %v4446, %v4448
          %v4450 = vrot.slane %v1204, %v4449
          %v4452 = vunpack.c.l.s4 1987475062
          %v4453 = vunpack.c.0.s8 %v4452
          %v4454 = vlaneseq
          %v4455 = vshrl.u32 %v4454, 7
          %v4456 = vsub.s32 %v4453, %v4455
          %v4457 = vrot.slane %v1204, %v4456
          %v4459 = vunpack.c.l.s4 269488144
          %v4460 = vunpack.c.0.s8 %v4459
          %v4461 = vlaneseq
          %v4462 = vshrl.u32 %v4461, 7
          %v4463 = vsub.s32 %v4460, %v4462
          %v4464 = vrot.slane %v1205, %v4463
          %v4466 = vunpack.c.l.s4 842150450
          %v4467 = vunpack.c.0.s8 %v4466
          %v4468 = vlaneseq
          %v4469 = vshrl.u32 %v4468, 7
          %v4470 = vsub.s32 %v4467, %v4469
          %v4471 = vrot.slane %v1205, %v4470
          %v4473 = vunpack.c.l.s4 1414812756
          %v4474 = vunpack.c.0.s8 %v4473
          %v4475 = vlaneseq
          %v4476 = vshrl.u32 %v4475, 7
          %v4477 = vsub.s32 %v4474, %v4476
          %v4478 = vrot.slane %v1205, %v4477
          %v4480 = vunpack.c.l.s4 1987475062
          %v4481 = vunpack.c.0.s8 %v4480
          %v4482 = vlaneseq
          %v4483 = vshrl.u32 %v4482, 7
          %v4484 = vsub.s32 %v4481, %v4483
          %v4485 = vrot.slane %v1205, %v4484
          %v4487 = vunpack.c.l.s4 269488144
          %v4488 = vunpack.c.0.s8 %v4487
          %v4489 = vlaneseq
          %v4490 = vshrl.u32 %v4489, 7
          %v4491 = vsub.s32 %v4488, %v4490
          %v4492 = vrot.slane %v1206, %v4491
          %v4494 = vunpack.c.l.s4 842150450
          %v4495 = vunpack.c.0.s8 %v4494
          %v4496 = vlaneseq
          %v4497 = vshrl.u32 %v4496, 7
          %v4498 = vsub.s32 %v4495, %v4497
          %v4499 = vrot.slane %v1206, %v4498
          %v4501 = vunpack.c.l.s4 1414812756
          %v4502 = vunpack.c.0.s8 %v4501
          %v4503 = vlaneseq
          %v4504 = vshrl.u32 %v4503, 7
          %v4505 = vsub.s32 %v4502, %v4504
          %v4506 = vrot.slane %v1206, %v4505
          %v4508 = vunpack.c.l.s4 1987475062
          %v4509 = vunpack.c.0.s8 %v4508
          %v4510 = vlaneseq
          %v4511 = vshrl.u32 %v4510, 7
          %v4512 = vsub.s32 %v4509, %v4511
          %v4513 = vrot.slane %v1206, %v4512
          %v4515 = vunpack.c.l.s4 269488144
          %v4516 = vunpack.c.0.s8 %v4515
          %v4517 = vlaneseq
          %v4518 = vshrl.u32 %v4517, 7
          %v4519 = vsub.s32 %v4516, %v4518
          %v4520 = vrot.slane %v1207, %v4519
          %v4522 = vunpack.c.l.s4 842150450
          %v4523 = vunpack.c.0.s8 %v4522
          %v4524 = vlaneseq
          %v4525 = vshrl.u32 %v4524, 7
          %v4526 = vsub.s32 %v4523, %v4525
          %v4527 = vrot.slane %v1207, %v4526
          %v4529 = vunpack.c.l.s4 1414812756
          %v4530 = vunpack.c.0.s8 %v4529
          %v4531 = vlaneseq
          %v4532 = vshrl.u32 %v4531, 7
          %v4533 = vsub.s32 %v4530, %v4532
          %v4534 = vrot.slane %v1207, %v4533
          %v4536 = vunpack.c.l.s4 1987475062
          %v4537 = vunpack.c.0.s8 %v4536
          %v4538 = vlaneseq
          %v4539 = vshrl.u32 %v4538, 7
          %v4540 = vsub.s32 %v4537, %v4539
          %v4541 = vrot.slane %v1207, %v4540
          %v4543 = vunpack.c.l.s4 269488144
          %v4544 = vunpack.c.0.s8 %v4543
          %v4545 = vlaneseq
          %v4546 = vshrl.u32 %v4545, 7
          %v4547 = vsub.s32 %v4544, %v4546
          %v4548 = vrot.slane %v1208, %v4547
          %v4550 = vunpack.c.l.s4 842150450
          %v4551 = vunpack.c.0.s8 %v4550
          %v4552 = vlaneseq
          %v4553 = vshrl.u32 %v4552, 7
          %v4554 = vsub.s32 %v4551, %v4553
          %v4555 = vrot.slane %v1208, %v4554
          %v4557 = vunpack.c.l.s4 1414812756
          %v4558 = vunpack.c.0.s8 %v4557
          %v4559 = vlaneseq
          %v4560 = vshrl.u32 %v4559, 7
          %v4561 = vsub.s32 %v4558, %v4560
          %v4562 = vrot.slane %v1208, %v4561
          %v4564 = vunpack.c.l.s4 1987475062
          %v4565 = vunpack.c.0.s8 %v4564
          %v4566 = vlaneseq
          %v4567 = vshrl.u32 %v4566, 7
          %v4568 = vsub.s32 %v4565, %v4567
          %v4569 = vrot.slane %v1208, %v4568
          %v4571 = vunpack.c.l.s4 269488144
          %v4572 = vunpack.c.0.s8 %v4571
          %v4573 = vlaneseq
          %v4574 = vshrl.u32 %v4573, 7
          %v4575 = vsub.s32 %v4572, %v4574
          %v4576 = vrot.slane %v1209, %v4575
          %v4578 = vunpack.c.l.s4 842150450
          %v4579 = vunpack.c.0.s8 %v4578
          %v4580 = vlaneseq
          %v4581 = vshrl.u32 %v4580, 7
          %v4582 = vsub.s32 %v4579, %v4581
          %v4583 = vrot.slane %v1209, %v4582
          %v4585 = vunpack.c.l.s4 1414812756
          %v4586 = vunpack.c.0.s8 %v4585
          %v4587 = vlaneseq
          %v4588 = vshrl.u32 %v4587, 7
          %v4589 = vsub.s32 %v4586, %v4588
          %v4590 = vrot.slane %v1209, %v4589
          %v4592 = vunpack.c.l.s4 1987475062
          %v4593 = vunpack.c.0.s8 %v4592
          %v4594 = vlaneseq
          %v4595 = vshrl.u32 %v4594, 7
          %v4596 = vsub.s32 %v4593, %v4595
          %v4597 = vrot.slane %v1209, %v4596
          %v4599 = vunpack.c.l.s4 269488144
          %v4600 = vunpack.c.0.s8 %v4599
          %v4601 = vlaneseq
          %v4602 = vshrl.u32 %v4601, 7
          %v4603 = vsub.s32 %v4600, %v4602
          %v4604 = vrot.slane %v1210, %v4603
          %v4606 = vunpack.c.l.s4 842150450
          %v4607 = vunpack.c.0.s8 %v4606
          %v4608 = vlaneseq
          %v4609 = vshrl.u32 %v4608, 7
          %v4610 = vsub.s32 %v4607, %v4609
          %v4611 = vrot.slane %v1210, %v4610
          %v4613 = vunpack.c.l.s4 1414812756
          %v4614 = vunpack.c.0.s8 %v4613
          %v4615 = vlaneseq
          %v4616 = vshrl.u32 %v4615, 7
          %v4617 = vsub.s32 %v4614, %v4616
          %v4618 = vrot.slane %v1210, %v4617
          %v4620 = vunpack.c.l.s4 1987475062
          %v4621 = vunpack.c.0.s8 %v4620
          %v4622 = vlaneseq
          %v4623 = vshrl.u32 %v4622, 7
          %v4624 = vsub.s32 %v4621, %v4623
          %v4625 = vrot.slane %v1210, %v4624
          %v4627 = vunpack.c.l.s4 269488144
          %v4628 = vunpack.c.0.s8 %v4627
          %v4629 = vlaneseq
          %v4630 = vshrl.u32 %v4629, 7
          %v4631 = vsub.s32 %v4628, %v4630
          %v4632 = vrot.slane %v1211, %v4631
          %v4634 = vunpack.c.l.s4 842150450
          %v4635 = vunpack.c.0.s8 %v4634
          %v4636 = vlaneseq
          %v4637 = vshrl.u32 %v4636, 7
          %v4638 = vsub.s32 %v4635, %v4637
          %v4639 = vrot.slane %v1211, %v4638
          %v4641 = vunpack.c.l.s4 1414812756
          %v4642 = vunpack.c.0.s8 %v4641
          %v4643 = vlaneseq
          %v4644 = vshrl.u32 %v4643, 7
          %v4645 = vsub.s32 %v4642, %v4644
          %v4646 = vrot.slane %v1211, %v4645
          %v4648 = vunpack.c.l.s4 1987475062
          %v4649 = vunpack.c.0.s8 %v4648
          %v4650 = vlaneseq
          %v4651 = vshrl.u32 %v4650, 7
          %v4652 = vsub.s32 %v4649, %v4651
          %v4653 = vrot.slane %v1211, %v4652
          %v4655 = vunpack.c.l.s4 269488144
          %v4656 = vunpack.c.0.s8 %v4655
          %v4657 = vlaneseq
          %v4658 = vshrl.u32 %v4657, 7
          %v4659 = vsub.s32 %v4656, %v4658
          %v4660 = vrot.slane %v1212, %v4659
          %v4662 = vunpack.c.l.s4 842150450
          %v4663 = vunpack.c.0.s8 %v4662
          %v4664 = vlaneseq
          %v4665 = vshrl.u32 %v4664, 7
          %v4666 = vsub.s32 %v4663, %v4665
          %v4667 = vrot.slane %v1212, %v4666
          %v4669 = vunpack.c.l.s4 1414812756
          %v4670 = vunpack.c.0.s8 %v4669
          %v4671 = vlaneseq
          %v4672 = vshrl.u32 %v4671, 7
          %v4673 = vsub.s32 %v4670, %v4672
          %v4674 = vrot.slane %v1212, %v4673
          %v4676 = vunpack.c.l.s4 1987475062
          %v4677 = vunpack.c.0.s8 %v4676
          %v4678 = vlaneseq
          %v4679 = vshrl.u32 %v4678, 7
          %v4680 = vsub.s32 %v4677, %v4679
          %v4681 = vrot.slane %v1212, %v4680
          %v4683 = vunpack.c.l.s4 269488144
          %v4684 = vunpack.c.0.s8 %v4683
          %v4685 = vlaneseq
          %v4686 = vshrl.u32 %v4685, 7
          %v4687 = vsub.s32 %v4684, %v4686
          %v4688 = vrot.slane %v1213, %v4687
          %v4690 = vunpack.c.l.s4 842150450
          %v4691 = vunpack.c.0.s8 %v4690
          %v4692 = vlaneseq
          %v4693 = vshrl.u32 %v4692, 7
          %v4694 = vsub.s32 %v4691, %v4693
          %v4695 = vrot.slane %v1213, %v4694
          %v4697 = vunpack.c.l.s4 1414812756
          %v4698 = vunpack.c.0.s8 %v4697
          %v4699 = vlaneseq
          %v4700 = vshrl.u32 %v4699, 7
          %v4701 = vsub.s32 %v4698, %v4700
          %v4702 = vrot.slane %v1213, %v4701
          %v4704 = vunpack.c.l.s4 1987475062
          %v4705 = vunpack.c.0.s8 %v4704
          %v4706 = vlaneseq
          %v4707 = vshrl.u32 %v4706, 7
          %v4708 = vsub.s32 %v4705, %v4707
          %v4709 = vrot.slane %v1213, %v4708
          %v4711 = vunpack.c.l.s4 269488144
          %v4712 = vunpack.c.0.s8 %v4711
          %v4713 = vlaneseq
          %v4714 = vshrl.u32 %v4713, 7
          %v4715 = vsub.s32 %v4712, %v4714
          %v4716 = vrot.slane %v1214, %v4715
          %v4718 = vunpack.c.l.s4 842150450
          %v4719 = vunpack.c.0.s8 %v4718
          %v4720 = vlaneseq
          %v4721 = vshrl.u32 %v4720, 7
          %v4722 = vsub.s32 %v4719, %v4721
          %v4723 = vrot.slane %v1214, %v4722
          %v4725 = vunpack.c.l.s4 1414812756
          %v4726 = vunpack.c.0.s8 %v4725
          %v4727 = vlaneseq
          %v4728 = vshrl.u32 %v4727, 7
          %v4729 = vsub.s32 %v4726, %v4728
          %v4730 = vrot.slane %v1214, %v4729
          %v4732 = vunpack.c.l.s4 1987475062
          %v4733 = vunpack.c.0.s8 %v4732
          %v4734 = vlaneseq
          %v4735 = vshrl.u32 %v4734, 7
          %v4736 = vsub.s32 %v4733, %v4735
          %v4737 = vrot.slane %v1214, %v4736
          %v4739 = vunpack.c.l.s4 269488144
          %v4740 = vunpack.c.0.s8 %v4739
          %v4741 = vlaneseq
          %v4742 = vshrl.u32 %v4741, 7
          %v4743 = vsub.s32 %v4740, %v4742
          %v4744 = vrot.slane %v1215, %v4743
          %v4746 = vunpack.c.l.s4 842150450
          %v4747 = vunpack.c.0.s8 %v4746
          %v4748 = vlaneseq
          %v4749 = vshrl.u32 %v4748, 7
          %v4750 = vsub.s32 %v4747, %v4749
          %v4751 = vrot.slane %v1215, %v4750
          %v4753 = vunpack.c.l.s4 1414812756
          %v4754 = vunpack.c.0.s8 %v4753
          %v4755 = vlaneseq
          %v4756 = vshrl.u32 %v4755, 7
          %v4757 = vsub.s32 %v4754, %v4756
          %v4758 = vrot.slane %v1215, %v4757
          %v4760 = vunpack.c.l.s4 1987475062
          %v4761 = vunpack.c.0.s8 %v4760
          %v4762 = vlaneseq
          %v4763 = vshrl.u32 %v4762, 7
          %v4764 = vsub.s32 %v4761, %v4763
          %v4765 = vrot.slane %v1215, %v4764
          %v4767 = vunpack.c.l.s4 269488144
          %v4768 = vunpack.c.0.s8 %v4767
          %v4769 = vlaneseq
          %v4770 = vshrl.u32 %v4769, 7
          %v4771 = vsub.s32 %v4768, %v4770
          %v4772 = vrot.slane %v1216, %v4771
          %v4774 = vunpack.c.l.s4 842150450
          %v4775 = vunpack.c.0.s8 %v4774
          %v4776 = vlaneseq
          %v4777 = vshrl.u32 %v4776, 7
          %v4778 = vsub.s32 %v4775, %v4777
          %v4779 = vrot.slane %v1216, %v4778
          %v4781 = vunpack.c.l.s4 1414812756
          %v4782 = vunpack.c.0.s8 %v4781
          %v4783 = vlaneseq
          %v4784 = vshrl.u32 %v4783, 7
          %v4785 = vsub.s32 %v4782, %v4784
          %v4786 = vrot.slane %v1216, %v4785
          %v4788 = vunpack.c.l.s4 1987475062
          %v4789 = vunpack.c.0.s8 %v4788
          %v4790 = vlaneseq
          %v4791 = vshrl.u32 %v4790, 7
          %v4792 = vsub.s32 %v4789, %v4791
          %v4793 = vrot.slane %v1216, %v4792
          %v4795 = vunpack.c.l.s4 269488144
          %v4796 = vunpack.c.0.s8 %v4795
          %v4797 = vlaneseq
          %v4798 = vshrl.u32 %v4797, 7
          %v4799 = vsub.s32 %v4796, %v4798
          %v4800 = vrot.slane %v1217, %v4799
          %v4802 = vunpack.c.l.s4 842150450
          %v4803 = vunpack.c.0.s8 %v4802
          %v4804 = vlaneseq
          %v4805 = vshrl.u32 %v4804, 7
          %v4806 = vsub.s32 %v4803, %v4805
          %v4807 = vrot.slane %v1217, %v4806
          %v4809 = vunpack.c.l.s4 1414812756
          %v4810 = vunpack.c.0.s8 %v4809
          %v4811 = vlaneseq
          %v4812 = vshrl.u32 %v4811, 7
          %v4813 = vsub.s32 %v4810, %v4812
          %v4814 = vrot.slane %v1217, %v4813
          %v4816 = vunpack.c.l.s4 1987475062
          %v4817 = vunpack.c.0.s8 %v4816
          %v4818 = vlaneseq
          %v4819 = vshrl.u32 %v4818, 7
          %v4820 = vsub.s32 %v4817, %v4819
          %v4821 = vrot.slane %v1217, %v4820
          %v4823 = vunpack.c.l.s4 269488144
          %v4824 = vunpack.c.0.s8 %v4823
          %v4825 = vlaneseq
          %v4826 = vshrl.u32 %v4825, 7
          %v4827 = vsub.s32 %v4824, %v4826
          %v4828 = vrot.slane %v1218, %v4827
          %v4830 = vunpack.c.l.s4 842150450
          %v4831 = vunpack.c.0.s8 %v4830
          %v4832 = vlaneseq
          %v4833 = vshrl.u32 %v4832, 7
          %v4834 = vsub.s32 %v4831, %v4833
          %v4835 = vrot.slane %v1218, %v4834
          %v4837 = vunpack.c.l.s4 1414812756
          %v4838 = vunpack.c.0.s8 %v4837
          %v4839 = vlaneseq
          %v4840 = vshrl.u32 %v4839, 7
          %v4841 = vsub.s32 %v4838, %v4840
          %v4842 = vrot.slane %v1218, %v4841
          %v4844 = vunpack.c.l.s4 1987475062
          %v4845 = vunpack.c.0.s8 %v4844
          %v4846 = vlaneseq
          %v4847 = vshrl.u32 %v4846, 7
          %v4848 = vsub.s32 %v4845, %v4847
          %v4849 = vrot.slane %v1218, %v4848
          %v4851 = vunpack.c.l.s4 269488144
          %v4852 = vunpack.c.0.s8 %v4851
          %v4853 = vlaneseq
          %v4854 = vshrl.u32 %v4853, 7
          %v4855 = vsub.s32 %v4852, %v4854
          %v4856 = vrot.slane %v1219, %v4855
          %v4858 = vunpack.c.l.s4 842150450
          %v4859 = vunpack.c.0.s8 %v4858
          %v4860 = vlaneseq
          %v4861 = vshrl.u32 %v4860, 7
          %v4862 = vsub.s32 %v4859, %v4861
          %v4863 = vrot.slane %v1219, %v4862
          %v4865 = vunpack.c.l.s4 1414812756
          %v4866 = vunpack.c.0.s8 %v4865
          %v4867 = vlaneseq
          %v4868 = vshrl.u32 %v4867, 7
          %v4869 = vsub.s32 %v4866, %v4868
          %v4870 = vrot.slane %v1219, %v4869
          %v4872 = vunpack.c.l.s4 1987475062
          %v4873 = vunpack.c.0.s8 %v4872
          %v4874 = vlaneseq
          %v4875 = vshrl.u32 %v4874, 7
          %v4876 = vsub.s32 %v4873, %v4875
          %v4877 = vrot.slane %v1219, %v4876
          %v4879 = vunpack.c.l.s4 269488144
          %v4880 = vunpack.c.0.s8 %v4879
          %v4881 = vlaneseq
          %v4882 = vshrl.u32 %v4881, 7
          %v4883 = vsub.s32 %v4880, %v4882
          %v4884 = vrot.slane %v1220, %v4883
          %v4886 = vunpack.c.l.s4 842150450
          %v4887 = vunpack.c.0.s8 %v4886
          %v4888 = vlaneseq
          %v4889 = vshrl.u32 %v4888, 7
          %v4890 = vsub.s32 %v4887, %v4889
          %v4891 = vrot.slane %v1220, %v4890
          %v4893 = vunpack.c.l.s4 1414812756
          %v4894 = vunpack.c.0.s8 %v4893
          %v4895 = vlaneseq
          %v4896 = vshrl.u32 %v4895, 7
          %v4897 = vsub.s32 %v4894, %v4896
          %v4898 = vrot.slane %v1220, %v4897
          %v4900 = vunpack.c.l.s4 1987475062
          %v4901 = vunpack.c.0.s8 %v4900
          %v4902 = vlaneseq
          %v4903 = vshrl.u32 %v4902, 7
          %v4904 = vsub.s32 %v4901, %v4903
          %v4905 = vrot.slane %v1220, %v4904
          %v4907 = vunpack.c.l.s4 269488144
          %v4908 = vunpack.c.0.s8 %v4907
          %v4909 = vlaneseq
          %v4910 = vshrl.u32 %v4909, 7
          %v4911 = vsub.s32 %v4908, %v4910
          %v4912 = vrot.slane %v1221, %v4911
          %v4914 = vunpack.c.l.s4 842150450
          %v4915 = vunpack.c.0.s8 %v4914
          %v4916 = vlaneseq
          %v4917 = vshrl.u32 %v4916, 7
          %v4918 = vsub.s32 %v4915, %v4917
          %v4919 = vrot.slane %v1221, %v4918
          %v4921 = vunpack.c.l.s4 1414812756
          %v4922 = vunpack.c.0.s8 %v4921
          %v4923 = vlaneseq
          %v4924 = vshrl.u32 %v4923, 7
          %v4925 = vsub.s32 %v4922, %v4924
          %v4926 = vrot.slane %v1221, %v4925
          %v4928 = vunpack.c.l.s4 1987475062
          %v4929 = vunpack.c.0.s8 %v4928
          %v4930 = vlaneseq
          %v4931 = vshrl.u32 %v4930, 7
          %v4932 = vsub.s32 %v4929, %v4931
          %v4933 = vrot.slane %v1221, %v4932
          %v4934 = vcombine.low %v1356, %v1363
          %v4935 = vcombine.low %v1370, %v1377
          %v4937 = vunpack.c.l.s4 1983009808
          %v4938 = vunpack.c.0.s8 %v4937
          %v4939 = vlaneseq
          %v4940 = vshrl.u32 %v4939, 7
          %v4941 = vsub.s32 %v4938, %v4940
          %v4942 = vrot.slane %v4934, %v4941
          %v4944 = vunpack.c.l.s4 1983009808
          %v4945 = vunpack.c.0.s8 %v4944
          %v4946 = vlaneseq
          %v4947 = vshrl.u32 %v4946, 7
          %v4948 = vsub.s32 %v4945, %v4947
          %v4949 = vrot.slane %v4935, %v4948
          %v4950 = vcombine.low %v4942, %v4949
          %v4951 = vcombine.low %v1384, %v1391
          %v4952 = vcombine.low %v1398, %v1405
          %v4954 = vunpack.c.l.s4 1983009808
          %v4955 = vunpack.c.0.s8 %v4954
          %v4956 = vlaneseq
          %v4957 = vshrl.u32 %v4956, 7
          %v4958 = vsub.s32 %v4955, %v4957
          %v4959 = vrot.slane %v4951, %v4958
          %v4961 = vunpack.c.l.s4 1983009808
          %v4962 = vunpack.c.0.s8 %v4961
          %v4963 = vlaneseq
          %v4964 = vshrl.u32 %v4963, 7
          %v4965 = vsub.s32 %v4962, %v4964
          %v4966 = vrot.slane %v4952, %v4965
          %v4967 = vcombine.low %v4959, %v4966
          %v4968 = vcombine.low %v1412, %v1419
          %v4969 = vcombine.low %v1426, %v1433
          %v4971 = vunpack.c.l.s4 1983009808
          %v4972 = vunpack.c.0.s8 %v4971
          %v4973 = vlaneseq
          %v4974 = vshrl.u32 %v4973, 7
          %v4975 = vsub.s32 %v4972, %v4974
          %v4976 = vrot.slane %v4968, %v4975
          %v4978 = vunpack.c.l.s4 1983009808
          %v4979 = vunpack.c.0.s8 %v4978
          %v4980 = vlaneseq
          %v4981 = vshrl.u32 %v4980, 7
          %v4982 = vsub.s32 %v4979, %v4981
          %v4983 = vrot.slane %v4969, %v4982
          %v4984 = vcombine.low %v4976, %v4983
          %v4985 = vcombine.low %v1440, %v1447
          %v4986 = vcombine.low %v1454, %v1461
          %v4988 = vunpack.c.l.s4 1983009808
          %v4989 = vunpack.c.0.s8 %v4988
          %v4990 = vlaneseq
          %v4991 = vshrl.u32 %v4990, 7
          %v4992 = vsub.s32 %v4989, %v4991
          %v4993 = vrot.slane %v4985, %v4992
          %v4995 = vunpack.c.l.s4 1983009808
          %v4996 = vunpack.c.0.s8 %v4995
          %v4997 = vlaneseq
          %v4998 = vshrl.u32 %v4997, 7
          %v4999 = vsub.s32 %v4996, %v4998
          %v5000 = vrot.slane %v4986, %v4999
          %v5001 = vcombine.low %v4993, %v5000
          %v5002 = vcombine.low %v1468, %v1475
          %v5003 = vcombine.low %v1482, %v1489
          %v5005 = vunpack.c.l.s4 1983009808
          %v5006 = vunpack.c.0.s8 %v5005
          %v5007 = vlaneseq
          %v5008 = vshrl.u32 %v5007, 7
          %v5009 = vsub.s32 %v5006, %v5008
          %v5010 = vrot.slane %v5002, %v5009
          %v5012 = vunpack.c.l.s4 1983009808
          %v5013 = vunpack.c.0.s8 %v5012
          %v5014 = vlaneseq
          %v5015 = vshrl.u32 %v5014, 7
          %v5016 = vsub.s32 %v5013, %v5015
          %v5017 = vrot.slane %v5003, %v5016
          %v5018 = vcombine.low %v5010, %v5017
          %v5019 = vcombine.low %v1496, %v1503
          %v5020 = vcombine.low %v1510, %v1517
          %v5022 = vunpack.c.l.s4 1983009808
          %v5023 = vunpack.c.0.s8 %v5022
          %v5024 = vlaneseq
          %v5025 = vshrl.u32 %v5024, 7
          %v5026 = vsub.s32 %v5023, %v5025
          %v5027 = vrot.slane %v5019, %v5026
          %v5029 = vunpack.c.l.s4 1983009808
          %v5030 = vunpack.c.0.s8 %v5029
          %v5031 = vlaneseq
          %v5032 = vshrl.u32 %v5031, 7
          %v5033 = vsub.s32 %v5030, %v5032
          %v5034 = vrot.slane %v5020, %v5033
          %v5035 = vcombine.low %v5027, %v5034
          %v5036 = vcombine.low %v1524, %v1531
          %v5037 = vcombine.low %v1538, %v1545
          %v5039 = vunpack.c.l.s4 1983009808
          %v5040 = vunpack.c.0.s8 %v5039
          %v5041 = vlaneseq
          %v5042 = vshrl.u32 %v5041, 7
          %v5043 = vsub.s32 %v5040, %v5042
          %v5044 = vrot.slane %v5036, %v5043
          %v5046 = vunpack.c.l.s4 1983009808
          %v5047 = vunpack.c.0.s8 %v5046
          %v5048 = vlaneseq
          %v5049 = vshrl.u32 %v5048, 7
          %v5050 = vsub.s32 %v5047, %v5049
          %v5051 = vrot.slane %v5037, %v5050
          %v5052 = vcombine.low %v5044, %v5051
          %v5053 = vcombine.low %v1552, %v1559
          %v5054 = vcombine.low %v1566, %v1573
          %v5056 = vunpack.c.l.s4 1983009808
          %v5057 = vunpack.c.0.s8 %v5056
          %v5058 = vlaneseq
          %v5059 = vshrl.u32 %v5058, 7
          %v5060 = vsub.s32 %v5057, %v5059
          %v5061 = vrot.slane %v5053, %v5060
          %v5063 = vunpack.c.l.s4 1983009808
          %v5064 = vunpack.c.0.s8 %v5063
          %v5065 = vlaneseq
          %v5066 = vshrl.u32 %v5065, 7
          %v5067 = vsub.s32 %v5064, %v5066
          %v5068 = vrot.slane %v5054, %v5067
          %v5069 = vcombine.low %v5061, %v5068
          %v5070 = vcombine.low %v1580, %v1587
          %v5071 = vcombine.low %v1594, %v1601
          %v5073 = vunpack.c.l.s4 1983009808
          %v5074 = vunpack.c.0.s8 %v5073
          %v5075 = vlaneseq
          %v5076 = vshrl.u32 %v5075, 7
          %v5077 = vsub.s32 %v5074, %v5076
          %v5078 = vrot.slane %v5070, %v5077
          %v5080 = vunpack.c.l.s4 1983009808
          %v5081 = vunpack.c.0.s8 %v5080
          %v5082 = vlaneseq
          %v5083 = vshrl.u32 %v5082, 7
          %v5084 = vsub.s32 %v5081, %v5083
          %v5085 = vrot.slane %v5071, %v5084
          %v5086 = vcombine.low %v5078, %v5085
          %v5087 = vcombine.low %v1608, %v1615
          %v5088 = vcombine.low %v1622, %v1629
          %v5090 = vunpack.c.l.s4 1983009808
          %v5091 = vunpack.c.0.s8 %v5090
          %v5092 = vlaneseq
          %v5093 = vshrl.u32 %v5092, 7
          %v5094 = vsub.s32 %v5091, %v5093
          %v5095 = vrot.slane %v5087, %v5094
          %v5097 = vunpack.c.l.s4 1983009808
          %v5098 = vunpack.c.0.s8 %v5097
          %v5099 = vlaneseq
          %v5100 = vshrl.u32 %v5099, 7
          %v5101 = vsub.s32 %v5098, %v5100
          %v5102 = vrot.slane %v5088, %v5101
          %v5103 = vcombine.low %v5095, %v5102
          %v5104 = vcombine.low %v1636, %v1643
          %v5105 = vcombine.low %v1650, %v1657
          %v5107 = vunpack.c.l.s4 1983009808
          %v5108 = vunpack.c.0.s8 %v5107
          %v5109 = vlaneseq
          %v5110 = vshrl.u32 %v5109, 7
          %v5111 = vsub.s32 %v5108, %v5110
          %v5112 = vrot.slane %v5104, %v5111
          %v5114 = vunpack.c.l.s4 1983009808
          %v5115 = vunpack.c.0.s8 %v5114
          %v5116 = vlaneseq
          %v5117 = vshrl.u32 %v5116, 7
          %v5118 = vsub.s32 %v5115, %v5117
          %v5119 = vrot.slane %v5105, %v5118
          %v5120 = vcombine.low %v5112, %v5119
          %v5121 = vcombine.low %v1664, %v1671
          %v5122 = vcombine.low %v1678, %v1685
          %v5124 = vunpack.c.l.s4 1983009808
          %v5125 = vunpack.c.0.s8 %v5124
          %v5126 = vlaneseq
          %v5127 = vshrl.u32 %v5126, 7
          %v5128 = vsub.s32 %v5125, %v5127
          %v5129 = vrot.slane %v5121, %v5128
          %v5131 = vunpack.c.l.s4 1983009808
          %v5132 = vunpack.c.0.s8 %v5131
          %v5133 = vlaneseq
          %v5134 = vshrl.u32 %v5133, 7
          %v5135 = vsub.s32 %v5132, %v5134
          %v5136 = vrot.slane %v5122, %v5135
          %v5137 = vcombine.low %v5129, %v5136
          %v5138 = vcombine.low %v1692, %v1699
          %v5139 = vcombine.low %v1706, %v1713
          %v5141 = vunpack.c.l.s4 1983009808
          %v5142 = vunpack.c.0.s8 %v5141
          %v5143 = vlaneseq
          %v5144 = vshrl.u32 %v5143, 7
          %v5145 = vsub.s32 %v5142, %v5144
          %v5146 = vrot.slane %v5138, %v5145
          %v5148 = vunpack.c.l.s4 1983009808
          %v5149 = vunpack.c.0.s8 %v5148
          %v5150 = vlaneseq
          %v5151 = vshrl.u32 %v5150, 7
          %v5152 = vsub.s32 %v5149, %v5151
          %v5153 = vrot.slane %v5139, %v5152
          %v5154 = vcombine.low %v5146, %v5153
          %v5155 = vcombine.low %v1720, %v1727
          %v5156 = vcombine.low %v1734, %v1741
          %v5158 = vunpack.c.l.s4 1983009808
          %v5159 = vunpack.c.0.s8 %v5158
          %v5160 = vlaneseq
          %v5161 = vshrl.u32 %v5160, 7
          %v5162 = vsub.s32 %v5159, %v5161
          %v5163 = vrot.slane %v5155, %v5162
          %v5165 = vunpack.c.l.s4 1983009808
          %v5166 = vunpack.c.0.s8 %v5165
          %v5167 = vlaneseq
          %v5168 = vshrl.u32 %v5167, 7
          %v5169 = vsub.s32 %v5166, %v5168
          %v5170 = vrot.slane %v5156, %v5169
          %v5171 = vcombine.low %v5163, %v5170
          %v5172 = vcombine.low %v1748, %v1755
          %v5173 = vcombine.low %v1762, %v1769
          %v5175 = vunpack.c.l.s4 1983009808
          %v5176 = vunpack.c.0.s8 %v5175
          %v5177 = vlaneseq
          %v5178 = vshrl.u32 %v5177, 7
          %v5179 = vsub.s32 %v5176, %v5178
          %v5180 = vrot.slane %v5172, %v5179
          %v5182 = vunpack.c.l.s4 1983009808
          %v5183 = vunpack.c.0.s8 %v5182
          %v5184 = vlaneseq
          %v5185 = vshrl.u32 %v5184, 7
          %v5186 = vsub.s32 %v5183, %v5185
          %v5187 = vrot.slane %v5173, %v5186
          %v5188 = vcombine.low %v5180, %v5187
          %v5189 = vcombine.low %v1776, %v1783
          %v5190 = vcombine.low %v1790, %v1797
          %v5192 = vunpack.c.l.s4 1983009808
          %v5193 = vunpack.c.0.s8 %v5192
          %v5194 = vlaneseq
          %v5195 = vshrl.u32 %v5194, 7
          %v5196 = vsub.s32 %v5193, %v5195
          %v5197 = vrot.slane %v5189, %v5196
          %v5199 = vunpack.c.l.s4 1983009808
          %v5200 = vunpack.c.0.s8 %v5199
          %v5201 = vlaneseq
          %v5202 = vshrl.u32 %v5201, 7
          %v5203 = vsub.s32 %v5200, %v5202
          %v5204 = vrot.slane %v5190, %v5203
          %v5205 = vcombine.low %v5197, %v5204
          %v5206 = vcombine.low %v1804, %v1811
          %v5207 = vcombine.low %v1818, %v1825
          %v5209 = vunpack.c.l.s4 1983009808
          %v5210 = vunpack.c.0.s8 %v5209
          %v5211 = vlaneseq
          %v5212 = vshrl.u32 %v5211, 7
          %v5213 = vsub.s32 %v5210, %v5212
          %v5214 = vrot.slane %v5206, %v5213
          %v5216 = vunpack.c.l.s4 1983009808
          %v5217 = vunpack.c.0.s8 %v5216
          %v5218 = vlaneseq
          %v5219 = vshrl.u32 %v5218, 7
          %v5220 = vsub.s32 %v5217, %v5219
          %v5221 = vrot.slane %v5207, %v5220
          %v5222 = vcombine.low %v5214, %v5221
          %v5223 = vcombine.low %v1832, %v1839
          %v5224 = vcombine.low %v1846, %v1853
          %v5226 = vunpack.c.l.s4 1983009808
          %v5227 = vunpack.c.0.s8 %v5226
          %v5228 = vlaneseq
          %v5229 = vshrl.u32 %v5228, 7
          %v5230 = vsub.s32 %v5227, %v5229
          %v5231 = vrot.slane %v5223, %v5230
          %v5233 = vunpack.c.l.s4 1983009808
          %v5234 = vunpack.c.0.s8 %v5233
          %v5235 = vlaneseq
          %v5236 = vshrl.u32 %v5235, 7
          %v5237 = vsub.s32 %v5234, %v5236
          %v5238 = vrot.slane %v5224, %v5237
          %v5239 = vcombine.low %v5231, %v5238
          %v5240 = vcombine.low %v1860, %v1867
          %v5241 = vcombine.low %v1874, %v1881
          %v5243 = vunpack.c.l.s4 1983009808
          %v5244 = vunpack.c.0.s8 %v5243
          %v5245 = vlaneseq
          %v5246 = vshrl.u32 %v5245, 7
          %v5247 = vsub.s32 %v5244, %v5246
          %v5248 = vrot.slane %v5240, %v5247
          %v5250 = vunpack.c.l.s4 1983009808
          %v5251 = vunpack.c.0.s8 %v5250
          %v5252 = vlaneseq
          %v5253 = vshrl.u32 %v5252, 7
          %v5254 = vsub.s32 %v5251, %v5253
          %v5255 = vrot.slane %v5241, %v5254
          %v5256 = vcombine.low %v5248, %v5255
          %v5257 = vcombine.low %v1888, %v1895
          %v5258 = vcombine.low %v1902, %v1909
          %v5260 = vunpack.c.l.s4 1983009808
          %v5261 = vunpack.c.0.s8 %v5260
          %v5262 = vlaneseq
          %v5263 = vshrl.u32 %v5262, 7
          %v5264 = vsub.s32 %v5261, %v5263
          %v5265 = vrot.slane %v5257, %v5264
          %v5267 = vunpack.c.l.s4 1983009808
          %v5268 = vunpack.c.0.s8 %v5267
          %v5269 = vlaneseq
          %v5270 = vshrl.u32 %v5269, 7
          %v5271 = vsub.s32 %v5268, %v5270
          %v5272 = vrot.slane %v5258, %v5271
          %v5273 = vcombine.low %v5265, %v5272
          %v5274 = vcombine.low %v1916, %v1923
          %v5275 = vcombine.low %v1930, %v1937
          %v5277 = vunpack.c.l.s4 1983009808
          %v5278 = vunpack.c.0.s8 %v5277
          %v5279 = vlaneseq
          %v5280 = vshrl.u32 %v5279, 7
          %v5281 = vsub.s32 %v5278, %v5280
          %v5282 = vrot.slane %v5274, %v5281
          %v5284 = vunpack.c.l.s4 1983009808
          %v5285 = vunpack.c.0.s8 %v5284
          %v5286 = vlaneseq
          %v5287 = vshrl.u32 %v5286, 7
          %v5288 = vsub.s32 %v5285, %v5287
          %v5289 = vrot.slane %v5275, %v5288
          %v5290 = vcombine.low %v5282, %v5289
          %v5291 = vcombine.low %v1944, %v1951
          %v5292 = vcombine.low %v1958, %v1965
          %v5294 = vunpack.c.l.s4 1983009808
          %v5295 = vunpack.c.0.s8 %v5294
          %v5296 = vlaneseq
          %v5297 = vshrl.u32 %v5296, 7
          %v5298 = vsub.s32 %v5295, %v5297
          %v5299 = vrot.slane %v5291, %v5298
          %v5301 = vunpack.c.l.s4 1983009808
          %v5302 = vunpack.c.0.s8 %v5301
          %v5303 = vlaneseq
          %v5304 = vshrl.u32 %v5303, 7
          %v5305 = vsub.s32 %v5302, %v5304
          %v5306 = vrot.slane %v5292, %v5305
          %v5307 = vcombine.low %v5299, %v5306
          %v5308 = vcombine.low %v1972, %v1979
          %v5309 = vcombine.low %v1986, %v1993
          %v5311 = vunpack.c.l.s4 1983009808
          %v5312 = vunpack.c.0.s8 %v5311
          %v5313 = vlaneseq
          %v5314 = vshrl.u32 %v5313, 7
          %v5315 = vsub.s32 %v5312, %v5314
          %v5316 = vrot.slane %v5308, %v5315
          %v5318 = vunpack.c.l.s4 1983009808
          %v5319 = vunpack.c.0.s8 %v5318
          %v5320 = vlaneseq
          %v5321 = vshrl.u32 %v5320, 7
          %v5322 = vsub.s32 %v5319, %v5321
          %v5323 = vrot.slane %v5309, %v5322
          %v5324 = vcombine.low %v5316, %v5323
          %v5325 = vcombine.low %v2000, %v2007
          %v5326 = vcombine.low %v2014, %v2021
          %v5328 = vunpack.c.l.s4 1983009808
          %v5329 = vunpack.c.0.s8 %v5328
          %v5330 = vlaneseq
          %v5331 = vshrl.u32 %v5330, 7
          %v5332 = vsub.s32 %v5329, %v5331
          %v5333 = vrot.slane %v5325, %v5332
          %v5335 = vunpack.c.l.s4 1983009808
          %v5336 = vunpack.c.0.s8 %v5335
          %v5337 = vlaneseq
          %v5338 = vshrl.u32 %v5337, 7
          %v5339 = vsub.s32 %v5336, %v5338
          %v5340 = vrot.slane %v5326, %v5339
          %v5341 = vcombine.low %v5333, %v5340
          %v5342 = vcombine.low %v2028, %v2035
          %v5343 = vcombine.low %v2042, %v2049
          %v5345 = vunpack.c.l.s4 1983009808
          %v5346 = vunpack.c.0.s8 %v5345
          %v5347 = vlaneseq
          %v5348 = vshrl.u32 %v5347, 7
          %v5349 = vsub.s32 %v5346, %v5348
          %v5350 = vrot.slane %v5342, %v5349
          %v5352 = vunpack.c.l.s4 1983009808
          %v5353 = vunpack.c.0.s8 %v5352
          %v5354 = vlaneseq
          %v5355 = vshrl.u32 %v5354, 7
          %v5356 = vsub.s32 %v5353, %v5355
          %v5357 = vrot.slane %v5343, %v5356
          %v5358 = vcombine.low %v5350, %v5357
          %v5359 = vcombine.low %v2056, %v2063
          %v5360 = vcombine.low %v2070, %v2077
          %v5362 = vunpack.c.l.s4 1983009808
          %v5363 = vunpack.c.0.s8 %v5362
          %v5364 = vlaneseq
          %v5365 = vshrl.u32 %v5364, 7
          %v5366 = vsub.s32 %v5363, %v5365
          %v5367 = vrot.slane %v5359, %v5366
          %v5369 = vunpack.c.l.s4 1983009808
          %v5370 = vunpack.c.0.s8 %v5369
          %v5371 = vlaneseq
          %v5372 = vshrl.u32 %v5371, 7
          %v5373 = vsub.s32 %v5370, %v5372
          %v5374 = vrot.slane %v5360, %v5373
          %v5375 = vcombine.low %v5367, %v5374
          %v5376 = vcombine.low %v2084, %v2091
          %v5377 = vcombine.low %v2098, %v2105
          %v5379 = vunpack.c.l.s4 1983009808
          %v5380 = vunpack.c.0.s8 %v5379
          %v5381 = vlaneseq
          %v5382 = vshrl.u32 %v5381, 7
          %v5383 = vsub.s32 %v5380, %v5382
          %v5384 = vrot.slane %v5376, %v5383
          %v5386 = vunpack.c.l.s4 1983009808
          %v5387 = vunpack.c.0.s8 %v5386
          %v5388 = vlaneseq
          %v5389 = vshrl.u32 %v5388, 7
          %v5390 = vsub.s32 %v5387, %v5389
          %v5391 = vrot.slane %v5377, %v5390
          %v5392 = vcombine.low %v5384, %v5391
          %v5393 = vcombine.low %v2112, %v2119
          %v5394 = vcombine.low %v2126, %v2133
          %v5396 = vunpack.c.l.s4 1983009808
          %v5397 = vunpack.c.0.s8 %v5396
          %v5398 = vlaneseq
          %v5399 = vshrl.u32 %v5398, 7
          %v5400 = vsub.s32 %v5397, %v5399
          %v5401 = vrot.slane %v5393, %v5400
          %v5403 = vunpack.c.l.s4 1983009808
          %v5404 = vunpack.c.0.s8 %v5403
          %v5405 = vlaneseq
          %v5406 = vshrl.u32 %v5405, 7
          %v5407 = vsub.s32 %v5404, %v5406
          %v5408 = vrot.slane %v5394, %v5407
          %v5409 = vcombine.low %v5401, %v5408
          %v5410 = vcombine.low %v2140, %v2147
          %v5411 = vcombine.low %v2154, %v2161
          %v5413 = vunpack.c.l.s4 1983009808
          %v5414 = vunpack.c.0.s8 %v5413
          %v5415 = vlaneseq
          %v5416 = vshrl.u32 %v5415, 7
          %v5417 = vsub.s32 %v5414, %v5416
          %v5418 = vrot.slane %v5410, %v5417
          %v5420 = vunpack.c.l.s4 1983009808
          %v5421 = vunpack.c.0.s8 %v5420
          %v5422 = vlaneseq
          %v5423 = vshrl.u32 %v5422, 7
          %v5424 = vsub.s32 %v5421, %v5423
          %v5425 = vrot.slane %v5411, %v5424
          %v5426 = vcombine.low %v5418, %v5425
          %v5427 = vcombine.low %v2168, %v2175
          %v5428 = vcombine.low %v2182, %v2189
          %v5430 = vunpack.c.l.s4 1983009808
          %v5431 = vunpack.c.0.s8 %v5430
          %v5432 = vlaneseq
          %v5433 = vshrl.u32 %v5432, 7
          %v5434 = vsub.s32 %v5431, %v5433
          %v5435 = vrot.slane %v5427, %v5434
          %v5437 = vunpack.c.l.s4 1983009808
          %v5438 = vunpack.c.0.s8 %v5437
          %v5439 = vlaneseq
          %v5440 = vshrl.u32 %v5439, 7
          %v5441 = vsub.s32 %v5438, %v5440
          %v5442 = vrot.slane %v5428, %v5441
          %v5443 = vcombine.low %v5435, %v5442
          %v5444 = vcombine.low %v2196, %v2203
          %v5445 = vcombine.low %v2210, %v2217
          %v5447 = vunpack.c.l.s4 1983009808
          %v5448 = vunpack.c.0.s8 %v5447
          %v5449 = vlaneseq
          %v5450 = vshrl.u32 %v5449, 7
          %v5451 = vsub.s32 %v5448, %v5450
          %v5452 = vrot.slane %v5444, %v5451
          %v5454 = vunpack.c.l.s4 1983009808
          %v5455 = vunpack.c.0.s8 %v5454
          %v5456 = vlaneseq
          %v5457 = vshrl.u32 %v5456, 7
          %v5458 = vsub.s32 %v5455, %v5457
          %v5459 = vrot.slane %v5445, %v5458
          %v5460 = vcombine.low %v5452, %v5459
          %v5461 = vcombine.low %v2224, %v2231
          %v5462 = vcombine.low %v2238, %v2245
          %v5464 = vunpack.c.l.s4 1983009808
          %v5465 = vunpack.c.0.s8 %v5464
          %v5466 = vlaneseq
          %v5467 = vshrl.u32 %v5466, 7
          %v5468 = vsub.s32 %v5465, %v5467
          %v5469 = vrot.slane %v5461, %v5468
          %v5471 = vunpack.c.l.s4 1983009808
          %v5472 = vunpack.c.0.s8 %v5471
          %v5473 = vlaneseq
          %v5474 = vshrl.u32 %v5473, 7
          %v5475 = vsub.s32 %v5472, %v5474
          %v5476 = vrot.slane %v5462, %v5475
          %v5477 = vcombine.low %v5469, %v5476
          %v5478 = vcombine.low %v2252, %v2259
          %v5479 = vcombine.low %v2266, %v2273
          %v5481 = vunpack.c.l.s4 1983009808
          %v5482 = vunpack.c.0.s8 %v5481
          %v5483 = vlaneseq
          %v5484 = vshrl.u32 %v5483, 7
          %v5485 = vsub.s32 %v5482, %v5484
          %v5486 = vrot.slane %v5478, %v5485
          %v5488 = vunpack.c.l.s4 1983009808
          %v5489 = vunpack.c.0.s8 %v5488
          %v5490 = vlaneseq
          %v5491 = vshrl.u32 %v5490, 7
          %v5492 = vsub.s32 %v5489, %v5491
          %v5493 = vrot.slane %v5479, %v5492
          %v5494 = vcombine.low %v5486, %v5493
          %v5495 = vcombine.low %v2280, %v2287
          %v5496 = vcombine.low %v2294, %v2301
          %v5498 = vunpack.c.l.s4 1983009808
          %v5499 = vunpack.c.0.s8 %v5498
          %v5500 = vlaneseq
          %v5501 = vshrl.u32 %v5500, 7
          %v5502 = vsub.s32 %v5499, %v5501
          %v5503 = vrot.slane %v5495, %v5502
          %v5505 = vunpack.c.l.s4 1983009808
          %v5506 = vunpack.c.0.s8 %v5505
          %v5507 = vlaneseq
          %v5508 = vshrl.u32 %v5507, 7
          %v5509 = vsub.s32 %v5506, %v5508
          %v5510 = vrot.slane %v5496, %v5509
          %v5511 = vcombine.low %v5503, %v5510
          %v5512 = vcombine.low %v2308, %v2315
          %v5513 = vcombine.low %v2322, %v2329
          %v5515 = vunpack.c.l.s4 1983009808
          %v5516 = vunpack.c.0.s8 %v5515
          %v5517 = vlaneseq
          %v5518 = vshrl.u32 %v5517, 7
          %v5519 = vsub.s32 %v5516, %v5518
          %v5520 = vrot.slane %v5512, %v5519
          %v5522 = vunpack.c.l.s4 1983009808
          %v5523 = vunpack.c.0.s8 %v5522
          %v5524 = vlaneseq
          %v5525 = vshrl.u32 %v5524, 7
          %v5526 = vsub.s32 %v5523, %v5525
          %v5527 = vrot.slane %v5513, %v5526
          %v5528 = vcombine.low %v5520, %v5527
          %v5529 = vcombine.low %v2336, %v2343
          %v5530 = vcombine.low %v2350, %v2357
          %v5532 = vunpack.c.l.s4 1983009808
          %v5533 = vunpack.c.0.s8 %v5532
          %v5534 = vlaneseq
          %v5535 = vshrl.u32 %v5534, 7
          %v5536 = vsub.s32 %v5533, %v5535
          %v5537 = vrot.slane %v5529, %v5536
          %v5539 = vunpack.c.l.s4 1983009808
          %v5540 = vunpack.c.0.s8 %v5539
          %v5541 = vlaneseq
          %v5542 = vshrl.u32 %v5541, 7
          %v5543 = vsub.s32 %v5540, %v5542
          %v5544 = vrot.slane %v5530, %v5543
          %v5545 = vcombine.low %v5537, %v5544
          %v5546 = vcombine.low %v2364, %v2371
          %v5547 = vcombine.low %v2378, %v2385
          %v5549 = vunpack.c.l.s4 1983009808
          %v5550 = vunpack.c.0.s8 %v5549
          %v5551 = vlaneseq
          %v5552 = vshrl.u32 %v5551, 7
          %v5553 = vsub.s32 %v5550, %v5552
          %v5554 = vrot.slane %v5546, %v5553
          %v5556 = vunpack.c.l.s4 1983009808
          %v5557 = vunpack.c.0.s8 %v5556
          %v5558 = vlaneseq
          %v5559 = vshrl.u32 %v5558, 7
          %v5560 = vsub.s32 %v5557, %v5559
          %v5561 = vrot.slane %v5547, %v5560
          %v5562 = vcombine.low %v5554, %v5561
          %v5563 = vcombine.low %v2392, %v2399
          %v5564 = vcombine.low %v2406, %v2413
          %v5566 = vunpack.c.l.s4 1983009808
          %v5567 = vunpack.c.0.s8 %v5566
          %v5568 = vlaneseq
          %v5569 = vshrl.u32 %v5568, 7
          %v5570 = vsub.s32 %v5567, %v5569
          %v5571 = vrot.slane %v5563, %v5570
          %v5573 = vunpack.c.l.s4 1983009808
          %v5574 = vunpack.c.0.s8 %v5573
          %v5575 = vlaneseq
          %v5576 = vshrl.u32 %v5575, 7
          %v5577 = vsub.s32 %v5574, %v5576
          %v5578 = vrot.slane %v5564, %v5577
          %v5579 = vcombine.low %v5571, %v5578
          %v5580 = vcombine.low %v2420, %v2427
          %v5581 = vcombine.low %v2434, %v2441
          %v5583 = vunpack.c.l.s4 1983009808
          %v5584 = vunpack.c.0.s8 %v5583
          %v5585 = vlaneseq
          %v5586 = vshrl.u32 %v5585, 7
          %v5587 = vsub.s32 %v5584, %v5586
          %v5588 = vrot.slane %v5580, %v5587
          %v5590 = vunpack.c.l.s4 1983009808
          %v5591 = vunpack.c.0.s8 %v5590
          %v5592 = vlaneseq
          %v5593 = vshrl.u32 %v5592, 7
          %v5594 = vsub.s32 %v5591, %v5593
          %v5595 = vrot.slane %v5581, %v5594
          %v5596 = vcombine.low %v5588, %v5595
          %v5597 = vcombine.low %v2448, %v2455
          %v5598 = vcombine.low %v2462, %v2469
          %v5600 = vunpack.c.l.s4 1983009808
          %v5601 = vunpack.c.0.s8 %v5600
          %v5602 = vlaneseq
          %v5603 = vshrl.u32 %v5602, 7
          %v5604 = vsub.s32 %v5601, %v5603
          %v5605 = vrot.slane %v5597, %v5604
          %v5607 = vunpack.c.l.s4 1983009808
          %v5608 = vunpack.c.0.s8 %v5607
          %v5609 = vlaneseq
          %v5610 = vshrl.u32 %v5609, 7
          %v5611 = vsub.s32 %v5608, %v5610
          %v5612 = vrot.slane %v5598, %v5611
          %v5613 = vcombine.low %v5605, %v5612
          %v5614 = vcombine.low %v2476, %v2483
          %v5615 = vcombine.low %v2490, %v2497
          %v5617 = vunpack.c.l.s4 1983009808
          %v5618 = vunpack.c.0.s8 %v5617
          %v5619 = vlaneseq
          %v5620 = vshrl.u32 %v5619, 7
          %v5621 = vsub.s32 %v5618, %v5620
          %v5622 = vrot.slane %v5614, %v5621
          %v5624 = vunpack.c.l.s4 1983009808
          %v5625 = vunpack.c.0.s8 %v5624
          %v5626 = vlaneseq
          %v5627 = vshrl.u32 %v5626, 7
          %v5628 = vsub.s32 %v5625, %v5627
          %v5629 = vrot.slane %v5615, %v5628
          %v5630 = vcombine.low %v5622, %v5629
          %v5631 = vcombine.low %v2504, %v2511
          %v5632 = vcombine.low %v2518, %v2525
          %v5634 = vunpack.c.l.s4 1983009808
          %v5635 = vunpack.c.0.s8 %v5634
          %v5636 = vlaneseq
          %v5637 = vshrl.u32 %v5636, 7
          %v5638 = vsub.s32 %v5635, %v5637
          %v5639 = vrot.slane %v5631, %v5638
          %v5641 = vunpack.c.l.s4 1983009808
          %v5642 = vunpack.c.0.s8 %v5641
          %v5643 = vlaneseq
          %v5644 = vshrl.u32 %v5643, 7
          %v5645 = vsub.s32 %v5642, %v5644
          %v5646 = vrot.slane %v5632, %v5645
          %v5647 = vcombine.low %v5639, %v5646
          %v5648 = vcombine.low %v2532, %v2539
          %v5649 = vcombine.low %v2546, %v2553
          %v5651 = vunpack.c.l.s4 1983009808
          %v5652 = vunpack.c.0.s8 %v5651
          %v5653 = vlaneseq
          %v5654 = vshrl.u32 %v5653, 7
          %v5655 = vsub.s32 %v5652, %v5654
          %v5656 = vrot.slane %v5648, %v5655
          %v5658 = vunpack.c.l.s4 1983009808
          %v5659 = vunpack.c.0.s8 %v5658
          %v5660 = vlaneseq
          %v5661 = vshrl.u32 %v5660, 7
          %v5662 = vsub.s32 %v5659, %v5661
          %v5663 = vrot.slane %v5649, %v5662
          %v5664 = vcombine.low %v5656, %v5663
          %v5665 = vcombine.low %v2560, %v2567
          %v5666 = vcombine.low %v2574, %v2581
          %v5668 = vunpack.c.l.s4 1983009808
          %v5669 = vunpack.c.0.s8 %v5668
          %v5670 = vlaneseq
          %v5671 = vshrl.u32 %v5670, 7
          %v5672 = vsub.s32 %v5669, %v5671
          %v5673 = vrot.slane %v5665, %v5672
          %v5675 = vunpack.c.l.s4 1983009808
          %v5676 = vunpack.c.0.s8 %v5675
          %v5677 = vlaneseq
          %v5678 = vshrl.u32 %v5677, 7
          %v5679 = vsub.s32 %v5676, %v5678
          %v5680 = vrot.slane %v5666, %v5679
          %v5681 = vcombine.low %v5673, %v5680
          %v5682 = vcombine.low %v2588, %v2595
          %v5683 = vcombine.low %v2602, %v2609
          %v5685 = vunpack.c.l.s4 1983009808
          %v5686 = vunpack.c.0.s8 %v5685
          %v5687 = vlaneseq
          %v5688 = vshrl.u32 %v5687, 7
          %v5689 = vsub.s32 %v5686, %v5688
          %v5690 = vrot.slane %v5682, %v5689
          %v5692 = vunpack.c.l.s4 1983009808
          %v5693 = vunpack.c.0.s8 %v5692
          %v5694 = vlaneseq
          %v5695 = vshrl.u32 %v5694, 7
          %v5696 = vsub.s32 %v5693, %v5695
          %v5697 = vrot.slane %v5683, %v5696
          %v5698 = vcombine.low %v5690, %v5697
          %v5699 = vcombine.low %v2616, %v2623
          %v5700 = vcombine.low %v2630, %v2637
          %v5702 = vunpack.c.l.s4 1983009808
          %v5703 = vunpack.c.0.s8 %v5702
          %v5704 = vlaneseq
          %v5705 = vshrl.u32 %v5704, 7
          %v5706 = vsub.s32 %v5703, %v5705
          %v5707 = vrot.slane %v5699, %v5706
          %v5709 = vunpack.c.l.s4 1983009808
          %v5710 = vunpack.c.0.s8 %v5709
          %v5711 = vlaneseq
          %v5712 = vshrl.u32 %v5711, 7
          %v5713 = vsub.s32 %v5710, %v5712
          %v5714 = vrot.slane %v5700, %v5713
          %v5715 = vcombine.low %v5707, %v5714
          %v5716 = vcombine.low %v2644, %v2651
          %v5717 = vcombine.low %v2658, %v2665
          %v5719 = vunpack.c.l.s4 1983009808
          %v5720 = vunpack.c.0.s8 %v5719
          %v5721 = vlaneseq
          %v5722 = vshrl.u32 %v5721, 7
          %v5723 = vsub.s32 %v5720, %v5722
          %v5724 = vrot.slane %v5716, %v5723
          %v5726 = vunpack.c.l.s4 1983009808
          %v5727 = vunpack.c.0.s8 %v5726
          %v5728 = vlaneseq
          %v5729 = vshrl.u32 %v5728, 7
          %v5730 = vsub.s32 %v5727, %v5729
          %v5731 = vrot.slane %v5717, %v5730
          %v5732 = vcombine.low %v5724, %v5731
          %v5733 = vcombine.low %v2672, %v2679
          %v5734 = vcombine.low %v2686, %v2693
          %v5736 = vunpack.c.l.s4 1983009808
          %v5737 = vunpack.c.0.s8 %v5736
          %v5738 = vlaneseq
          %v5739 = vshrl.u32 %v5738, 7
          %v5740 = vsub.s32 %v5737, %v5739
          %v5741 = vrot.slane %v5733, %v5740
          %v5743 = vunpack.c.l.s4 1983009808
          %v5744 = vunpack.c.0.s8 %v5743
          %v5745 = vlaneseq
          %v5746 = vshrl.u32 %v5745, 7
          %v5747 = vsub.s32 %v5744, %v5746
          %v5748 = vrot.slane %v5734, %v5747
          %v5749 = vcombine.low %v5741, %v5748
          %v5750 = vcombine.low %v2700, %v2707
          %v5751 = vcombine.low %v2714, %v2721
          %v5753 = vunpack.c.l.s4 1983009808
          %v5754 = vunpack.c.0.s8 %v5753
          %v5755 = vlaneseq
          %v5756 = vshrl.u32 %v5755, 7
          %v5757 = vsub.s32 %v5754, %v5756
          %v5758 = vrot.slane %v5750, %v5757
          %v5760 = vunpack.c.l.s4 1983009808
          %v5761 = vunpack.c.0.s8 %v5760
          %v5762 = vlaneseq
          %v5763 = vshrl.u32 %v5762, 7
          %v5764 = vsub.s32 %v5761, %v5763
          %v5765 = vrot.slane %v5751, %v5764
          %v5766 = vcombine.low %v5758, %v5765
          %v5767 = vcombine.low %v2728, %v2735
          %v5768 = vcombine.low %v2742, %v2749
          %v5770 = vunpack.c.l.s4 1983009808
          %v5771 = vunpack.c.0.s8 %v5770
          %v5772 = vlaneseq
          %v5773 = vshrl.u32 %v5772, 7
          %v5774 = vsub.s32 %v5771, %v5773
          %v5775 = vrot.slane %v5767, %v5774
          %v5777 = vunpack.c.l.s4 1983009808
          %v5778 = vunpack.c.0.s8 %v5777
          %v5779 = vlaneseq
          %v5780 = vshrl.u32 %v5779, 7
          %v5781 = vsub.s32 %v5778, %v5780
          %v5782 = vrot.slane %v5768, %v5781
          %v5783 = vcombine.low %v5775, %v5782
          %v5784 = vcombine.low %v2756, %v2763
          %v5785 = vcombine.low %v2770, %v2777
          %v5787 = vunpack.c.l.s4 1983009808
          %v5788 = vunpack.c.0.s8 %v5787
          %v5789 = vlaneseq
          %v5790 = vshrl.u32 %v5789, 7
          %v5791 = vsub.s32 %v5788, %v5790
          %v5792 = vrot.slane %v5784, %v5791
          %v5794 = vunpack.c.l.s4 1983009808
          %v5795 = vunpack.c.0.s8 %v5794
          %v5796 = vlaneseq
          %v5797 = vshrl.u32 %v5796, 7
          %v5798 = vsub.s32 %v5795, %v5797
          %v5799 = vrot.slane %v5785, %v5798
          %v5800 = vcombine.low %v5792, %v5799
          %v5801 = vcombine.low %v2784, %v2791
          %v5802 = vcombine.low %v2798, %v2805
          %v5804 = vunpack.c.l.s4 1983009808
          %v5805 = vunpack.c.0.s8 %v5804
          %v5806 = vlaneseq
          %v5807 = vshrl.u32 %v5806, 7
          %v5808 = vsub.s32 %v5805, %v5807
          %v5809 = vrot.slane %v5801, %v5808
          %v5811 = vunpack.c.l.s4 1983009808
          %v5812 = vunpack.c.0.s8 %v5811
          %v5813 = vlaneseq
          %v5814 = vshrl.u32 %v5813, 7
          %v5815 = vsub.s32 %v5812, %v5814
          %v5816 = vrot.slane %v5802, %v5815
          %v5817 = vcombine.low %v5809, %v5816
          %v5818 = vcombine.low %v2812, %v2819
          %v5819 = vcombine.low %v2826, %v2833
          %v5821 = vunpack.c.l.s4 1983009808
          %v5822 = vunpack.c.0.s8 %v5821
          %v5823 = vlaneseq
          %v5824 = vshrl.u32 %v5823, 7
          %v5825 = vsub.s32 %v5822, %v5824
          %v5826 = vrot.slane %v5818, %v5825
          %v5828 = vunpack.c.l.s4 1983009808
          %v5829 = vunpack.c.0.s8 %v5828
          %v5830 = vlaneseq
          %v5831 = vshrl.u32 %v5830, 7
          %v5832 = vsub.s32 %v5829, %v5831
          %v5833 = vrot.slane %v5819, %v5832
          %v5834 = vcombine.low %v5826, %v5833
          %v5835 = vcombine.low %v2840, %v2847
          %v5836 = vcombine.low %v2854, %v2861
          %v5838 = vunpack.c.l.s4 1983009808
          %v5839 = vunpack.c.0.s8 %v5838
          %v5840 = vlaneseq
          %v5841 = vshrl.u32 %v5840, 7
          %v5842 = vsub.s32 %v5839, %v5841
          %v5843 = vrot.slane %v5835, %v5842
          %v5845 = vunpack.c.l.s4 1983009808
          %v5846 = vunpack.c.0.s8 %v5845
          %v5847 = vlaneseq
          %v5848 = vshrl.u32 %v5847, 7
          %v5849 = vsub.s32 %v5846, %v5848
          %v5850 = vrot.slane %v5836, %v5849
          %v5851 = vcombine.low %v5843, %v5850
          %v5852 = vcombine.low %v2868, %v2875
          %v5853 = vcombine.low %v2882, %v2889
          %v5855 = vunpack.c.l.s4 1983009808
          %v5856 = vunpack.c.0.s8 %v5855
          %v5857 = vlaneseq
          %v5858 = vshrl.u32 %v5857, 7
          %v5859 = vsub.s32 %v5856, %v5858
          %v5860 = vrot.slane %v5852, %v5859
          %v5862 = vunpack.c.l.s4 1983009808
          %v5863 = vunpack.c.0.s8 %v5862
          %v5864 = vlaneseq
          %v5865 = vshrl.u32 %v5864, 7
          %v5866 = vsub.s32 %v5863, %v5865
          %v5867 = vrot.slane %v5853, %v5866
          %v5868 = vcombine.low %v5860, %v5867
          %v5869 = vcombine.low %v2896, %v2903
          %v5870 = vcombine.low %v2910, %v2917
          %v5872 = vunpack.c.l.s4 1983009808
          %v5873 = vunpack.c.0.s8 %v5872
          %v5874 = vlaneseq
          %v5875 = vshrl.u32 %v5874, 7
          %v5876 = vsub.s32 %v5873, %v5875
          %v5877 = vrot.slane %v5869, %v5876
          %v5879 = vunpack.c.l.s4 1983009808
          %v5880 = vunpack.c.0.s8 %v5879
          %v5881 = vlaneseq
          %v5882 = vshrl.u32 %v5881, 7
          %v5883 = vsub.s32 %v5880, %v5882
          %v5884 = vrot.slane %v5870, %v5883
          %v5885 = vcombine.low %v5877, %v5884
          %v5886 = vcombine.low %v2924, %v2931
          %v5887 = vcombine.low %v2938, %v2945
          %v5889 = vunpack.c.l.s4 1983009808
          %v5890 = vunpack.c.0.s8 %v5889
          %v5891 = vlaneseq
          %v5892 = vshrl.u32 %v5891, 7
          %v5893 = vsub.s32 %v5890, %v5892
          %v5894 = vrot.slane %v5886, %v5893
          %v5896 = vunpack.c.l.s4 1983009808
          %v5897 = vunpack.c.0.s8 %v5896
          %v5898 = vlaneseq
          %v5899 = vshrl.u32 %v5898, 7
          %v5900 = vsub.s32 %v5897, %v5899
          %v5901 = vrot.slane %v5887, %v5900
          %v5902 = vcombine.low %v5894, %v5901
          %v5903 = vcombine.low %v2952, %v2959
          %v5904 = vcombine.low %v2966, %v2973
          %v5906 = vunpack.c.l.s4 1983009808
          %v5907 = vunpack.c.0.s8 %v5906
          %v5908 = vlaneseq
          %v5909 = vshrl.u32 %v5908, 7
          %v5910 = vsub.s32 %v5907, %v5909
          %v5911 = vrot.slane %v5903, %v5910
          %v5913 = vunpack.c.l.s4 1983009808
          %v5914 = vunpack.c.0.s8 %v5913
          %v5915 = vlaneseq
          %v5916 = vshrl.u32 %v5915, 7
          %v5917 = vsub.s32 %v5914, %v5916
          %v5918 = vrot.slane %v5904, %v5917
          %v5919 = vcombine.low %v5911, %v5918
          %v5920 = vcombine.low %v2980, %v2987
          %v5921 = vcombine.low %v2994, %v3001
          %v5923 = vunpack.c.l.s4 1983009808
          %v5924 = vunpack.c.0.s8 %v5923
          %v5925 = vlaneseq
          %v5926 = vshrl.u32 %v5925, 7
          %v5927 = vsub.s32 %v5924, %v5926
          %v5928 = vrot.slane %v5920, %v5927
          %v5930 = vunpack.c.l.s4 1983009808
          %v5931 = vunpack.c.0.s8 %v5930
          %v5932 = vlaneseq
          %v5933 = vshrl.u32 %v5932, 7
          %v5934 = vsub.s32 %v5931, %v5933
          %v5935 = vrot.slane %v5921, %v5934
          %v5936 = vcombine.low %v5928, %v5935
          %v5937 = vcombine.low %v3008, %v3015
          %v5938 = vcombine.low %v3022, %v3029
          %v5940 = vunpack.c.l.s4 1983009808
          %v5941 = vunpack.c.0.s8 %v5940
          %v5942 = vlaneseq
          %v5943 = vshrl.u32 %v5942, 7
          %v5944 = vsub.s32 %v5941, %v5943
          %v5945 = vrot.slane %v5937, %v5944
          %v5947 = vunpack.c.l.s4 1983009808
          %v5948 = vunpack.c.0.s8 %v5947
          %v5949 = vlaneseq
          %v5950 = vshrl.u32 %v5949, 7
          %v5951 = vsub.s32 %v5948, %v5950
          %v5952 = vrot.slane %v5938, %v5951
          %v5953 = vcombine.low %v5945, %v5952
          %v5954 = vcombine.low %v3036, %v3043
          %v5955 = vcombine.low %v3050, %v3057
          %v5957 = vunpack.c.l.s4 1983009808
          %v5958 = vunpack.c.0.s8 %v5957
          %v5959 = vlaneseq
          %v5960 = vshrl.u32 %v5959, 7
          %v5961 = vsub.s32 %v5958, %v5960
          %v5962 = vrot.slane %v5954, %v5961
          %v5964 = vunpack.c.l.s4 1983009808
          %v5965 = vunpack.c.0.s8 %v5964
          %v5966 = vlaneseq
          %v5967 = vshrl.u32 %v5966, 7
          %v5968 = vsub.s32 %v5965, %v5967
          %v5969 = vrot.slane %v5955, %v5968
          %v5970 = vcombine.low %v5962, %v5969
          %v5971 = vcombine.low %v3064, %v3071
          %v5972 = vcombine.low %v3078, %v3085
          %v5974 = vunpack.c.l.s4 1983009808
          %v5975 = vunpack.c.0.s8 %v5974
          %v5976 = vlaneseq
          %v5977 = vshrl.u32 %v5976, 7
          %v5978 = vsub.s32 %v5975, %v5977
          %v5979 = vrot.slane %v5971, %v5978
          %v5981 = vunpack.c.l.s4 1983009808
          %v5982 = vunpack.c.0.s8 %v5981
          %v5983 = vlaneseq
          %v5984 = vshrl.u32 %v5983, 7
          %v5985 = vsub.s32 %v5982, %v5984
          %v5986 = vrot.slane %v5972, %v5985
          %v5987 = vcombine.low %v5979, %v5986
          %v5988 = vcombine.low %v3092, %v3099
          %v5989 = vcombine.low %v3106, %v3113
          %v5991 = vunpack.c.l.s4 1983009808
          %v5992 = vunpack.c.0.s8 %v5991
          %v5993 = vlaneseq
          %v5994 = vshrl.u32 %v5993, 7
          %v5995 = vsub.s32 %v5992, %v5994
          %v5996 = vrot.slane %v5988, %v5995
          %v5998 = vunpack.c.l.s4 1983009808
          %v5999 = vunpack.c.0.s8 %v5998
          %v6000 = vlaneseq
          %v6001 = vshrl.u32 %v6000, 7
          %v6002 = vsub.s32 %v5999, %v6001
          %v6003 = vrot.slane %v5989, %v6002
          %v6004 = vcombine.low %v5996, %v6003
          %v6005 = vcombine.low %v3120, %v3127
          %v6006 = vcombine.low %v3134, %v3141
          %v6008 = vunpack.c.l.s4 1983009808
          %v6009 = vunpack.c.0.s8 %v6008
          %v6010 = vlaneseq
          %v6011 = vshrl.u32 %v6010, 7
          %v6012 = vsub.s32 %v6009, %v6011
          %v6013 = vrot.slane %v6005, %v6012
          %v6015 = vunpack.c.l.s4 1983009808
          %v6016 = vunpack.c.0.s8 %v6015
          %v6017 = vlaneseq
          %v6018 = vshrl.u32 %v6017, 7
          %v6019 = vsub.s32 %v6016, %v6018
          %v6020 = vrot.slane %v6006, %v6019
          %v6021 = vcombine.low %v6013, %v6020
          %v6022 = vcombine.low %v3148, %v3155
          %v6023 = vcombine.low %v3162, %v3169
          %v6025 = vunpack.c.l.s4 1983009808
          %v6026 = vunpack.c.0.s8 %v6025
          %v6027 = vlaneseq
          %v6028 = vshrl.u32 %v6027, 7
          %v6029 = vsub.s32 %v6026, %v6028
          %v6030 = vrot.slane %v6022, %v6029
          %v6032 = vunpack.c.l.s4 1983009808
          %v6033 = vunpack.c.0.s8 %v6032
          %v6034 = vlaneseq
          %v6035 = vshrl.u32 %v6034, 7
          %v6036 = vsub.s32 %v6033, %v6035
          %v6037 = vrot.slane %v6023, %v6036
          %v6038 = vcombine.low %v6030, %v6037
          %v6039 = vcombine.low %v3176, %v3183
          %v6040 = vcombine.low %v3190, %v3197
          %v6042 = vunpack.c.l.s4 1983009808
          %v6043 = vunpack.c.0.s8 %v6042
          %v6044 = vlaneseq
          %v6045 = vshrl.u32 %v6044, 7
          %v6046 = vsub.s32 %v6043, %v6045
          %v6047 = vrot.slane %v6039, %v6046
          %v6049 = vunpack.c.l.s4 1983009808
          %v6050 = vunpack.c.0.s8 %v6049
          %v6051 = vlaneseq
          %v6052 = vshrl.u32 %v6051, 7
          %v6053 = vsub.s32 %v6050, %v6052
          %v6054 = vrot.slane %v6040, %v6053
          %v6055 = vcombine.low %v6047, %v6054
          %v6056 = vcombine.low %v3204, %v3211
          %v6057 = vcombine.low %v3218, %v3225
          %v6059 = vunpack.c.l.s4 1983009808
          %v6060 = vunpack.c.0.s8 %v6059
          %v6061 = vlaneseq
          %v6062 = vshrl.u32 %v6061, 7
          %v6063 = vsub.s32 %v6060, %v6062
          %v6064 = vrot.slane %v6056, %v6063
          %v6066 = vunpack.c.l.s4 1983009808
          %v6067 = vunpack.c.0.s8 %v6066
          %v6068 = vlaneseq
          %v6069 = vshrl.u32 %v6068, 7
          %v6070 = vsub.s32 %v6067, %v6069
          %v6071 = vrot.slane %v6057, %v6070
          %v6072 = vcombine.low %v6064, %v6071
          %v6073 = vcombine.low %v3232, %v3239
          %v6074 = vcombine.low %v3246, %v3253
          %v6076 = vunpack.c.l.s4 1983009808
          %v6077 = vunpack.c.0.s8 %v6076
          %v6078 = vlaneseq
          %v6079 = vshrl.u32 %v6078, 7
          %v6080 = vsub.s32 %v6077, %v6079
          %v6081 = vrot.slane %v6073, %v6080
          %v6083 = vunpack.c.l.s4 1983009808
          %v6084 = vunpack.c.0.s8 %v6083
          %v6085 = vlaneseq
          %v6086 = vshrl.u32 %v6085, 7
          %v6087 = vsub.s32 %v6084, %v6086
          %v6088 = vrot.slane %v6074, %v6087
          %v6089 = vcombine.low %v6081, %v6088
          %v6090 = vcombine.low %v3260, %v3267
          %v6091 = vcombine.low %v3274, %v3281
          %v6093 = vunpack.c.l.s4 1983009808
          %v6094 = vunpack.c.0.s8 %v6093
          %v6095 = vlaneseq
          %v6096 = vshrl.u32 %v6095, 7
          %v6097 = vsub.s32 %v6094, %v6096
          %v6098 = vrot.slane %v6090, %v6097
          %v6100 = vunpack.c.l.s4 1983009808
          %v6101 = vunpack.c.0.s8 %v6100
          %v6102 = vlaneseq
          %v6103 = vshrl.u32 %v6102, 7
          %v6104 = vsub.s32 %v6101, %v6103
          %v6105 = vrot.slane %v6091, %v6104
          %v6106 = vcombine.low %v6098, %v6105
          %v6107 = vcombine.low %v3288, %v3295
          %v6108 = vcombine.low %v3302, %v3309
          %v6110 = vunpack.c.l.s4 1983009808
          %v6111 = vunpack.c.0.s8 %v6110
          %v6112 = vlaneseq
          %v6113 = vshrl.u32 %v6112, 7
          %v6114 = vsub.s32 %v6111, %v6113
          %v6115 = vrot.slane %v6107, %v6114
          %v6117 = vunpack.c.l.s4 1983009808
          %v6118 = vunpack.c.0.s8 %v6117
          %v6119 = vlaneseq
          %v6120 = vshrl.u32 %v6119, 7
          %v6121 = vsub.s32 %v6118, %v6120
          %v6122 = vrot.slane %v6108, %v6121
          %v6123 = vcombine.low %v6115, %v6122
          %v6124 = vcombine.low %v3316, %v3323
          %v6125 = vcombine.low %v3330, %v3337
          %v6127 = vunpack.c.l.s4 1983009808
          %v6128 = vunpack.c.0.s8 %v6127
          %v6129 = vlaneseq
          %v6130 = vshrl.u32 %v6129, 7
          %v6131 = vsub.s32 %v6128, %v6130
          %v6132 = vrot.slane %v6124, %v6131
          %v6134 = vunpack.c.l.s4 1983009808
          %v6135 = vunpack.c.0.s8 %v6134
          %v6136 = vlaneseq
          %v6137 = vshrl.u32 %v6136, 7
          %v6138 = vsub.s32 %v6135, %v6137
          %v6139 = vrot.slane %v6125, %v6138
          %v6140 = vcombine.low %v6132, %v6139
          %v6141 = vcombine.low %v3344, %v3351
          %v6142 = vcombine.low %v3358, %v3365
          %v6144 = vunpack.c.l.s4 1983009808
          %v6145 = vunpack.c.0.s8 %v6144
          %v6146 = vlaneseq
          %v6147 = vshrl.u32 %v6146, 7
          %v6148 = vsub.s32 %v6145, %v6147
          %v6149 = vrot.slane %v6141, %v6148
          %v6151 = vunpack.c.l.s4 1983009808
          %v6152 = vunpack.c.0.s8 %v6151
          %v6153 = vlaneseq
          %v6154 = vshrl.u32 %v6153, 7
          %v6155 = vsub.s32 %v6152, %v6154
          %v6156 = vrot.slane %v6142, %v6155
          %v6157 = vcombine.low %v6149, %v6156
          %v6158 = vcombine.low %v3372, %v3379
          %v6159 = vcombine.low %v3386, %v3393
          %v6161 = vunpack.c.l.s4 1983009808
          %v6162 = vunpack.c.0.s8 %v6161
          %v6163 = vlaneseq
          %v6164 = vshrl.u32 %v6163, 7
          %v6165 = vsub.s32 %v6162, %v6164
          %v6166 = vrot.slane %v6158, %v6165
          %v6168 = vunpack.c.l.s4 1983009808
          %v6169 = vunpack.c.0.s8 %v6168
          %v6170 = vlaneseq
          %v6171 = vshrl.u32 %v6170, 7
          %v6172 = vsub.s32 %v6169, %v6171
          %v6173 = vrot.slane %v6159, %v6172
          %v6174 = vcombine.low %v6166, %v6173
          %v6175 = vcombine.low %v3400, %v3407
          %v6176 = vcombine.low %v3414, %v3421
          %v6178 = vunpack.c.l.s4 1983009808
          %v6179 = vunpack.c.0.s8 %v6178
          %v6180 = vlaneseq
          %v6181 = vshrl.u32 %v6180, 7
          %v6182 = vsub.s32 %v6179, %v6181
          %v6183 = vrot.slane %v6175, %v6182
          %v6185 = vunpack.c.l.s4 1983009808
          %v6186 = vunpack.c.0.s8 %v6185
          %v6187 = vlaneseq
          %v6188 = vshrl.u32 %v6187, 7
          %v6189 = vsub.s32 %v6186, %v6188
          %v6190 = vrot.slane %v6176, %v6189
          %v6191 = vcombine.low %v6183, %v6190
          %v6192 = vcombine.low %v3428, %v3435
          %v6193 = vcombine.low %v3442, %v3449
          %v6195 = vunpack.c.l.s4 1983009808
          %v6196 = vunpack.c.0.s8 %v6195
          %v6197 = vlaneseq
          %v6198 = vshrl.u32 %v6197, 7
          %v6199 = vsub.s32 %v6196, %v6198
          %v6200 = vrot.slane %v6192, %v6199
          %v6202 = vunpack.c.l.s4 1983009808
          %v6203 = vunpack.c.0.s8 %v6202
          %v6204 = vlaneseq
          %v6205 = vshrl.u32 %v6204, 7
          %v6206 = vsub.s32 %v6203, %v6205
          %v6207 = vrot.slane %v6193, %v6206
          %v6208 = vcombine.low %v6200, %v6207
          %v6209 = vcombine.low %v3456, %v3463
          %v6210 = vcombine.low %v3470, %v3477
          %v6212 = vunpack.c.l.s4 1983009808
          %v6213 = vunpack.c.0.s8 %v6212
          %v6214 = vlaneseq
          %v6215 = vshrl.u32 %v6214, 7
          %v6216 = vsub.s32 %v6213, %v6215
          %v6217 = vrot.slane %v6209, %v6216
          %v6219 = vunpack.c.l.s4 1983009808
          %v6220 = vunpack.c.0.s8 %v6219
          %v6221 = vlaneseq
          %v6222 = vshrl.u32 %v6221, 7
          %v6223 = vsub.s32 %v6220, %v6222
          %v6224 = vrot.slane %v6210, %v6223
          %v6225 = vcombine.low %v6217, %v6224
          %v6226 = vcombine.low %v3484, %v3491
          %v6227 = vcombine.low %v3498, %v3505
          %v6229 = vunpack.c.l.s4 1983009808
          %v6230 = vunpack.c.0.s8 %v6229
          %v6231 = vlaneseq
          %v6232 = vshrl.u32 %v6231, 7
          %v6233 = vsub.s32 %v6230, %v6232
          %v6234 = vrot.slane %v6226, %v6233
          %v6236 = vunpack.c.l.s4 1983009808
          %v6237 = vunpack.c.0.s8 %v6236
          %v6238 = vlaneseq
          %v6239 = vshrl.u32 %v6238, 7
          %v6240 = vsub.s32 %v6237, %v6239
          %v6241 = vrot.slane %v6227, %v6240
          %v6242 = vcombine.low %v6234, %v6241
          %v6243 = vcombine.low %v3512, %v3519
          %v6244 = vcombine.low %v3526, %v3533
          %v6246 = vunpack.c.l.s4 1983009808
          %v6247 = vunpack.c.0.s8 %v6246
          %v6248 = vlaneseq
          %v6249 = vshrl.u32 %v6248, 7
          %v6250 = vsub.s32 %v6247, %v6249
          %v6251 = vrot.slane %v6243, %v6250
          %v6253 = vunpack.c.l.s4 1983009808
          %v6254 = vunpack.c.0.s8 %v6253
          %v6255 = vlaneseq
          %v6256 = vshrl.u32 %v6255, 7
          %v6257 = vsub.s32 %v6254, %v6256
          %v6258 = vrot.slane %v6244, %v6257
          %v6259 = vcombine.low %v6251, %v6258
          %v6260 = vcombine.low %v3540, %v3547
          %v6261 = vcombine.low %v3554, %v3561
          %v6263 = vunpack.c.l.s4 1983009808
          %v6264 = vunpack.c.0.s8 %v6263
          %v6265 = vlaneseq
          %v6266 = vshrl.u32 %v6265, 7
          %v6267 = vsub.s32 %v6264, %v6266
          %v6268 = vrot.slane %v6260, %v6267
          %v6270 = vunpack.c.l.s4 1983009808
          %v6271 = vunpack.c.0.s8 %v6270
          %v6272 = vlaneseq
          %v6273 = vshrl.u32 %v6272, 7
          %v6274 = vsub.s32 %v6271, %v6273
          %v6275 = vrot.slane %v6261, %v6274
          %v6276 = vcombine.low %v6268, %v6275
          %v6277 = vcombine.low %v3568, %v3575
          %v6278 = vcombine.low %v3582, %v3589
          %v6280 = vunpack.c.l.s4 1983009808
          %v6281 = vunpack.c.0.s8 %v6280
          %v6282 = vlaneseq
          %v6283 = vshrl.u32 %v6282, 7
          %v6284 = vsub.s32 %v6281, %v6283
          %v6285 = vrot.slane %v6277, %v6284
          %v6287 = vunpack.c.l.s4 1983009808
          %v6288 = vunpack.c.0.s8 %v6287
          %v6289 = vlaneseq
          %v6290 = vshrl.u32 %v6289, 7
          %v6291 = vsub.s32 %v6288, %v6290
          %v6292 = vrot.slane %v6278, %v6291
          %v6293 = vcombine.low %v6285, %v6292
          %v6294 = vcombine.low %v3596, %v3603
          %v6295 = vcombine.low %v3610, %v3617
          %v6297 = vunpack.c.l.s4 1983009808
          %v6298 = vunpack.c.0.s8 %v6297
          %v6299 = vlaneseq
          %v6300 = vshrl.u32 %v6299, 7
          %v6301 = vsub.s32 %v6298, %v6300
          %v6302 = vrot.slane %v6294, %v6301
          %v6304 = vunpack.c.l.s4 1983009808
          %v6305 = vunpack.c.0.s8 %v6304
          %v6306 = vlaneseq
          %v6307 = vshrl.u32 %v6306, 7
          %v6308 = vsub.s32 %v6305, %v6307
          %v6309 = vrot.slane %v6295, %v6308
          %v6310 = vcombine.low %v6302, %v6309
          %v6311 = vcombine.low %v3624, %v3631
          %v6312 = vcombine.low %v3638, %v3645
          %v6314 = vunpack.c.l.s4 1983009808
          %v6315 = vunpack.c.0.s8 %v6314
          %v6316 = vlaneseq
          %v6317 = vshrl.u32 %v6316, 7
          %v6318 = vsub.s32 %v6315, %v6317
          %v6319 = vrot.slane %v6311, %v6318
          %v6321 = vunpack.c.l.s4 1983009808
          %v6322 = vunpack.c.0.s8 %v6321
          %v6323 = vlaneseq
          %v6324 = vshrl.u32 %v6323, 7
          %v6325 = vsub.s32 %v6322, %v6324
          %v6326 = vrot.slane %v6312, %v6325
          %v6327 = vcombine.low %v6319, %v6326
          %v6328 = vcombine.low %v3652, %v3659
          %v6329 = vcombine.low %v3666, %v3673
          %v6331 = vunpack.c.l.s4 1983009808
          %v6332 = vunpack.c.0.s8 %v6331
          %v6333 = vlaneseq
          %v6334 = vshrl.u32 %v6333, 7
          %v6335 = vsub.s32 %v6332, %v6334
          %v6336 = vrot.slane %v6328, %v6335
          %v6338 = vunpack.c.l.s4 1983009808
          %v6339 = vunpack.c.0.s8 %v6338
          %v6340 = vlaneseq
          %v6341 = vshrl.u32 %v6340, 7
          %v6342 = vsub.s32 %v6339, %v6341
          %v6343 = vrot.slane %v6329, %v6342
          %v6344 = vcombine.low %v6336, %v6343
          %v6345 = vcombine.low %v3680, %v3687
          %v6346 = vcombine.low %v3694, %v3701
          %v6348 = vunpack.c.l.s4 1983009808
          %v6349 = vunpack.c.0.s8 %v6348
          %v6350 = vlaneseq
          %v6351 = vshrl.u32 %v6350, 7
          %v6352 = vsub.s32 %v6349, %v6351
          %v6353 = vrot.slane %v6345, %v6352
          %v6355 = vunpack.c.l.s4 1983009808
          %v6356 = vunpack.c.0.s8 %v6355
          %v6357 = vlaneseq
          %v6358 = vshrl.u32 %v6357, 7
          %v6359 = vsub.s32 %v6356, %v6358
          %v6360 = vrot.slane %v6346, %v6359
          %v6361 = vcombine.low %v6353, %v6360
          %v6362 = vcombine.low %v3708, %v3715
          %v6363 = vcombine.low %v3722, %v3729
          %v6365 = vunpack.c.l.s4 1983009808
          %v6366 = vunpack.c.0.s8 %v6365
          %v6367 = vlaneseq
          %v6368 = vshrl.u32 %v6367, 7
          %v6369 = vsub.s32 %v6366, %v6368
          %v6370 = vrot.slane %v6362, %v6369
          %v6372 = vunpack.c.l.s4 1983009808
          %v6373 = vunpack.c.0.s8 %v6372
          %v6374 = vlaneseq
          %v6375 = vshrl.u32 %v6374, 7
          %v6376 = vsub.s32 %v6373, %v6375
          %v6377 = vrot.slane %v6363, %v6376
          %v6378 = vcombine.low %v6370, %v6377
          %v6379 = vcombine.low %v3736, %v3743
          %v6380 = vcombine.low %v3750, %v3757
          %v6382 = vunpack.c.l.s4 1983009808
          %v6383 = vunpack.c.0.s8 %v6382
          %v6384 = vlaneseq
          %v6385 = vshrl.u32 %v6384, 7
          %v6386 = vsub.s32 %v6383, %v6385
          %v6387 = vrot.slane %v6379, %v6386
          %v6389 = vunpack.c.l.s4 1983009808
          %v6390 = vunpack.c.0.s8 %v6389
          %v6391 = vlaneseq
          %v6392 = vshrl.u32 %v6391, 7
          %v6393 = vsub.s32 %v6390, %v6392
          %v6394 = vrot.slane %v6380, %v6393
          %v6395 = vcombine.low %v6387, %v6394
          %v6396 = vcombine.low %v3764, %v3771
          %v6397 = vcombine.low %v3778, %v3785
          %v6399 = vunpack.c.l.s4 1983009808
          %v6400 = vunpack.c.0.s8 %v6399
          %v6401 = vlaneseq
          %v6402 = vshrl.u32 %v6401, 7
          %v6403 = vsub.s32 %v6400, %v6402
          %v6404 = vrot.slane %v6396, %v6403
          %v6406 = vunpack.c.l.s4 1983009808
          %v6407 = vunpack.c.0.s8 %v6406
          %v6408 = vlaneseq
          %v6409 = vshrl.u32 %v6408, 7
          %v6410 = vsub.s32 %v6407, %v6409
          %v6411 = vrot.slane %v6397, %v6410
          %v6412 = vcombine.low %v6404, %v6411
          %v6413 = vcombine.low %v3792, %v3799
          %v6414 = vcombine.low %v3806, %v3813
          %v6416 = vunpack.c.l.s4 1983009808
          %v6417 = vunpack.c.0.s8 %v6416
          %v6418 = vlaneseq
          %v6419 = vshrl.u32 %v6418, 7
          %v6420 = vsub.s32 %v6417, %v6419
          %v6421 = vrot.slane %v6413, %v6420
          %v6423 = vunpack.c.l.s4 1983009808
          %v6424 = vunpack.c.0.s8 %v6423
          %v6425 = vlaneseq
          %v6426 = vshrl.u32 %v6425, 7
          %v6427 = vsub.s32 %v6424, %v6426
          %v6428 = vrot.slane %v6414, %v6427
          %v6429 = vcombine.low %v6421, %v6428
          %v6430 = vcombine.low %v3820, %v3827
          %v6431 = vcombine.low %v3834, %v3841
          %v6433 = vunpack.c.l.s4 1983009808
          %v6434 = vunpack.c.0.s8 %v6433
          %v6435 = vlaneseq
          %v6436 = vshrl.u32 %v6435, 7
          %v6437 = vsub.s32 %v6434, %v6436
          %v6438 = vrot.slane %v6430, %v6437
          %v6440 = vunpack.c.l.s4 1983009808
          %v6441 = vunpack.c.0.s8 %v6440
          %v6442 = vlaneseq
          %v6443 = vshrl.u32 %v6442, 7
          %v6444 = vsub.s32 %v6441, %v6443
          %v6445 = vrot.slane %v6431, %v6444
          %v6446 = vcombine.low %v6438, %v6445
          %v6447 = vcombine.low %v3848, %v3855
          %v6448 = vcombine.low %v3862, %v3869
          %v6450 = vunpack.c.l.s4 1983009808
          %v6451 = vunpack.c.0.s8 %v6450
          %v6452 = vlaneseq
          %v6453 = vshrl.u32 %v6452, 7
          %v6454 = vsub.s32 %v6451, %v6453
          %v6455 = vrot.slane %v6447, %v6454
          %v6457 = vunpack.c.l.s4 1983009808
          %v6458 = vunpack.c.0.s8 %v6457
          %v6459 = vlaneseq
          %v6460 = vshrl.u32 %v6459, 7
          %v6461 = vsub.s32 %v6458, %v6460
          %v6462 = vrot.slane %v6448, %v6461
          %v6463 = vcombine.low %v6455, %v6462
          %v6464 = vcombine.low %v3876, %v3883
          %v6465 = vcombine.low %v3890, %v3897
          %v6467 = vunpack.c.l.s4 1983009808
          %v6468 = vunpack.c.0.s8 %v6467
          %v6469 = vlaneseq
          %v6470 = vshrl.u32 %v6469, 7
          %v6471 = vsub.s32 %v6468, %v6470
          %v6472 = vrot.slane %v6464, %v6471
          %v6474 = vunpack.c.l.s4 1983009808
          %v6475 = vunpack.c.0.s8 %v6474
          %v6476 = vlaneseq
          %v6477 = vshrl.u32 %v6476, 7
          %v6478 = vsub.s32 %v6475, %v6477
          %v6479 = vrot.slane %v6465, %v6478
          %v6480 = vcombine.low %v6472, %v6479
          %v6481 = vcombine.low %v3904, %v3911
          %v6482 = vcombine.low %v3918, %v3925
          %v6484 = vunpack.c.l.s4 1983009808
          %v6485 = vunpack.c.0.s8 %v6484
          %v6486 = vlaneseq
          %v6487 = vshrl.u32 %v6486, 7
          %v6488 = vsub.s32 %v6485, %v6487
          %v6489 = vrot.slane %v6481, %v6488
          %v6491 = vunpack.c.l.s4 1983009808
          %v6492 = vunpack.c.0.s8 %v6491
          %v6493 = vlaneseq
          %v6494 = vshrl.u32 %v6493, 7
          %v6495 = vsub.s32 %v6492, %v6494
          %v6496 = vrot.slane %v6482, %v6495
          %v6497 = vcombine.low %v6489, %v6496
          %v6498 = vcombine.low %v3932, %v3939
          %v6499 = vcombine.low %v3946, %v3953
          %v6501 = vunpack.c.l.s4 1983009808
          %v6502 = vunpack.c.0.s8 %v6501
          %v6503 = vlaneseq
          %v6504 = vshrl.u32 %v6503, 7
          %v6505 = vsub.s32 %v6502, %v6504
          %v6506 = vrot.slane %v6498, %v6505
          %v6508 = vunpack.c.l.s4 1983009808
          %v6509 = vunpack.c.0.s8 %v6508
          %v6510 = vlaneseq
          %v6511 = vshrl.u32 %v6510, 7
          %v6512 = vsub.s32 %v6509, %v6511
          %v6513 = vrot.slane %v6499, %v6512
          %v6514 = vcombine.low %v6506, %v6513
          %v6515 = vcombine.low %v3960, %v3967
          %v6516 = vcombine.low %v3974, %v3981
          %v6518 = vunpack.c.l.s4 1983009808
          %v6519 = vunpack.c.0.s8 %v6518
          %v6520 = vlaneseq
          %v6521 = vshrl.u32 %v6520, 7
          %v6522 = vsub.s32 %v6519, %v6521
          %v6523 = vrot.slane %v6515, %v6522
          %v6525 = vunpack.c.l.s4 1983009808
          %v6526 = vunpack.c.0.s8 %v6525
          %v6527 = vlaneseq
          %v6528 = vshrl.u32 %v6527, 7
          %v6529 = vsub.s32 %v6526, %v6528
          %v6530 = vrot.slane %v6516, %v6529
          %v6531 = vcombine.low %v6523, %v6530
          %v6532 = vcombine.low %v3988, %v3995
          %v6533 = vcombine.low %v4002, %v4009
          %v6535 = vunpack.c.l.s4 1983009808
          %v6536 = vunpack.c.0.s8 %v6535
          %v6537 = vlaneseq
          %v6538 = vshrl.u32 %v6537, 7
          %v6539 = vsub.s32 %v6536, %v6538
          %v6540 = vrot.slane %v6532, %v6539
          %v6542 = vunpack.c.l.s4 1983009808
          %v6543 = vunpack.c.0.s8 %v6542
          %v6544 = vlaneseq
          %v6545 = vshrl.u32 %v6544, 7
          %v6546 = vsub.s32 %v6543, %v6545
          %v6547 = vrot.slane %v6533, %v6546
          %v6548 = vcombine.low %v6540, %v6547
          %v6549 = vcombine.low %v4016, %v4023
          %v6550 = vcombine.low %v4030, %v4037
          %v6552 = vunpack.c.l.s4 1983009808
          %v6553 = vunpack.c.0.s8 %v6552
          %v6554 = vlaneseq
          %v6555 = vshrl.u32 %v6554, 7
          %v6556 = vsub.s32 %v6553, %v6555
          %v6557 = vrot.slane %v6549, %v6556
          %v6559 = vunpack.c.l.s4 1983009808
          %v6560 = vunpack.c.0.s8 %v6559
          %v6561 = vlaneseq
          %v6562 = vshrl.u32 %v6561, 7
          %v6563 = vsub.s32 %v6560, %v6562
          %v6564 = vrot.slane %v6550, %v6563
          %v6565 = vcombine.low %v6557, %v6564
          %v6566 = vcombine.low %v4044, %v4051
          %v6567 = vcombine.low %v4058, %v4065
          %v6569 = vunpack.c.l.s4 1983009808
          %v6570 = vunpack.c.0.s8 %v6569
          %v6571 = vlaneseq
          %v6572 = vshrl.u32 %v6571, 7
          %v6573 = vsub.s32 %v6570, %v6572
          %v6574 = vrot.slane %v6566, %v6573
          %v6576 = vunpack.c.l.s4 1983009808
          %v6577 = vunpack.c.0.s8 %v6576
          %v6578 = vlaneseq
          %v6579 = vshrl.u32 %v6578, 7
          %v6580 = vsub.s32 %v6577, %v6579
          %v6581 = vrot.slane %v6567, %v6580
          %v6582 = vcombine.low %v6574, %v6581
          %v6583 = vcombine.low %v4072, %v4079
          %v6584 = vcombine.low %v4086, %v4093
          %v6586 = vunpack.c.l.s4 1983009808
          %v6587 = vunpack.c.0.s8 %v6586
          %v6588 = vlaneseq
          %v6589 = vshrl.u32 %v6588, 7
          %v6590 = vsub.s32 %v6587, %v6589
          %v6591 = vrot.slane %v6583, %v6590
          %v6593 = vunpack.c.l.s4 1983009808
          %v6594 = vunpack.c.0.s8 %v6593
          %v6595 = vlaneseq
          %v6596 = vshrl.u32 %v6595, 7
          %v6597 = vsub.s32 %v6594, %v6596
          %v6598 = vrot.slane %v6584, %v6597
          %v6599 = vcombine.low %v6591, %v6598
          %v6600 = vcombine.low %v4100, %v4107
          %v6601 = vcombine.low %v4114, %v4121
          %v6603 = vunpack.c.l.s4 1983009808
          %v6604 = vunpack.c.0.s8 %v6603
          %v6605 = vlaneseq
          %v6606 = vshrl.u32 %v6605, 7
          %v6607 = vsub.s32 %v6604, %v6606
          %v6608 = vrot.slane %v6600, %v6607
          %v6610 = vunpack.c.l.s4 1983009808
          %v6611 = vunpack.c.0.s8 %v6610
          %v6612 = vlaneseq
          %v6613 = vshrl.u32 %v6612, 7
          %v6614 = vsub.s32 %v6611, %v6613
          %v6615 = vrot.slane %v6601, %v6614
          %v6616 = vcombine.low %v6608, %v6615
          %v6617 = vcombine.low %v4128, %v4135
          %v6618 = vcombine.low %v4142, %v4149
          %v6620 = vunpack.c.l.s4 1983009808
          %v6621 = vunpack.c.0.s8 %v6620
          %v6622 = vlaneseq
          %v6623 = vshrl.u32 %v6622, 7
          %v6624 = vsub.s32 %v6621, %v6623
          %v6625 = vrot.slane %v6617, %v6624
          %v6627 = vunpack.c.l.s4 1983009808
          %v6628 = vunpack.c.0.s8 %v6627
          %v6629 = vlaneseq
          %v6630 = vshrl.u32 %v6629, 7
          %v6631 = vsub.s32 %v6628, %v6630
          %v6632 = vrot.slane %v6618, %v6631
          %v6633 = vcombine.low %v6625, %v6632
          %v6634 = vcombine.low %v4156, %v4163
          %v6635 = vcombine.low %v4170, %v4177
          %v6637 = vunpack.c.l.s4 1983009808
          %v6638 = vunpack.c.0.s8 %v6637
          %v6639 = vlaneseq
          %v6640 = vshrl.u32 %v6639, 7
          %v6641 = vsub.s32 %v6638, %v6640
          %v6642 = vrot.slane %v6634, %v6641
          %v6644 = vunpack.c.l.s4 1983009808
          %v6645 = vunpack.c.0.s8 %v6644
          %v6646 = vlaneseq
          %v6647 = vshrl.u32 %v6646, 7
          %v6648 = vsub.s32 %v6645, %v6647
          %v6649 = vrot.slane %v6635, %v6648
          %v6650 = vcombine.low %v6642, %v6649
          %v6651 = vcombine.low %v4184, %v4191
          %v6652 = vcombine.low %v4198, %v4205
          %v6654 = vunpack.c.l.s4 1983009808
          %v6655 = vunpack.c.0.s8 %v6654
          %v6656 = vlaneseq
          %v6657 = vshrl.u32 %v6656, 7
          %v6658 = vsub.s32 %v6655, %v6657
          %v6659 = vrot.slane %v6651, %v6658
          %v6661 = vunpack.c.l.s4 1983009808
          %v6662 = vunpack.c.0.s8 %v6661
          %v6663 = vlaneseq
          %v6664 = vshrl.u32 %v6663, 7
          %v6665 = vsub.s32 %v6662, %v6664
          %v6666 = vrot.slane %v6652, %v6665
          %v6667 = vcombine.low %v6659, %v6666
          %v6668 = vcombine.low %v4212, %v4219
          %v6669 = vcombine.low %v4226, %v4233
          %v6671 = vunpack.c.l.s4 1983009808
          %v6672 = vunpack.c.0.s8 %v6671
          %v6673 = vlaneseq
          %v6674 = vshrl.u32 %v6673, 7
          %v6675 = vsub.s32 %v6672, %v6674
          %v6676 = vrot.slane %v6668, %v6675
          %v6678 = vunpack.c.l.s4 1983009808
          %v6679 = vunpack.c.0.s8 %v6678
          %v6680 = vlaneseq
          %v6681 = vshrl.u32 %v6680, 7
          %v6682 = vsub.s32 %v6679, %v6681
          %v6683 = vrot.slane %v6669, %v6682
          %v6684 = vcombine.low %v6676, %v6683
          %v6685 = vcombine.low %v4240, %v4247
          %v6686 = vcombine.low %v4254, %v4261
          %v6688 = vunpack.c.l.s4 1983009808
          %v6689 = vunpack.c.0.s8 %v6688
          %v6690 = vlaneseq
          %v6691 = vshrl.u32 %v6690, 7
          %v6692 = vsub.s32 %v6689, %v6691
          %v6693 = vrot.slane %v6685, %v6692
          %v6695 = vunpack.c.l.s4 1983009808
          %v6696 = vunpack.c.0.s8 %v6695
          %v6697 = vlaneseq
          %v6698 = vshrl.u32 %v6697, 7
          %v6699 = vsub.s32 %v6696, %v6698
          %v6700 = vrot.slane %v6686, %v6699
          %v6701 = vcombine.low %v6693, %v6700
          %v6702 = vcombine.low %v4268, %v4275
          %v6703 = vcombine.low %v4282, %v4289
          %v6705 = vunpack.c.l.s4 1983009808
          %v6706 = vunpack.c.0.s8 %v6705
          %v6707 = vlaneseq
          %v6708 = vshrl.u32 %v6707, 7
          %v6709 = vsub.s32 %v6706, %v6708
          %v6710 = vrot.slane %v6702, %v6709
          %v6712 = vunpack.c.l.s4 1983009808
          %v6713 = vunpack.c.0.s8 %v6712
          %v6714 = vlaneseq
          %v6715 = vshrl.u32 %v6714, 7
          %v6716 = vsub.s32 %v6713, %v6715
          %v6717 = vrot.slane %v6703, %v6716
          %v6718 = vcombine.low %v6710, %v6717
          %v6719 = vcombine.low %v4296, %v4303
          %v6720 = vcombine.low %v4310, %v4317
          %v6722 = vunpack.c.l.s4 1983009808
          %v6723 = vunpack.c.0.s8 %v6722
          %v6724 = vlaneseq
          %v6725 = vshrl.u32 %v6724, 7
          %v6726 = vsub.s32 %v6723, %v6725
          %v6727 = vrot.slane %v6719, %v6726
          %v6729 = vunpack.c.l.s4 1983009808
          %v6730 = vunpack.c.0.s8 %v6729
          %v6731 = vlaneseq
          %v6732 = vshrl.u32 %v6731, 7
          %v6733 = vsub.s32 %v6730, %v6732
          %v6734 = vrot.slane %v6720, %v6733
          %v6735 = vcombine.low %v6727, %v6734
          %v6736 = vcombine.low %v4324, %v4331
          %v6737 = vcombine.low %v4338, %v4345
          %v6739 = vunpack.c.l.s4 1983009808
          %v6740 = vunpack.c.0.s8 %v6739
          %v6741 = vlaneseq
          %v6742 = vshrl.u32 %v6741, 7
          %v6743 = vsub.s32 %v6740, %v6742
          %v6744 = vrot.slane %v6736, %v6743
          %v6746 = vunpack.c.l.s4 1983009808
          %v6747 = vunpack.c.0.s8 %v6746
          %v6748 = vlaneseq
          %v6749 = vshrl.u32 %v6748, 7
          %v6750 = vsub.s32 %v6747, %v6749
          %v6751 = vrot.slane %v6737, %v6750
          %v6752 = vcombine.low %v6744, %v6751
          %v6753 = vcombine.low %v4352, %v4359
          %v6754 = vcombine.low %v4366, %v4373
          %v6756 = vunpack.c.l.s4 1983009808
          %v6757 = vunpack.c.0.s8 %v6756
          %v6758 = vlaneseq
          %v6759 = vshrl.u32 %v6758, 7
          %v6760 = vsub.s32 %v6757, %v6759
          %v6761 = vrot.slane %v6753, %v6760
          %v6763 = vunpack.c.l.s4 1983009808
          %v6764 = vunpack.c.0.s8 %v6763
          %v6765 = vlaneseq
          %v6766 = vshrl.u32 %v6765, 7
          %v6767 = vsub.s32 %v6764, %v6766
          %v6768 = vrot.slane %v6754, %v6767
          %v6769 = vcombine.low %v6761, %v6768
          %v6770 = vcombine.low %v4380, %v4387
          %v6771 = vcombine.low %v4394, %v4401
          %v6773 = vunpack.c.l.s4 1983009808
          %v6774 = vunpack.c.0.s8 %v6773
          %v6775 = vlaneseq
          %v6776 = vshrl.u32 %v6775, 7
          %v6777 = vsub.s32 %v6774, %v6776
          %v6778 = vrot.slane %v6770, %v6777
          %v6780 = vunpack.c.l.s4 1983009808
          %v6781 = vunpack.c.0.s8 %v6780
          %v6782 = vlaneseq
          %v6783 = vshrl.u32 %v6782, 7
          %v6784 = vsub.s32 %v6781, %v6783
          %v6785 = vrot.slane %v6771, %v6784
          %v6786 = vcombine.low %v6778, %v6785
          %v6787 = vcombine.low %v4408, %v4415
          %v6788 = vcombine.low %v4422, %v4429
          %v6790 = vunpack.c.l.s4 1983009808
          %v6791 = vunpack.c.0.s8 %v6790
          %v6792 = vlaneseq
          %v6793 = vshrl.u32 %v6792, 7
          %v6794 = vsub.s32 %v6791, %v6793
          %v6795 = vrot.slane %v6787, %v6794
          %v6797 = vunpack.c.l.s4 1983009808
          %v6798 = vunpack.c.0.s8 %v6797
          %v6799 = vlaneseq
          %v6800 = vshrl.u32 %v6799, 7
          %v6801 = vsub.s32 %v6798, %v6800
          %v6802 = vrot.slane %v6788, %v6801
          %v6803 = vcombine.low %v6795, %v6802
          %v6804 = vcombine.low %v4436, %v4443
          %v6805 = vcombine.low %v4450, %v4457
          %v6807 = vunpack.c.l.s4 1983009808
          %v6808 = vunpack.c.0.s8 %v6807
          %v6809 = vlaneseq
          %v6810 = vshrl.u32 %v6809, 7
          %v6811 = vsub.s32 %v6808, %v6810
          %v6812 = vrot.slane %v6804, %v6811
          %v6814 = vunpack.c.l.s4 1983009808
          %v6815 = vunpack.c.0.s8 %v6814
          %v6816 = vlaneseq
          %v6817 = vshrl.u32 %v6816, 7
          %v6818 = vsub.s32 %v6815, %v6817
          %v6819 = vrot.slane %v6805, %v6818
          %v6820 = vcombine.low %v6812, %v6819
          %v6821 = vcombine.low %v4464, %v4471
          %v6822 = vcombine.low %v4478, %v4485
          %v6824 = vunpack.c.l.s4 1983009808
          %v6825 = vunpack.c.0.s8 %v6824
          %v6826 = vlaneseq
          %v6827 = vshrl.u32 %v6826, 7
          %v6828 = vsub.s32 %v6825, %v6827
          %v6829 = vrot.slane %v6821, %v6828
          %v6831 = vunpack.c.l.s4 1983009808
          %v6832 = vunpack.c.0.s8 %v6831
          %v6833 = vlaneseq
          %v6834 = vshrl.u32 %v6833, 7
          %v6835 = vsub.s32 %v6832, %v6834
          %v6836 = vrot.slane %v6822, %v6835
          %v6837 = vcombine.low %v6829, %v6836
          %v6838 = vcombine.low %v4492, %v4499
          %v6839 = vcombine.low %v4506, %v4513
          %v6841 = vunpack.c.l.s4 1983009808
          %v6842 = vunpack.c.0.s8 %v6841
          %v6843 = vlaneseq
          %v6844 = vshrl.u32 %v6843, 7
          %v6845 = vsub.s32 %v6842, %v6844
          %v6846 = vrot.slane %v6838, %v6845
          %v6848 = vunpack.c.l.s4 1983009808
          %v6849 = vunpack.c.0.s8 %v6848
          %v6850 = vlaneseq
          %v6851 = vshrl.u32 %v6850, 7
          %v6852 = vsub.s32 %v6849, %v6851
          %v6853 = vrot.slane %v6839, %v6852
          %v6854 = vcombine.low %v6846, %v6853
          %v6855 = vcombine.low %v4520, %v4527
          %v6856 = vcombine.low %v4534, %v4541
          %v6858 = vunpack.c.l.s4 1983009808
          %v6859 = vunpack.c.0.s8 %v6858
          %v6860 = vlaneseq
          %v6861 = vshrl.u32 %v6860, 7
          %v6862 = vsub.s32 %v6859, %v6861
          %v6863 = vrot.slane %v6855, %v6862
          %v6865 = vunpack.c.l.s4 1983009808
          %v6866 = vunpack.c.0.s8 %v6865
          %v6867 = vlaneseq
          %v6868 = vshrl.u32 %v6867, 7
          %v6869 = vsub.s32 %v6866, %v6868
          %v6870 = vrot.slane %v6856, %v6869
          %v6871 = vcombine.low %v6863, %v6870
          %v6872 = vcombine.low %v4548, %v4555
          %v6873 = vcombine.low %v4562, %v4569
          %v6875 = vunpack.c.l.s4 1983009808
          %v6876 = vunpack.c.0.s8 %v6875
          %v6877 = vlaneseq
          %v6878 = vshrl.u32 %v6877, 7
          %v6879 = vsub.s32 %v6876, %v6878
          %v6880 = vrot.slane %v6872, %v6879
          %v6882 = vunpack.c.l.s4 1983009808
          %v6883 = vunpack.c.0.s8 %v6882
          %v6884 = vlaneseq
          %v6885 = vshrl.u32 %v6884, 7
          %v6886 = vsub.s32 %v6883, %v6885
          %v6887 = vrot.slane %v6873, %v6886
          %v6888 = vcombine.low %v6880, %v6887
          %v6889 = vcombine.low %v4576, %v4583
          %v6890 = vcombine.low %v4590, %v4597
          %v6892 = vunpack.c.l.s4 1983009808
          %v6893 = vunpack.c.0.s8 %v6892
          %v6894 = vlaneseq
          %v6895 = vshrl.u32 %v6894, 7
          %v6896 = vsub.s32 %v6893, %v6895
          %v6897 = vrot.slane %v6889, %v6896
          %v6899 = vunpack.c.l.s4 1983009808
          %v6900 = vunpack.c.0.s8 %v6899
          %v6901 = vlaneseq
          %v6902 = vshrl.u32 %v6901, 7
          %v6903 = vsub.s32 %v6900, %v6902
          %v6904 = vrot.slane %v6890, %v6903
          %v6905 = vcombine.low %v6897, %v6904
          %v6906 = vcombine.low %v4604, %v4611
          %v6907 = vcombine.low %v4618, %v4625
          %v6909 = vunpack.c.l.s4 1983009808
          %v6910 = vunpack.c.0.s8 %v6909
          %v6911 = vlaneseq
          %v6912 = vshrl.u32 %v6911, 7
          %v6913 = vsub.s32 %v6910, %v6912
          %v6914 = vrot.slane %v6906, %v6913
          %v6916 = vunpack.c.l.s4 1983009808
          %v6917 = vunpack.c.0.s8 %v6916
          %v6918 = vlaneseq
          %v6919 = vshrl.u32 %v6918, 7
          %v6920 = vsub.s32 %v6917, %v6919
          %v6921 = vrot.slane %v6907, %v6920
          %v6922 = vcombine.low %v6914, %v6921
          %v6923 = vcombine.low %v4632, %v4639
          %v6924 = vcombine.low %v4646, %v4653
          %v6926 = vunpack.c.l.s4 1983009808
          %v6927 = vunpack.c.0.s8 %v6926
          %v6928 = vlaneseq
          %v6929 = vshrl.u32 %v6928, 7
          %v6930 = vsub.s32 %v6927, %v6929
          %v6931 = vrot.slane %v6923, %v6930
          %v6933 = vunpack.c.l.s4 1983009808
          %v6934 = vunpack.c.0.s8 %v6933
          %v6935 = vlaneseq
          %v6936 = vshrl.u32 %v6935, 7
          %v6937 = vsub.s32 %v6934, %v6936
          %v6938 = vrot.slane %v6924, %v6937
          %v6939 = vcombine.low %v6931, %v6938
          %v6940 = vcombine.low %v4660, %v4667
          %v6941 = vcombine.low %v4674, %v4681
          %v6943 = vunpack.c.l.s4 1983009808
          %v6944 = vunpack.c.0.s8 %v6943
          %v6945 = vlaneseq
          %v6946 = vshrl.u32 %v6945, 7
          %v6947 = vsub.s32 %v6944, %v6946
          %v6948 = vrot.slane %v6940, %v6947
          %v6950 = vunpack.c.l.s4 1983009808
          %v6951 = vunpack.c.0.s8 %v6950
          %v6952 = vlaneseq
          %v6953 = vshrl.u32 %v6952, 7
          %v6954 = vsub.s32 %v6951, %v6953
          %v6955 = vrot.slane %v6941, %v6954
          %v6956 = vcombine.low %v6948, %v6955
          %v6957 = vcombine.low %v4688, %v4695
          %v6958 = vcombine.low %v4702, %v4709
          %v6960 = vunpack.c.l.s4 1983009808
          %v6961 = vunpack.c.0.s8 %v6960
          %v6962 = vlaneseq
          %v6963 = vshrl.u32 %v6962, 7
          %v6964 = vsub.s32 %v6961, %v6963
          %v6965 = vrot.slane %v6957, %v6964
          %v6967 = vunpack.c.l.s4 1983009808
          %v6968 = vunpack.c.0.s8 %v6967
          %v6969 = vlaneseq
          %v6970 = vshrl.u32 %v6969, 7
          %v6971 = vsub.s32 %v6968, %v6970
          %v6972 = vrot.slane %v6958, %v6971
          %v6973 = vcombine.low %v6965, %v6972
          %v6974 = vcombine.low %v4716, %v4723
          %v6975 = vcombine.low %v4730, %v4737
          %v6977 = vunpack.c.l.s4 1983009808
          %v6978 = vunpack.c.0.s8 %v6977
          %v6979 = vlaneseq
          %v6980 = vshrl.u32 %v6979, 7
          %v6981 = vsub.s32 %v6978, %v6980
          %v6982 = vrot.slane %v6974, %v6981
          %v6984 = vunpack.c.l.s4 1983009808
          %v6985 = vunpack.c.0.s8 %v6984
          %v6986 = vlaneseq
          %v6987 = vshrl.u32 %v6986, 7
          %v6988 = vsub.s32 %v6985, %v6987
          %v6989 = vrot.slane %v6975, %v6988
          %v6990 = vcombine.low %v6982, %v6989
          %v6991 = vcombine.low %v4744, %v4751
          %v6992 = vcombine.low %v4758, %v4765
          %v6994 = vunpack.c.l.s4 1983009808
          %v6995 = vunpack.c.0.s8 %v6994
          %v6996 = vlaneseq
          %v6997 = vshrl.u32 %v6996, 7
          %v6998 = vsub.s32 %v6995, %v6997
          %v6999 = vrot.slane %v6991, %v6998
          %v7001 = vunpack.c.l.s4 1983009808
          %v7002 = vunpack.c.0.s8 %v7001
          %v7003 = vlaneseq
          %v7004 = vshrl.u32 %v7003, 7
          %v7005 = vsub.s32 %v7002, %v7004
          %v7006 = vrot.slane %v6992, %v7005
          %v7007 = vcombine.low %v6999, %v7006
          %v7008 = vcombine.low %v4772, %v4779
          %v7009 = vcombine.low %v4786, %v4793
          %v7011 = vunpack.c.l.s4 1983009808
          %v7012 = vunpack.c.0.s8 %v7011
          %v7013 = vlaneseq
          %v7014 = vshrl.u32 %v7013, 7
          %v7015 = vsub.s32 %v7012, %v7014
          %v7016 = vrot.slane %v7008, %v7015
          %v7018 = vunpack.c.l.s4 1983009808
          %v7019 = vunpack.c.0.s8 %v7018
          %v7020 = vlaneseq
          %v7021 = vshrl.u32 %v7020, 7
          %v7022 = vsub.s32 %v7019, %v7021
          %v7023 = vrot.slane %v7009, %v7022
          %v7024 = vcombine.low %v7016, %v7023
          %v7025 = vcombine.low %v4800, %v4807
          %v7026 = vcombine.low %v4814, %v4821
          %v7028 = vunpack.c.l.s4 1983009808
          %v7029 = vunpack.c.0.s8 %v7028
          %v7030 = vlaneseq
          %v7031 = vshrl.u32 %v7030, 7
          %v7032 = vsub.s32 %v7029, %v7031
          %v7033 = vrot.slane %v7025, %v7032
          %v7035 = vunpack.c.l.s4 1983009808
          %v7036 = vunpack.c.0.s8 %v7035
          %v7037 = vlaneseq
          %v7038 = vshrl.u32 %v7037, 7
          %v7039 = vsub.s32 %v7036, %v7038
          %v7040 = vrot.slane %v7026, %v7039
          %v7041 = vcombine.low %v7033, %v7040
          %v7042 = vcombine.low %v4828, %v4835
          %v7043 = vcombine.low %v4842, %v4849
          %v7045 = vunpack.c.l.s4 1983009808
          %v7046 = vunpack.c.0.s8 %v7045
          %v7047 = vlaneseq
          %v7048 = vshrl.u32 %v7047, 7
          %v7049 = vsub.s32 %v7046, %v7048
          %v7050 = vrot.slane %v7042, %v7049
          %v7052 = vunpack.c.l.s4 1983009808
          %v7053 = vunpack.c.0.s8 %v7052
          %v7054 = vlaneseq
          %v7055 = vshrl.u32 %v7054, 7
          %v7056 = vsub.s32 %v7053, %v7055
          %v7057 = vrot.slane %v7043, %v7056
          %v7058 = vcombine.low %v7050, %v7057
          %v7059 = vcombine.low %v4856, %v4863
          %v7060 = vcombine.low %v4870, %v4877
          %v7062 = vunpack.c.l.s4 1983009808
          %v7063 = vunpack.c.0.s8 %v7062
          %v7064 = vlaneseq
          %v7065 = vshrl.u32 %v7064, 7
          %v7066 = vsub.s32 %v7063, %v7065
          %v7067 = vrot.slane %v7059, %v7066
          %v7069 = vunpack.c.l.s4 1983009808
          %v7070 = vunpack.c.0.s8 %v7069
          %v7071 = vlaneseq
          %v7072 = vshrl.u32 %v7071, 7
          %v7073 = vsub.s32 %v7070, %v7072
          %v7074 = vrot.slane %v7060, %v7073
          %v7075 = vcombine.low %v7067, %v7074
          %v7076 = vcombine.low %v4884, %v4891
          %v7077 = vcombine.low %v4898, %v4905
          %v7079 = vunpack.c.l.s4 1983009808
          %v7080 = vunpack.c.0.s8 %v7079
          %v7081 = vlaneseq
          %v7082 = vshrl.u32 %v7081, 7
          %v7083 = vsub.s32 %v7080, %v7082
          %v7084 = vrot.slane %v7076, %v7083
          %v7086 = vunpack.c.l.s4 1983009808
          %v7087 = vunpack.c.0.s8 %v7086
          %v7088 = vlaneseq
          %v7089 = vshrl.u32 %v7088, 7
          %v7090 = vsub.s32 %v7087, %v7089
          %v7091 = vrot.slane %v7077, %v7090
          %v7092 = vcombine.low %v7084, %v7091
          %v7093 = vcombine.low %v4912, %v4919
          %v7094 = vcombine.low %v4926, %v4933
          %v7096 = vunpack.c.l.s4 1983009808
          %v7097 = vunpack.c.0.s8 %v7096
          %v7098 = vlaneseq
          %v7099 = vshrl.u32 %v7098, 7
          %v7100 = vsub.s32 %v7097, %v7099
          %v7101 = vrot.slane %v7093, %v7100
          %v7103 = vunpack.c.l.s4 1983009808
          %v7104 = vunpack.c.0.s8 %v7103
          %v7105 = vlaneseq
          %v7106 = vshrl.u32 %v7105, 7
          %v7107 = vsub.s32 %v7104, %v7106
          %v7108 = vrot.slane %v7094, %v7107
          %v7109 = vcombine.low %v7101, %v7108
          %7110 = vset.pattern.permute.xlu0 0
          %7111 = vperm.xlu0 %7110, %v4950
          %v7112 = vpop.permute.xlu0 %7111
          %7113 = vset.pattern.permute.xlu0 0
          %7114 = vperm.xlu0 %7113, %v4967
          %v7115 = vpop.permute.xlu0 %7114
          %7116 = vset.pattern.permute.xlu0 0
          %7117 = vperm.xlu0 %7116, %v4984
          %v7118 = vpop.permute.xlu0 %7117
          %7119 = vset.pattern.permute.xlu0 0
          %7120 = vperm.xlu0 %7119, %v5001
          %v7121 = vpop.permute.xlu0 %7120
          %7122 = vset.pattern.permute.xlu0 0
          %7123 = vperm.xlu0 %7122, %v5018
          %v7124 = vpop.permute.xlu0 %7123
          %7125 = vset.pattern.permute.xlu0 0
          %7126 = vperm.xlu0 %7125, %v5035
          %v7127 = vpop.permute.xlu0 %7126
          %7128 = vset.pattern.permute.xlu0 0
          %7129 = vperm.xlu0 %7128, %v5052
          %v7130 = vpop.permute.xlu0 %7129
          %7131 = vset.pattern.permute.xlu0 0
          %7132 = vperm.xlu0 %7131, %v5069
          %v7133 = vpop.permute.xlu0 %7132
          %7134 = vset.pattern.permute.xlu0 0
          %7135 = vperm.xlu0 %7134, %v5086
          %v7136 = vpop.permute.xlu0 %7135
          %7137 = vset.pattern.permute.xlu0 0
          %7138 = vperm.xlu0 %7137, %v5103
          %v7139 = vpop.permute.xlu0 %7138
          %7140 = vset.pattern.permute.xlu0 0
          %7141 = vperm.xlu0 %7140, %v5120
          %v7142 = vpop.permute.xlu0 %7141
          %7143 = vset.pattern.permute.xlu0 0
          %7144 = vperm.xlu0 %7143, %v5137
          %v7145 = vpop.permute.xlu0 %7144
          %7146 = vset.pattern.permute.xlu0 0
          %7147 = vperm.xlu0 %7146, %v5154
          %v7148 = vpop.permute.xlu0 %7147
          %7149 = vset.pattern.permute.xlu0 0
          %7150 = vperm.xlu0 %7149, %v5171
          %v7151 = vpop.permute.xlu0 %7150
          %7152 = vset.pattern.permute.xlu0 0
          %7153 = vperm.xlu0 %7152, %v5188
          %v7154 = vpop.permute.xlu0 %7153
          %7155 = vset.pattern.permute.xlu0 0
          %7156 = vperm.xlu0 %7155, %v5205
          %v7157 = vpop.permute.xlu0 %7156
          %7158 = vset.pattern.permute.xlu0 0
          %7159 = vperm.xlu0 %7158, %v5222
          %v7160 = vpop.permute.xlu0 %7159
          %7161 = vset.pattern.permute.xlu0 0
          %7162 = vperm.xlu0 %7161, %v5239
          %v7163 = vpop.permute.xlu0 %7162
          %7164 = vset.pattern.permute.xlu0 0
          %7165 = vperm.xlu0 %7164, %v5256
          %v7166 = vpop.permute.xlu0 %7165
          %7167 = vset.pattern.permute.xlu0 0
          %7168 = vperm.xlu0 %7167, %v5273
          %v7169 = vpop.permute.xlu0 %7168
          %7170 = vset.pattern.permute.xlu0 0
          %7171 = vperm.xlu0 %7170, %v5290
          %v7172 = vpop.permute.xlu0 %7171
          %7173 = vset.pattern.permute.xlu0 0
          %7174 = vperm.xlu0 %7173, %v5307
          %v7175 = vpop.permute.xlu0 %7174
          %7176 = vset.pattern.permute.xlu0 0
          %7177 = vperm.xlu0 %7176, %v5324
          %v7178 = vpop.permute.xlu0 %7177
          %7179 = vset.pattern.permute.xlu0 0
          %7180 = vperm.xlu0 %7179, %v5341
          %v7181 = vpop.permute.xlu0 %7180
          %7182 = vset.pattern.permute.xlu0 0
          %7183 = vperm.xlu0 %7182, %v5358
          %v7184 = vpop.permute.xlu0 %7183
          %7185 = vset.pattern.permute.xlu0 0
          %7186 = vperm.xlu0 %7185, %v5375
          %v7187 = vpop.permute.xlu0 %7186
          %7188 = vset.pattern.permute.xlu0 0
          %7189 = vperm.xlu0 %7188, %v5392
          %v7190 = vpop.permute.xlu0 %7189
          %7191 = vset.pattern.permute.xlu0 0
          %7192 = vperm.xlu0 %7191, %v5409
          %v7193 = vpop.permute.xlu0 %7192
          %7194 = vset.pattern.permute.xlu0 0
          %7195 = vperm.xlu0 %7194, %v5426
          %v7196 = vpop.permute.xlu0 %7195
          %7197 = vset.pattern.permute.xlu0 0
          %7198 = vperm.xlu0 %7197, %v5443
          %v7199 = vpop.permute.xlu0 %7198
          %7200 = vset.pattern.permute.xlu0 0
          %7201 = vperm.xlu0 %7200, %v5460
          %v7202 = vpop.permute.xlu0 %7201
          %7203 = vset.pattern.permute.xlu0 0
          %7204 = vperm.xlu0 %7203, %v5477
          %v7205 = vpop.permute.xlu0 %7204
          %7206 = vset.pattern.permute.xlu0 0
          %7207 = vperm.xlu0 %7206, %v5494
          %v7208 = vpop.permute.xlu0 %7207
          %7209 = vset.pattern.permute.xlu0 0
          %7210 = vperm.xlu0 %7209, %v5511
          %v7211 = vpop.permute.xlu0 %7210
          %7212 = vset.pattern.permute.xlu0 0
          %7213 = vperm.xlu0 %7212, %v5528
          %v7214 = vpop.permute.xlu0 %7213
          %7215 = vset.pattern.permute.xlu0 0
          %7216 = vperm.xlu0 %7215, %v5545
          %v7217 = vpop.permute.xlu0 %7216
          %7218 = vset.pattern.permute.xlu0 0
          %7219 = vperm.xlu0 %7218, %v5562
          %v7220 = vpop.permute.xlu0 %7219
          %7221 = vset.pattern.permute.xlu0 0
          %7222 = vperm.xlu0 %7221, %v5579
          %v7223 = vpop.permute.xlu0 %7222
          %7224 = vset.pattern.permute.xlu0 0
          %7225 = vperm.xlu0 %7224, %v5596
          %v7226 = vpop.permute.xlu0 %7225
          %7227 = vset.pattern.permute.xlu0 0
          %7228 = vperm.xlu0 %7227, %v5613
          %v7229 = vpop.permute.xlu0 %7228
          %7230 = vset.pattern.permute.xlu0 0
          %7231 = vperm.xlu0 %7230, %v5630
          %v7232 = vpop.permute.xlu0 %7231
          %7233 = vset.pattern.permute.xlu0 0
          %7234 = vperm.xlu0 %7233, %v5647
          %v7235 = vpop.permute.xlu0 %7234
          %7236 = vset.pattern.permute.xlu0 0
          %7237 = vperm.xlu0 %7236, %v5664
          %v7238 = vpop.permute.xlu0 %7237
          %7239 = vset.pattern.permute.xlu0 0
          %7240 = vperm.xlu0 %7239, %v5681
          %v7241 = vpop.permute.xlu0 %7240
          %7242 = vset.pattern.permute.xlu0 0
          %7243 = vperm.xlu0 %7242, %v5698
          %v7244 = vpop.permute.xlu0 %7243
          %7245 = vset.pattern.permute.xlu0 0
          %7246 = vperm.xlu0 %7245, %v5715
          %v7247 = vpop.permute.xlu0 %7246
          %7248 = vset.pattern.permute.xlu0 0
          %7249 = vperm.xlu0 %7248, %v5732
          %v7250 = vpop.permute.xlu0 %7249
          %7251 = vset.pattern.permute.xlu0 0
          %7252 = vperm.xlu0 %7251, %v5749
          %v7253 = vpop.permute.xlu0 %7252
          %7254 = vset.pattern.permute.xlu0 0
          %7255 = vperm.xlu0 %7254, %v5766
          %v7256 = vpop.permute.xlu0 %7255
          %7257 = vset.pattern.permute.xlu0 0
          %7258 = vperm.xlu0 %7257, %v5783
          %v7259 = vpop.permute.xlu0 %7258
          %7260 = vset.pattern.permute.xlu0 0
          %7261 = vperm.xlu0 %7260, %v5800
          %v7262 = vpop.permute.xlu0 %7261
          %7263 = vset.pattern.permute.xlu0 0
          %7264 = vperm.xlu0 %7263, %v5817
          %v7265 = vpop.permute.xlu0 %7264
          %7266 = vset.pattern.permute.xlu0 0
          %7267 = vperm.xlu0 %7266, %v5834
          %v7268 = vpop.permute.xlu0 %7267
          %7269 = vset.pattern.permute.xlu0 0
          %7270 = vperm.xlu0 %7269, %v5851
          %v7271 = vpop.permute.xlu0 %7270
          %7272 = vset.pattern.permute.xlu0 0
          %7273 = vperm.xlu0 %7272, %v5868
          %v7274 = vpop.permute.xlu0 %7273
          %7275 = vset.pattern.permute.xlu0 0
          %7276 = vperm.xlu0 %7275, %v5885
          %v7277 = vpop.permute.xlu0 %7276
          %7278 = vset.pattern.permute.xlu0 0
          %7279 = vperm.xlu0 %7278, %v5902
          %v7280 = vpop.permute.xlu0 %7279
          %7281 = vset.pattern.permute.xlu0 0
          %7282 = vperm.xlu0 %7281, %v5919
          %v7283 = vpop.permute.xlu0 %7282
          %7284 = vset.pattern.permute.xlu0 0
          %7285 = vperm.xlu0 %7284, %v5936
          %v7286 = vpop.permute.xlu0 %7285
          %7287 = vset.pattern.permute.xlu0 0
          %7288 = vperm.xlu0 %7287, %v5953
          %v7289 = vpop.permute.xlu0 %7288
          %7290 = vset.pattern.permute.xlu0 0
          %7291 = vperm.xlu0 %7290, %v5970
          %v7292 = vpop.permute.xlu0 %7291
          %7293 = vset.pattern.permute.xlu0 0
          %7294 = vperm.xlu0 %7293, %v5987
          %v7295 = vpop.permute.xlu0 %7294
          %7296 = vset.pattern.permute.xlu0 0
          %7297 = vperm.xlu0 %7296, %v6004
          %v7298 = vpop.permute.xlu0 %7297
          %7299 = vset.pattern.permute.xlu0 0
          %7300 = vperm.xlu0 %7299, %v6021
          %v7301 = vpop.permute.xlu0 %7300
          %7302 = vset.pattern.permute.xlu0 0
          %7303 = vperm.xlu0 %7302, %v6038
          %v7304 = vpop.permute.xlu0 %7303
          %7305 = vset.pattern.permute.xlu0 0
          %7306 = vperm.xlu0 %7305, %v6055
          %v7307 = vpop.permute.xlu0 %7306
          %7308 = vset.pattern.permute.xlu0 0
          %7309 = vperm.xlu0 %7308, %v6072
          %v7310 = vpop.permute.xlu0 %7309
          %7311 = vset.pattern.permute.xlu0 0
          %7312 = vperm.xlu0 %7311, %v6089
          %v7313 = vpop.permute.xlu0 %7312
          %7314 = vset.pattern.permute.xlu0 0
          %7315 = vperm.xlu0 %7314, %v6106
          %v7316 = vpop.permute.xlu0 %7315
          %7317 = vset.pattern.permute.xlu0 0
          %7318 = vperm.xlu0 %7317, %v6123
          %v7319 = vpop.permute.xlu0 %7318
          %7320 = vset.pattern.permute.xlu0 0
          %7321 = vperm.xlu0 %7320, %v6140
          %v7322 = vpop.permute.xlu0 %7321
          %7323 = vset.pattern.permute.xlu0 0
          %7324 = vperm.xlu0 %7323, %v6157
          %v7325 = vpop.permute.xlu0 %7324
          %7326 = vset.pattern.permute.xlu0 0
          %7327 = vperm.xlu0 %7326, %v6174
          %v7328 = vpop.permute.xlu0 %7327
          %7329 = vset.pattern.permute.xlu0 0
          %7330 = vperm.xlu0 %7329, %v6191
          %v7331 = vpop.permute.xlu0 %7330
          %7332 = vset.pattern.permute.xlu0 0
          %7333 = vperm.xlu0 %7332, %v6208
          %v7334 = vpop.permute.xlu0 %7333
          %7335 = vset.pattern.permute.xlu0 0
          %7336 = vperm.xlu0 %7335, %v6225
          %v7337 = vpop.permute.xlu0 %7336
          %7338 = vset.pattern.permute.xlu0 0
          %7339 = vperm.xlu0 %7338, %v6242
          %v7340 = vpop.permute.xlu0 %7339
          %7341 = vset.pattern.permute.xlu0 0
          %7342 = vperm.xlu0 %7341, %v6259
          %v7343 = vpop.permute.xlu0 %7342
          %7344 = vset.pattern.permute.xlu0 0
          %7345 = vperm.xlu0 %7344, %v6276
          %v7346 = vpop.permute.xlu0 %7345
          %7347 = vset.pattern.permute.xlu0 0
          %7348 = vperm.xlu0 %7347, %v6293
          %v7349 = vpop.permute.xlu0 %7348
          %7350 = vset.pattern.permute.xlu0 0
          %7351 = vperm.xlu0 %7350, %v6310
          %v7352 = vpop.permute.xlu0 %7351
          %7353 = vset.pattern.permute.xlu0 0
          %7354 = vperm.xlu0 %7353, %v6327
          %v7355 = vpop.permute.xlu0 %7354
          %7356 = vset.pattern.permute.xlu0 0
          %7357 = vperm.xlu0 %7356, %v6344
          %v7358 = vpop.permute.xlu0 %7357
          %7359 = vset.pattern.permute.xlu0 0
          %7360 = vperm.xlu0 %7359, %v6361
          %v7361 = vpop.permute.xlu0 %7360
          %7362 = vset.pattern.permute.xlu0 0
          %7363 = vperm.xlu0 %7362, %v6378
          %v7364 = vpop.permute.xlu0 %7363
          %7365 = vset.pattern.permute.xlu0 0
          %7366 = vperm.xlu0 %7365, %v6395
          %v7367 = vpop.permute.xlu0 %7366
          %7368 = vset.pattern.permute.xlu0 0
          %7369 = vperm.xlu0 %7368, %v6412
          %v7370 = vpop.permute.xlu0 %7369
          %7371 = vset.pattern.permute.xlu0 0
          %7372 = vperm.xlu0 %7371, %v6429
          %v7373 = vpop.permute.xlu0 %7372
          %7374 = vset.pattern.permute.xlu0 0
          %7375 = vperm.xlu0 %7374, %v6446
          %v7376 = vpop.permute.xlu0 %7375
          %7377 = vset.pattern.permute.xlu0 0
          %7378 = vperm.xlu0 %7377, %v6463
          %v7379 = vpop.permute.xlu0 %7378
          %7380 = vset.pattern.permute.xlu0 0
          %7381 = vperm.xlu0 %7380, %v6480
          %v7382 = vpop.permute.xlu0 %7381
          %7383 = vset.pattern.permute.xlu0 0
          %7384 = vperm.xlu0 %7383, %v6497
          %v7385 = vpop.permute.xlu0 %7384
          %7386 = vset.pattern.permute.xlu0 0
          %7387 = vperm.xlu0 %7386, %v6514
          %v7388 = vpop.permute.xlu0 %7387
          %7389 = vset.pattern.permute.xlu0 0
          %7390 = vperm.xlu0 %7389, %v6531
          %v7391 = vpop.permute.xlu0 %7390
          %7392 = vset.pattern.permute.xlu0 0
          %7393 = vperm.xlu0 %7392, %v6548
          %v7394 = vpop.permute.xlu0 %7393
          %7395 = vset.pattern.permute.xlu0 0
          %7396 = vperm.xlu0 %7395, %v6565
          %v7397 = vpop.permute.xlu0 %7396
          %7398 = vset.pattern.permute.xlu0 0
          %7399 = vperm.xlu0 %7398, %v6582
          %v7400 = vpop.permute.xlu0 %7399
          %7401 = vset.pattern.permute.xlu0 0
          %7402 = vperm.xlu0 %7401, %v6599
          %v7403 = vpop.permute.xlu0 %7402
          %7404 = vset.pattern.permute.xlu0 0
          %7405 = vperm.xlu0 %7404, %v6616
          %v7406 = vpop.permute.xlu0 %7405
          %7407 = vset.pattern.permute.xlu0 0
          %7408 = vperm.xlu0 %7407, %v6633
          %v7409 = vpop.permute.xlu0 %7408
          %7410 = vset.pattern.permute.xlu0 0
          %7411 = vperm.xlu0 %7410, %v6650
          %v7412 = vpop.permute.xlu0 %7411
          %7413 = vset.pattern.permute.xlu0 0
          %7414 = vperm.xlu0 %7413, %v6667
          %v7415 = vpop.permute.xlu0 %7414
          %7416 = vset.pattern.permute.xlu0 0
          %7417 = vperm.xlu0 %7416, %v6684
          %v7418 = vpop.permute.xlu0 %7417
          %7419 = vset.pattern.permute.xlu0 0
          %7420 = vperm.xlu0 %7419, %v6701
          %v7421 = vpop.permute.xlu0 %7420
          %7422 = vset.pattern.permute.xlu0 0
          %7423 = vperm.xlu0 %7422, %v6718
          %v7424 = vpop.permute.xlu0 %7423
          %7425 = vset.pattern.permute.xlu0 0
          %7426 = vperm.xlu0 %7425, %v6735
          %v7427 = vpop.permute.xlu0 %7426
          %7428 = vset.pattern.permute.xlu0 0
          %7429 = vperm.xlu0 %7428, %v6752
          %v7430 = vpop.permute.xlu0 %7429
          %7431 = vset.pattern.permute.xlu0 0
          %7432 = vperm.xlu0 %7431, %v6769
          %v7433 = vpop.permute.xlu0 %7432
          %7434 = vset.pattern.permute.xlu0 0
          %7435 = vperm.xlu0 %7434, %v6786
          %v7436 = vpop.permute.xlu0 %7435
          %7437 = vset.pattern.permute.xlu0 0
          %7438 = vperm.xlu0 %7437, %v6803
          %v7439 = vpop.permute.xlu0 %7438
          %7440 = vset.pattern.permute.xlu0 0
          %7441 = vperm.xlu0 %7440, %v6820
          %v7442 = vpop.permute.xlu0 %7441
          %7443 = vset.pattern.permute.xlu0 0
          %7444 = vperm.xlu0 %7443, %v6837
          %v7445 = vpop.permute.xlu0 %7444
          %7446 = vset.pattern.permute.xlu0 0
          %7447 = vperm.xlu0 %7446, %v6854
          %v7448 = vpop.permute.xlu0 %7447
          %7449 = vset.pattern.permute.xlu0 0
          %7450 = vperm.xlu0 %7449, %v6871
          %v7451 = vpop.permute.xlu0 %7450
          %7452 = vset.pattern.permute.xlu0 0
          %7453 = vperm.xlu0 %7452, %v6888
          %v7454 = vpop.permute.xlu0 %7453
          %7455 = vset.pattern.permute.xlu0 0
          %7456 = vperm.xlu0 %7455, %v6905
          %v7457 = vpop.permute.xlu0 %7456
          %7458 = vset.pattern.permute.xlu0 0
          %7459 = vperm.xlu0 %7458, %v6922
          %v7460 = vpop.permute.xlu0 %7459
          %7461 = vset.pattern.permute.xlu0 0
          %7462 = vperm.xlu0 %7461, %v6939
          %v7463 = vpop.permute.xlu0 %7462
          %7464 = vset.pattern.permute.xlu0 0
          %7465 = vperm.xlu0 %7464, %v6956
          %v7466 = vpop.permute.xlu0 %7465
          %7467 = vset.pattern.permute.xlu0 0
          %7468 = vperm.xlu0 %7467, %v6973
          %v7469 = vpop.permute.xlu0 %7468
          %7470 = vset.pattern.permute.xlu0 0
          %7471 = vperm.xlu0 %7470, %v6990
          %v7472 = vpop.permute.xlu0 %7471
          %7473 = vset.pattern.permute.xlu0 0
          %7474 = vperm.xlu0 %7473, %v7007
          %v7475 = vpop.permute.xlu0 %7474
          %7476 = vset.pattern.permute.xlu0 0
          %7477 = vperm.xlu0 %7476, %v7024
          %v7478 = vpop.permute.xlu0 %7477
          %7479 = vset.pattern.permute.xlu0 0
          %7480 = vperm.xlu0 %7479, %v7041
          %v7481 = vpop.permute.xlu0 %7480
          %7482 = vset.pattern.permute.xlu0 0
          %7483 = vperm.xlu0 %7482, %v7058
          %v7484 = vpop.permute.xlu0 %7483
          %7485 = vset.pattern.permute.xlu0 0
          %7486 = vperm.xlu0 %7485, %v7075
          %v7487 = vpop.permute.xlu0 %7486
          %7488 = vset.pattern.permute.xlu0 0
          %7489 = vperm.xlu0 %7488, %v7092
          %v7490 = vpop.permute.xlu0 %7489
          %7491 = vset.pattern.permute.xlu0 0
          %7492 = vperm.xlu0 %7491, %v7109
          %v7493 = vpop.permute.xlu0 %7492
          %v7494 = vlaneseq
          %v7495 = vand.u32 %v7494, 127
          %v7496 = vlaneseq
          %v7497 = vshrl.u32 %v7496, 7
          %v7498 = vsub.s32 %v7495, %v7497
          %v7499 = vrot.slane %v7112, %v7498
          %v7500 = vadd.s32 %v7495, 4294967288
          %v7501 = vlaneseq
          %v7502 = vshrl.u32 %v7501, 7
          %v7503 = vsub.s32 %v7500, %v7502
          %v7504 = vrot.slane %v7115, %v7503
          %vm7505 = vcmask 130112
          %v7506 = vsel %vm7505, %v7504, %v7499
          %v7507 = vadd.s32 %v7495, 4294967280
          %v7508 = vlaneseq
          %v7509 = vshrl.u32 %v7508, 7
          %v7510 = vsub.s32 %v7507, %v7509
          %v7511 = vrot.slane %v7118, %v7510
          %vm7512 = vcmask 195712
          %v7513 = vsel %vm7512, %v7511, %v7506
          %v7514 = vadd.s32 %v7495, 4294967272
          %v7515 = vlaneseq
          %v7516 = vshrl.u32 %v7515, 7
          %v7517 = vsub.s32 %v7514, %v7516
          %v7518 = vrot.slane %v7121, %v7517
          %vm7519 = vcmask 261312
          %v7520 = vsel %vm7519, %v7518, %v7513
          %v7521 = vadd.s32 %v7495, 4294967264
          %v7522 = vlaneseq
          %v7523 = vshrl.u32 %v7522, 7
          %v7524 = vsub.s32 %v7521, %v7523
          %v7525 = vrot.slane %v7124, %v7524
          %vm7526 = vcmask 326912
          %v7527 = vsel %vm7526, %v7525, %v7520
          %v7528 = vadd.s32 %v7495, 4294967256
          %v7529 = vlaneseq
          %v7530 = vshrl.u32 %v7529, 7
          %v7531 = vsub.s32 %v7528, %v7530
          %v7532 = vrot.slane %v7127, %v7531
          %vm7533 = vcmask 392512
          %v7534 = vsel %vm7533, %v7532, %v7527
          %v7535 = vadd.s32 %v7495, 4294967248
          %v7536 = vlaneseq
          %v7537 = vshrl.u32 %v7536, 7
          %v7538 = vsub.s32 %v7535, %v7537
          %v7539 = vrot.slane %v7130, %v7538
          %vm7540 = vcmask 458112
          %v7541 = vsel %vm7540, %v7539, %v7534
          %v7542 = vadd.s32 %v7495, 4294967240
          %v7543 = vlaneseq
          %v7544 = vshrl.u32 %v7543, 7
          %v7545 = vsub.s32 %v7542, %v7544
          %v7546 = vrot.slane %v7133, %v7545
          %vm7547 = vcmask 523712
          %v7548 = vsel %vm7547, %v7546, %v7541
          %v7549 = vadd.s32 %v7495, 4294967232
          %v7550 = vlaneseq
          %v7551 = vshrl.u32 %v7550, 7
          %v7552 = vsub.s32 %v7549, %v7551
          %v7553 = vrot.slane %v7136, %v7552
          %vm7554 = vcmask 589312
          %v7555 = vsel %vm7554, %v7553, %v7548
          %v7556 = vadd.s32 %v7495, 4294967224
          %v7557 = vlaneseq
          %v7558 = vshrl.u32 %v7557, 7
          %v7559 = vsub.s32 %v7556, %v7558
          %v7560 = vrot.slane %v7139, %v7559
          %vm7561 = vcmask 654912
          %v7562 = vsel %vm7561, %v7560, %v7555
          %v7563 = vadd.s32 %v7495, 4294967216
          %v7564 = vlaneseq
          %v7565 = vshrl.u32 %v7564, 7
          %v7566 = vsub.s32 %v7563, %v7565
          %v7567 = vrot.slane %v7142, %v7566
          %vm7568 = vcmask 720512
          %v7569 = vsel %vm7568, %v7567, %v7562
          %v7570 = vadd.s32 %v7495, 4294967208
          %v7571 = vlaneseq
          %v7572 = vshrl.u32 %v7571, 7
          %v7573 = vsub.s32 %v7570, %v7572
          %v7574 = vrot.slane %v7145, %v7573
          %vm7575 = vcmask 786112
          %v7576 = vsel %vm7575, %v7574, %v7569
          %v7577 = vadd.s32 %v7495, 4294967200
          %v7578 = vlaneseq
          %v7579 = vshrl.u32 %v7578, 7
          %v7580 = vsub.s32 %v7577, %v7579
          %v7581 = vrot.slane %v7148, %v7580
          %vm7582 = vcmask 851712
          %v7583 = vsel %vm7582, %v7581, %v7576
          %v7584 = vadd.s32 %v7495, 4294967192
          %v7585 = vlaneseq
          %v7586 = vshrl.u32 %v7585, 7
          %v7587 = vsub.s32 %v7584, %v7586
          %v7588 = vrot.slane %v7151, %v7587
          %vm7589 = vcmask 917312
          %v7590 = vsel %vm7589, %v7588, %v7583
          %v7591 = vadd.s32 %v7495, 4294967184
          %v7592 = vlaneseq
          %v7593 = vshrl.u32 %v7592, 7
          %v7594 = vsub.s32 %v7591, %v7593
          %v7595 = vrot.slane %v7154, %v7594
          %vm7596 = vcmask 982912
          %v7597 = vsel %vm7596, %v7595, %v7590
          %v7598 = vadd.s32 %v7495, 4294967176
          %v7599 = vlaneseq
          %v7600 = vshrl.u32 %v7599, 7
          %v7601 = vsub.s32 %v7598, %v7600
          %v7602 = vrot.slane %v7157, %v7601
          %vm7603 = vcmask 1048512
          %v7604 = vsel %vm7603, %v7602, %v7597
          %v7605 = vlaneseq
          %v7606 = vshrl.u32 %v7605, 7
          %v7607 = vsub.s32 %v7495, %v7606
          %v7608 = vrot.slane %v7160, %v7607
          %v7609 = vlaneseq
          %v7610 = vshrl.u32 %v7609, 7
          %v7611 = vsub.s32 %v7500, %v7610
          %v7612 = vrot.slane %v7163, %v7611
          %v7613 = vsel %vm7505, %v7612, %v7608
          %v7614 = vlaneseq
          %v7615 = vshrl.u32 %v7614, 7
          %v7616 = vsub.s32 %v7507, %v7615
          %v7617 = vrot.slane %v7166, %v7616
          %v7618 = vsel %vm7512, %v7617, %v7613
          %v7619 = vlaneseq
          %v7620 = vshrl.u32 %v7619, 7
          %v7621 = vsub.s32 %v7514, %v7620
          %v7622 = vrot.slane %v7169, %v7621
          %v7623 = vsel %vm7519, %v7622, %v7618
          %v7624 = vlaneseq
          %v7625 = vshrl.u32 %v7624, 7
          %v7626 = vsub.s32 %v7521, %v7625
          %v7627 = vrot.slane %v7172, %v7626
          %v7628 = vsel %vm7526, %v7627, %v7623
          %v7629 = vlaneseq
          %v7630 = vshrl.u32 %v7629, 7
          %v7631 = vsub.s32 %v7528, %v7630
          %v7632 = vrot.slane %v7175, %v7631
          %v7633 = vsel %vm7533, %v7632, %v7628
          %v7634 = vlaneseq
          %v7635 = vshrl.u32 %v7634, 7
          %v7636 = vsub.s32 %v7535, %v7635
          %v7637 = vrot.slane %v7178, %v7636
          %v7638 = vsel %vm7540, %v7637, %v7633
          %v7639 = vlaneseq
          %v7640 = vshrl.u32 %v7639, 7
          %v7641 = vsub.s32 %v7542, %v7640
          %v7642 = vrot.slane %v7181, %v7641
          %v7643 = vsel %vm7547, %v7642, %v7638
          %v7644 = vlaneseq
          %v7645 = vshrl.u32 %v7644, 7
          %v7646 = vsub.s32 %v7549, %v7645
          %v7647 = vrot.slane %v7184, %v7646
          %v7648 = vsel %vm7554, %v7647, %v7643
          %v7649 = vlaneseq
          %v7650 = vshrl.u32 %v7649, 7
          %v7651 = vsub.s32 %v7556, %v7650
          %v7652 = vrot.slane %v7187, %v7651
          %v7653 = vsel %vm7561, %v7652, %v7648
          %v7654 = vlaneseq
          %v7655 = vshrl.u32 %v7654, 7
          %v7656 = vsub.s32 %v7563, %v7655
          %v7657 = vrot.slane %v7190, %v7656
          %v7658 = vsel %vm7568, %v7657, %v7653
          %v7659 = vlaneseq
          %v7660 = vshrl.u32 %v7659, 7
          %v7661 = vsub.s32 %v7570, %v7660
          %v7662 = vrot.slane %v7193, %v7661
          %v7663 = vsel %vm7575, %v7662, %v7658
          %v7664 = vlaneseq
          %v7665 = vshrl.u32 %v7664, 7
          %v7666 = vsub.s32 %v7577, %v7665
          %v7667 = vrot.slane %v7196, %v7666
          %v7668 = vsel %vm7582, %v7667, %v7663
          %v7669 = vlaneseq
          %v7670 = vshrl.u32 %v7669, 7
          %v7671 = vsub.s32 %v7584, %v7670
          %v7672 = vrot.slane %v7199, %v7671
          %v7673 = vsel %vm7589, %v7672, %v7668
          %v7674 = vlaneseq
          %v7675 = vshrl.u32 %v7674, 7
          %v7676 = vsub.s32 %v7591, %v7675
          %v7677 = vrot.slane %v7202, %v7676
          %v7678 = vsel %vm7596, %v7677, %v7673
          %v7679 = vlaneseq
          %v7680 = vshrl.u32 %v7679, 7
          %v7681 = vsub.s32 %v7598, %v7680
          %v7682 = vrot.slane %v7205, %v7681
          %v7683 = vsel %vm7603, %v7682, %v7678
          %v7684 = vlaneseq
          %v7685 = vshrl.u32 %v7684, 7
          %v7686 = vsub.s32 %v7495, %v7685
          %v7687 = vrot.slane %v7208, %v7686
          %v7688 = vlaneseq
          %v7689 = vshrl.u32 %v7688, 7
          %v7690 = vsub.s32 %v7500, %v7689
          %v7691 = vrot.slane %v7211, %v7690
          %v7692 = vsel %vm7505, %v7691, %v7687
          %v7693 = vlaneseq
          %v7694 = vshrl.u32 %v7693, 7
          %v7695 = vsub.s32 %v7507, %v7694
          %v7696 = vrot.slane %v7214, %v7695
          %v7697 = vsel %vm7512, %v7696, %v7692
          %v7698 = vlaneseq
          %v7699 = vshrl.u32 %v7698, 7
          %v7700 = vsub.s32 %v7514, %v7699
          %v7701 = vrot.slane %v7217, %v7700
          %v7702 = vsel %vm7519, %v7701, %v7697
          %v7703 = vlaneseq
          %v7704 = vshrl.u32 %v7703, 7
          %v7705 = vsub.s32 %v7521, %v7704
          %v7706 = vrot.slane %v7220, %v7705
          %v7707 = vsel %vm7526, %v7706, %v7702
          %v7708 = vlaneseq
          %v7709 = vshrl.u32 %v7708, 7
          %v7710 = vsub.s32 %v7528, %v7709
          %v7711 = vrot.slane %v7223, %v7710
          %v7712 = vsel %vm7533, %v7711, %v7707
          %v7713 = vlaneseq
          %v7714 = vshrl.u32 %v7713, 7
          %v7715 = vsub.s32 %v7535, %v7714
          %v7716 = vrot.slane %v7226, %v7715
          %v7717 = vsel %vm7540, %v7716, %v7712
          %v7718 = vlaneseq
          %v7719 = vshrl.u32 %v7718, 7
          %v7720 = vsub.s32 %v7542, %v7719
          %v7721 = vrot.slane %v7229, %v7720
          %v7722 = vsel %vm7547, %v7721, %v7717
          %v7723 = vlaneseq
          %v7724 = vshrl.u32 %v7723, 7
          %v7725 = vsub.s32 %v7549, %v7724
          %v7726 = vrot.slane %v7232, %v7725
          %v7727 = vsel %vm7554, %v7726, %v7722
          %v7728 = vlaneseq
          %v7729 = vshrl.u32 %v7728, 7
          %v7730 = vsub.s32 %v7556, %v7729
          %v7731 = vrot.slane %v7235, %v7730
          %v7732 = vsel %vm7561, %v7731, %v7727
          %v7733 = vlaneseq
          %v7734 = vshrl.u32 %v7733, 7
          %v7735 = vsub.s32 %v7563, %v7734
          %v7736 = vrot.slane %v7238, %v7735
          %v7737 = vsel %vm7568, %v7736, %v7732
          %v7738 = vlaneseq
          %v7739 = vshrl.u32 %v7738, 7
          %v7740 = vsub.s32 %v7570, %v7739
          %v7741 = vrot.slane %v7241, %v7740
          %v7742 = vsel %vm7575, %v7741, %v7737
          %v7743 = vlaneseq
          %v7744 = vshrl.u32 %v7743, 7
          %v7745 = vsub.s32 %v7577, %v7744
          %v7746 = vrot.slane %v7244, %v7745
          %v7747 = vsel %vm7582, %v7746, %v7742
          %v7748 = vlaneseq
          %v7749 = vshrl.u32 %v7748, 7
          %v7750 = vsub.s32 %v7584, %v7749
          %v7751 = vrot.slane %v7247, %v7750
          %v7752 = vsel %vm7589, %v7751, %v7747
          %v7753 = vlaneseq
          %v7754 = vshrl.u32 %v7753, 7
          %v7755 = vsub.s32 %v7591, %v7754
          %v7756 = vrot.slane %v7250, %v7755
          %v7757 = vsel %vm7596, %v7756, %v7752
          %v7758 = vlaneseq
          %v7759 = vshrl.u32 %v7758, 7
          %v7760 = vsub.s32 %v7598, %v7759
          %v7761 = vrot.slane %v7253, %v7760
          %v7762 = vsel %vm7603, %v7761, %v7757
          %v7763 = vlaneseq
          %v7764 = vshrl.u32 %v7763, 7
          %v7765 = vsub.s32 %v7495, %v7764
          %v7766 = vrot.slane %v7256, %v7765
          %v7767 = vlaneseq
          %v7768 = vshrl.u32 %v7767, 7
          %v7769 = vsub.s32 %v7500, %v7768
          %v7770 = vrot.slane %v7259, %v7769
          %v7771 = vsel %vm7505, %v7770, %v7766
          %v7772 = vlaneseq
          %v7773 = vshrl.u32 %v7772, 7
          %v7774 = vsub.s32 %v7507, %v7773
          %v7775 = vrot.slane %v7262, %v7774
          %v7776 = vsel %vm7512, %v7775, %v7771
          %v7777 = vlaneseq
          %v7778 = vshrl.u32 %v7777, 7
          %v7779 = vsub.s32 %v7514, %v7778
          %v7780 = vrot.slane %v7265, %v7779
          %v7781 = vsel %vm7519, %v7780, %v7776
          %v7782 = vlaneseq
          %v7783 = vshrl.u32 %v7782, 7
          %v7784 = vsub.s32 %v7521, %v7783
          %v7785 = vrot.slane %v7268, %v7784
          %v7786 = vsel %vm7526, %v7785, %v7781
          %v7787 = vlaneseq
          %v7788 = vshrl.u32 %v7787, 7
          %v7789 = vsub.s32 %v7528, %v7788
          %v7790 = vrot.slane %v7271, %v7789
          %v7791 = vsel %vm7533, %v7790, %v7786
          %v7792 = vlaneseq
          %v7793 = vshrl.u32 %v7792, 7
          %v7794 = vsub.s32 %v7535, %v7793
          %v7795 = vrot.slane %v7274, %v7794
          %v7796 = vsel %vm7540, %v7795, %v7791
          %v7797 = vlaneseq
          %v7798 = vshrl.u32 %v7797, 7
          %v7799 = vsub.s32 %v7542, %v7798
          %v7800 = vrot.slane %v7277, %v7799
          %v7801 = vsel %vm7547, %v7800, %v7796
          %v7802 = vlaneseq
          %v7803 = vshrl.u32 %v7802, 7
          %v7804 = vsub.s32 %v7549, %v7803
          %v7805 = vrot.slane %v7280, %v7804
          %v7806 = vsel %vm7554, %v7805, %v7801
          %v7807 = vlaneseq
          %v7808 = vshrl.u32 %v7807, 7
          %v7809 = vsub.s32 %v7556, %v7808
          %v7810 = vrot.slane %v7283, %v7809
          %v7811 = vsel %vm7561, %v7810, %v7806
          %v7812 = vlaneseq
          %v7813 = vshrl.u32 %v7812, 7
          %v7814 = vsub.s32 %v7563, %v7813
          %v7815 = vrot.slane %v7286, %v7814
          %v7816 = vsel %vm7568, %v7815, %v7811
          %v7817 = vlaneseq
          %v7818 = vshrl.u32 %v7817, 7
          %v7819 = vsub.s32 %v7570, %v7818
          %v7820 = vrot.slane %v7289, %v7819
          %v7821 = vsel %vm7575, %v7820, %v7816
          %v7822 = vlaneseq
          %v7823 = vshrl.u32 %v7822, 7
          %v7824 = vsub.s32 %v7577, %v7823
          %v7825 = vrot.slane %v7292, %v7824
          %v7826 = vsel %vm7582, %v7825, %v7821
          %v7827 = vlaneseq
          %v7828 = vshrl.u32 %v7827, 7
          %v7829 = vsub.s32 %v7584, %v7828
          %v7830 = vrot.slane %v7295, %v7829
          %v7831 = vsel %vm7589, %v7830, %v7826
          %v7832 = vlaneseq
          %v7833 = vshrl.u32 %v7832, 7
          %v7834 = vsub.s32 %v7591, %v7833
          %v7835 = vrot.slane %v7298, %v7834
          %v7836 = vsel %vm7596, %v7835, %v7831
          %v7837 = vlaneseq
          %v7838 = vshrl.u32 %v7837, 7
          %v7839 = vsub.s32 %v7598, %v7838
          %v7840 = vrot.slane %v7301, %v7839
          %v7841 = vsel %vm7603, %v7840, %v7836
          %v7842 = vlaneseq
          %v7843 = vshrl.u32 %v7842, 7
          %v7844 = vsub.s32 %v7495, %v7843
          %v7845 = vrot.slane %v7304, %v7844
          %v7846 = vlaneseq
          %v7847 = vshrl.u32 %v7846, 7
          %v7848 = vsub.s32 %v7500, %v7847
          %v7849 = vrot.slane %v7307, %v7848
          %v7850 = vsel %vm7505, %v7849, %v7845
          %v7851 = vlaneseq
          %v7852 = vshrl.u32 %v7851, 7
          %v7853 = vsub.s32 %v7507, %v7852
          %v7854 = vrot.slane %v7310, %v7853
          %v7855 = vsel %vm7512, %v7854, %v7850
          %v7856 = vlaneseq
          %v7857 = vshrl.u32 %v7856, 7
          %v7858 = vsub.s32 %v7514, %v7857
          %v7859 = vrot.slane %v7313, %v7858
          %v7860 = vsel %vm7519, %v7859, %v7855
          %v7861 = vlaneseq
          %v7862 = vshrl.u32 %v7861, 7
          %v7863 = vsub.s32 %v7521, %v7862
          %v7864 = vrot.slane %v7316, %v7863
          %v7865 = vsel %vm7526, %v7864, %v7860
          %v7866 = vlaneseq
          %v7867 = vshrl.u32 %v7866, 7
          %v7868 = vsub.s32 %v7528, %v7867
          %v7869 = vrot.slane %v7319, %v7868
          %v7870 = vsel %vm7533, %v7869, %v7865
          %v7871 = vlaneseq
          %v7872 = vshrl.u32 %v7871, 7
          %v7873 = vsub.s32 %v7535, %v7872
          %v7874 = vrot.slane %v7322, %v7873
          %v7875 = vsel %vm7540, %v7874, %v7870
          %v7876 = vlaneseq
          %v7877 = vshrl.u32 %v7876, 7
          %v7878 = vsub.s32 %v7542, %v7877
          %v7879 = vrot.slane %v7325, %v7878
          %v7880 = vsel %vm7547, %v7879, %v7875
          %v7881 = vlaneseq
          %v7882 = vshrl.u32 %v7881, 7
          %v7883 = vsub.s32 %v7549, %v7882
          %v7884 = vrot.slane %v7328, %v7883
          %v7885 = vsel %vm7554, %v7884, %v7880
          %v7886 = vlaneseq
          %v7887 = vshrl.u32 %v7886, 7
          %v7888 = vsub.s32 %v7556, %v7887
          %v7889 = vrot.slane %v7331, %v7888
          %v7890 = vsel %vm7561, %v7889, %v7885
          %v7891 = vlaneseq
          %v7892 = vshrl.u32 %v7891, 7
          %v7893 = vsub.s32 %v7563, %v7892
          %v7894 = vrot.slane %v7334, %v7893
          %v7895 = vsel %vm7568, %v7894, %v7890
          %v7896 = vlaneseq
          %v7897 = vshrl.u32 %v7896, 7
          %v7898 = vsub.s32 %v7570, %v7897
          %v7899 = vrot.slane %v7337, %v7898
          %v7900 = vsel %vm7575, %v7899, %v7895
          %v7901 = vlaneseq
          %v7902 = vshrl.u32 %v7901, 7
          %v7903 = vsub.s32 %v7577, %v7902
          %v7904 = vrot.slane %v7340, %v7903
          %v7905 = vsel %vm7582, %v7904, %v7900
          %v7906 = vlaneseq
          %v7907 = vshrl.u32 %v7906, 7
          %v7908 = vsub.s32 %v7584, %v7907
          %v7909 = vrot.slane %v7343, %v7908
          %v7910 = vsel %vm7589, %v7909, %v7905
          %v7911 = vlaneseq
          %v7912 = vshrl.u32 %v7911, 7
          %v7913 = vsub.s32 %v7591, %v7912
          %v7914 = vrot.slane %v7346, %v7913
          %v7915 = vsel %vm7596, %v7914, %v7910
          %v7916 = vlaneseq
          %v7917 = vshrl.u32 %v7916, 7
          %v7918 = vsub.s32 %v7598, %v7917
          %v7919 = vrot.slane %v7349, %v7918
          %v7920 = vsel %vm7603, %v7919, %v7915
          %v7921 = vlaneseq
          %v7922 = vshrl.u32 %v7921, 7
          %v7923 = vsub.s32 %v7495, %v7922
          %v7924 = vrot.slane %v7352, %v7923
          %v7925 = vlaneseq
          %v7926 = vshrl.u32 %v7925, 7
          %v7927 = vsub.s32 %v7500, %v7926
          %v7928 = vrot.slane %v7355, %v7927
          %v7929 = vsel %vm7505, %v7928, %v7924
          %v7930 = vlaneseq
          %v7931 = vshrl.u32 %v7930, 7
          %v7932 = vsub.s32 %v7507, %v7931
          %v7933 = vrot.slane %v7358, %v7932
          %v7934 = vsel %vm7512, %v7933, %v7929
          %v7935 = vlaneseq
          %v7936 = vshrl.u32 %v7935, 7
          %v7937 = vsub.s32 %v7514, %v7936
          %v7938 = vrot.slane %v7361, %v7937
          %v7939 = vsel %vm7519, %v7938, %v7934
          %v7940 = vlaneseq
          %v7941 = vshrl.u32 %v7940, 7
          %v7942 = vsub.s32 %v7521, %v7941
          %v7943 = vrot.slane %v7364, %v7942
          %v7944 = vsel %vm7526, %v7943, %v7939
          %v7945 = vlaneseq
          %v7946 = vshrl.u32 %v7945, 7
          %v7947 = vsub.s32 %v7528, %v7946
          %v7948 = vrot.slane %v7367, %v7947
          %v7949 = vsel %vm7533, %v7948, %v7944
          %v7950 = vlaneseq
          %v7951 = vshrl.u32 %v7950, 7
          %v7952 = vsub.s32 %v7535, %v7951
          %v7953 = vrot.slane %v7370, %v7952
          %v7954 = vsel %vm7540, %v7953, %v7949
          %v7955 = vlaneseq
          %v7956 = vshrl.u32 %v7955, 7
          %v7957 = vsub.s32 %v7542, %v7956
          %v7958 = vrot.slane %v7373, %v7957
          %v7959 = vsel %vm7547, %v7958, %v7954
          %v7960 = vlaneseq
          %v7961 = vshrl.u32 %v7960, 7
          %v7962 = vsub.s32 %v7549, %v7961
          %v7963 = vrot.slane %v7376, %v7962
          %v7964 = vsel %vm7554, %v7963, %v7959
          %v7965 = vlaneseq
          %v7966 = vshrl.u32 %v7965, 7
          %v7967 = vsub.s32 %v7556, %v7966
          %v7968 = vrot.slane %v7379, %v7967
          %v7969 = vsel %vm7561, %v7968, %v7964
          %v7970 = vlaneseq
          %v7971 = vshrl.u32 %v7970, 7
          %v7972 = vsub.s32 %v7563, %v7971
          %v7973 = vrot.slane %v7382, %v7972
          %v7974 = vsel %vm7568, %v7973, %v7969
          %v7975 = vlaneseq
          %v7976 = vshrl.u32 %v7975, 7
          %v7977 = vsub.s32 %v7570, %v7976
          %v7978 = vrot.slane %v7385, %v7977
          %v7979 = vsel %vm7575, %v7978, %v7974
          %v7980 = vlaneseq
          %v7981 = vshrl.u32 %v7980, 7
          %v7982 = vsub.s32 %v7577, %v7981
          %v7983 = vrot.slane %v7388, %v7982
          %v7984 = vsel %vm7582, %v7983, %v7979
          %v7985 = vlaneseq
          %v7986 = vshrl.u32 %v7985, 7
          %v7987 = vsub.s32 %v7584, %v7986
          %v7988 = vrot.slane %v7391, %v7987
          %v7989 = vsel %vm7589, %v7988, %v7984
          %v7990 = vlaneseq
          %v7991 = vshrl.u32 %v7990, 7
          %v7992 = vsub.s32 %v7591, %v7991
          %v7993 = vrot.slane %v7394, %v7992
          %v7994 = vsel %vm7596, %v7993, %v7989
          %v7995 = vlaneseq
          %v7996 = vshrl.u32 %v7995, 7
          %v7997 = vsub.s32 %v7598, %v7996
          %v7998 = vrot.slane %v7397, %v7997
          %v7999 = vsel %vm7603, %v7998, %v7994
          %v8000 = vlaneseq
          %v8001 = vshrl.u32 %v8000, 7
          %v8002 = vsub.s32 %v7495, %v8001
          %v8003 = vrot.slane %v7400, %v8002
          %v8004 = vlaneseq
          %v8005 = vshrl.u32 %v8004, 7
          %v8006 = vsub.s32 %v7500, %v8005
          %v8007 = vrot.slane %v7403, %v8006
          %v8008 = vsel %vm7505, %v8007, %v8003
          %v8009 = vlaneseq
          %v8010 = vshrl.u32 %v8009, 7
          %v8011 = vsub.s32 %v7507, %v8010
          %v8012 = vrot.slane %v7406, %v8011
          %v8013 = vsel %vm7512, %v8012, %v8008
          %v8014 = vlaneseq
          %v8015 = vshrl.u32 %v8014, 7
          %v8016 = vsub.s32 %v7514, %v8015
          %v8017 = vrot.slane %v7409, %v8016
          %v8018 = vsel %vm7519, %v8017, %v8013
          %v8019 = vlaneseq
          %v8020 = vshrl.u32 %v8019, 7
          %v8021 = vsub.s32 %v7521, %v8020
          %v8022 = vrot.slane %v7412, %v8021
          %v8023 = vsel %vm7526, %v8022, %v8018
          %v8024 = vlaneseq
          %v8025 = vshrl.u32 %v8024, 7
          %v8026 = vsub.s32 %v7528, %v8025
          %v8027 = vrot.slane %v7415, %v8026
          %v8028 = vsel %vm7533, %v8027, %v8023
          %v8029 = vlaneseq
          %v8030 = vshrl.u32 %v8029, 7
          %v8031 = vsub.s32 %v7535, %v8030
          %v8032 = vrot.slane %v7418, %v8031
          %v8033 = vsel %vm7540, %v8032, %v8028
          %v8034 = vlaneseq
          %v8035 = vshrl.u32 %v8034, 7
          %v8036 = vsub.s32 %v7542, %v8035
          %v8037 = vrot.slane %v7421, %v8036
          %v8038 = vsel %vm7547, %v8037, %v8033
          %v8039 = vlaneseq
          %v8040 = vshrl.u32 %v8039, 7
          %v8041 = vsub.s32 %v7549, %v8040
          %v8042 = vrot.slane %v7424, %v8041
          %v8043 = vsel %vm7554, %v8042, %v8038
          %v8044 = vlaneseq
          %v8045 = vshrl.u32 %v8044, 7
          %v8046 = vsub.s32 %v7556, %v8045
          %v8047 = vrot.slane %v7427, %v8046
          %v8048 = vsel %vm7561, %v8047, %v8043
          %v8049 = vlaneseq
          %v8050 = vshrl.u32 %v8049, 7
          %v8051 = vsub.s32 %v7563, %v8050
          %v8052 = vrot.slane %v7430, %v8051
          %v8053 = vsel %vm7568, %v8052, %v8048
          %v8054 = vlaneseq
          %v8055 = vshrl.u32 %v8054, 7
          %v8056 = vsub.s32 %v7570, %v8055
          %v8057 = vrot.slane %v7433, %v8056
          %v8058 = vsel %vm7575, %v8057, %v8053
          %v8059 = vlaneseq
          %v8060 = vshrl.u32 %v8059, 7
          %v8061 = vsub.s32 %v7577, %v8060
          %v8062 = vrot.slane %v7436, %v8061
          %v8063 = vsel %vm7582, %v8062, %v8058
          %v8064 = vlaneseq
          %v8065 = vshrl.u32 %v8064, 7
          %v8066 = vsub.s32 %v7584, %v8065
          %v8067 = vrot.slane %v7439, %v8066
          %v8068 = vsel %vm7589, %v8067, %v8063
          %v8069 = vlaneseq
          %v8070 = vshrl.u32 %v8069, 7
          %v8071 = vsub.s32 %v7591, %v8070
          %v8072 = vrot.slane %v7442, %v8071
          %v8073 = vsel %vm7596, %v8072, %v8068
          %v8074 = vlaneseq
          %v8075 = vshrl.u32 %v8074, 7
          %v8076 = vsub.s32 %v7598, %v8075
          %v8077 = vrot.slane %v7445, %v8076
          %v8078 = vsel %vm7603, %v8077, %v8073
          %v8079 = vlaneseq
          %v8080 = vshrl.u32 %v8079, 7
          %v8081 = vsub.s32 %v7495, %v8080
          %v8082 = vrot.slane %v7448, %v8081
          %v8083 = vlaneseq
          %v8084 = vshrl.u32 %v8083, 7
          %v8085 = vsub.s32 %v7500, %v8084
          %v8086 = vrot.slane %v7451, %v8085
          %v8087 = vsel %vm7505, %v8086, %v8082
          %v8088 = vlaneseq
          %v8089 = vshrl.u32 %v8088, 7
          %v8090 = vsub.s32 %v7507, %v8089
          %v8091 = vrot.slane %v7454, %v8090
          %v8092 = vsel %vm7512, %v8091, %v8087
          %v8093 = vlaneseq
          %v8094 = vshrl.u32 %v8093, 7
          %v8095 = vsub.s32 %v7514, %v8094
          %v8096 = vrot.slane %v7457, %v8095
          %v8097 = vsel %vm7519, %v8096, %v8092
          %v8098 = vlaneseq
          %v8099 = vshrl.u32 %v8098, 7
          %v8100 = vsub.s32 %v7521, %v8099
          %v8101 = vrot.slane %v7460, %v8100
          %v8102 = vsel %vm7526, %v8101, %v8097
          %v8103 = vlaneseq
          %v8104 = vshrl.u32 %v8103, 7
          %v8105 = vsub.s32 %v7528, %v8104
          %v8106 = vrot.slane %v7463, %v8105
          %v8107 = vsel %vm7533, %v8106, %v8102
          %v8108 = vlaneseq
          %v8109 = vshrl.u32 %v8108, 7
          %v8110 = vsub.s32 %v7535, %v8109
          %v8111 = vrot.slane %v7466, %v8110
          %v8112 = vsel %vm7540, %v8111, %v8107
          %v8113 = vlaneseq
          %v8114 = vshrl.u32 %v8113, 7
          %v8115 = vsub.s32 %v7542, %v8114
          %v8116 = vrot.slane %v7469, %v8115
          %v8117 = vsel %vm7547, %v8116, %v8112
          %v8118 = vlaneseq
          %v8119 = vshrl.u32 %v8118, 7
          %v8120 = vsub.s32 %v7549, %v8119
          %v8121 = vrot.slane %v7472, %v8120
          %v8122 = vsel %vm7554, %v8121, %v8117
          %v8123 = vlaneseq
          %v8124 = vshrl.u32 %v8123, 7
          %v8125 = vsub.s32 %v7556, %v8124
          %v8126 = vrot.slane %v7475, %v8125
          %v8127 = vsel %vm7561, %v8126, %v8122
          %v8128 = vlaneseq
          %v8129 = vshrl.u32 %v8128, 7
          %v8130 = vsub.s32 %v7563, %v8129
          %v8131 = vrot.slane %v7478, %v8130
          %v8132 = vsel %vm7568, %v8131, %v8127
          %v8133 = vlaneseq
          %v8134 = vshrl.u32 %v8133, 7
          %v8135 = vsub.s32 %v7570, %v8134
          %v8136 = vrot.slane %v7481, %v8135
          %v8137 = vsel %vm7575, %v8136, %v8132
          %v8138 = vlaneseq
          %v8139 = vshrl.u32 %v8138, 7
          %v8140 = vsub.s32 %v7577, %v8139
          %v8141 = vrot.slane %v7484, %v8140
          %v8142 = vsel %vm7582, %v8141, %v8137
          %v8143 = vlaneseq
          %v8144 = vshrl.u32 %v8143, 7
          %v8145 = vsub.s32 %v7584, %v8144
          %v8146 = vrot.slane %v7487, %v8145
          %v8147 = vsel %vm7589, %v8146, %v8142
          %v8148 = vlaneseq
          %v8149 = vshrl.u32 %v8148, 7
          %v8150 = vsub.s32 %v7591, %v8149
          %v8151 = vrot.slane %v7490, %v8150
          %v8152 = vsel %vm7596, %v8151, %v8147
          %v8153 = vlaneseq
          %v8154 = vshrl.u32 %v8153, 7
          %v8155 = vsub.s32 %v7598, %v8154
          %v8156 = vrot.slane %v7493, %v8155
          %v8157 = vsel %vm7603, %v8156, %v8152
          %vm8158 = vcmask 1041409
          %v8159 = vsel %vm8158, %v7920, %v7604
          %v8160 = vsel %vm8158, %v7999, %v7683
          %v8161 = vsel %vm8158, %v8078, %v7762
          %v8162 = vsel %vm8158, %v8157, %v7841
          %v8163 = vcombine.low %v8159, %v8160
          %v8164 = vcombine.low %v8161, %v8162
          %v8166 = vunpack.c.l.s4 1983009808
          %v8167 = vunpack.c.0.s8 %v8166
          %v8168 = vlaneseq
          %v8169 = vshrl.u32 %v8168, 7
          %v8170 = vsub.s32 %v8167, %v8169
          %v8171 = vrot.slane %v8163, %v8170
          %v8173 = vunpack.c.l.s4 1983009808
          %v8174 = vunpack.c.0.s8 %v8173
          %v8175 = vlaneseq
          %v8176 = vshrl.u32 %v8175, 7
          %v8177 = vsub.s32 %v8174, %v8176
          %v8178 = vrot.slane %v8164, %v8177
          %v8179 = vcombine.low %v8171, %v8178
          %8181 = vst [vmem:[#allocation2] sm:$0xff] %v8179
          %8182 = vst [vmem:[#allocation3] sm:$0xff] 0.0
          %8183 = vst [vmem:[#allocation3 + $0x8] sm:$0xff] 0.0
        $region108: #{forward.1} parent=67 // pred_fallthru
          _
        %v8184 = vld [vmem:[#allocation2] sm:$0xff]
        %v8186 = vcombine.high %v8184, %v8184
        %v8188 = vunpack.c.l.s4 1983009808
        %v8189 = vunpack.c.0.s8 %v8188
        %v8190 = vlaneseq
        %v8191 = vshrl.u32 %v8190, 7
        %v8192 = vsub.s32 %v8189, %v8191
        %v8193 = vrot.slane %v8184, %v8192
        %v8195 = vunpack.c.l.s4 1983009808
        %v8196 = vunpack.c.0.s8 %v8195
        %v8197 = vlaneseq
        %v8198 = vshrl.u32 %v8197, 7
        %v8199 = vsub.s32 %v8196, %v8198
        %v8200 = vrot.slane %v8186, %v8199
        %v8201 = vcombine.high %v8193, %v8193
        %v8202 = vcombine.high %v8200, %v8200
        %v8207 = vpack.c.bf16 %v8193, %v8193
        %v8208 = vpack.c.bf16 %v8201, %v8201
        %v8209 = vpack.c.bf16 %v8200, %v8200
        %v8210 = vpack.c.bf16 %v8202, %v8202
        %v8211 = vld [vmem:[%s496] sm:$0xff]
        %v8212 = vld [vmem:[%s496 + $0x8] sm:$0xff]
        %v8213 = vld [vmem:[%s496 + $0x10] sm:$0xff]
        %v8214 = vld [vmem:[%s496 + $0x18] sm:$0xff]
        %v8215 = vld [vmem:[%s496 + $0x20] sm:$0xff]
        %v8216 = vld [vmem:[%s496 + $0x28] sm:$0xff]
        %v8217 = vld [vmem:[%s496 + $0x30] sm:$0xff]
        %v8218 = vld [vmem:[%s496 + $0x38] sm:$0xff]
        %v8219 = vld [vmem:[%s496 + $0x40] sm:$0xff]
        %v8220 = vld [vmem:[%s496 + $0x48] sm:$0xff]
        %v8221 = vld [vmem:[%s496 + $0x50] sm:$0xff]
        %v8222 = vld [vmem:[%s496 + $0x58] sm:$0xff]
        %v8223 = vld [vmem:[%s496 + $0x60] sm:$0xff]
        %v8224 = vld [vmem:[%s496 + $0x68] sm:$0xff]
        %v8225 = vld [vmem:[%s496 + $0x70] sm:$0xff]
        %v8226 = vld [vmem:[%s496 + $0x78] sm:$0xff]
        %v8227 = vld [vmem:[%s496 + $0x80] sm:$0xff]
        %v8228 = vld [vmem:[%s496 + $0x88] sm:$0xff]
        %v8229 = vld [vmem:[%s496 + $0x90] sm:$0xff]
        %v8230 = vld [vmem:[%s496 + $0x98] sm:$0xff]
        %v8231 = vld [vmem:[%s496 + $0xa0] sm:$0xff]
        %v8232 = vld [vmem:[%s496 + $0xa8] sm:$0xff]
        %v8233 = vld [vmem:[%s496 + $0xb0] sm:$0xff]
        %v8234 = vld [vmem:[%s496 + $0xb8] sm:$0xff]
        %v8235 = vld [vmem:[%s496 + $0xc0] sm:$0xff]
        %v8236 = vld [vmem:[%s496 + $0xc8] sm:$0xff]
        %v8237 = vld [vmem:[%s496 + $0xd0] sm:$0xff]
        %v8238 = vld [vmem:[%s496 + $0xd8] sm:$0xff]
        %v8239 = vld [vmem:[%s496 + $0xe0] sm:$0xff]
        %v8240 = vld [vmem:[%s496 + $0xe8] sm:$0xff]
        %v8241 = vld [vmem:[%s496 + $0xf0] sm:$0xff]
        %v8242 = vld [vmem:[%s496 + $0xf8] sm:$0xff]
        %v8243 = vld [vmem:[%s496 + $0x100] sm:$0xff]
        %v8244 = vld [vmem:[%s496 + $0x108] sm:$0xff]
        %v8245 = vld [vmem:[%s496 + $0x110] sm:$0xff]
        %v8246 = vld [vmem:[%s496 + $0x118] sm:$0xff]
        %v8247 = vld [vmem:[%s496 + $0x120] sm:$0xff]
        %v8248 = vld [vmem:[%s496 + $0x128] sm:$0xff]
        %v8249 = vld [vmem:[%s496 + $0x130] sm:$0xff]
        %v8250 = vld [vmem:[%s496 + $0x138] sm:$0xff]
        %v8251 = vld [vmem:[%s496 + $0x140] sm:$0xff]
        %v8252 = vld [vmem:[%s496 + $0x148] sm:$0xff]
        %v8253 = vld [vmem:[%s496 + $0x150] sm:$0xff]
        %v8254 = vld [vmem:[%s496 + $0x158] sm:$0xff]
        %v8255 = vld [vmem:[%s496 + $0x160] sm:$0xff]
        %v8256 = vld [vmem:[%s496 + $0x168] sm:$0xff]
        %v8257 = vld [vmem:[%s496 + $0x170] sm:$0xff]
        %v8258 = vld [vmem:[%s496 + $0x178] sm:$0xff]
        %v8259 = vld [vmem:[%s496 + $0x180] sm:$0xff]
        %v8260 = vld [vmem:[%s496 + $0x188] sm:$0xff]
        %v8261 = vld [vmem:[%s496 + $0x190] sm:$0xff]
        %v8262 = vld [vmem:[%s496 + $0x198] sm:$0xff]
        %v8263 = vld [vmem:[%s496 + $0x1a0] sm:$0xff]
        %v8264 = vld [vmem:[%s496 + $0x1a8] sm:$0xff]
        %v8265 = vld [vmem:[%s496 + $0x1b0] sm:$0xff]
        %v8266 = vld [vmem:[%s496 + $0x1b8] sm:$0xff]
        %v8267 = vld [vmem:[%s496 + $0x1c0] sm:$0xff]
        %v8268 = vld [vmem:[%s496 + $0x1c8] sm:$0xff]
        %v8269 = vld [vmem:[%s496 + $0x1d0] sm:$0xff]
        %v8270 = vld [vmem:[%s496 + $0x1d8] sm:$0xff]
        %v8271 = vld [vmem:[%s496 + $0x1e0] sm:$0xff]
        %v8272 = vld [vmem:[%s496 + $0x1e8] sm:$0xff]
        %v8273 = vld [vmem:[%s496 + $0x1f0] sm:$0xff]
        %v8274 = vld [vmem:[%s496 + $0x1f8] sm:$0xff]
        %v8275 = vld [vmem:[%s505] sm:$0x3]
        %v8277 = vlaneseq
        %v8278 = vshrl.u32 %v8277, 7
        %v8279 = vsub.s32 0, %v8278
        %v8280 = vrot.slane %v8275, %v8279
        %v8281 = vlaneseq
        %v8282 = vshrl.u32 %v8281, 7
        %v8283 = vsub.s32 1, %v8282
        %v8284 = vrot.slane %v8275, %v8283
        %v8351 = vunpack.c.l.b16 %v8211
        %v8352 = vunpack.c.h.b16 %v8211
        %v8353 = vunpack.c.l.b16 %v8212
        %v8354 = vunpack.c.h.b16 %v8212
        %v8355 = vunpack.c.l.b16 %v8213
        %v8356 = vunpack.c.h.b16 %v8213
        %v8357 = vunpack.c.l.b16 %v8214
        %v8358 = vunpack.c.h.b16 %v8214
        %v8359 = vunpack.c.l.b16 %v8215
        %v8360 = vunpack.c.h.b16 %v8215
        %v8361 = vunpack.c.l.b16 %v8216
        %v8362 = vunpack.c.h.b16 %v8216
        %v8363 = vunpack.c.l.b16 %v8217
        %v8364 = vunpack.c.h.b16 %v8217
        %v8365 = vunpack.c.l.b16 %v8218
        %v8366 = vunpack.c.h.b16 %v8218
        %v8367 = vunpack.c.l.b16 %v8219
        %v8368 = vunpack.c.h.b16 %v8219
        %v8369 = vunpack.c.l.b16 %v8220
        %v8370 = vunpack.c.h.b16 %v8220
        %v8371 = vunpack.c.l.b16 %v8221
        %v8372 = vunpack.c.h.b16 %v8221
        %v8373 = vunpack.c.l.b16 %v8222
        %v8374 = vunpack.c.h.b16 %v8222
        %v8375 = vunpack.c.l.b16 %v8223
        %v8376 = vunpack.c.h.b16 %v8223
        %v8377 = vunpack.c.l.b16 %v8224
        %v8378 = vunpack.c.h.b16 %v8224
        %v8379 = vunpack.c.l.b16 %v8225
        %v8380 = vunpack.c.h.b16 %v8225
        %v8381 = vunpack.c.l.b16 %v8226
        %v8382 = vunpack.c.h.b16 %v8226
        %v8383 = vunpack.c.l.b16 %v8227
        %v8384 = vunpack.c.h.b16 %v8227
        %v8385 = vunpack.c.l.b16 %v8228
        %v8386 = vunpack.c.h.b16 %v8228
        %v8387 = vunpack.c.l.b16 %v8229
        %v8388 = vunpack.c.h.b16 %v8229
        %v8389 = vunpack.c.l.b16 %v8230
        %v8390 = vunpack.c.h.b16 %v8230
        %v8391 = vunpack.c.l.b16 %v8231
        %v8392 = vunpack.c.h.b16 %v8231
        %v8393 = vunpack.c.l.b16 %v8232
        %v8394 = vunpack.c.h.b16 %v8232
        %v8395 = vunpack.c.l.b16 %v8233
        %v8396 = vunpack.c.h.b16 %v8233
        %v8397 = vunpack.c.l.b16 %v8234
        %v8398 = vunpack.c.h.b16 %v8234
        %v8399 = vunpack.c.l.b16 %v8235
        %v8400 = vunpack.c.h.b16 %v8235
        %v8401 = vunpack.c.l.b16 %v8236
        %v8402 = vunpack.c.h.b16 %v8236
        %v8403 = vunpack.c.l.b16 %v8237
        %v8404 = vunpack.c.h.b16 %v8237
        %v8405 = vunpack.c.l.b16 %v8238
        %v8406 = vunpack.c.h.b16 %v8238
        %v8407 = vunpack.c.l.b16 %v8239
        %v8408 = vunpack.c.h.b16 %v8239
        %v8409 = vunpack.c.l.b16 %v8240
        %v8410 = vunpack.c.h.b16 %v8240
        %v8411 = vunpack.c.l.b16 %v8241
        %v8412 = vunpack.c.h.b16 %v8241
        %v8413 = vunpack.c.l.b16 %v8242
        %v8414 = vunpack.c.h.b16 %v8242
        %v8415 = vunpack.c.l.b16 %v8243
        %v8416 = vunpack.c.h.b16 %v8243
        %v8417 = vunpack.c.l.b16 %v8244
        %v8418 = vunpack.c.h.b16 %v8244
        %v8419 = vunpack.c.l.b16 %v8245
        %v8420 = vunpack.c.h.b16 %v8245
        %v8421 = vunpack.c.l.b16 %v8246
        %v8422 = vunpack.c.h.b16 %v8246
        %v8423 = vunpack.c.l.b16 %v8247
        %v8424 = vunpack.c.h.b16 %v8247
        %v8425 = vunpack.c.l.b16 %v8248
        %v8426 = vunpack.c.h.b16 %v8248
        %v8427 = vunpack.c.l.b16 %v8249
        %v8428 = vunpack.c.h.b16 %v8249
        %v8429 = vunpack.c.l.b16 %v8250
        %v8430 = vunpack.c.h.b16 %v8250
        %v8431 = vunpack.c.l.b16 %v8251
        %v8432 = vunpack.c.h.b16 %v8251
        %v8433 = vunpack.c.l.b16 %v8252
        %v8434 = vunpack.c.h.b16 %v8252
        %v8435 = vunpack.c.l.b16 %v8253
        %v8436 = vunpack.c.h.b16 %v8253
        %v8437 = vunpack.c.l.b16 %v8254
        %v8438 = vunpack.c.h.b16 %v8254
        %v8439 = vunpack.c.l.b16 %v8255
        %v8440 = vunpack.c.h.b16 %v8255
        %v8441 = vunpack.c.l.b16 %v8256
        %v8442 = vunpack.c.h.b16 %v8256
        %v8443 = vunpack.c.l.b16 %v8257
        %v8444 = vunpack.c.h.b16 %v8257
        %v8445 = vunpack.c.l.b16 %v8258
        %v8446 = vunpack.c.h.b16 %v8258
        %v8447 = vunpack.c.l.b16 %v8259
        %v8448 = vunpack.c.h.b16 %v8259
        %v8449 = vunpack.c.l.b16 %v8260
        %v8450 = vunpack.c.h.b16 %v8260
        %v8451 = vunpack.c.l.b16 %v8261
        %v8452 = vunpack.c.h.b16 %v8261
        %v8453 = vunpack.c.l.b16 %v8262
        %v8454 = vunpack.c.h.b16 %v8262
        %v8455 = vunpack.c.l.b16 %v8263
        %v8456 = vunpack.c.h.b16 %v8263
        %v8457 = vunpack.c.l.b16 %v8264
        %v8458 = vunpack.c.h.b16 %v8264
        %v8459 = vunpack.c.l.b16 %v8265
        %v8460 = vunpack.c.h.b16 %v8265
        %v8461 = vunpack.c.l.b16 %v8266
        %v8462 = vunpack.c.h.b16 %v8266
        %v8463 = vunpack.c.l.b16 %v8267
        %v8464 = vunpack.c.h.b16 %v8267
        %v8465 = vunpack.c.l.b16 %v8268
        %v8466 = vunpack.c.h.b16 %v8268
        %v8467 = vunpack.c.l.b16 %v8269
        %v8468 = vunpack.c.h.b16 %v8269
        %v8469 = vunpack.c.l.b16 %v8270
        %v8470 = vunpack.c.h.b16 %v8270
        %v8471 = vunpack.c.l.b16 %v8271
        %v8472 = vunpack.c.h.b16 %v8271
        %v8473 = vunpack.c.l.b16 %v8272
        %v8474 = vunpack.c.h.b16 %v8272
        %v8475 = vunpack.c.l.b16 %v8273
        %v8476 = vunpack.c.h.b16 %v8273
        %v8477 = vunpack.c.l.b16 %v8274
        %v8478 = vunpack.c.h.b16 %v8274
        %v8479 = vpack.c.b16 %v8353, %v8351
        %v8480 = vpack.c.b16 %v8354, %v8352
        %v8481 = vpack.c.b16 %v8357, %v8355
        %v8482 = vpack.c.b16 %v8358, %v8356
        %v8483 = vpack.c.b16 %v8361, %v8359
        %v8484 = vpack.c.b16 %v8362, %v8360
        %v8485 = vpack.c.b16 %v8365, %v8363
        %v8486 = vpack.c.b16 %v8366, %v8364
        %v8487 = vpack.c.b16 %v8369, %v8367
        %v8488 = vpack.c.b16 %v8370, %v8368
        %v8489 = vpack.c.b16 %v8373, %v8371
        %v8490 = vpack.c.b16 %v8374, %v8372
        %v8491 = vpack.c.b16 %v8377, %v8375
        %v8492 = vpack.c.b16 %v8378, %v8376
        %v8493 = vpack.c.b16 %v8381, %v8379
        %v8494 = vpack.c.b16 %v8382, %v8380
        %v8495 = vpack.c.b16 %v8385, %v8383
        %v8496 = vpack.c.b16 %v8386, %v8384
        %v8497 = vpack.c.b16 %v8389, %v8387
        %v8498 = vpack.c.b16 %v8390, %v8388
        %v8499 = vpack.c.b16 %v8393, %v8391
        %v8500 = vpack.c.b16 %v8394, %v8392
        %v8501 = vpack.c.b16 %v8397, %v8395
        %v8502 = vpack.c.b16 %v8398, %v8396
        %v8503 = vpack.c.b16 %v8401, %v8399
        %v8504 = vpack.c.b16 %v8402, %v8400
        %v8505 = vpack.c.b16 %v8405, %v8403
        %v8506 = vpack.c.b16 %v8406, %v8404
        %v8507 = vpack.c.b16 %v8409, %v8407
        %v8508 = vpack.c.b16 %v8410, %v8408
        %v8509 = vpack.c.b16 %v8413, %v8411
        %v8510 = vpack.c.b16 %v8414, %v8412
        %v8511 = vpack.c.b16 %v8417, %v8415
        %v8512 = vpack.c.b16 %v8418, %v8416
        %v8513 = vpack.c.b16 %v8421, %v8419
        %v8514 = vpack.c.b16 %v8422, %v8420
        %v8515 = vpack.c.b16 %v8425, %v8423
        %v8516 = vpack.c.b16 %v8426, %v8424
        %v8517 = vpack.c.b16 %v8429, %v8427
        %v8518 = vpack.c.b16 %v8430, %v8428
        %v8519 = vpack.c.b16 %v8433, %v8431
        %v8520 = vpack.c.b16 %v8434, %v8432
        %v8521 = vpack.c.b16 %v8437, %v8435
        %v8522 = vpack.c.b16 %v8438, %v8436
        %v8523 = vpack.c.b16 %v8441, %v8439
        %v8524 = vpack.c.b16 %v8442, %v8440
        %v8525 = vpack.c.b16 %v8445, %v8443
        %v8526 = vpack.c.b16 %v8446, %v8444
        %v8527 = vpack.c.b16 %v8449, %v8447
        %v8528 = vpack.c.b16 %v8450, %v8448
        %v8529 = vpack.c.b16 %v8453, %v8451
        %v8530 = vpack.c.b16 %v8454, %v8452
        %v8531 = vpack.c.b16 %v8457, %v8455
        %v8532 = vpack.c.b16 %v8458, %v8456
        %v8533 = vpack.c.b16 %v8461, %v8459
        %v8534 = vpack.c.b16 %v8462, %v8460
        %v8535 = vpack.c.b16 %v8465, %v8463
        %v8536 = vpack.c.b16 %v8466, %v8464
        %v8537 = vpack.c.b16 %v8469, %v8467
        %v8538 = vpack.c.b16 %v8470, %v8468
        %v8539 = vpack.c.b16 %v8473, %v8471
        %v8540 = vpack.c.b16 %v8474, %v8472
        %v8541 = vpack.c.b16 %v8477, %v8475
        %v8542 = vpack.c.b16 %v8478, %v8476
        %8607 = vmatprep.subr.bf16.mxu0 %v8480
        %8608 = vmatpush1.bf16.msra.mxu0 %v8479
        %8609 = vmatprep.subr.bf16.mxu0 %v8482
        %8610 = vmatpush1.bf16.msra.mxu0 %v8481
        %8611 = vmatprep.subr.bf16.mxu0 %v8484
        %8612 = vmatpush1.bf16.msra.mxu0 %v8483
        %8613 = vmatprep.subr.bf16.mxu0 %v8486
        %8614 = vmatpush1.bf16.msra.mxu0 %v8485
        %8615 = vmatprep.subr.bf16.mxu0 %v8488
        %8616 = vmatpush1.bf16.msra.mxu0 %v8487
        %8617 = vmatprep.subr.bf16.mxu0 %v8490
        %8618 = vmatpush1.bf16.msra.mxu0 %v8489
        %8619 = vmatprep.subr.bf16.mxu0 %v8492
        %8620 = vmatpush1.bf16.msra.mxu0 %v8491
        %8621 = vmatprep.subr.bf16.mxu0 %v8494
        %8622 = vmatpush1.bf16.msra.mxu0 %v8493
        %8623 = vmatprep.subr.bf16.mxu0 %v8496
        %8624 = vmatpush1.bf16.msra.mxu0 %v8495
        %8625 = vmatprep.subr.bf16.mxu0 %v8498
        %8626 = vmatpush1.bf16.msra.mxu0 %v8497
        %8627 = vmatprep.subr.bf16.mxu0 %v8500
        %8628 = vmatpush1.bf16.msra.mxu0 %v8499
        %8629 = vmatprep.subr.bf16.mxu0 %v8502
        %8630 = vmatpush1.bf16.msra.mxu0 %v8501
        %8631 = vmatprep.subr.bf16.mxu0 %v8504
        %8632 = vmatpush1.bf16.msra.mxu0 %v8503
        %8633 = vmatprep.subr.bf16.mxu0 %v8506
        %8634 = vmatpush1.bf16.msra.mxu0 %v8505
        %8635 = vmatprep.subr.bf16.mxu0 %v8508
        %8636 = vmatpush1.bf16.msra.mxu0 %v8507
        %8637 = vmatprep.subr.bf16.mxu0 %v8510
        %8638 = vmatpush1.bf16.msra.mxu0 %v8509
        %8639 = vmatprep.mubr.bf16.mxu0 %v8208
        %8640 = vmatmul.mubr.bf16.gmra.mrb[0].mxu0 %v8207
        %v8641 = vpop.f32.mrb[0].mxu0
        %v8642 = vadd.f32 %v8280, %v8641
        %v8643 = vpop.f32.mrb[0].mxu0
        %v8644 = vadd.f32 %v8284, %v8643
        %v8645 = vpop.f32.mrb[0].mxu0
        %v8646 = vpop.f32.mrb[0].mxu0
        %8647 = vdwg.mxu0
        %8648 = vmatprep.subr.bf16.mxu0 %v8512
        %8649 = vmatpush1.bf16.msra.mxu0 %v8511
        %8650 = vmatprep.subr.bf16.mxu0 %v8514
        %8651 = vmatpush1.bf16.msra.mxu0 %v8513
        %8652 = vmatprep.subr.bf16.mxu0 %v8516
        %8653 = vmatpush1.bf16.msra.mxu0 %v8515
        %8654 = vmatprep.subr.bf16.mxu0 %v8518
        %8655 = vmatpush1.bf16.msra.mxu0 %v8517
        %8656 = vmatprep.subr.bf16.mxu0 %v8520
        %8657 = vmatpush1.bf16.msra.mxu0 %v8519
        %8658 = vmatprep.subr.bf16.mxu0 %v8522
        %8659 = vmatpush1.bf16.msra.mxu0 %v8521
        %8660 = vmatprep.subr.bf16.mxu0 %v8524
        %8661 = vmatpush1.bf16.msra.mxu0 %v8523
        %8662 = vmatprep.subr.bf16.mxu0 %v8526
        %8663 = vmatpush1.bf16.msra.mxu0 %v8525
        %8664 = vmatprep.subr.bf16.mxu0 %v8528
        %8665 = vmatpush1.bf16.msra.mxu0 %v8527
        %8666 = vmatprep.subr.bf16.mxu0 %v8530
        %8667 = vmatpush1.bf16.msra.mxu0 %v8529
        %8668 = vmatprep.subr.bf16.mxu0 %v8532
        %8669 = vmatpush1.bf16.msra.mxu0 %v8531
        %8670 = vmatprep.subr.bf16.mxu0 %v8534
        %8671 = vmatpush1.bf16.msra.mxu0 %v8533
        %8672 = vmatprep.subr.bf16.mxu0 %v8536
        %8673 = vmatpush1.bf16.msra.mxu0 %v8535
        %8674 = vmatprep.subr.bf16.mxu0 %v8538
        %8675 = vmatpush1.bf16.msra.mxu0 %v8537
        %8676 = vmatprep.subr.bf16.mxu0 %v8540
        %8677 = vmatpush1.bf16.msra.mxu0 %v8539
        %8678 = vmatprep.subr.bf16.mxu0 %v8542
        %8679 = vmatpush1.bf16.msra.mxu0 %v8541
        %8680 = vmatprep.mubr.bf16.mxu0 %v8210
        %8681 = vmatmul.mubr.bf16.gmra.mrb[0].mxu0 %v8209
        %v8682 = vpop.f32.mrb[0].mxu0
        %v8683 = vadd.f32 %v8642, %v8682
        %v8684 = vpop.f32.mrb[0].mxu0
        %v8685 = vadd.f32 %v8644, %v8684
        %v8686 = vpop.f32.mrb[0].mxu0
        %v8687 = vpop.f32.mrb[0].mxu0
        %8688 = vdwg.mxu0
        %v8689 = vld [vmem:[#allocation3] sm:$0xff]
        %v8690 = vld [vmem:[#allocation3 + $0x8] sm:$0xff]
        %v8691 = vpack.c.bf16 %v8683, %v8683
        %v8692 = vpack.c.bf16 %v8685, %v8685
        %v8693 = vld [vmem:[%s514] sm:$0xff]
        %v8694 = vld [vmem:[%s514 + $0x8] sm:$0xff]
        %v8695 = vld [vmem:[%s514 + $0x10] sm:$0xff]
        %v8696 = vld [vmem:[%s514 + $0x18] sm:$0xff]
        %v8697 = vld [vmem:[%s514 + $0x20] sm:$0xff]
        %v8698 = vld [vmem:[%s514 + $0x28] sm:$0xff]
        %v8699 = vld [vmem:[%s514 + $0x30] sm:$0xff]
        %v8700 = vld [vmem:[%s514 + $0x38] sm:$0xff]
        %v8701 = vld [vmem:[%s514 + $0x40] sm:$0xff]
        %v8702 = vld [vmem:[%s514 + $0x48] sm:$0xff]
        %v8703 = vld [vmem:[%s514 + $0x50] sm:$0xff]
        %v8704 = vld [vmem:[%s514 + $0x58] sm:$0xff]
        %v8705 = vld [vmem:[%s514 + $0x60] sm:$0xff]
        %v8706 = vld [vmem:[%s514 + $0x68] sm:$0xff]
        %v8707 = vld [vmem:[%s514 + $0x70] sm:$0xff]
        %v8708 = vld [vmem:[%s514 + $0x78] sm:$0xff]
        %v8709 = vld [vmem:[%s514 + $0x80] sm:$0xff]
        %v8710 = vld [vmem:[%s514 + $0x88] sm:$0xff]
        %v8711 = vld [vmem:[%s514 + $0x90] sm:$0xff]
        %v8712 = vld [vmem:[%s514 + $0x98] sm:$0xff]
        %v8713 = vld [vmem:[%s514 + $0xa0] sm:$0xff]
        %v8714 = vld [vmem:[%s514 + $0xa8] sm:$0xff]
        %v8715 = vld [vmem:[%s514 + $0xb0] sm:$0xff]
        %v8716 = vld [vmem:[%s514 + $0xb8] sm:$0xff]
        %v8717 = vld [vmem:[%s514 + $0xc0] sm:$0xff]
        %v8718 = vld [vmem:[%s514 + $0xc8] sm:$0xff]
        %v8719 = vld [vmem:[%s514 + $0xd0] sm:$0xff]
        %v8720 = vld [vmem:[%s514 + $0xd8] sm:$0xff]
        %v8721 = vld [vmem:[%s514 + $0xe0] sm:$0xff]
        %v8722 = vld [vmem:[%s514 + $0xe8] sm:$0xff]
        %v8723 = vld [vmem:[%s514 + $0xf0] sm:$0xff]
        %v8724 = vld [vmem:[%s514 + $0xf8] sm:$0xff]
        %v8725 = vld [vmem:[%s514 + $0x100] sm:$0xff]
        %v8726 = vld [vmem:[%s514 + $0x108] sm:$0xff]
        %v8727 = vld [vmem:[%s514 + $0x110] sm:$0xff]
        %v8728 = vld [vmem:[%s514 + $0x118] sm:$0xff]
        %v8729 = vld [vmem:[%s514 + $0x120] sm:$0xff]
        %v8730 = vld [vmem:[%s514 + $0x128] sm:$0xff]
        %v8731 = vld [vmem:[%s514 + $0x130] sm:$0xff]
        %v8732 = vld [vmem:[%s514 + $0x138] sm:$0xff]
        %v8733 = vld [vmem:[%s514 + $0x140] sm:$0xff]
        %v8734 = vld [vmem:[%s514 + $0x148] sm:$0xff]
        %v8735 = vld [vmem:[%s514 + $0x150] sm:$0xff]
        %v8736 = vld [vmem:[%s514 + $0x158] sm:$0xff]
        %v8737 = vld [vmem:[%s514 + $0x160] sm:$0xff]
        %v8738 = vld [vmem:[%s514 + $0x168] sm:$0xff]
        %v8739 = vld [vmem:[%s514 + $0x170] sm:$0xff]
        %v8740 = vld [vmem:[%s514 + $0x178] sm:$0xff]
        %v8741 = vld [vmem:[%s514 + $0x180] sm:$0xff]
        %v8742 = vld [vmem:[%s514 + $0x188] sm:$0xff]
        %v8743 = vld [vmem:[%s514 + $0x190] sm:$0xff]
        %v8744 = vld [vmem:[%s514 + $0x198] sm:$0xff]
        %v8745 = vld [vmem:[%s514 + $0x1a0] sm:$0xff]
        %v8746 = vld [vmem:[%s514 + $0x1a8] sm:$0xff]
        %v8747 = vld [vmem:[%s514 + $0x1b0] sm:$0xff]
        %v8748 = vld [vmem:[%s514 + $0x1b8] sm:$0xff]
        %v8749 = vld [vmem:[%s514 + $0x1c0] sm:$0xff]
        %v8750 = vld [vmem:[%s514 + $0x1c8] sm:$0xff]
        %v8751 = vld [vmem:[%s514 + $0x1d0] sm:$0xff]
        %v8752 = vld [vmem:[%s514 + $0x1d8] sm:$0xff]
        %v8753 = vld [vmem:[%s514 + $0x1e0] sm:$0xff]
        %v8754 = vld [vmem:[%s514 + $0x1e8] sm:$0xff]
        %v8755 = vld [vmem:[%s514 + $0x1f0] sm:$0xff]
        %v8756 = vld [vmem:[%s514 + $0x1f8] sm:$0xff]
        %v8757 = vld [vmem:[%s514 + $0x200] sm:$0xff]
        %v8758 = vld [vmem:[%s514 + $0x208] sm:$0xff]
        %v8759 = vld [vmem:[%s514 + $0x210] sm:$0xff]
        %v8760 = vld [vmem:[%s514 + $0x218] sm:$0xff]
        %v8761 = vld [vmem:[%s514 + $0x220] sm:$0xff]
        %v8762 = vld [vmem:[%s514 + $0x228] sm:$0xff]
        %v8763 = vld [vmem:[%s514 + $0x230] sm:$0xff]
        %v8764 = vld [vmem:[%s514 + $0x238] sm:$0xff]
        %v8765 = vld [vmem:[%s514 + $0x240] sm:$0xff]
        %v8766 = vld [vmem:[%s514 + $0x248] sm:$0xff]
        %v8767 = vld [vmem:[%s514 + $0x250] sm:$0xff]
        %v8768 = vld [vmem:[%s514 + $0x258] sm:$0xff]
        %v8769 = vld [vmem:[%s514 + $0x260] sm:$0xff]
        %v8770 = vld [vmem:[%s514 + $0x268] sm:$0xff]
        %v8771 = vld [vmem:[%s514 + $0x270] sm:$0xff]
        %v8772 = vld [vmem:[%s514 + $0x278] sm:$0xff]
        %v8773 = vld [vmem:[%s514 + $0x280] sm:$0xff]
        %v8774 = vld [vmem:[%s514 + $0x288] sm:$0xff]
        %v8775 = vld [vmem:[%s514 + $0x290] sm:$0xff]
        %v8776 = vld [vmem:[%s514 + $0x298] sm:$0xff]
        %v8777 = vld [vmem:[%s514 + $0x2a0] sm:$0xff]
        %v8778 = vld [vmem:[%s514 + $0x2a8] sm:$0xff]
        %v8779 = vld [vmem:[%s514 + $0x2b0] sm:$0xff]
        %v8780 = vld [vmem:[%s514 + $0x2b8] sm:$0xff]
        %v8781 = vld [vmem:[%s514 + $0x2c0] sm:$0xff]
        %v8782 = vld [vmem:[%s514 + $0x2c8] sm:$0xff]
        %v8783 = vld [vmem:[%s514 + $0x2d0] sm:$0xff]
        %v8784 = vld [vmem:[%s514 + $0x2d8] sm:$0xff]
        %v8785 = vld [vmem:[%s514 + $0x2e0] sm:$0xff]
        %v8786 = vld [vmem:[%s514 + $0x2e8] sm:$0xff]
        %v8787 = vld [vmem:[%s514 + $0x2f0] sm:$0xff]
        %v8788 = vld [vmem:[%s514 + $0x2f8] sm:$0xff]
        %v8789 = vld [vmem:[%s514 + $0x300] sm:$0xff]
        %v8790 = vld [vmem:[%s514 + $0x308] sm:$0xff]
        %v8791 = vld [vmem:[%s514 + $0x310] sm:$0xff]
        %v8792 = vld [vmem:[%s514 + $0x318] sm:$0xff]
        %v8793 = vld [vmem:[%s514 + $0x320] sm:$0xff]
        %v8794 = vld [vmem:[%s514 + $0x328] sm:$0xff]
        %v8795 = vld [vmem:[%s514 + $0x330] sm:$0xff]
        %v8796 = vld [vmem:[%s514 + $0x338] sm:$0xff]
        %v8797 = vld [vmem:[%s514 + $0x340] sm:$0xff]
        %v8798 = vld [vmem:[%s514 + $0x348] sm:$0xff]
        %v8799 = vld [vmem:[%s514 + $0x350] sm:$0xff]
        %v8800 = vld [vmem:[%s514 + $0x358] sm:$0xff]
        %v8801 = vld [vmem:[%s514 + $0x360] sm:$0xff]
        %v8802 = vld [vmem:[%s514 + $0x368] sm:$0xff]
        %v8803 = vld [vmem:[%s514 + $0x370] sm:$0xff]
        %v8804 = vld [vmem:[%s514 + $0x378] sm:$0xff]
        %v8805 = vld [vmem:[%s514 + $0x380] sm:$0xff]
        %v8806 = vld [vmem:[%s514 + $0x388] sm:$0xff]
        %v8807 = vld [vmem:[%s514 + $0x390] sm:$0xff]
        %v8808 = vld [vmem:[%s514 + $0x398] sm:$0xff]
        %v8809 = vld [vmem:[%s514 + $0x3a0] sm:$0xff]
        %v8810 = vld [vmem:[%s514 + $0x3a8] sm:$0xff]
        %v8811 = vld [vmem:[%s514 + $0x3b0] sm:$0xff]
        %v8812 = vld [vmem:[%s514 + $0x3b8] sm:$0xff]
        %v8813 = vld [vmem:[%s514 + $0x3c0] sm:$0xff]
        %v8814 = vld [vmem:[%s514 + $0x3c8] sm:$0xff]
        %v8815 = vld [vmem:[%s514 + $0x3d0] sm:$0xff]
        %v8816 = vld [vmem:[%s514 + $0x3d8] sm:$0xff]
        %v8817 = vld [vmem:[%s514 + $0x3e0] sm:$0xff]
        %v8818 = vld [vmem:[%s514 + $0x3e8] sm:$0xff]
        %v8819 = vld [vmem:[%s514 + $0x3f0] sm:$0xff]
        %v8820 = vld [vmem:[%s514 + $0x3f8] sm:$0xff]
        %v8949 = vunpack.c.l.b16 %v8693
        %v8950 = vunpack.c.h.b16 %v8693
        %v8951 = vunpack.c.l.b16 %v8694
        %v8952 = vunpack.c.h.b16 %v8694
        %v8953 = vunpack.c.l.b16 %v8695
        %v8954 = vunpack.c.h.b16 %v8695
        %v8955 = vunpack.c.l.b16 %v8696
        %v8956 = vunpack.c.h.b16 %v8696
        %v8957 = vunpack.c.l.b16 %v8697
        %v8958 = vunpack.c.h.b16 %v8697
        %v8959 = vunpack.c.l.b16 %v8698
        %v8960 = vunpack.c.h.b16 %v8698
        %v8961 = vunpack.c.l.b16 %v8699
        %v8962 = vunpack.c.h.b16 %v8699
        %v8963 = vunpack.c.l.b16 %v8700
        %v8964 = vunpack.c.h.b16 %v8700
        %v8965 = vunpack.c.l.b16 %v8701
        %v8966 = vunpack.c.h.b16 %v8701
        %v8967 = vunpack.c.l.b16 %v8702
        %v8968 = vunpack.c.h.b16 %v8702
        %v8969 = vunpack.c.l.b16 %v8703
        %v8970 = vunpack.c.h.b16 %v8703
        %v8971 = vunpack.c.l.b16 %v8704
        %v8972 = vunpack.c.h.b16 %v8704
        %v8973 = vunpack.c.l.b16 %v8705
        %v8974 = vunpack.c.h.b16 %v8705
        %v8975 = vunpack.c.l.b16 %v8706
        %v8976 = vunpack.c.h.b16 %v8706
        %v8977 = vunpack.c.l.b16 %v8707
        %v8978 = vunpack.c.h.b16 %v8707
        %v8979 = vunpack.c.l.b16 %v8708
        %v8980 = vunpack.c.h.b16 %v8708
        %v8981 = vunpack.c.l.b16 %v8709
        %v8982 = vunpack.c.h.b16 %v8709
        %v8983 = vunpack.c.l.b16 %v8710
        %v8984 = vunpack.c.h.b16 %v8710
        %v8985 = vunpack.c.l.b16 %v8711
        %v8986 = vunpack.c.h.b16 %v8711
        %v8987 = vunpack.c.l.b16 %v8712
        %v8988 = vunpack.c.h.b16 %v8712
        %v8989 = vunpack.c.l.b16 %v8713
        %v8990 = vunpack.c.h.b16 %v8713
        %v8991 = vunpack.c.l.b16 %v8714
        %v8992 = vunpack.c.h.b16 %v8714
        %v8993 = vunpack.c.l.b16 %v8715
        %v8994 = vunpack.c.h.b16 %v8715
        %v8995 = vunpack.c.l.b16 %v8716
        %v8996 = vunpack.c.h.b16 %v8716
        %v8997 = vunpack.c.l.b16 %v8717
        %v8998 = vunpack.c.h.b16 %v8717
        %v8999 = vunpack.c.l.b16 %v8718
        %v9000 = vunpack.c.h.b16 %v8718
        %v9001 = vunpack.c.l.b16 %v8719
        %v9002 = vunpack.c.h.b16 %v8719
        %v9003 = vunpack.c.l.b16 %v8720
        %v9004 = vunpack.c.h.b16 %v8720
        %v9005 = vunpack.c.l.b16 %v8721
        %v9006 = vunpack.c.h.b16 %v8721
        %v9007 = vunpack.c.l.b16 %v8722
        %v9008 = vunpack.c.h.b16 %v8722
        %v9009 = vunpack.c.l.b16 %v8723
        %v9010 = vunpack.c.h.b16 %v8723
        %v9011 = vunpack.c.l.b16 %v8724
        %v9012 = vunpack.c.h.b16 %v8724
        %v9013 = vunpack.c.l.b16 %v8725
        %v9014 = vunpack.c.h.b16 %v8725
        %v9015 = vunpack.c.l.b16 %v8726
        %v9016 = vunpack.c.h.b16 %v8726
        %v9017 = vunpack.c.l.b16 %v8727
        %v9018 = vunpack.c.h.b16 %v8727
        %v9019 = vunpack.c.l.b16 %v8728
        %v9020 = vunpack.c.h.b16 %v8728
        %v9021 = vunpack.c.l.b16 %v8729
        %v9022 = vunpack.c.h.b16 %v8729
        %v9023 = vunpack.c.l.b16 %v8730
        %v9024 = vunpack.c.h.b16 %v8730
        %v9025 = vunpack.c.l.b16 %v8731
        %v9026 = vunpack.c.h.b16 %v8731
        %v9027 = vunpack.c.l.b16 %v8732
        %v9028 = vunpack.c.h.b16 %v8732
        %v9029 = vunpack.c.l.b16 %v8733
        %v9030 = vunpack.c.h.b16 %v8733
        %v9031 = vunpack.c.l.b16 %v8734
        %v9032 = vunpack.c.h.b16 %v8734
        %v9033 = vunpack.c.l.b16 %v8735
        %v9034 = vunpack.c.h.b16 %v8735
        %v9035 = vunpack.c.l.b16 %v8736
        %v9036 = vunpack.c.h.b16 %v8736
        %v9037 = vunpack.c.l.b16 %v8737
        %v9038 = vunpack.c.h.b16 %v8737
        %v9039 = vunpack.c.l.b16 %v8738
        %v9040 = vunpack.c.h.b16 %v8738
        %v9041 = vunpack.c.l.b16 %v8739
        %v9042 = vunpack.c.h.b16 %v8739
        %v9043 = vunpack.c.l.b16 %v8740
        %v9044 = vunpack.c.h.b16 %v8740
        %v9045 = vunpack.c.l.b16 %v8741
        %v9046 = vunpack.c.h.b16 %v8741
        %v9047 = vunpack.c.l.b16 %v8742
        %v9048 = vunpack.c.h.b16 %v8742
        %v9049 = vunpack.c.l.b16 %v8743
        %v9050 = vunpack.c.h.b16 %v8743
        %v9051 = vunpack.c.l.b16 %v8744
        %v9052 = vunpack.c.h.b16 %v8744
        %v9053 = vunpack.c.l.b16 %v8745
        %v9054 = vunpack.c.h.b16 %v8745
        %v9055 = vunpack.c.l.b16 %v8746
        %v9056 = vunpack.c.h.b16 %v8746
        %v9057 = vunpack.c.l.b16 %v8747
        %v9058 = vunpack.c.h.b16 %v8747
        %v9059 = vunpack.c.l.b16 %v8748
        %v9060 = vunpack.c.h.b16 %v8748
        %v9061 = vunpack.c.l.b16 %v8749
        %v9062 = vunpack.c.h.b16 %v8749
        %v9063 = vunpack.c.l.b16 %v8750
        %v9064 = vunpack.c.h.b16 %v8750
        %v9065 = vunpack.c.l.b16 %v8751
        %v9066 = vunpack.c.h.b16 %v8751
        %v9067 = vunpack.c.l.b16 %v8752
        %v9068 = vunpack.c.h.b16 %v8752
        %v9069 = vunpack.c.l.b16 %v8753
        %v9070 = vunpack.c.h.b16 %v8753
        %v9071 = vunpack.c.l.b16 %v8754
        %v9072 = vunpack.c.h.b16 %v8754
        %v9073 = vunpack.c.l.b16 %v8755
        %v9074 = vunpack.c.h.b16 %v8755
        %v9075 = vunpack.c.l.b16 %v8756
        %v9076 = vunpack.c.h.b16 %v8756
        %v9077 = vunpack.c.l.b16 %v8757
        %v9078 = vunpack.c.h.b16 %v8757
        %v9079 = vunpack.c.l.b16 %v8758
        %v9080 = vunpack.c.h.b16 %v8758
        %v9081 = vunpack.c.l.b16 %v8759
        %v9082 = vunpack.c.h.b16 %v8759
        %v9083 = vunpack.c.l.b16 %v8760
        %v9084 = vunpack.c.h.b16 %v8760
        %v9085 = vunpack.c.l.b16 %v8761
        %v9086 = vunpack.c.h.b16 %v8761
        %v9087 = vunpack.c.l.b16 %v8762
        %v9088 = vunpack.c.h.b16 %v8762
        %v9089 = vunpack.c.l.b16 %v8763
        %v9090 = vunpack.c.h.b16 %v8763
        %v9091 = vunpack.c.l.b16 %v8764
        %v9092 = vunpack.c.h.b16 %v8764
        %v9093 = vunpack.c.l.b16 %v8765
        %v9094 = vunpack.c.h.b16 %v8765
        %v9095 = vunpack.c.l.b16 %v8766
        %v9096 = vunpack.c.h.b16 %v8766
        %v9097 = vunpack.c.l.b16 %v8767
        %v9098 = vunpack.c.h.b16 %v8767
        %v9099 = vunpack.c.l.b16 %v8768
        %v9100 = vunpack.c.h.b16 %v8768
        %v9101 = vunpack.c.l.b16 %v8769
        %v9102 = vunpack.c.h.b16 %v8769
        %v9103 = vunpack.c.l.b16 %v8770
        %v9104 = vunpack.c.h.b16 %v8770
        %v9105 = vunpack.c.l.b16 %v8771
        %v9106 = vunpack.c.h.b16 %v8771
        %v9107 = vunpack.c.l.b16 %v8772
        %v9108 = vunpack.c.h.b16 %v8772
        %v9109 = vunpack.c.l.b16 %v8773
        %v9110 = vunpack.c.h.b16 %v8773
        %v9111 = vunpack.c.l.b16 %v8774
        %v9112 = vunpack.c.h.b16 %v8774
        %v9113 = vunpack.c.l.b16 %v8775
        %v9114 = vunpack.c.h.b16 %v8775
        %v9115 = vunpack.c.l.b16 %v8776
        %v9116 = vunpack.c.h.b16 %v8776
        %v9117 = vunpack.c.l.b16 %v8777
        %v9118 = vunpack.c.h.b16 %v8777
        %v9119 = vunpack.c.l.b16 %v8778
        %v9120 = vunpack.c.h.b16 %v8778
        %v9121 = vunpack.c.l.b16 %v8779
        %v9122 = vunpack.c.h.b16 %v8779
        %v9123 = vunpack.c.l.b16 %v8780
        %v9124 = vunpack.c.h.b16 %v8780
        %v9125 = vunpack.c.l.b16 %v8781
        %v9126 = vunpack.c.h.b16 %v8781
        %v9127 = vunpack.c.l.b16 %v8782
        %v9128 = vunpack.c.h.b16 %v8782
        %v9129 = vunpack.c.l.b16 %v8783
        %v9130 = vunpack.c.h.b16 %v8783
        %v9131 = vunpack.c.l.b16 %v8784
        %v9132 = vunpack.c.h.b16 %v8784
        %v9133 = vunpack.c.l.b16 %v8785
        %v9134 = vunpack.c.h.b16 %v8785
        %v9135 = vunpack.c.l.b16 %v8786
        %v9136 = vunpack.c.h.b16 %v8786
        %v9137 = vunpack.c.l.b16 %v8787
        %v9138 = vunpack.c.h.b16 %v8787
        %v9139 = vunpack.c.l.b16 %v8788
        %v9140 = vunpack.c.h.b16 %v8788
        %v9141 = vunpack.c.l.b16 %v8789
        %v9142 = vunpack.c.h.b16 %v8789
        %v9143 = vunpack.c.l.b16 %v8790
        %v9144 = vunpack.c.h.b16 %v8790
        %v9145 = vunpack.c.l.b16 %v8791
        %v9146 = vunpack.c.h.b16 %v8791
        %v9147 = vunpack.c.l.b16 %v8792
        %v9148 = vunpack.c.h.b16 %v8792
        %v9149 = vunpack.c.l.b16 %v8793
        %v9150 = vunpack.c.h.b16 %v8793
        %v9151 = vunpack.c.l.b16 %v8794
        %v9152 = vunpack.c.h.b16 %v8794
        %v9153 = vunpack.c.l.b16 %v8795
        %v9154 = vunpack.c.h.b16 %v8795
        %v9155 = vunpack.c.l.b16 %v8796
        %v9156 = vunpack.c.h.b16 %v8796
        %v9157 = vunpack.c.l.b16 %v8797
        %v9158 = vunpack.c.h.b16 %v8797
        %v9159 = vunpack.c.l.b16 %v8798
        %v9160 = vunpack.c.h.b16 %v8798
        %v9161 = vunpack.c.l.b16 %v8799
        %v9162 = vunpack.c.h.b16 %v8799
        %v9163 = vunpack.c.l.b16 %v8800
        %v9164 = vunpack.c.h.b16 %v8800
        %v9165 = vunpack.c.l.b16 %v8801
        %v9166 = vunpack.c.h.b16 %v8801
        %v9167 = vunpack.c.l.b16 %v8802
        %v9168 = vunpack.c.h.b16 %v8802
        %v9169 = vunpack.c.l.b16 %v8803
        %v9170 = vunpack.c.h.b16 %v8803
        %v9171 = vunpack.c.l.b16 %v8804
        %v9172 = vunpack.c.h.b16 %v8804
        %v9173 = vunpack.c.l.b16 %v8805
        %v9174 = vunpack.c.h.b16 %v8805
        %v9175 = vunpack.c.l.b16 %v8806
        %v9176 = vunpack.c.h.b16 %v8806
        %v9177 = vunpack.c.l.b16 %v8807
        %v9178 = vunpack.c.h.b16 %v8807
        %v9179 = vunpack.c.l.b16 %v8808
        %v9180 = vunpack.c.h.b16 %v8808
        %v9181 = vunpack.c.l.b16 %v8809
        %v9182 = vunpack.c.h.b16 %v8809
        %v9183 = vunpack.c.l.b16 %v8810
        %v9184 = vunpack.c.h.b16 %v8810
        %v9185 = vunpack.c.l.b16 %v8811
        %v9186 = vunpack.c.h.b16 %v8811
        %v9187 = vunpack.c.l.b16 %v8812
        %v9188 = vunpack.c.h.b16 %v8812
        %v9189 = vunpack.c.l.b16 %v8813
        %v9190 = vunpack.c.h.b16 %v8813
        %v9191 = vunpack.c.l.b16 %v8814
        %v9192 = vunpack.c.h.b16 %v8814
        %v9193 = vunpack.c.l.b16 %v8815
        %v9194 = vunpack.c.h.b16 %v8815
        %v9195 = vunpack.c.l.b16 %v8816
        %v9196 = vunpack.c.h.b16 %v8816
        %v9197 = vunpack.c.l.b16 %v8817
        %v9198 = vunpack.c.h.b16 %v8817
        %v9199 = vunpack.c.l.b16 %v8818
        %v9200 = vunpack.c.h.b16 %v8818
        %v9201 = vunpack.c.l.b16 %v8819
        %v9202 = vunpack.c.h.b16 %v8819
        %v9203 = vunpack.c.l.b16 %v8820
        %v9204 = vunpack.c.h.b16 %v8820
        %v9205 = vpack.c.b16 %v8957, %v8949
        %v9206 = vpack.c.b16 %v8958, %v8950
        %v9207 = vpack.c.b16 %v8959, %v8951
        %v9208 = vpack.c.b16 %v8960, %v8952
        %v9209 = vpack.c.b16 %v8961, %v8953
        %v9210 = vpack.c.b16 %v8962, %v8954
        %v9211 = vpack.c.b16 %v8963, %v8955
        %v9212 = vpack.c.b16 %v8964, %v8956
        %v9213 = vpack.c.b16 %v8973, %v8965
        %v9214 = vpack.c.b16 %v8974, %v8966
        %v9215 = vpack.c.b16 %v8975, %v8967
        %v9216 = vpack.c.b16 %v8976, %v8968
        %v9217 = vpack.c.b16 %v8977, %v8969
        %v9218 = vpack.c.b16 %v8978, %v8970
        %v9219 = vpack.c.b16 %v8979, %v8971
        %v9220 = vpack.c.b16 %v8980, %v8972
        %v9221 = vpack.c.b16 %v8989, %v8981
        %v9222 = vpack.c.b16 %v8990, %v8982
        %v9223 = vpack.c.b16 %v8991, %v8983
        %v9224 = vpack.c.b16 %v8992, %v8984
        %v9225 = vpack.c.b16 %v8993, %v8985
        %v9226 = vpack.c.b16 %v8994, %v8986
        %v9227 = vpack.c.b16 %v8995, %v8987
        %v9228 = vpack.c.b16 %v8996, %v8988
        %v9229 = vpack.c.b16 %v9005, %v8997
        %v9230 = vpack.c.b16 %v9006, %v8998
        %v9231 = vpack.c.b16 %v9007, %v8999
        %v9232 = vpack.c.b16 %v9008, %v9000
        %v9233 = vpack.c.b16 %v9009, %v9001
        %v9234 = vpack.c.b16 %v9010, %v9002
        %v9235 = vpack.c.b16 %v9011, %v9003
        %v9236 = vpack.c.b16 %v9012, %v9004
        %v9237 = vpack.c.b16 %v9021, %v9013
        %v9238 = vpack.c.b16 %v9022, %v9014
        %v9239 = vpack.c.b16 %v9023, %v9015
        %v9240 = vpack.c.b16 %v9024, %v9016
        %v9241 = vpack.c.b16 %v9025, %v9017
        %v9242 = vpack.c.b16 %v9026, %v9018
        %v9243 = vpack.c.b16 %v9027, %v9019
        %v9244 = vpack.c.b16 %v9028, %v9020
        %v9245 = vpack.c.b16 %v9037, %v9029
        %v9246 = vpack.c.b16 %v9038, %v9030
        %v9247 = vpack.c.b16 %v9039, %v9031
        %v9248 = vpack.c.b16 %v9040, %v9032
        %v9249 = vpack.c.b16 %v9041, %v9033
        %v9250 = vpack.c.b16 %v9042, %v9034
        %v9251 = vpack.c.b16 %v9043, %v9035
        %v9252 = vpack.c.b16 %v9044, %v9036
        %v9253 = vpack.c.b16 %v9053, %v9045
        %v9254 = vpack.c.b16 %v9054, %v9046
        %v9255 = vpack.c.b16 %v9055, %v9047
        %v9256 = vpack.c.b16 %v9056, %v9048
        %v9257 = vpack.c.b16 %v9057, %v9049
        %v9258 = vpack.c.b16 %v9058, %v9050
        %v9259 = vpack.c.b16 %v9059, %v9051
        %v9260 = vpack.c.b16 %v9060, %v9052
        %v9261 = vpack.c.b16 %v9069, %v9061
        %v9262 = vpack.c.b16 %v9070, %v9062
        %v9263 = vpack.c.b16 %v9071, %v9063
        %v9264 = vpack.c.b16 %v9072, %v9064
        %v9265 = vpack.c.b16 %v9073, %v9065
        %v9266 = vpack.c.b16 %v9074, %v9066
        %v9267 = vpack.c.b16 %v9075, %v9067
        %v9268 = vpack.c.b16 %v9076, %v9068
        %v9269 = vpack.c.b16 %v9085, %v9077
        %v9270 = vpack.c.b16 %v9086, %v9078
        %v9271 = vpack.c.b16 %v9087, %v9079
        %v9272 = vpack.c.b16 %v9088, %v9080
        %v9273 = vpack.c.b16 %v9089, %v9081
        %v9274 = vpack.c.b16 %v9090, %v9082
        %v9275 = vpack.c.b16 %v9091, %v9083
        %v9276 = vpack.c.b16 %v9092, %v9084
        %v9277 = vpack.c.b16 %v9101, %v9093
        %v9278 = vpack.c.b16 %v9102, %v9094
        %v9279 = vpack.c.b16 %v9103, %v9095
        %v9280 = vpack.c.b16 %v9104, %v9096
        %v9281 = vpack.c.b16 %v9105, %v9097
        %v9282 = vpack.c.b16 %v9106, %v9098
        %v9283 = vpack.c.b16 %v9107, %v9099
        %v9284 = vpack.c.b16 %v9108, %v9100
        %v9285 = vpack.c.b16 %v9117, %v9109
        %v9286 = vpack.c.b16 %v9118, %v9110
        %v9287 = vpack.c.b16 %v9119, %v9111
        %v9288 = vpack.c.b16 %v9120, %v9112
        %v9289 = vpack.c.b16 %v9121, %v9113
        %v9290 = vpack.c.b16 %v9122, %v9114
        %v9291 = vpack.c.b16 %v9123, %v9115
        %v9292 = vpack.c.b16 %v9124, %v9116
        %v9293 = vpack.c.b16 %v9133, %v9125
        %v9294 = vpack.c.b16 %v9134, %v9126
        %v9295 = vpack.c.b16 %v9135, %v9127
        %v9296 = vpack.c.b16 %v9136, %v9128
        %v9297 = vpack.c.b16 %v9137, %v9129
        %v9298 = vpack.c.b16 %v9138, %v9130
        %v9299 = vpack.c.b16 %v9139, %v9131
        %v9300 = vpack.c.b16 %v9140, %v9132
        %v9301 = vpack.c.b16 %v9149, %v9141
        %v9302 = vpack.c.b16 %v9150, %v9142
        %v9303 = vpack.c.b16 %v9151, %v9143
        %v9304 = vpack.c.b16 %v9152, %v9144
        %v9305 = vpack.c.b16 %v9153, %v9145
        %v9306 = vpack.c.b16 %v9154, %v9146
        %v9307 = vpack.c.b16 %v9155, %v9147
        %v9308 = vpack.c.b16 %v9156, %v9148
        %v9309 = vpack.c.b16 %v9165, %v9157
        %v9310 = vpack.c.b16 %v9166, %v9158
        %v9311 = vpack.c.b16 %v9167, %v9159
        %v9312 = vpack.c.b16 %v9168, %v9160
        %v9313 = vpack.c.b16 %v9169, %v9161
        %v9314 = vpack.c.b16 %v9170, %v9162
        %v9315 = vpack.c.b16 %v9171, %v9163
        %v9316 = vpack.c.b16 %v9172, %v9164
        %v9317 = vpack.c.b16 %v9181, %v9173
        %v9318 = vpack.c.b16 %v9182, %v9174
        %v9319 = vpack.c.b16 %v9183, %v9175
        %v9320 = vpack.c.b16 %v9184, %v9176
        %v9321 = vpack.c.b16 %v9185, %v9177
        %v9322 = vpack.c.b16 %v9186, %v9178
        %v9323 = vpack.c.b16 %v9187, %v9179
        %v9324 = vpack.c.b16 %v9188, %v9180
        %v9325 = vpack.c.b16 %v9197, %v9189
        %v9326 = vpack.c.b16 %v9198, %v9190
        %v9327 = vpack.c.b16 %v9199, %v9191
        %v9328 = vpack.c.b16 %v9200, %v9192
        %v9329 = vpack.c.b16 %v9201, %v9193
        %v9330 = vpack.c.b16 %v9202, %v9194
        %v9331 = vpack.c.b16 %v9203, %v9195
        %v9332 = vpack.c.b16 %v9204, %v9196
        %9461 = vmatprep.subr.bf16.mxu0 %v9206
        %9462 = vmatpush1.bf16.msra.mxu0 %v9205
        %9463 = vmatprep.subr.bf16.mxu0 %v9214
        %9464 = vmatpush1.bf16.msra.mxu0 %v9213
        %9465 = vmatprep.subr.bf16.mxu0 %v9222
        %9466 = vmatpush1.bf16.msra.mxu0 %v9221
        %9467 = vmatprep.subr.bf16.mxu0 %v9230
        %9468 = vmatpush1.bf16.msra.mxu0 %v9229
        %9469 = vmatprep.subr.bf16.mxu0 %v9238
        %9470 = vmatpush1.bf16.msra.mxu0 %v9237
        %9471 = vmatprep.subr.bf16.mxu0 %v9246
        %9472 = vmatpush1.bf16.msra.mxu0 %v9245
        %9473 = vmatprep.subr.bf16.mxu0 %v9254
        %9474 = vmatpush1.bf16.msra.mxu0 %v9253
        %9475 = vmatprep.subr.bf16.mxu0 %v9262
        %9476 = vmatpush1.bf16.msra.mxu0 %v9261
        %9477 = vmatprep.subr.bf16.mxu0 %v9270
        %9478 = vmatpush1.bf16.msra.mxu0 %v9269
        %9479 = vmatprep.subr.bf16.mxu0 %v9278
        %9480 = vmatpush1.bf16.msra.mxu0 %v9277
        %9481 = vmatprep.subr.bf16.mxu0 %v9286
        %9482 = vmatpush1.bf16.msra.mxu0 %v9285
        %9483 = vmatprep.subr.bf16.mxu0 %v9294
        %9484 = vmatpush1.bf16.msra.mxu0 %v9293
        %9485 = vmatprep.subr.bf16.mxu0 %v9302
        %9486 = vmatpush1.bf16.msra.mxu0 %v9301
        %9487 = vmatprep.subr.bf16.mxu0 %v9310
        %9488 = vmatpush1.bf16.msra.mxu0 %v9309
        %9489 = vmatprep.subr.bf16.mxu0 %v9318
        %9490 = vmatpush1.bf16.msra.mxu0 %v9317
        %9491 = vmatprep.subr.bf16.mxu0 %v9326
        %9492 = vmatpush1.bf16.msra.mxu0 %v9325
        %9493 = vmatprep.mubr.bf16.mxu0 %v8692
        %9494 = vmatmul.mubr.bf16.gmra.mrb[0].mxu0 %v8691
        %v9495 = vpop.f32.mrb[0].mxu0
        %v9496 = vadd.f32 0.0, %v9495
        %v9497 = vpop.f32.mrb[0].mxu0
        %v9498 = vadd.f32 0.0, %v9497
        %v9499 = vpop.f32.mrb[0].mxu0
        %v9500 = vpop.f32.mrb[0].mxu0
        %9501 = vdwg.mxu0
        %9502 = vmatprep.subr.bf16.mxu0 %v9208
        %9503 = vmatpush1.bf16.msra.mxu0 %v9207
        %9504 = vmatprep.subr.bf16.mxu0 %v9216
        %9505 = vmatpush1.bf16.msra.mxu0 %v9215
        %9506 = vmatprep.subr.bf16.mxu0 %v9224
        %9507 = vmatpush1.bf16.msra.mxu0 %v9223
        %9508 = vmatprep.subr.bf16.mxu0 %v9232
        %9509 = vmatpush1.bf16.msra.mxu0 %v9231
        %9510 = vmatprep.subr.bf16.mxu0 %v9240
        %9511 = vmatpush1.bf16.msra.mxu0 %v9239
        %9512 = vmatprep.subr.bf16.mxu0 %v9248
        %9513 = vmatpush1.bf16.msra.mxu0 %v9247
        %9514 = vmatprep.subr.bf16.mxu0 %v9256
        %9515 = vmatpush1.bf16.msra.mxu0 %v9255
        %9516 = vmatprep.subr.bf16.mxu0 %v9264
        %9517 = vmatpush1.bf16.msra.mxu0 %v9263
        %9518 = vmatprep.subr.bf16.mxu0 %v9272
        %9519 = vmatpush1.bf16.msra.mxu0 %v9271
        %9520 = vmatprep.subr.bf16.mxu0 %v9280
        %9521 = vmatpush1.bf16.msra.mxu0 %v9279
        %9522 = vmatprep.subr.bf16.mxu0 %v9288
        %9523 = vmatpush1.bf16.msra.mxu0 %v9287
        %9524 = vmatprep.subr.bf16.mxu0 %v9296
        %9525 = vmatpush1.bf16.msra.mxu0 %v9295
        %9526 = vmatprep.subr.bf16.mxu0 %v9304
        %9527 = vmatpush1.bf16.msra.mxu0 %v9303
        %9528 = vmatprep.subr.bf16.mxu0 %v9312
        %9529 = vmatpush1.bf16.msra.mxu0 %v9311
        %9530 = vmatprep.subr.bf16.mxu0 %v9320
        %9531 = vmatpush1.bf16.msra.mxu0 %v9319
        %9532 = vmatprep.subr.bf16.mxu0 %v9328
        %9533 = vmatpush1.bf16.msra.mxu0 %v9327
        %9534 = vmatprep.mubr.bf16.mxu0 %v8692
        %9535 = vmatmul.mubr.bf16.gmra.mrb[0].mxu0 %v8691
        %v9536 = vpop.f32.mrb[0].mxu0
        %v9537 = vadd.f32 0.0, %v9536
        %v9538 = vpop.f32.mrb[0].mxu0
        %v9539 = vadd.f32 0.0, %v9538
        %v9540 = vpop.f32.mrb[0].mxu0
        %v9541 = vpop.f32.mrb[0].mxu0
        %9542 = vdwg.mxu0
        %9543 = vmatprep.subr.bf16.mxu0 %v9210
        %9544 = vmatpush1.bf16.msra.mxu0 %v9209
        %9545 = vmatprep.subr.bf16.mxu0 %v9218
        %9546 = vmatpush1.bf16.msra.mxu0 %v9217
        %9547 = vmatprep.subr.bf16.mxu0 %v9226
        %9548 = vmatpush1.bf16.msra.mxu0 %v9225
        %9549 = vmatprep.subr.bf16.mxu0 %v9234
        %9550 = vmatpush1.bf16.msra.mxu0 %v9233
        %9551 = vmatprep.subr.bf16.mxu0 %v9242
        %9552 = vmatpush1.bf16.msra.mxu0 %v9241
        %9553 = vmatprep.subr.bf16.mxu0 %v9250
        %9554 = vmatpush1.bf16.msra.mxu0 %v9249
        %9555 = vmatprep.subr.bf16.mxu0 %v9258
        %9556 = vmatpush1.bf16.msra.mxu0 %v9257
        %9557 = vmatprep.subr.bf16.mxu0 %v9266
        %9558 = vmatpush1.bf16.msra.mxu0 %v9265
        %9559 = vmatprep.subr.bf16.mxu0 %v9274
        %9560 = vmatpush1.bf16.msra.mxu0 %v9273
        %9561 = vmatprep.subr.bf16.mxu0 %v9282
        %9562 = vmatpush1.bf16.msra.mxu0 %v9281
        %9563 = vmatprep.subr.bf16.mxu0 %v9290
        %9564 = vmatpush1.bf16.msra.mxu0 %v9289
        %9565 = vmatprep.subr.bf16.mxu0 %v9298
        %9566 = vmatpush1.bf16.msra.mxu0 %v9297
        %9567 = vmatprep.subr.bf16.mxu0 %v9306
        %9568 = vmatpush1.bf16.msra.mxu0 %v9305
        %9569 = vmatprep.subr.bf16.mxu0 %v9314
        %9570 = vmatpush1.bf16.msra.mxu0 %v9313
        %9571 = vmatprep.subr.bf16.mxu0 %v9322
        %9572 = vmatpush1.bf16.msra.mxu0 %v9321
        %9573 = vmatprep.subr.bf16.mxu0 %v9330
        %9574 = vmatpush1.bf16.msra.mxu0 %v9329
        %9575 = vmatprep.mubr.bf16.mxu0 %v8692
        %9576 = vmatmul.mubr.bf16.gmra.mrb[0].mxu0 %v8691
        %v9577 = vpop.f32.mrb[0].mxu0
        %v9578 = vadd.f32 0.0, %v9577
        %v9579 = vpop.f32.mrb[0].mxu0
        %v9580 = vadd.f32 0.0, %v9579
        %v9581 = vpop.f32.mrb[0].mxu0
        %v9582 = vpop.f32.mrb[0].mxu0
        %9583 = vdwg.mxu0
        %9584 = vmatprep.subr.bf16.mxu0 %v9212
        %9585 = vmatpush1.bf16.msra.mxu0 %v9211
        %9586 = vmatprep.subr.bf16.mxu0 %v9220
        %9587 = vmatpush1.bf16.msra.mxu0 %v9219
        %9588 = vmatprep.subr.bf16.mxu0 %v9228
        %9589 = vmatpush1.bf16.msra.mxu0 %v9227
        %9590 = vmatprep.subr.bf16.mxu0 %v9236
        %9591 = vmatpush1.bf16.msra.mxu0 %v9235
        %9592 = vmatprep.subr.bf16.mxu0 %v9244
        %9593 = vmatpush1.bf16.msra.mxu0 %v9243
        %9594 = vmatprep.subr.bf16.mxu0 %v9252
        %9595 = vmatpush1.bf16.msra.mxu0 %v9251
        %9596 = vmatprep.subr.bf16.mxu0 %v9260
        %9597 = vmatpush1.bf16.msra.mxu0 %v9259
        %9598 = vmatprep.subr.bf16.mxu0 %v9268
        %9599 = vmatpush1.bf16.msra.mxu0 %v9267
        %9600 = vmatprep.subr.bf16.mxu0 %v9276
        %9601 = vmatpush1.bf16.msra.mxu0 %v9275
        %9602 = vmatprep.subr.bf16.mxu0 %v9284
        %9603 = vmatpush1.bf16.msra.mxu0 %v9283
        %9604 = vmatprep.subr.bf16.mxu0 %v9292
        %9605 = vmatpush1.bf16.msra.mxu0 %v9291
        %9606 = vmatprep.subr.bf16.mxu0 %v9300
        %9607 = vmatpush1.bf16.msra.mxu0 %v9299
        %9608 = vmatprep.subr.bf16.mxu0 %v9308
        %9609 = vmatpush1.bf16.msra.mxu0 %v9307
        %9610 = vmatprep.subr.bf16.mxu0 %v9316
        %9611 = vmatpush1.bf16.msra.mxu0 %v9315
        %9612 = vmatprep.subr.bf16.mxu0 %v9324
        %9613 = vmatpush1.bf16.msra.mxu0 %v9323
        %9614 = vmatprep.subr.bf16.mxu0 %v9332
        %9615 = vmatpush1.bf16.msra.mxu0 %v9331
        %9616 = vmatprep.mubr.bf16.mxu0 %v8692
        %9617 = vmatmul.mubr.bf16.gmra.mrb[0].mxu0 %v8691
        %v9618 = vpop.f32.mrb[0].mxu0
        %v9619 = vadd.f32 0.0, %v9618
        %v9620 = vpop.f32.mrb[0].mxu0
        %v9621 = vadd.f32 0.0, %v9620
        %v9622 = vpop.f32.mrb[0].mxu0
        %v9623 = vpop.f32.mrb[0].mxu0
        %9624 = vdwg.mxu0
        %v9633 = vcombine.low %v9496, %v9498
        %v9634 = vcombine.low %v9537, %v9539
        %v9636 = vunpack.c.l.s4 1983009808
        %v9637 = vunpack.c.0.s8 %v9636
        %v9638 = vlaneseq
        %v9639 = vshrl.u32 %v9638, 7
        %v9640 = vsub.s32 %v9637, %v9639
        %v9641 = vrot.slane %v9633, %v9640
        %v9643 = vunpack.c.l.s4 1983009808
        %v9644 = vunpack.c.0.s8 %v9643
        %v9645 = vlaneseq
        %v9646 = vshrl.u32 %v9645, 7
        %v9647 = vsub.s32 %v9644, %v9646
        %v9648 = vrot.slane %v9634, %v9647
        %v9649 = vcombine.low %v9641, %v9648
        %v9650 = vcombine.low %v9578, %v9580
        %v9651 = vcombine.low %v9619, %v9621
        %v9653 = vunpack.c.l.s4 1983009808
        %v9654 = vunpack.c.0.s8 %v9653
        %v9655 = vlaneseq
        %v9656 = vshrl.u32 %v9655, 7
        %v9657 = vsub.s32 %v9654, %v9656
        %v9658 = vrot.slane %v9650, %v9657
        %v9660 = vunpack.c.l.s4 1983009808
        %v9661 = vunpack.c.0.s8 %v9660
        %v9662 = vlaneseq
        %v9663 = vshrl.u32 %v9662, 7
        %v9664 = vsub.s32 %v9661, %v9663
        %v9665 = vrot.slane %v9651, %v9664
        %v9666 = vcombine.low %v9658, %v9665
        %v9669 = vadd.f32 %v8689, %v9649
        %v9670 = vadd.f32 %v8690, %v9666
        %9671 = vst [vmem:[#allocation3] sm:$0xff] %v9669
        %9672 = vst [vmem:[#allocation3 + $0x8] sm:$0xff] %v9670
        %p9673 = scmp.eq.s32.totalorder %s32, 3
        // Predicated region
        $region109: #{forward.1} parent=67 // pred_check
          %p9674 = pneg %p9673
        $region110: #{forward.1} parent=67 // pred_check_branch
          %9676 = sbr.rel (%p9674) target = $region112
        $region111: #{forward.1} parent=67 // pred_region
          %v9677 = vmul.f32 %v8184, %v8184
          %v9679 = vcombine.high %v9677, %v9677
          %v9681 = vunpack.c.l.s4 1983009808
          %v9682 = vunpack.c.0.s8 %v9681
          %v9683 = vlaneseq
          %v9684 = vshrl.u32 %v9683, 7
          %v9685 = vsub.s32 %v9682, %v9684
          %v9686 = vrot.slane %v9677, %v9685
          %v9688 = vunpack.c.l.s4 1983009808
          %v9689 = vunpack.c.0.s8 %v9688
          %v9690 = vlaneseq
          %v9691 = vshrl.u32 %v9690, 7
          %v9692 = vsub.s32 %v9689, %v9691
          %v9693 = vrot.slane %v9679, %v9692
          %v9694 = vcombine.high %v9686, %v9686
          %v9695 = vcombine.high %v9693, %v9693
          %vm9700 = vcmask 1041408
          %v9701 = vsel %vm9700, %v9686, 0.0
          %v9702 = vsel %vm9700, %v9694, 0.0
          %v9703 = vadd.f32 %v9701, %v9702
          %v9704 = vsel %vm9700, %v9693, 0.0
          %v9705 = vadd.f32 %v9703, %v9704
          %v9706 = vsel %vm9700, %v9695, 0.0
          %v9707 = vadd.f32 %v9705, %v9706
          %9708 = vadd.xlane.f32.xlu0 %v9707
          %v9709 = vpop.xlane.xlu0 %9708
          %v9710 = vrsqrt.pop %v9709
          %v9711 = vld [vmem:[#allocation4] sm:$0xff]
          %v9712 = vld [vmem:[#allocation4 + $0x8] sm:$0xff]
          %v9713 = vld [vmem:[#allocation4 + $0x10] sm:$0xff]
          %v9714 = vld [vmem:[#allocation4 + $0x18] sm:$0xff]
          %v9715 = vld [vmem:[#allocation4 + $0x20] sm:$0xff]
          %v9716 = vld [vmem:[#allocation4 + $0x28] sm:$0xff]
          %v9717 = vld [vmem:[#allocation4 + $0x30] sm:$0xff]
          %v9718 = vld [vmem:[#allocation4 + $0x38] sm:$0xff]
          %v9719 = vld [vmem:[#allocation4 + $0x40] sm:$0xff]
          %v9720 = vld [vmem:[#allocation4 + $0x48] sm:$0xff]
          %v9721 = vld [vmem:[#allocation4 + $0x50] sm:$0xff]
          %v9722 = vld [vmem:[#allocation4 + $0x58] sm:$0xff]
          %v9723 = vld [vmem:[#allocation4 + $0x60] sm:$0xff]
          %v9724 = vld [vmem:[#allocation4 + $0x68] sm:$0xff]
          %v9725 = vld [vmem:[#allocation4 + $0x70] sm:$0xff]
          %v9726 = vld [vmem:[#allocation4 + $0x78] sm:$0xff]
          %v9727 = vld [vmem:[#allocation4 + $0x80] sm:$0xff]
          %v9728 = vld [vmem:[#allocation4 + $0x88] sm:$0xff]
          %v9729 = vld [vmem:[#allocation4 + $0x90] sm:$0xff]
          %v9730 = vld [vmem:[#allocation4 + $0x98] sm:$0xff]
          %v9731 = vld [vmem:[#allocation4 + $0xa0] sm:$0xff]
          %v9732 = vld [vmem:[#allocation4 + $0xa8] sm:$0xff]
          %v9733 = vld [vmem:[#allocation4 + $0xb0] sm:$0xff]
          %v9734 = vld [vmem:[#allocation4 + $0xb8] sm:$0xff]
          %v9735 = vld [vmem:[#allocation4 + $0xc0] sm:$0xff]
          %v9736 = vld [vmem:[#allocation4 + $0xc8] sm:$0xff]
          %v9737 = vld [vmem:[#allocation4 + $0xd0] sm:$0xff]
          %v9738 = vld [vmem:[#allocation4 + $0xd8] sm:$0xff]
          %v9739 = vld [vmem:[#allocation4 + $0xe0] sm:$0xff]
          %v9740 = vld [vmem:[#allocation4 + $0xe8] sm:$0xff]
          %v9741 = vld [vmem:[#allocation4 + $0xf0] sm:$0xff]
          %v9742 = vld [vmem:[#allocation4 + $0xf8] sm:$0xff]
          %v9743 = vld [vmem:[#allocation4 + $0x100] sm:$0xff]
          %v9744 = vld [vmem:[#allocation4 + $0x108] sm:$0xff]
          %v9745 = vld [vmem:[#allocation4 + $0x110] sm:$0xff]
          %v9746 = vld [vmem:[#allocation4 + $0x118] sm:$0xff]
          %v9747 = vld [vmem:[#allocation4 + $0x120] sm:$0xff]
          %v9748 = vld [vmem:[#allocation4 + $0x128] sm:$0xff]
          %v9749 = vld [vmem:[#allocation4 + $0x130] sm:$0xff]
          %v9750 = vld [vmem:[#allocation4 + $0x138] sm:$0xff]
          %v9751 = vld [vmem:[#allocation4 + $0x140] sm:$0xff]
          %v9752 = vld [vmem:[#allocation4 + $0x148] sm:$0xff]
          %v9753 = vld [vmem:[#allocation4 + $0x150] sm:$0xff]
          %v9754 = vld [vmem:[#allocation4 + $0x158] sm:$0xff]
          %v9755 = vld [vmem:[#allocation4 + $0x160] sm:$0xff]
          %v9756 = vld [vmem:[#allocation4 + $0x168] sm:$0xff]
          %v9757 = vld [vmem:[#allocation4 + $0x170] sm:$0xff]
          %v9758 = vld [vmem:[#allocation4 + $0x178] sm:$0xff]
          %v9759 = vld [vmem:[#allocation4 + $0x180] sm:$0xff]
          %v9760 = vld [vmem:[#allocation4 + $0x188] sm:$0xff]
          %v9761 = vld [vmem:[#allocation4 + $0x190] sm:$0xff]
          %v9762 = vld [vmem:[#allocation4 + $0x198] sm:$0xff]
          %v9763 = vld [vmem:[#allocation4 + $0x1a0] sm:$0xff]
          %v9764 = vld [vmem:[#allocation4 + $0x1a8] sm:$0xff]
          %v9765 = vld [vmem:[#allocation4 + $0x1b0] sm:$0xff]
          %v9766 = vld [vmem:[#allocation4 + $0x1b8] sm:$0xff]
          %v9767 = vld [vmem:[#allocation4 + $0x1c0] sm:$0xff]
          %v9768 = vld [vmem:[#allocation4 + $0x1c8] sm:$0xff]
          %v9769 = vld [vmem:[#allocation4 + $0x1d0] sm:$0xff]
          %v9770 = vld [vmem:[#allocation4 + $0x1d8] sm:$0xff]
          %v9771 = vld [vmem:[#allocation4 + $0x1e0] sm:$0xff]
          %v9772 = vld [vmem:[#allocation4 + $0x1e8] sm:$0xff]
          %v9773 = vld [vmem:[#allocation4 + $0x1f0] sm:$0xff]
          %v9774 = vld [vmem:[#allocation4 + $0x1f8] sm:$0xff]
          %v9839 = vunpack.c.l.b16 %v9711
          %v9840 = vunpack.c.h.b16 %v9711
          %v9841 = vunpack.c.l.b16 %v9712
          %v9842 = vunpack.c.h.b16 %v9712
          %v9843 = vunpack.c.l.b16 %v9713
          %v9844 = vunpack.c.h.b16 %v9713
          %v9845 = vunpack.c.l.b16 %v9714
          %v9846 = vunpack.c.h.b16 %v9714
          %v9847 = vunpack.c.l.b16 %v9715
          %v9848 = vunpack.c.h.b16 %v9715
          %v9849 = vunpack.c.l.b16 %v9716
          %v9850 = vunpack.c.h.b16 %v9716
          %v9851 = vunpack.c.l.b16 %v9717
          %v9852 = vunpack.c.h.b16 %v9717
          %v9853 = vunpack.c.l.b16 %v9718
          %v9854 = vunpack.c.h.b16 %v9718
          %v9855 = vunpack.c.l.b16 %v9719
          %v9856 = vunpack.c.h.b16 %v9719
          %v9857 = vunpack.c.l.b16 %v9720
          %v9858 = vunpack.c.h.b16 %v9720
          %v9859 = vunpack.c.l.b16 %v9721
          %v9860 = vunpack.c.h.b16 %v9721
          %v9861 = vunpack.c.l.b16 %v9722
          %v9862 = vunpack.c.h.b16 %v9722
          %v9863 = vunpack.c.l.b16 %v9723
          %v9864 = vunpack.c.h.b16 %v9723
          %v9865 = vunpack.c.l.b16 %v9724
          %v9866 = vunpack.c.h.b16 %v9724
          %v9867 = vunpack.c.l.b16 %v9725
          %v9868 = vunpack.c.h.b16 %v9725
          %v9869 = vunpack.c.l.b16 %v9726
          %v9870 = vunpack.c.h.b16 %v9726
          %v9871 = vunpack.c.l.b16 %v9727
          %v9872 = vunpack.c.h.b16 %v9727
          %v9873 = vunpack.c.l.b16 %v9728
          %v9874 = vunpack.c.h.b16 %v9728
          %v9875 = vunpack.c.l.b16 %v9729
          %v9876 = vunpack.c.h.b16 %v9729
          %v9877 = vunpack.c.l.b16 %v9730
          %v9878 = vunpack.c.h.b16 %v9730
          %v9879 = vunpack.c.l.b16 %v9731
          %v9880 = vunpack.c.h.b16 %v9731
          %v9881 = vunpack.c.l.b16 %v9732
          %v9882 = vunpack.c.h.b16 %v9732
          %v9883 = vunpack.c.l.b16 %v9733
          %v9884 = vunpack.c.h.b16 %v9733
          %v9885 = vunpack.c.l.b16 %v9734
          %v9886 = vunpack.c.h.b16 %v9734
          %v9887 = vunpack.c.l.b16 %v9735
          %v9888 = vunpack.c.h.b16 %v9735
          %v9889 = vunpack.c.l.b16 %v9736
          %v9890 = vunpack.c.h.b16 %v9736
          %v9891 = vunpack.c.l.b16 %v9737
          %v9892 = vunpack.c.h.b16 %v9737
          %v9893 = vunpack.c.l.b16 %v9738
          %v9894 = vunpack.c.h.b16 %v9738
          %v9895 = vunpack.c.l.b16 %v9739
          %v9896 = vunpack.c.h.b16 %v9739
          %v9897 = vunpack.c.l.b16 %v9740
          %v9898 = vunpack.c.h.b16 %v9740
          %v9899 = vunpack.c.l.b16 %v9741
          %v9900 = vunpack.c.h.b16 %v9741
          %v9901 = vunpack.c.l.b16 %v9742
          %v9902 = vunpack.c.h.b16 %v9742
          %v9903 = vunpack.c.l.b16 %v9743
          %v9904 = vunpack.c.h.b16 %v9743
          %v9905 = vunpack.c.l.b16 %v9744
          %v9906 = vunpack.c.h.b16 %v9744
          %v9907 = vunpack.c.l.b16 %v9745
          %v9908 = vunpack.c.h.b16 %v9745
          %v9909 = vunpack.c.l.b16 %v9746
          %v9910 = vunpack.c.h.b16 %v9746
          %v9911 = vunpack.c.l.b16 %v9747
          %v9912 = vunpack.c.h.b16 %v9747
          %v9913 = vunpack.c.l.b16 %v9748
          %v9914 = vunpack.c.h.b16 %v9748
          %v9915 = vunpack.c.l.b16 %v9749
          %v9916 = vunpack.c.h.b16 %v9749
          %v9917 = vunpack.c.l.b16 %v9750
          %v9918 = vunpack.c.h.b16 %v9750
          %v9919 = vunpack.c.l.b16 %v9751
          %v9920 = vunpack.c.h.b16 %v9751
          %v9921 = vunpack.c.l.b16 %v9752
          %v9922 = vunpack.c.h.b16 %v9752
          %v9923 = vunpack.c.l.b16 %v9753
          %v9924 = vunpack.c.h.b16 %v9753
          %v9925 = vunpack.c.l.b16 %v9754
          %v9926 = vunpack.c.h.b16 %v9754
          %v9927 = vunpack.c.l.b16 %v9755
          %v9928 = vunpack.c.h.b16 %v9755
          %v9929 = vunpack.c.l.b16 %v9756
          %v9930 = vunpack.c.h.b16 %v9756
          %v9931 = vunpack.c.l.b16 %v9757
          %v9932 = vunpack.c.h.b16 %v9757
          %v9933 = vunpack.c.l.b16 %v9758
          %v9934 = vunpack.c.h.b16 %v9758
          %v9935 = vunpack.c.l.b16 %v9759
          %v9936 = vunpack.c.h.b16 %v9759
          %v9937 = vunpack.c.l.b16 %v9760
          %v9938 = vunpack.c.h.b16 %v9760
          %v9939 = vunpack.c.l.b16 %v9761
          %v9940 = vunpack.c.h.b16 %v9761
          %v9941 = vunpack.c.l.b16 %v9762
          %v9942 = vunpack.c.h.b16 %v9762
          %v9943 = vunpack.c.l.b16 %v9763
          %v9944 = vunpack.c.h.b16 %v9763
          %v9945 = vunpack.c.l.b16 %v9764
          %v9946 = vunpack.c.h.b16 %v9764
          %v9947 = vunpack.c.l.b16 %v9765
          %v9948 = vunpack.c.h.b16 %v9765
          %v9949 = vunpack.c.l.b16 %v9766
          %v9950 = vunpack.c.h.b16 %v9766
          %v9951 = vunpack.c.l.b16 %v9767
          %v9952 = vunpack.c.h.b16 %v9767
          %v9953 = vunpack.c.l.b16 %v9768
          %v9954 = vunpack.c.h.b16 %v9768
          %v9955 = vunpack.c.l.b16 %v9769
          %v9956 = vunpack.c.h.b16 %v9769
          %v9957 = vunpack.c.l.b16 %v9770
          %v9958 = vunpack.c.h.b16 %v9770
          %v9959 = vunpack.c.l.b16 %v9771
          %v9960 = vunpack.c.h.b16 %v9771
          %v9961 = vunpack.c.l.b16 %v9772
          %v9962 = vunpack.c.h.b16 %v9772
          %v9963 = vunpack.c.l.b16 %v9773
          %v9964 = vunpack.c.h.b16 %v9773
          %v9965 = vunpack.c.l.b16 %v9774
          %v9966 = vunpack.c.h.b16 %v9774
          %v9967 = vpack.c.b16 %v9841, %v9839
          %v9968 = vpack.c.b16 %v9842, %v9840
          %v9969 = vpack.c.b16 %v9845, %v9843
          %v9970 = vpack.c.b16 %v9846, %v9844
          %v9971 = vpack.c.b16 %v9849, %v9847
          %v9972 = vpack.c.b16 %v9850, %v9848
          %v9973 = vpack.c.b16 %v9853, %v9851
          %v9974 = vpack.c.b16 %v9854, %v9852
          %v9975 = vpack.c.b16 %v9857, %v9855
          %v9976 = vpack.c.b16 %v9858, %v9856
          %v9977 = vpack.c.b16 %v9861, %v9859
          %v9978 = vpack.c.b16 %v9862, %v9860
          %v9979 = vpack.c.b16 %v9865, %v9863
          %v9980 = vpack.c.b16 %v9866, %v9864
          %v9981 = vpack.c.b16 %v9869, %v9867
          %v9982 = vpack.c.b16 %v9870, %v9868
          %v9983 = vpack.c.b16 %v9873, %v9871
          %v9984 = vpack.c.b16 %v9874, %v9872
          %v9985 = vpack.c.b16 %v9877, %v9875
          %v9986 = vpack.c.b16 %v9878, %v9876
          %v9987 = vpack.c.b16 %v9881, %v9879
          %v9988 = vpack.c.b16 %v9882, %v9880
          %v9989 = vpack.c.b16 %v9885, %v9883
          %v9990 = vpack.c.b16 %v9886, %v9884
          %v9991 = vpack.c.b16 %v9889, %v9887
          %v9992 = vpack.c.b16 %v9890, %v9888
          %v9993 = vpack.c.b16 %v9893, %v9891
          %v9994 = vpack.c.b16 %v9894, %v9892
          %v9995 = vpack.c.b16 %v9897, %v9895
          %v9996 = vpack.c.b16 %v9898, %v9896
          %v9997 = vpack.c.b16 %v9901, %v9899
          %v9998 = vpack.c.b16 %v9902, %v9900
          %v9999 = vpack.c.b16 %v9905, %v9903
          %v10000 = vpack.c.b16 %v9906, %v9904
          %v10001 = vpack.c.b16 %v9909, %v9907
          %v10002 = vpack.c.b16 %v9910, %v9908
          %v10003 = vpack.c.b16 %v9913, %v9911
          %v10004 = vpack.c.b16 %v9914, %v9912
          %v10005 = vpack.c.b16 %v9917, %v9915
          %v10006 = vpack.c.b16 %v9918, %v9916
          %v10007 = vpack.c.b16 %v9921, %v9919
          %v10008 = vpack.c.b16 %v9922, %v9920
          %v10009 = vpack.c.b16 %v9925, %v9923
          %v10010 = vpack.c.b16 %v9926, %v9924
          %v10011 = vpack.c.b16 %v9929, %v9927
          %v10012 = vpack.c.b16 %v9930, %v9928
          %v10013 = vpack.c.b16 %v9933, %v9931
          %v10014 = vpack.c.b16 %v9934, %v9932
          %v10015 = vpack.c.b16 %v9937, %v9935
          %v10016 = vpack.c.b16 %v9938, %v9936
          %v10017 = vpack.c.b16 %v9941, %v9939
          %v10018 = vpack.c.b16 %v9942, %v9940
          %v10019 = vpack.c.b16 %v9945, %v9943
          %v10020 = vpack.c.b16 %v9946, %v9944
          %v10021 = vpack.c.b16 %v9949, %v9947
          %v10022 = vpack.c.b16 %v9950, %v9948
          %v10023 = vpack.c.b16 %v9953, %v9951
          %v10024 = vpack.c.b16 %v9954, %v9952
          %v10025 = vpack.c.b16 %v9957, %v9955
          %v10026 = vpack.c.b16 %v9958, %v9956
          %v10027 = vpack.c.b16 %v9961, %v9959
          %v10028 = vpack.c.b16 %v9962, %v9960
          %v10029 = vpack.c.b16 %v9965, %v9963
          %v10030 = vpack.c.b16 %v9966, %v9964
          %10095 = vmatprep.subr.bf16.mxu0 %v9968
          %10096 = vmatpush1.bf16.msra.mxu0 %v9967
          %10097 = vmatprep.subr.bf16.mxu0 %v9970
          %10098 = vmatpush1.bf16.msra.mxu0 %v9969
          %10099 = vmatprep.subr.bf16.mxu0 %v9972
          %10100 = vmatpush1.bf16.msra.mxu0 %v9971
          %10101 = vmatprep.subr.bf16.mxu0 %v9974
          %10102 = vmatpush1.bf16.msra.mxu0 %v9973
          %10103 = vmatprep.subr.bf16.mxu0 %v9976
          %10104 = vmatpush1.bf16.msra.mxu0 %v9975
          %10105 = vmatprep.subr.bf16.mxu0 %v9978
          %10106 = vmatpush1.bf16.msra.mxu0 %v9977
          %10107 = vmatprep.subr.bf16.mxu0 %v9980
          %10108 = vmatpush1.bf16.msra.mxu0 %v9979
          %10109 = vmatprep.subr.bf16.mxu0 %v9982
          %10110 = vmatpush1.bf16.msra.mxu0 %v9981
          %10111 = vmatprep.subr.bf16.mxu0 %v9984
          %10112 = vmatpush1.bf16.msra.mxu0 %v9983
          %10113 = vmatprep.subr.bf16.mxu0 %v9986
          %10114 = vmatpush1.bf16.msra.mxu0 %v9985
          %10115 = vmatprep.subr.bf16.mxu0 %v9988
          %10116 = vmatpush1.bf16.msra.mxu0 %v9987
          %10117 = vmatprep.subr.bf16.mxu0 %v9990
          %10118 = vmatpush1.bf16.msra.mxu0 %v9989
          %10119 = vmatprep.subr.bf16.mxu0 %v9992
          %10120 = vmatpush1.bf16.msra.mxu0 %v9991
          %10121 = vmatprep.subr.bf16.mxu0 %v9994
          %10122 = vmatpush1.bf16.msra.mxu0 %v9993
          %10123 = vmatprep.subr.bf16.mxu0 %v9996
          %10124 = vmatpush1.bf16.msra.mxu0 %v9995
          %10125 = vmatprep.subr.bf16.mxu0 %v9998
          %10126 = vmatpush1.bf16.msra.mxu0 %v9997
          %10127 = vmatprep.mubr.bf16.mxu0 %v8208
          %10128 = vmatmul.mubr.bf16.gmra.mrb[0].mxu0 %v8207
          %v10129 = vpop.f32.mrb[0].mxu0
          %v10130 = vadd.f32 0.0, %v10129
          %v10131 = vpop.f32.mrb[0].mxu0
          %v10132 = vadd.f32 0.0, %v10131
          %v10133 = vpop.f32.mrb[0].mxu0
          %v10134 = vpop.f32.mrb[0].mxu0
          %10135 = vdwg.mxu0
          %10136 = vmatprep.subr.bf16.mxu0 %v10000
          %10137 = vmatpush1.bf16.msra.mxu0 %v9999
          %10138 = vmatprep.subr.bf16.mxu0 %v10002
          %10139 = vmatpush1.bf16.msra.mxu0 %v10001
          %10140 = vmatprep.subr.bf16.mxu0 %v10004
          %10141 = vmatpush1.bf16.msra.mxu0 %v10003
          %10142 = vmatprep.subr.bf16.mxu0 %v10006
          %10143 = vmatpush1.bf16.msra.mxu0 %v10005
          %10144 = vmatprep.subr.bf16.mxu0 %v10008
          %10145 = vmatpush1.bf16.msra.mxu0 %v10007
          %10146 = vmatprep.subr.bf16.mxu0 %v10010
          %10147 = vmatpush1.bf16.msra.mxu0 %v10009
          %10148 = vmatprep.subr.bf16.mxu0 %v10012
          %10149 = vmatpush1.bf16.msra.mxu0 %v10011
          %10150 = vmatprep.subr.bf16.mxu0 %v10014
          %10151 = vmatpush1.bf16.msra.mxu0 %v10013
          %10152 = vmatprep.subr.bf16.mxu0 %v10016
          %10153 = vmatpush1.bf16.msra.mxu0 %v10015
          %10154 = vmatprep.subr.bf16.mxu0 %v10018
          %10155 = vmatpush1.bf16.msra.mxu0 %v10017
          %10156 = vmatprep.subr.bf16.mxu0 %v10020
          %10157 = vmatpush1.bf16.msra.mxu0 %v10019
          %10158 = vmatprep.subr.bf16.mxu0 %v10022
          %10159 = vmatpush1.bf16.msra.mxu0 %v10021
          %10160 = vmatprep.subr.bf16.mxu0 %v10024
          %10161 = vmatpush1.bf16.msra.mxu0 %v10023
          %10162 = vmatprep.subr.bf16.mxu0 %v10026
          %10163 = vmatpush1.bf16.msra.mxu0 %v10025
          %10164 = vmatprep.subr.bf16.mxu0 %v10028
          %10165 = vmatpush1.bf16.msra.mxu0 %v10027
          %10166 = vmatprep.subr.bf16.mxu0 %v10030
          %10167 = vmatpush1.bf16.msra.mxu0 %v10029
          %10168 = vmatprep.mubr.bf16.mxu0 %v8210
          %10169 = vmatmul.mubr.bf16.gmra.mrb[0].mxu0 %v8209
          %v10170 = vpop.f32.mrb[0].mxu0
          %v10171 = vadd.f32 %v10130, %v10170
          %v10172 = vpop.f32.mrb[0].mxu0
          %v10173 = vadd.f32 %v10132, %v10172
          %v10174 = vpop.f32.mrb[0].mxu0
          %v10175 = vpop.f32.mrb[0].mxu0
          %10176 = vdwg.mxu0
          %v10177 = vmul.f32 %v10171, %v9710
          %v10178 = vld [vmem:[#allocation6] sm:$0x1]
          %v10180 = vlaneseq
          %v10181 = vshrl.u32 %v10180, 7
          %v10182 = vsub.s32 0, %v10181
          %v10183 = vrot.slane %v10178, %v10182
          %v10185 = vadd.f32 %v10177, %v10183
          %v10186 = vld [vmem:[#allocation8] sm:$0x1]
          %v10188 = vlaneseq
          %v10189 = vshrl.u32 %v10188, 7
          %v10190 = vsub.s32 0, %v10189
          %v10191 = vrot.slane %v10186, %v10190
          %v10193 = vadd.f32 %v10173, %v10191
          %v10194 = vxor.u32 %v10193, 2147483648
          %v10195 = vmul.f32 %v10194, 1.442695
          %v10196 = vpow.pop %v10195
          %v10197 = vadd.f32 %v10196, 1.0
          %v10198 = vrcp.pop %v10197
          %v10199 = vmul.f32 1.0, %v10198
          %v10200 = vadd.f32 %v10199, 1e-09
          %v10201 = vld [vmem:[#allocation3] sm:$0xff]
          %v10202 = vld [vmem:[#allocation3 + $0x8] sm:$0xff]
          %v10203 = vld [vmem:[#allocation14] sm:$0xff]
          %v10205 = vlaneseq
          %v10206 = vshrl.u32 %v10205, 7
          %v10207 = vsub.s32 0, %v10206
          %v10208 = vrot.slane %v10203, %v10207
          %v10209 = vlaneseq
          %v10210 = vshrl.u32 %v10209, 7
          %v10211 = vsub.s32 1, %v10210
          %v10212 = vrot.slane %v10203, %v10211
          %v10213 = vlaneseq
          %v10214 = vshrl.u32 %v10213, 7
          %v10215 = vsub.s32 2, %v10214
          %v10216 = vrot.slane %v10203, %v10215
          %v10217 = vlaneseq
          %v10218 = vshrl.u32 %v10217, 7
          %v10219 = vsub.s32 3, %v10218
          %v10220 = vrot.slane %v10203, %v10219
          %v10221 = vlaneseq
          %v10222 = vshrl.u32 %v10221, 7
          %v10223 = vsub.s32 4, %v10222
          %v10224 = vrot.slane %v10203, %v10223
          %v10225 = vlaneseq
          %v10226 = vshrl.u32 %v10225, 7
          %v10227 = vsub.s32 5, %v10226
          %v10228 = vrot.slane %v10203, %v10227
          %v10229 = vlaneseq
          %v10230 = vshrl.u32 %v10229, 7
          %v10231 = vsub.s32 6, %v10230
          %v10232 = vrot.slane %v10203, %v10231
          %v10233 = vlaneseq
          %v10234 = vshrl.u32 %v10233, 7
          %v10235 = vsub.s32 7, %v10234
          %v10236 = vrot.slane %v10203, %v10235
          %v10237 = vcombine.low %v10208, %v10212
          %v10238 = vcombine.low %v10216, %v10220
          %v10240 = vunpack.c.l.s4 1983009808
          %v10241 = vunpack.c.0.s8 %v10240
          %v10242 = vlaneseq
          %v10243 = vshrl.u32 %v10242, 7
          %v10244 = vsub.s32 %v10241, %v10243
          %v10245 = vrot.slane %v10237, %v10244
          %v10247 = vunpack.c.l.s4 1983009808
          %v10248 = vunpack.c.0.s8 %v10247
          %v10249 = vlaneseq
          %v10250 = vshrl.u32 %v10249, 7
          %v10251 = vsub.s32 %v10248, %v10250
          %v10252 = vrot.slane %v10238, %v10251
          %v10253 = vcombine.low %v10245, %v10252
          %v10254 = vcombine.low %v10224, %v10228
          %v10255 = vcombine.low %v10232, %v10236
          %v10257 = vunpack.c.l.s4 1983009808
          %v10258 = vunpack.c.0.s8 %v10257
          %v10259 = vlaneseq
          %v10260 = vshrl.u32 %v10259, 7
          %v10261 = vsub.s32 %v10258, %v10260
          %v10262 = vrot.slane %v10254, %v10261
          %v10264 = vunpack.c.l.s4 1983009808
          %v10265 = vunpack.c.0.s8 %v10264
          %v10266 = vlaneseq
          %v10267 = vshrl.u32 %v10266, 7
          %v10268 = vsub.s32 %v10265, %v10267
          %v10269 = vrot.slane %v10255, %v10268
          %v10270 = vcombine.low %v10262, %v10269
          %v10273 = vadd.f32 %v10201, %v10253
          %v10274 = vadd.f32 %v10202, %v10270
          %v10277 = vcombine.high %v10273, %v10273
          %v10279 = vunpack.c.l.s4 1983009808
          %v10280 = vunpack.c.0.s8 %v10279
          %v10281 = vlaneseq
          %v10282 = vshrl.u32 %v10281, 7
          %v10283 = vsub.s32 %v10280, %v10282
          %v10284 = vrot.slane %v10273, %v10283
          %v10286 = vunpack.c.l.s4 1983009808
          %v10287 = vunpack.c.0.s8 %v10286
          %v10288 = vlaneseq
          %v10289 = vshrl.u32 %v10288, 7
          %v10290 = vsub.s32 %v10287, %v10289
          %v10291 = vrot.slane %v10277, %v10290
          %v10292 = vcombine.high %v10284, %v10284
          %v10293 = vcombine.high %v10291, %v10291
          %v10294 = vcombine.high %v10274, %v10274
          %v10296 = vunpack.c.l.s4 1983009808
          %v10297 = vunpack.c.0.s8 %v10296
          %v10298 = vlaneseq
          %v10299 = vshrl.u32 %v10298, 7
          %v10300 = vsub.s32 %v10297, %v10299
          %v10301 = vrot.slane %v10274, %v10300
          %v10303 = vunpack.c.l.s4 1983009808
          %v10304 = vunpack.c.0.s8 %v10303
          %v10305 = vlaneseq
          %v10306 = vshrl.u32 %v10305, 7
          %v10307 = vsub.s32 %v10304, %v10306
          %v10308 = vrot.slane %v10294, %v10307
          %v10309 = vcombine.high %v10301, %v10301
          %v10310 = vcombine.high %v10308, %v10308
          %v10319 = vpack.c.bf16 %v10284, %v10284
          %v10320 = vpack.c.bf16 %v10292, %v10292
          %v10321 = vpack.c.bf16 %v10291, %v10291
          %v10322 = vpack.c.bf16 %v10293, %v10293
          %v10323 = vpack.c.bf16 %v10301, %v10301
          %v10324 = vpack.c.bf16 %v10309, %v10309
          %v10325 = vpack.c.bf16 %v10308, %v10308
          %v10326 = vpack.c.bf16 %v10310, %v10310
          %v10327 = vld [vmem:[%s8] sm:$0xf]
          %v10328 = vld [vmem:[%s8 + $0x4] sm:$0xf]
          %v10329 = vld [vmem:[%s8 + $0x8] sm:$0xf]
          %v10330 = vld [vmem:[%s8 + $0xc] sm:$0xf]
          %v10331 = vld [vmem:[%s8 + $0x10] sm:$0xf]
          %v10332 = vld [vmem:[%s8 + $0x14] sm:$0xf]
          %v10333 = vld [vmem:[%s8 + $0x18] sm:$0xf]
          %v10334 = vld [vmem:[%s8 + $0x1c] sm:$0xf]
          %v10335 = vld [vmem:[%s8 + $0x20] sm:$0xf]
          %v10336 = vld [vmem:[%s8 + $0x24] sm:$0xf]
          %v10337 = vld [vmem:[%s8 + $0x28] sm:$0xf]
          %v10338 = vld [vmem:[%s8 + $0x2c] sm:$0xf]
          %v10339 = vld [vmem:[%s8 + $0x30] sm:$0xf]
          %v10340 = vld [vmem:[%s8 + $0x34] sm:$0xf]
          %v10341 = vld [vmem:[%s8 + $0x38] sm:$0xf]
          %v10342 = vld [vmem:[%s8 + $0x3c] sm:$0xf]
          %v10343 = vld [vmem:[%s8 + $0x40] sm:$0xf]
          %v10344 = vld [vmem:[%s8 + $0x44] sm:$0xf]
          %v10345 = vld [vmem:[%s8 + $0x48] sm:$0xf]
          %v10346 = vld [vmem:[%s8 + $0x4c] sm:$0xf]
          %v10347 = vld [vmem:[%s8 + $0x50] sm:$0xf]
          %v10348 = vld [vmem:[%s8 + $0x54] sm:$0xf]
          %v10349 = vld [vmem:[%s8 + $0x58] sm:$0xf]
          %v10350 = vld [vmem:[%s8 + $0x5c] sm:$0xf]
          %v10351 = vld [vmem:[%s8 + $0x60] sm:$0xf]
          %v10352 = vld [vmem:[%s8 + $0x64] sm:$0xf]
          %v10353 = vld [vmem:[%s8 + $0x68] sm:$0xf]
          %v10354 = vld [vmem:[%s8 + $0x6c] sm:$0xf]
          %v10355 = vld [vmem:[%s8 + $0x70] sm:$0xf]
          %v10356 = vld [vmem:[%s8 + $0x74] sm:$0xf]
          %v10357 = vld [vmem:[%s8 + $0x78] sm:$0xf]
          %v10358 = vld [vmem:[%s8 + $0x7c] sm:$0xf]
          %v10359 = vld [vmem:[%s8 + $0x80] sm:$0xf]
          %v10360 = vld [vmem:[%s8 + $0x84] sm:$0xf]
          %v10361 = vld [vmem:[%s8 + $0x88] sm:$0xf]
          %v10362 = vld [vmem:[%s8 + $0x8c] sm:$0xf]
          %v10363 = vld [vmem:[%s8 + $0x90] sm:$0xf]
          %v10364 = vld [vmem:[%s8 + $0x94] sm:$0xf]
          %v10365 = vld [vmem:[%s8 + $0x98] sm:$0xf]
          %v10366 = vld [vmem:[%s8 + $0x9c] sm:$0xf]
          %v10367 = vld [vmem:[%s8 + $0xa0] sm:$0xf]
          %v10368 = vld [vmem:[%s8 + $0xa4] sm:$0xf]
          %v10369 = vld [vmem:[%s8 + $0xa8] sm:$0xf]
          %v10370 = vld [vmem:[%s8 + $0xac] sm:$0xf]
          %v10371 = vld [vmem:[%s8 + $0xb0] sm:$0xf]
          %v10372 = vld [vmem:[%s8 + $0xb4] sm:$0xf]
          %v10373 = vld [vmem:[%s8 + $0xb8] sm:$0xf]
          %v10374 = vld [vmem:[%s8 + $0xbc] sm:$0xf]
          %v10375 = vld [vmem:[%s8 + $0xc0] sm:$0xf]
          %v10376 = vld [vmem:[%s8 + $0xc4] sm:$0xf]
          %v10377 = vld [vmem:[%s8 + $0xc8] sm:$0xf]
          %v10378 = vld [vmem:[%s8 + $0xcc] sm:$0xf]
          %v10379 = vld [vmem:[%s8 + $0xd0] sm:$0xf]
          %v10380 = vld [vmem:[%s8 + $0xd4] sm:$0xf]
          %v10381 = vld [vmem:[%s8 + $0xd8] sm:$0xf]
          %v10382 = vld [vmem:[%s8 + $0xdc] sm:$0xf]
          %v10383 = vld [vmem:[%s8 + $0xe0] sm:$0xf]
          %v10384 = vld [vmem:[%s8 + $0xe4] sm:$0xf]
          %v10385 = vld [vmem:[%s8 + $0xe8] sm:$0xf]
          %v10386 = vld [vmem:[%s8 + $0xec] sm:$0xf]
          %v10387 = vld [vmem:[%s8 + $0xf0] sm:$0xf]
          %v10388 = vld [vmem:[%s8 + $0xf4] sm:$0xf]
          %v10389 = vld [vmem:[%s8 + $0xf8] sm:$0xf]
          %v10390 = vld [vmem:[%s8 + $0xfc] sm:$0xf]
          %v10391 = vld [vmem:[%s8 + $0x100] sm:$0xf]
          %v10392 = vld [vmem:[%s8 + $0x104] sm:$0xf]
          %v10393 = vld [vmem:[%s8 + $0x108] sm:$0xf]
          %v10394 = vld [vmem:[%s8 + $0x10c] sm:$0xf]
          %v10395 = vld [vmem:[%s8 + $0x110] sm:$0xf]
          %v10396 = vld [vmem:[%s8 + $0x114] sm:$0xf]
          %v10397 = vld [vmem:[%s8 + $0x118] sm:$0xf]
          %v10398 = vld [vmem:[%s8 + $0x11c] sm:$0xf]
          %v10399 = vld [vmem:[%s8 + $0x120] sm:$0xf]
          %v10400 = vld [vmem:[%s8 + $0x124] sm:$0xf]
          %v10401 = vld [vmem:[%s8 + $0x128] sm:$0xf]
          %v10402 = vld [vmem:[%s8 + $0x12c] sm:$0xf]
          %v10403 = vld [vmem:[%s8 + $0x130] sm:$0xf]
          %v10404 = vld [vmem:[%s8 + $0x134] sm:$0xf]
          %v10405 = vld [vmem:[%s8 + $0x138] sm:$0xf]
          %v10406 = vld [vmem:[%s8 + $0x13c] sm:$0xf]
          %v10407 = vld [vmem:[%s8 + $0x140] sm:$0xf]
          %v10408 = vld [vmem:[%s8 + $0x144] sm:$0xf]
          %v10409 = vld [vmem:[%s8 + $0x148] sm:$0xf]
          %v10410 = vld [vmem:[%s8 + $0x14c] sm:$0xf]
          %v10411 = vld [vmem:[%s8 + $0x150] sm:$0xf]
          %v10412 = vld [vmem:[%s8 + $0x154] sm:$0xf]
          %v10413 = vld [vmem:[%s8 + $0x158] sm:$0xf]
          %v10414 = vld [vmem:[%s8 + $0x15c] sm:$0xf]
          %v10415 = vld [vmem:[%s8 + $0x160] sm:$0xf]
          %v10416 = vld [vmem:[%s8 + $0x164] sm:$0xf]
          %v10417 = vld [vmem:[%s8 + $0x168] sm:$0xf]
          %v10418 = vld [vmem:[%s8 + $0x16c] sm:$0xf]
          %v10419 = vld [vmem:[%s8 + $0x170] sm:$0xf]
          %v10420 = vld [vmem:[%s8 + $0x174] sm:$0xf]
          %v10421 = vld [vmem:[%s8 + $0x178] sm:$0xf]
          %v10422 = vld [vmem:[%s8 + $0x17c] sm:$0xf]
          %v10423 = vld [vmem:[%s8 + $0x180] sm:$0xf]
          %v10424 = vld [vmem:[%s8 + $0x184] sm:$0xf]
          %v10425 = vld [vmem:[%s8 + $0x188] sm:$0xf]
          %v10426 = vld [vmem:[%s8 + $0x18c] sm:$0xf]
          %v10427 = vld [vmem:[%s8 + $0x190] sm:$0xf]
          %v10428 = vld [vmem:[%s8 + $0x194] sm:$0xf]
          %v10429 = vld [vmem:[%s8 + $0x198] sm:$0xf]
          %v10430 = vld [vmem:[%s8 + $0x19c] sm:$0xf]
          %v10431 = vld [vmem:[%s8 + $0x1a0] sm:$0xf]
          %v10432 = vld [vmem:[%s8 + $0x1a4] sm:$0xf]
          %v10433 = vld [vmem:[%s8 + $0x1a8] sm:$0xf]
          %v10434 = vld [vmem:[%s8 + $0x1ac] sm:$0xf]
          %v10435 = vld [vmem:[%s8 + $0x1b0] sm:$0xf]
          %v10436 = vld [vmem:[%s8 + $0x1b4] sm:$0xf]
          %v10437 = vld [vmem:[%s8 + $0x1b8] sm:$0xf]
          %v10438 = vld [vmem:[%s8 + $0x1bc] sm:$0xf]
          %v10439 = vld [vmem:[%s8 + $0x1c0] sm:$0xf]
          %v10440 = vld [vmem:[%s8 + $0x1c4] sm:$0xf]
          %v10441 = vld [vmem:[%s8 + $0x1c8] sm:$0xf]
          %v10442 = vld [vmem:[%s8 + $0x1cc] sm:$0xf]
          %v10443 = vld [vmem:[%s8 + $0x1d0] sm:$0xf]
          %v10444 = vld [vmem:[%s8 + $0x1d4] sm:$0xf]
          %v10445 = vld [vmem:[%s8 + $0x1d8] sm:$0xf]
          %v10446 = vld [vmem:[%s8 + $0x1dc] sm:$0xf]
          %v10447 = vld [vmem:[%s8 + $0x1e0] sm:$0xf]
          %v10448 = vld [vmem:[%s8 + $0x1e4] sm:$0xf]
          %v10449 = vld [vmem:[%s8 + $0x1e8] sm:$0xf]
          %v10450 = vld [vmem:[%s8 + $0x1ec] sm:$0xf]
          %v10451 = vld [vmem:[%s8 + $0x1f0] sm:$0xf]
          %v10452 = vld [vmem:[%s8 + $0x1f4] sm:$0xf]
          %v10453 = vld [vmem:[%s8 + $0x1f8] sm:$0xf]
          %v10454 = vld [vmem:[%s8 + $0x1fc] sm:$0xf]
          %v10455 = vld [vmem:[#allocation15] sm:$0x1]
          %v10457 = vlaneseq
          %v10458 = vshrl.u32 %v10457, 7
          %v10459 = vsub.s32 0, %v10458
          %v10460 = vrot.slane %v10455, %v10459
          %v10590 = vunpack.c.l.b16 %v10327
          %v10591 = vunpack.c.l.b16 %v10328
          %v10592 = vunpack.c.l.b16 %v10329
          %v10593 = vunpack.c.l.b16 %v10330
          %v10594 = vunpack.c.l.b16 %v10331
          %v10595 = vunpack.c.l.b16 %v10332
          %v10596 = vunpack.c.l.b16 %v10333
          %v10597 = vunpack.c.l.b16 %v10334
          %v10598 = vunpack.c.l.b16 %v10335
          %v10599 = vunpack.c.l.b16 %v10336
          %v10600 = vunpack.c.l.b16 %v10337
          %v10601 = vunpack.c.l.b16 %v10338
          %v10602 = vunpack.c.l.b16 %v10339
          %v10603 = vunpack.c.l.b16 %v10340
          %v10604 = vunpack.c.l.b16 %v10341
          %v10605 = vunpack.c.l.b16 %v10342
          %v10606 = vunpack.c.l.b16 %v10343
          %v10607 = vunpack.c.l.b16 %v10344
          %v10608 = vunpack.c.l.b16 %v10345
          %v10609 = vunpack.c.l.b16 %v10346
          %v10610 = vunpack.c.l.b16 %v10347
          %v10611 = vunpack.c.l.b16 %v10348
          %v10612 = vunpack.c.l.b16 %v10349
          %v10613 = vunpack.c.l.b16 %v10350
          %v10614 = vunpack.c.l.b16 %v10351
          %v10615 = vunpack.c.l.b16 %v10352
          %v10616 = vunpack.c.l.b16 %v10353
          %v10617 = vunpack.c.l.b16 %v10354
          %v10618 = vunpack.c.l.b16 %v10355
          %v10619 = vunpack.c.l.b16 %v10356
          %v10620 = vunpack.c.l.b16 %v10357
          %v10621 = vunpack.c.l.b16 %v10358
          %v10622 = vunpack.c.l.b16 %v10359
          %v10623 = vunpack.c.l.b16 %v10360
          %v10624 = vunpack.c.l.b16 %v10361
          %v10625 = vunpack.c.l.b16 %v10362
          %v10626 = vunpack.c.l.b16 %v10363
          %v10627 = vunpack.c.l.b16 %v10364
          %v10628 = vunpack.c.l.b16 %v10365
          %v10629 = vunpack.c.l.b16 %v10366
          %v10630 = vunpack.c.l.b16 %v10367
          %v10631 = vunpack.c.l.b16 %v10368
          %v10632 = vunpack.c.l.b16 %v10369
          %v10633 = vunpack.c.l.b16 %v10370
          %v10634 = vunpack.c.l.b16 %v10371
          %v10635 = vunpack.c.l.b16 %v10372
          %v10636 = vunpack.c.l.b16 %v10373
          %v10637 = vunpack.c.l.b16 %v10374
          %v10638 = vunpack.c.l.b16 %v10375
          %v10639 = vunpack.c.l.b16 %v10376
          %v10640 = vunpack.c.l.b16 %v10377
          %v10641 = vunpack.c.l.b16 %v10378
          %v10642 = vunpack.c.l.b16 %v10379
          %v10643 = vunpack.c.l.b16 %v10380
          %v10644 = vunpack.c.l.b16 %v10381
          %v10645 = vunpack.c.l.b16 %v10382
          %v10646 = vunpack.c.l.b16 %v10383
          %v10647 = vunpack.c.l.b16 %v10384
          %v10648 = vunpack.c.l.b16 %v10385
          %v10649 = vunpack.c.l.b16 %v10386
          %v10650 = vunpack.c.l.b16 %v10387
          %v10651 = vunpack.c.l.b16 %v10388
          %v10652 = vunpack.c.l.b16 %v10389
          %v10653 = vunpack.c.l.b16 %v10390
          %v10654 = vunpack.c.l.b16 %v10391
          %v10655 = vunpack.c.l.b16 %v10392
          %v10656 = vunpack.c.l.b16 %v10393
          %v10657 = vunpack.c.l.b16 %v10394
          %v10658 = vunpack.c.l.b16 %v10395
          %v10659 = vunpack.c.l.b16 %v10396
          %v10660 = vunpack.c.l.b16 %v10397
          %v10661 = vunpack.c.l.b16 %v10398
          %v10662 = vunpack.c.l.b16 %v10399
          %v10663 = vunpack.c.l.b16 %v10400
          %v10664 = vunpack.c.l.b16 %v10401
          %v10665 = vunpack.c.l.b16 %v10402
          %v10666 = vunpack.c.l.b16 %v10403
          %v10667 = vunpack.c.l.b16 %v10404
          %v10668 = vunpack.c.l.b16 %v10405
          %v10669 = vunpack.c.l.b16 %v10406
          %v10670 = vunpack.c.l.b16 %v10407
          %v10671 = vunpack.c.l.b16 %v10408
          %v10672 = vunpack.c.l.b16 %v10409
          %v10673 = vunpack.c.l.b16 %v10410
          %v10674 = vunpack.c.l.b16 %v10411
          %v10675 = vunpack.c.l.b16 %v10412
          %v10676 = vunpack.c.l.b16 %v10413
          %v10677 = vunpack.c.l.b16 %v10414
          %v10678 = vunpack.c.l.b16 %v10415
          %v10679 = vunpack.c.l.b16 %v10416
          %v10680 = vunpack.c.l.b16 %v10417
          %v10681 = vunpack.c.l.b16 %v10418
          %v10682 = vunpack.c.l.b16 %v10419
          %v10683 = vunpack.c.l.b16 %v10420
          %v10684 = vunpack.c.l.b16 %v10421
          %v10685 = vunpack.c.l.b16 %v10422
          %v10686 = vunpack.c.l.b16 %v10423
          %v10687 = vunpack.c.l.b16 %v10424
          %v10688 = vunpack.c.l.b16 %v10425
          %v10689 = vunpack.c.l.b16 %v10426
          %v10690 = vunpack.c.l.b16 %v10427
          %v10691 = vunpack.c.l.b16 %v10428
          %v10692 = vunpack.c.l.b16 %v10429
          %v10693 = vunpack.c.l.b16 %v10430
          %v10694 = vunpack.c.l.b16 %v10431
          %v10695 = vunpack.c.l.b16 %v10432
          %v10696 = vunpack.c.l.b16 %v10433
          %v10697 = vunpack.c.l.b16 %v10434
          %v10698 = vunpack.c.l.b16 %v10435
          %v10699 = vunpack.c.l.b16 %v10436
          %v10700 = vunpack.c.l.b16 %v10437
          %v10701 = vunpack.c.l.b16 %v10438
          %v10702 = vunpack.c.l.b16 %v10439
          %v10703 = vunpack.c.l.b16 %v10440
          %v10704 = vunpack.c.l.b16 %v10441
          %v10705 = vunpack.c.l.b16 %v10442
          %v10706 = vunpack.c.l.b16 %v10443
          %v10707 = vunpack.c.l.b16 %v10444
          %v10708 = vunpack.c.l.b16 %v10445
          %v10709 = vunpack.c.l.b16 %v10446
          %v10710 = vunpack.c.l.b16 %v10447
          %v10711 = vunpack.c.l.b16 %v10448
          %v10712 = vunpack.c.l.b16 %v10449
          %v10713 = vunpack.c.l.b16 %v10450
          %v10714 = vunpack.c.l.b16 %v10451
          %v10715 = vunpack.c.l.b16 %v10452
          %v10716 = vunpack.c.l.b16 %v10453
          %v10717 = vunpack.c.l.b16 %v10454
          %v10718 = vpack.c.b16 %v10591, %v10590
          %v10719 = vpack.c.b16 %v10593, %v10592
          %v10720 = vpack.c.b16 %v10595, %v10594
          %v10721 = vpack.c.b16 %v10597, %v10596
          %v10722 = vpack.c.b16 %v10599, %v10598
          %v10723 = vpack.c.b16 %v10601, %v10600
          %v10724 = vpack.c.b16 %v10603, %v10602
          %v10725 = vpack.c.b16 %v10605, %v10604
          %v10726 = vpack.c.b16 %v10607, %v10606
          %v10727 = vpack.c.b16 %v10609, %v10608
          %v10728 = vpack.c.b16 %v10611, %v10610
          %v10729 = vpack.c.b16 %v10613, %v10612
          %v10730 = vpack.c.b16 %v10615, %v10614
          %v10731 = vpack.c.b16 %v10617, %v10616
          %v10732 = vpack.c.b16 %v10619, %v10618
          %v10733 = vpack.c.b16 %v10621, %v10620
          %v10734 = vpack.c.b16 %v10623, %v10622
          %v10735 = vpack.c.b16 %v10625, %v10624
          %v10736 = vpack.c.b16 %v10627, %v10626
          %v10737 = vpack.c.b16 %v10629, %v10628
          %v10738 = vpack.c.b16 %v10631, %v10630
          %v10739 = vpack.c.b16 %v10633, %v10632
          %v10740 = vpack.c.b16 %v10635, %v10634
          %v10741 = vpack.c.b16 %v10637, %v10636
          %v10742 = vpack.c.b16 %v10639, %v10638
          %v10743 = vpack.c.b16 %v10641, %v10640
          %v10744 = vpack.c.b16 %v10643, %v10642
          %v10745 = vpack.c.b16 %v10645, %v10644
          %v10746 = vpack.c.b16 %v10647, %v10646
          %v10747 = vpack.c.b16 %v10649, %v10648
          %v10748 = vpack.c.b16 %v10651, %v10650
          %v10749 = vpack.c.b16 %v10653, %v10652
          %v10750 = vpack.c.b16 %v10655, %v10654
          %v10751 = vpack.c.b16 %v10657, %v10656
          %v10752 = vpack.c.b16 %v10659, %v10658
          %v10753 = vpack.c.b16 %v10661, %v10660
          %v10754 = vpack.c.b16 %v10663, %v10662
          %v10755 = vpack.c.b16 %v10665, %v10664
          %v10756 = vpack.c.b16 %v10667, %v10666
          %v10757 = vpack.c.b16 %v10669, %v10668
          %v10758 = vpack.c.b16 %v10671, %v10670
          %v10759 = vpack.c.b16 %v10673, %v10672
          %v10760 = vpack.c.b16 %v10675, %v10674
          %v10761 = vpack.c.b16 %v10677, %v10676
          %v10762 = vpack.c.b16 %v10679, %v10678
          %v10763 = vpack.c.b16 %v10681, %v10680
          %v10764 = vpack.c.b16 %v10683, %v10682
          %v10765 = vpack.c.b16 %v10685, %v10684
          %v10766 = vpack.c.b16 %v10687, %v10686
          %v10767 = vpack.c.b16 %v10689, %v10688
          %v10768 = vpack.c.b16 %v10691, %v10690
          %v10769 = vpack.c.b16 %v10693, %v10692
          %v10770 = vpack.c.b16 %v10695, %v10694
          %v10771 = vpack.c.b16 %v10697, %v10696
          %v10772 = vpack.c.b16 %v10699, %v10698
          %v10773 = vpack.c.b16 %v10701, %v10700
          %v10774 = vpack.c.b16 %v10703, %v10702
          %v10775 = vpack.c.b16 %v10705, %v10704
          %v10776 = vpack.c.b16 %v10707, %v10706
          %v10777 = vpack.c.b16 %v10709, %v10708
          %v10778 = vpack.c.b16 %v10711, %v10710
          %v10779 = vpack.c.b16 %v10713, %v10712
          %v10780 = vpack.c.b16 %v10715, %v10714
          %v10781 = vpack.c.b16 %v10717, %v10716
          %10846 = vmatprep.subr.bf16.mxu0 0
          %10847 = vmatpush1.bf16.msra.mxu0 %v10718
          %10848 = vmatprep.subr.bf16.mxu0 0
          %10849 = vmatpush1.bf16.msra.mxu0 %v10719
          %10850 = vmatprep.subr.bf16.mxu0 0
          %10851 = vmatpush1.bf16.msra.mxu0 %v10720
          %10852 = vmatprep.subr.bf16.mxu0 0
          %10853 = vmatpush1.bf16.msra.mxu0 %v10721
          %10854 = vmatprep.subr.bf16.mxu0 0
          %10855 = vmatpush1.bf16.msra.mxu0 %v10722
          %10856 = vmatprep.subr.bf16.mxu0 0
          %10857 = vmatpush1.bf16.msra.mxu0 %v10723
          %10858 = vmatprep.subr.bf16.mxu0 0
          %10859 = vmatpush1.bf16.msra.mxu0 %v10724
          %10860 = vmatprep.subr.bf16.mxu0 0
          %10861 = vmatpush1.bf16.msra.mxu0 %v10725
          %10862 = vmatprep.subr.bf16.mxu0 0
          %10863 = vmatpush1.bf16.msra.mxu0 %v10726
          %10864 = vmatprep.subr.bf16.mxu0 0
          %10865 = vmatpush1.bf16.msra.mxu0 %v10727
          %10866 = vmatprep.subr.bf16.mxu0 0
          %10867 = vmatpush1.bf16.msra.mxu0 %v10728
          %10868 = vmatprep.subr.bf16.mxu0 0
          %10869 = vmatpush1.bf16.msra.mxu0 %v10729
          %10870 = vmatprep.subr.bf16.mxu0 0
          %10871 = vmatpush1.bf16.msra.mxu0 %v10730
          %10872 = vmatprep.subr.bf16.mxu0 0
          %10873 = vmatpush1.bf16.msra.mxu0 %v10731
          %10874 = vmatprep.subr.bf16.mxu0 0
          %10875 = vmatpush1.bf16.msra.mxu0 %v10732
          %10876 = vmatprep.subr.bf16.mxu0 0
          %10877 = vmatpush1.bf16.msra.mxu0 %v10733
          %10878 = vmatprep.mubr.bf16.mxu0 %v10320
          %10879 = vmatmul.mubr.bf16.gmra.mrb[0].mxu0 %v10319
          %v10880 = vpop.f32.mrb[0].mxu0
          %v10881 = vadd.f32 %v10460, %v10880
          %v10882 = vpop.f32.mrb[0].mxu0
          %v10883 = vpop.f32.mrb[0].mxu0
          %v10884 = vpop.f32.mrb[0].mxu0
          %10885 = vdwg.mxu0
          %10886 = vmatprep.subr.bf16.mxu0 0
          %10887 = vmatpush1.bf16.msra.mxu0 %v10734
          %10888 = vmatprep.subr.bf16.mxu0 0
          %10889 = vmatpush1.bf16.msra.mxu0 %v10735
          %10890 = vmatprep.subr.bf16.mxu0 0
          %10891 = vmatpush1.bf16.msra.mxu0 %v10736
          %10892 = vmatprep.subr.bf16.mxu0 0
          %10893 = vmatpush1.bf16.msra.mxu0 %v10737
          %10894 = vmatprep.subr.bf16.mxu0 0
          %10895 = vmatpush1.bf16.msra.mxu0 %v10738
          %10896 = vmatprep.subr.bf16.mxu0 0
          %10897 = vmatpush1.bf16.msra.mxu0 %v10739
          %10898 = vmatprep.subr.bf16.mxu0 0
          %10899 = vmatpush1.bf16.msra.mxu0 %v10740
          %10900 = vmatprep.subr.bf16.mxu0 0
          %10901 = vmatpush1.bf16.msra.mxu0 %v10741
          %10902 = vmatprep.subr.bf16.mxu0 0
          %10903 = vmatpush1.bf16.msra.mxu0 %v10742
          %10904 = vmatprep.subr.bf16.mxu0 0
          %10905 = vmatpush1.bf16.msra.mxu0 %v10743
          %10906 = vmatprep.subr.bf16.mxu0 0
          %10907 = vmatpush1.bf16.msra.mxu0 %v10744
          %10908 = vmatprep.subr.bf16.mxu0 0
          %10909 = vmatpush1.bf16.msra.mxu0 %v10745
          %10910 = vmatprep.subr.bf16.mxu0 0
          %10911 = vmatpush1.bf16.msra.mxu0 %v10746
          %10912 = vmatprep.subr.bf16.mxu0 0
          %10913 = vmatpush1.bf16.msra.mxu0 %v10747
          %10914 = vmatprep.subr.bf16.mxu0 0
          %10915 = vmatpush1.bf16.msra.mxu0 %v10748
          %10916 = vmatprep.subr.bf16.mxu0 0
          %10917 = vmatpush1.bf16.msra.mxu0 %v10749
          %10918 = vmatprep.mubr.bf16.mxu0 %v10322
          %10919 = vmatmul.mubr.bf16.gmra.mrb[0].mxu0 %v10321
          %v10920 = vpop.f32.mrb[0].mxu0
          %v10921 = vadd.f32 %v10881, %v10920
          %v10922 = vpop.f32.mrb[0].mxu0
          %v10923 = vpop.f32.mrb[0].mxu0
          %v10924 = vpop.f32.mrb[0].mxu0
          %10925 = vdwg.mxu0
          %10926 = vmatprep.subr.bf16.mxu0 0
          %10927 = vmatpush1.bf16.msra.mxu0 %v10750
          %10928 = vmatprep.subr.bf16.mxu0 0
          %10929 = vmatpush1.bf16.msra.mxu0 %v10751
          %10930 = vmatprep.subr.bf16.mxu0 0
          %10931 = vmatpush1.bf16.msra.mxu0 %v10752
          %10932 = vmatprep.subr.bf16.mxu0 0
          %10933 = vmatpush1.bf16.msra.mxu0 %v10753
          %10934 = vmatprep.subr.bf16.mxu0 0
          %10935 = vmatpush1.bf16.msra.mxu0 %v10754
          %10936 = vmatprep.subr.bf16.mxu0 0
          %10937 = vmatpush1.bf16.msra.mxu0 %v10755
          %10938 = vmatprep.subr.bf16.mxu0 0
          %10939 = vmatpush1.bf16.msra.mxu0 %v10756
          %10940 = vmatprep.subr.bf16.mxu0 0
          %10941 = vmatpush1.bf16.msra.mxu0 %v10757
          %10942 = vmatprep.subr.bf16.mxu0 0
          %10943 = vmatpush1.bf16.msra.mxu0 %v10758
          %10944 = vmatprep.subr.bf16.mxu0 0
          %10945 = vmatpush1.bf16.msra.mxu0 %v10759
          %10946 = vmatprep.subr.bf16.mxu0 0
          %10947 = vmatpush1.bf16.msra.mxu0 %v10760
          %10948 = vmatprep.subr.bf16.mxu0 0
          %10949 = vmatpush1.bf16.msra.mxu0 %v10761
          %10950 = vmatprep.subr.bf16.mxu0 0
          %10951 = vmatpush1.bf16.msra.mxu0 %v10762
          %10952 = vmatprep.subr.bf16.mxu0 0
          %10953 = vmatpush1.bf16.msra.mxu0 %v10763
          %10954 = vmatprep.subr.bf16.mxu0 0
          %10955 = vmatpush1.bf16.msra.mxu0 %v10764
          %10956 = vmatprep.subr.bf16.mxu0 0
          %10957 = vmatpush1.bf16.msra.mxu0 %v10765
          %10958 = vmatprep.mubr.bf16.mxu0 %v10324
          %10959 = vmatmul.mubr.bf16.gmra.mrb[0].mxu0 %v10323
          %v10960 = vpop.f32.mrb[0].mxu0
          %v10961 = vadd.f32 %v10921, %v10960
          %v10962 = vpop.f32.mrb[0].mxu0
          %v10963 = vpop.f32.mrb[0].mxu0
          %v10964 = vpop.f32.mrb[0].mxu0
          %10965 = vdwg.mxu0
          %10966 = vmatprep.subr.bf16.mxu0 0
          %10967 = vmatpush1.bf16.msra.mxu0 %v10766
          %10968 = vmatprep.subr.bf16.mxu0 0
          %10969 = vmatpush1.bf16.msra.mxu0 %v10767
          %10970 = vmatprep.subr.bf16.mxu0 0
          %10971 = vmatpush1.bf16.msra.mxu0 %v10768
          %10972 = vmatprep.subr.bf16.mxu0 0
          %10973 = vmatpush1.bf16.msra.mxu0 %v10769
          %10974 = vmatprep.subr.bf16.mxu0 0
          %10975 = vmatpush1.bf16.msra.mxu0 %v10770
          %10976 = vmatprep.subr.bf16.mxu0 0
          %10977 = vmatpush1.bf16.msra.mxu0 %v10771
          %10978 = vmatprep.subr.bf16.mxu0 0
          %10979 = vmatpush1.bf16.msra.mxu0 %v10772
          %10980 = vmatprep.subr.bf16.mxu0 0
          %10981 = vmatpush1.bf16.msra.mxu0 %v10773
          %10982 = vmatprep.subr.bf16.mxu0 0
          %10983 = vmatpush1.bf16.msra.mxu0 %v10774
          %10984 = vmatprep.subr.bf16.mxu0 0
          %10985 = vmatpush1.bf16.msra.mxu0 %v10775
          %10986 = vmatprep.subr.bf16.mxu0 0
          %10987 = vmatpush1.bf16.msra.mxu0 %v10776
          %10988 = vmatprep.subr.bf16.mxu0 0
          %10989 = vmatpush1.bf16.msra.mxu0 %v10777
          %10990 = vmatprep.subr.bf16.mxu0 0
          %10991 = vmatpush1.bf16.msra.mxu0 %v10778
          %10992 = vmatprep.subr.bf16.mxu0 0
          %10993 = vmatpush1.bf16.msra.mxu0 %v10779
          %10994 = vmatprep.subr.bf16.mxu0 0
          %10995 = vmatpush1.bf16.msra.mxu0 %v10780
          %10996 = vmatprep.subr.bf16.mxu0 0
          %10997 = vmatpush1.bf16.msra.mxu0 %v10781
          %10998 = vmatprep.mubr.bf16.mxu0 %v10326
          %10999 = vmatmul.mubr.bf16.gmra.mrb[0].mxu0 %v10325
          %v11000 = vpop.f32.mrb[0].mxu0
          %v11001 = vadd.f32 %v10961, %v11000
          %v11002 = vpop.f32.mrb[0].mxu0
          %v11003 = vpop.f32.mrb[0].mxu0
          %v11004 = vpop.f32.mrb[0].mxu0
          %11005 = vdwg.mxu0
          %v11006 = vld [vmem:[#allocation17] sm:$0x1]
          %v11008 = vlaneseq
          %v11009 = vshrl.u32 %v11008, 7
          %v11010 = vsub.s32 0, %v11009
          %v11011 = vrot.slane %v11006, %v11010
          %v11013 = vadd.f32 %v11001, %v11011
          %v11014 = vld [vmem:[%s11] sm:$0x3]
          %v11015 = vadd.f32 %v10185, 0.5
          %v11016 = vmul.f32 %v11015, 256.0
          %v11017 = vrcp.pop %v11014
          %v11018 = vmul.f32 1.0, %v11017
          %11020 = vset.pattern.permute.xlu0 18
          %11021 = vperm.xlu0 %11020, %v11014
          %v11022 = vpop.permute.xlu0 %11021
          %v11024 = vmul.f32 %v10185, %v11022
          %11025 = vset.pattern.permute.xlu0 0
          %11026 = vperm.xlu0 %11025, %v11014
          %v11027 = vpop.permute.xlu0 %11026
          %v11029 = vmul.f32 %v11027, %v11016
          %11030 = vset.pattern.permute.xlu0 1
          %11031 = vperm.xlu0 %11030, %v11014
          %v11032 = vpop.permute.xlu0 %11031
          %v11034 = vmul.f32 %v11032, %v11016
          %11036 = vrot.lane.b32.xlu0 %v11034, 99
          %v11037 = vpop.permute.xlu0 %11036
          %v11039 = vadd.f32 %v11029, %v11037
          %11040 = vset.pattern.permute.xlu0 2
          %11041 = vperm.xlu0 %11040, %v11014
          %v11042 = vpop.permute.xlu0 %11041
          %v11044 = vadd.f32 %v11039, %v11042
          %11045 = vset.pattern.permute.xlu0 3
          %11046 = vperm.xlu0 %11045, %v11014
          %v11047 = vpop.permute.xlu0 %11046
          %v11049 = vmul.f32 %v11047, %v11016
          %11050 = vset.pattern.permute.xlu0 4
          %11051 = vperm.xlu0 %11050, %v11014
          %v11052 = vpop.permute.xlu0 %11051
          %v11054 = vmul.f32 %v11052, %v11016
          %11056 = vrot.lane.b32.xlu0 %v11054, 99
          %v11057 = vpop.permute.xlu0 %11056
          %v11059 = vadd.f32 %v11049, %v11057
          %11060 = vset.pattern.permute.xlu0 5
          %11061 = vperm.xlu0 %11060, %v11014
          %v11062 = vpop.permute.xlu0 %11061
          %v11064 = vadd.f32 %v11059, %v11062
          %11065 = vset.pattern.permute.xlu0 6
          %11066 = vperm.xlu0 %11065, %v11014
          %v11067 = vpop.permute.xlu0 %11066
          %v11069 = vmul.f32 %v11067, %v11044
          %11070 = vset.pattern.permute.xlu0 7
          %11071 = vperm.xlu0 %11070, %v11014
          %v11072 = vpop.permute.xlu0 %11071
          %v11074 = vmul.f32 %v11072, %v11064
          %v11075 = vadd.f32 %v11069, %v11074
          %11076 = vset.pattern.permute.xlu0 8
          %11077 = vperm.xlu0 %11076, %v11014
          %v11078 = vpop.permute.xlu0 %11077
          %v11080 = vadd.f32 %v11075, %v11078
          %11081 = vset.pattern.permute.xlu0 9
          %11082 = vperm.xlu0 %11081, %v11014
          %v11083 = vpop.permute.xlu0 %11082
          %v11085 = vmul.f32 %v11083, %v11044
          %11086 = vset.pattern.permute.xlu0 10
          %11087 = vperm.xlu0 %11086, %v11014
          %v11088 = vpop.permute.xlu0 %11087
          %v11090 = vmul.f32 %v11088, %v11064
          %v11091 = vadd.f32 %v11085, %v11090
          %11092 = vset.pattern.permute.xlu0 11
          %11093 = vperm.xlu0 %11092, %v11014
          %v11094 = vpop.permute.xlu0 %11093
          %v11096 = vadd.f32 %v11091, %v11094
          %11097 = vset.pattern.permute.xlu0 12
          %11098 = vperm.xlu0 %11097, %v11014
          %v11099 = vpop.permute.xlu0 %11098
          %v11101 = vmul.f32 %v11099, %v11044
          %11102 = vset.pattern.permute.xlu0 13
          %11103 = vperm.xlu0 %11102, %v11014
          %v11104 = vpop.permute.xlu0 %11103
          %v11106 = vmul.f32 %v11104, %v11064
          %v11107 = vadd.f32 %v11101, %v11106
          %11108 = vset.pattern.permute.xlu0 14
          %11109 = vperm.xlu0 %11108, %v11014
          %v11110 = vpop.permute.xlu0 %11109
          %v11112 = vadd.f32 %v11107, %v11110
          %11113 = vset.pattern.permute.xlu0 17
          %11114 = vperm.xlu0 %11113, %v11014
          %v11115 = vpop.permute.xlu0 %11114
          %v11117 = vadd.f32 %v11024, %v11115
          %11119 = vrot.lane.b32.xlu0 %v11117, 70
          %v11120 = vpop.permute.xlu0 %11119
          %v11122 = vmul.f32 %v11080, %v11120
          %11123 = vset.pattern.permute.xlu0 15
          %11124 = vperm.xlu0 %11123, %v11014
          %v11125 = vpop.permute.xlu0 %11124
          %v11127 = vsub.f32 %v11122, %v11125
          %11129 = vset.pattern.permute.xlu0 18
          %11130 = vperm.xlu0 %11129, %v11018
          %v11131 = vpop.permute.xlu0 %11130
          %v11133 = vmul.f32 %v11127, %v11131
          %v11134 = vmul.f32 %v11096, %v11120
          %11135 = vset.pattern.permute.xlu0 16
          %11136 = vperm.xlu0 %11135, %v11014
          %v11137 = vpop.permute.xlu0 %11136
          %v11139 = vsub.f32 %v11134, %v11137
          %v11140 = vmul.f32 %v11139, %v11131
          %v11141 = vmul.f32 %v11112, %v11120
          %v11142 = vsub.f32 %v11141, %v11115
          %v11143 = vmul.f32 %v11142, %v11131
          %11145 = vset.pattern.permute.xlu0 0
          %11146 = vperm.xlu0 %11145, %v11133
          %v11147 = vpop.permute.xlu0 %11146
          %v11149 = vsub.f32 %v11133, %v11147
          %11151 = vset.pattern.permute.xlu0 0
          %11152 = vperm.xlu0 %11151, %v11140
          %v11153 = vpop.permute.xlu0 %11152
          %v11155 = vsub.f32 %v11140, %v11153
          %11157 = vset.pattern.permute.xlu0 0
          %11158 = vperm.xlu0 %11157, %v11143
          %v11159 = vpop.permute.xlu0 %11158
          %v11161 = vsub.f32 %v11143, %v11159
          %vm11162 = vcmask 711680
          %v11163 = vsel %vm11162, %v10185, 0.0
          %v11164 = vsel %vm11162, %v10200, 0.0
          %vm11165 = vcmask 80896
          %v11166 = vsel %vm11165, %v11001, 0.0
          %v11167 = vsel %vm11165, %v11013, 0.0
          %11169 = vrot.lane.b32.xlu0 %v11001, 118
          %v11170 = vpop.permute.xlu0 %11169
          %vm11172 = vcmask 375808
          %v11173 = vsel %vm11172, %v11170, 0.0
          %vm11174 = vcmask 236544
          %v11175 = vsel %vm11174, %v11149, 0.0
          %v11176 = vsel %vm11174, %v11155, 0.0
          %v11177 = vsel %vm11174, %v11161, 0.0
          %v11186 = vcombine.low %v11163, %v11164
          %v11187 = vcombine.low %v11166, %v11167
          %v11189 = vunpack.c.l.s4 1983009808
          %v11190 = vunpack.c.0.s8 %v11189
          %v11191 = vlaneseq
          %v11192 = vshrl.u32 %v11191, 7
          %v11193 = vsub.s32 %v11190, %v11192
          %v11194 = vrot.slane %v11186, %v11193
          %v11196 = vunpack.c.l.s4 1983009808
          %v11197 = vunpack.c.0.s8 %v11196
          %v11198 = vlaneseq
          %v11199 = vshrl.u32 %v11198, 7
          %v11200 = vsub.s32 %v11197, %v11199
          %v11201 = vrot.slane %v11187, %v11200
          %v11202 = vcombine.low %v11194, %v11201
          %v11203 = vcombine.low %v11173, %v11175
          %v11204 = vcombine.low %v11176, %v11177
          %v11206 = vunpack.c.l.s4 1983009808
          %v11207 = vunpack.c.0.s8 %v11206
          %v11208 = vlaneseq
          %v11209 = vshrl.u32 %v11208, 7
          %v11210 = vsub.s32 %v11207, %v11209
          %v11211 = vrot.slane %v11203, %v11210
          %v11213 = vunpack.c.l.s4 1983009808
          %v11214 = vunpack.c.0.s8 %v11213
          %v11215 = vlaneseq
          %v11216 = vshrl.u32 %v11215, 7
          %v11217 = vsub.s32 %v11214, %v11216
          %v11218 = vrot.slane %v11204, %v11217
          %v11219 = vcombine.low %v11211, %v11218
          %11222 = vst [vmem:[%s12] sm:$0xff] %v11202
          %11223 = vst [vmem:[%s12 + $0x8] sm:$0xff] %v11219
        $region112: #{forward.1} parent=67 // pred_fallthru
          _
        // Predicated region
        $region113: #{forward.1} parent=67 // pred_check
          %p11224 = pneg %p312
        $region114: #{forward.1} parent=67 // pred_check_branch
          %11226 = sbr.rel (%p11224) target = $region116
        $region115: #{forward.1} parent=67 // pred_region
          _
        $region116: #{forward.1} parent=67 // pred_fallthru
          _
        // Predicated region
        $region117: #{forward.1} parent=67 // pred_check
          %p11227 = pneg %p312
        $region118: #{forward.1} parent=67 // pred_check_branch
          %11229 = sbr.rel (%p11227) target = $region120
        $region119: #{forward.1} parent=67 // pred_region
          _
        $region120: #{forward.1} parent=67 // pred_fallthru
          _
      $region68: #{forward.1} parent=5 // pred_fallthru
        _
      %p11230 = scmp.le.s32.totalorder 2, %s27
      // Predicated region
      $region121: #{forward.1} parent=5 // pred_check
        %p11231 = pneg %p11230
      $region122: #{forward.1} parent=5 // pred_check_branch
        %11233 = sbr.rel (%p11231) target = $region124
      $region123: #{forward.1} parent=5 // pred_region
        %s11234 = ssub.s32 %s27, 2
      $region124: #{forward.1} parent=5 // pred_fallthru
        _
    $region6: #{forward.1} parent=1 // loop_footer
      %s31 = sadd.s32 1, %s27
    $region7: #{forward.1} parent=1 // loop_footer_branch
      %26 = sbr.rel target = $region3
    $region8: #{forward.1} parent=1 // loop_exit
      _
    %11235 = vsyncpa [#allocation5], 1
    %s11236 = scalar_lea.sflag [#allocation5], 1
    %11237 = vsyncpa %s11236, 1
    %11238 = vsyncpa [#allocation7], 1
    %11239 = vsyncpa [#allocation10], 1
    %s11240 = scalar_lea.sflag [#allocation10], 1
    %11241 = vsyncpa %s11240, 1
    %11242 = vsyncpa [#allocation13], 1
    %s11243 = scalar_lea.sflag [#allocation13], 1
    %11244 = vsyncpa %s11243, 1
    %11245 = vsyncpa [#allocation16], 1

</llo_original>
